<compile_context>
chip_gen: v7x
topology: tpu7x:2x2x1
jax: 0.10.0
libtpu: 0.0.40
codegen_flags: <defaults>
</compile_context>

<pallas_src>
import functools

import jax
import jax.numpy as jnp
from jax.experimental import pallas as pl
from jax.experimental.pallas import tpu as pltpu


PARAM_ORDER = (
    "sa_wq", "sa_wk", "sa_wv", "sa_wo", "sa_bq", "sa_bk", "sa_bv", "sa_bo",
    "ca_wq", "ca_wk", "ca_wv", "ca_wo", "ca_bq", "ca_bk", "ca_bv", "ca_bo",
    "ff_w1", "ff_w2", "ff_b1", "ff_b2",
    "ln1_g", "ln1_b", "ln2_g", "ln2_b", "ln3_g", "ln3_b",
)
# Matmul weights -> bf16 for the MXU; biases / LN params stay fp32.
WEIGHT_KEYS = ("sa_wq", "sa_wk", "sa_wv", "sa_wo",
               "ca_wq", "ca_wk", "ca_wv", "ca_wo",
               "ff_w1", "ff_w2")


def decoder_layer_kernel(
    tgt_ref, mem_ref,
    sa_wq, sa_wk, sa_wv, sa_wo, sa_bq, sa_bk, sa_bv, sa_bo,
    ca_wq, ca_wk, ca_wv, ca_wo, ca_bq, ca_bk, ca_bv, ca_bo,
    ff_w1, ff_w2, ff_b1, ff_b2,
    ln1_g, ln1_b, ln2_g, ln2_b, ln3_g, ln3_b,
    out_ref, x_scr, *, nhead, ff_chunk):
    """One grid step = one decoder layer applied to one batch tile."""
    layer = pl.program_id(1)
    n_layers = pl.num_programs(1)

    Bt, St, D = tgt_ref.shape
    Sm = mem_ref.shape[1]
    hd = D // nhead
    M = Bt * St
    dim_ff = ff_w1.shape[-1]

    # Initialize the activation carry from tgt at the first layer.
    @pl.when(layer == 0)
    def _init():
        x_scr[...] = tgt_ref[...].reshape(M, D)

    x = x_scr[...]                                      # (M, D) fp32

    def layer_norm(v, g_ref, b_ref):
        # Single-pass LN: E[x], E[x^2] (fewer VPU sweeps on v5e).
        mu = jnp.mean(v, axis=-1, keepdims=True)
        ms = jnp.mean(v * v, axis=-1, keepdims=True)
        inv = jax.lax.rsqrt(ms - mu * mu + 1e-5)
        return (v - mu) * inv * g_ref[0] + b_ref[0]

    def split_heads(t2d, s):
        # (Bt*s, D) bf16 -> (nhead*Bt, s, hd) head-major.  Only lane slices and
        # a leading-dim concatenation (no minor-dim transposes in-kernel).
        t = t2d.reshape(Bt, s, D)
        return jnp.concatenate([t[:, :, h * hd:(h + 1) * hd]
                                for h in range(nhead)], axis=0)

    def mha(xq_b, xkv_b, s_q, s_kv, wq, wk, wv, wo, bq, bk, bv, bo):
        # Full-width projections: bf16 x bf16 -> fp32 on the MXU.
        # Wq / bq carry the 1/sqrt(hd) scale folded in host-side.
        q = (jnp.dot(xq_b, wq[0], preferred_element_type=jnp.float32)
             + bq[0]).astype(jnp.bfloat16)
        k = (jnp.dot(xkv_b, wk[0], preferred_element_type=jnp.float32)
             + bk[0]).astype(jnp.bfloat16)
        v = (jnp.dot(xkv_b, wv[0], preferred_element_type=jnp.float32)
             + bv[0]).astype(jnp.bfloat16)

        qh = split_heads(q, s_q)                        # (nhead*Bt, s_q, hd)
        kh = split_heads(k, s_kv)
        vh = split_heads(v, s_kv)

        # All heads in ONE pair of batched einsums (no per-head unroll).
        s = jnp.einsum('bqd,bkd->bqk', qh, kh,
                       preferred_element_type=jnp.float32)
        s = s - jnp.max(s, axis=-1, keepdims=True)
        p = jnp.exp(s)
        p = p * pl.reciprocal(jnp.sum(p, axis=-1, keepdims=True), approx=True)
        ctx = jnp.einsum('bqk,bkd->bqd', p.astype(jnp.bfloat16), vh,
                         preferred_element_type=jnp.float32).astype(jnp.bfloat16)

        # Re-assemble heads along lanes and apply one K=D output projection.
        ctx2d = jnp.concatenate([ctx[h * Bt:(h + 1) * Bt] for h in range(nhead)],
                                axis=-1).reshape(Bt * s_q, D)
        return jnp.dot(ctx2d, wo[0], preferred_element_type=jnp.float32) + bo[0]

    # ---- self-attention sublayer (post-norm) -------------------------------
    x_b = x.astype(jnp.bfloat16)                        # cast once per sublayer
    sa = mha(x_b, x_b, St, St,
             sa_wq, sa_wk, sa_wv, sa_wo, sa_bq, sa_bk, sa_bv, sa_bo)
    x = layer_norm(x + sa, ln1_g, ln1_b)

    # ---- cross-attention over encoder memory (already bf16) ----------------
    mem_b = mem_ref[...].reshape(Bt * Sm, D)
    x_b = x.astype(jnp.bfloat16)
    ca = mha(x_b, mem_b, St, Sm,
             ca_wq, ca_wk, ca_wv, ca_wo, ca_bq, ca_bk, ca_bv, ca_bo)
    x = layer_norm(x + ca, ln2_g, ln2_b)

    # ---- feed-forward, tiled over dim_ff ------------------------------------
    x_b = x.astype(jnp.bfloat16)
    ff = jnp.zeros((M, D), jnp.float32)
    for c0 in range(0, dim_ff, ff_chunk):               # static chunk loop
        cs = min(ff_chunk, dim_ff - c0)
        h1 = (jnp.dot(x_b, ff_w1[0, :, c0:c0 + cs],
                      preferred_element_type=jnp.float32)
              + ff_b1[0, :, c0:c0 + cs])
        h1 = jnp.maximum(h1, 0.0).astype(jnp.bfloat16)
        ff = ff + jnp.dot(h1, ff_w2[0, c0:c0 + cs, :],
                          preferred_element_type=jnp.float32)
    x = layer_norm(x + ff + ff_b2[0], ln3_g, ln3_b)

    x_scr[...] = x

    @pl.when(layer == n_layers - 1)
    def _finalize():
        out_ref[...] = x.reshape(Bt, St, D)


def transformer_decoder(tgt_sbd, mem_sbd, params, *, nhead, block_b=None,
                        ff_chunk=512):
    """tgt_sbd: (S_tgt, B, D); mem_sbd: (S_mem, B, D)  (PyTorch axis order).

    Note: D and dim_ff should be multiples of 128 for lane-dense stores and
    full MXU N-dim utilization (pad host-side if needed).
    """
    St, B, D = tgt_sbd.shape
    Sm = mem_sbd.shape[0]
    tgt = jnp.transpose(tgt_sbd, (1, 0, 2)).astype(jnp.float32)   # (B, St, D)
    # memory is only ever a matmul operand -> ship it as bf16 (half the DMA).
    mem = jnp.transpose(mem_sbd, (1, 0, 2)).astype(jnp.bfloat16)  # (B, Sm, D)

    n_layers = params["sa_wq"].shape[0]
    dim_ff = params["ff_w1"].shape[-1]
    plist = [params[k].astype(jnp.bfloat16) if k in WEIGHT_KEYS
             else params[k].astype(jnp.float32) for k in PARAM_ORDER]
    per_layer = sum((int(p.size) // p.shape[0]) * p.dtype.itemsize for p in plist)

    # Generation-aware VMEM budget (v7x = 64 MiB, v5e/v6e = 128 MiB).
    try:
        info = pltpu.get_tpu_info()
        vmem_cap = int(getattr(info, "vmem_capacity_bytes", 128 << 20))
    except Exception:                                   # pragma: no cover
        vmem_cap = 128 << 20
    budget = int(0.8 * vmem_cap)

    def vmem_est(bt):
        rows_q = bt * St
        rows_kv = bt * max(St, Sm)
        smax = max(St, Sm)
        io = (2 * rows_q * D * 4          # tgt block, double-buffered (fp32)
              + 2 * bt * Sm * D * 2       # mem block, double-buffered (bf16)
              + 2 * rows_q * D * 4)       # out block
        qkv = 3 * rows_kv * D * 2 * 2     # bf16 q/k/v + head-split copies
        scores = 2 * bt * nhead * St * smax * 4
        ctx = rows_q * D * (4 + 2)
        ffn = rows_q * min(dim_ff, ff_chunk) * (4 + 2) + rows_q * D * 4
        resid = 3 * rows_q * D * 4
        return (2 * per_layer + io + rows_q * D * 4 + qkv + scores + ctx
                + ffn + resid + (4 << 20))

    if block_b is None:
        target_m = 512                    # amortize MXU drain + per-step overhead
        bt = max(1, min(B, max(1, target_m // max(St, 1))))
        while bt > 1 and vmem_est(bt) > budget:
            bt = max(1, bt // 2)
        # 64 MiB parts (v7x) have 2 TensorCores: keep >= 2 batch tiles so the
        # "parallel" batch axis can be sharded across both cores.
        if vmem_cap <= (64 << 20) and bt > 1 and pl.cdiv(B, bt) < 2:
            bt = max(1, pl.cdiv(B, 2))
        block_b = bt
    Bt = block_b

    # Pad the batch to a multiple of the tile instead of shrinking Bt to a
    # divisor (keeps matmul M at the target for odd/prime B).
    B_pad = pl.cdiv(B, Bt) * Bt
    if B_pad != B:
        pad = B_pad - B
        tgt = jnp.pad(tgt, ((0, pad), (0, 0), (0, 0)))
        mem = jnp.pad(mem, ((0, pad), (0, 0), (0, 0)))

    grid = (B_pad // Bt, n_layers)
    vmem_limit = int(min(max(vmem_est(Bt), 32 << 20), budget))

    def layer_spec(p):
        nd = p.ndim
        # NOTE: if profiling shows the per-layer weight DMA exposed, add
        # pipeline_mode=pl.Buffered(3) here (VMEM permitting).
        return pl.BlockSpec((1,) + p.shape[1:],
                            lambda b, l, _nd=nd: (l,) + (0,) * (_nd - 1))

    out = pl.pallas_call(
        functools.partial(decoder_layer_kernel, nhead=nhead, ff_chunk=ff_chunk),
        out_shape=jax.ShapeDtypeStruct((B_pad, St, D), jnp.float32),
        grid=grid,
        in_specs=[pl.BlockSpec((Bt, St, D), lambda b, l: (b, 0, 0)),
                  pl.BlockSpec((Bt, Sm, D), lambda b, l: (b, 0, 0))]
                 + [layer_spec(p) for p in plist],
        out_specs=pl.BlockSpec((Bt, St, D), lambda b, l: (b, 0, 0)),
        scratch_shapes=[pltpu.VMEM((Bt * St, D), jnp.float32)],
        compiler_params=pltpu.CompilerParams(
            dimension_semantics=("parallel", "arbitrary"),
            vmem_limit_bytes=vmem_limit),
    )(tgt, mem, *plist)

    return jnp.transpose(out[:B], (1, 0, 2))            # back to (S, B, D)


def reference_decoder(tgt_sbd, mem_sbd, params, *, nhead):
    """Pure-JAX fp32 reference with identical parameter conventions."""
    x = jnp.transpose(tgt_sbd, (1, 0, 2)).astype(jnp.float32)
    m = jnp.transpose(mem_sbd, (1, 0, 2)).astype(jnp.float32)
    n_layers = params["sa_wq"].shape[0]
    D = x.shape[-1]
    hd = D // nhead

    def ln(v, g, b):
        mu = jnp.mean(v, -1, keepdims=True)
        var = jnp.mean((v - mu) ** 2, -1, keepdims=True)
        return (v - mu) / jnp.sqrt(var + 1e-5) * g + b

    def attn(xq, xkv, wq, wk, wv, wo, bq, bk, bv, bo):
        q = xq @ wq + bq
        k = xkv @ wk + bk
        v = xkv @ wv + bv
        Bb, Sq, _ = xq.shape
        Sk = xkv.shape[1]
        qh = q.reshape(Bb, Sq, nhead, hd).transpose(0, 2, 1, 3)
        kh = k.reshape(Bb, Sk, nhead, hd).transpose(0, 2, 1, 3)
        vh = v.reshape(Bb, Sk, nhead, hd).transpose(0, 2, 1, 3)
        s = jnp.einsum('bhqd,bhkd->bhqk', qh, kh)
        p = jax.nn.softmax(s, axis=-1)
        ctx = jnp.einsum('bhqk,bhkd->bhqd', p, vh)
        ctx = ctx.transpose(0, 2, 1, 3).reshape(Bb, Sq, D)
        return ctx @ wo + bo

    for l in range(n_layers):
        g = lambda name: params[name][l]
        sa = attn(x, x, g("sa_wq"), g("sa_wk"), g("sa_wv"), g("sa_wo"),
                  g("sa_bq"), g("sa_bk"), g("sa_bv"), g("sa_bo"))
        x = ln(x + sa, g("ln1_g"), g("ln1_b"))
        ca = attn(x, m, g("ca_wq"), g("ca_wk"), g("ca_wv"), g("ca_wo"),
                  g("ca_bq"), g("ca_bk"), g("ca_bv"), g("ca_bo"))
        x = ln(x + ca, g("ln2_g"), g("ln2_b"))
        h1 = jnp.maximum(x @ g("ff_w1") + g("ff_b1"), 0.0)
        x = ln(x + h1 @ g("ff_w2") + g("ff_b2"), g("ln3_g"), g("ln3_b"))
    return jnp.transpose(x, (1, 0, 2))


def init_params(key, num_layers, d_model, nhead, dim_ff):
    """fp32 master params, already in kernel orientation: K-major weights,
    1/sqrt(hd) folded into Wq/bq, Wo stored dense as (d_model, d_model)."""
    n_total = num_layers + 1        # + `last_layer`, modeled as a decoder layer
    hd = d_model // nhead
    qscale = 1.0 / float(hd) ** 0.5

    p = {name: [] for name in PARAM_ORDER}
    for l in range(n_total):
        ks = jax.random.split(jax.random.fold_in(key, l), 20)
        r = lambda i, shape: 0.05 * jax.random.normal(ks[i], shape, jnp.float32)
        p["sa_wq"].append(r(0, (d_model, d_model)) * qscale)
        p["sa_wk"].append(r(1, (d_model, d_model)))
        p["sa_wv"].append(r(2, (d_model, d_model)))
        p["sa_wo"].append(r(3, (d_model, d_model)))
        p["sa_bq"].append(r(4, (1, d_model)) * qscale)
        p["sa_bk"].append(r(5, (1, d_model)))
        p["sa_bv"].append(r(6, (1, d_model)))
        p["sa_bo"].append(r(7, (1, d_model)))
        p["ca_wq"].append(r(8, (d_model, d_model)) * qscale)
        p["ca_wk"].append(r(9, (d_model, d_model)))
        p["ca_wv"].append(r(10, (d_model, d_model)))
        p["ca_wo"].append(r(11, (d_model, d_model)))
        p["ca_bq"].append(r(12, (1, d_model)) * qscale)
        p["ca_bk"].append(r(13, (1, d_model)))
        p["ca_bv"].append(r(14, (1, d_model)))
        p["ca_bo"].append(r(15, (1, d_model)))
        p["ff_w1"].append(r(16, (d_model, dim_ff)))
        p["ff_w2"].append(r(17, (dim_ff, d_model)))
        p["ff_b1"].append(r(18, (1, dim_ff)))
        p["ff_b2"].append(r(19, (1, d_model)))
        p["ln1_g"].append(jnp.ones((1, d_model), jnp.float32))
        p["ln1_b"].append(jnp.zeros((1, d_model), jnp.float32))
        p["ln2_g"].append(jnp.ones((1, d_model), jnp.float32))
        p["ln2_b"].append(jnp.zeros((1, d_model), jnp.float32))
        p["ln3_g"].append(jnp.ones((1, d_model), jnp.float32))
        p["ln3_b"].append(jnp.zeros((1, d_model), jnp.float32))
    return {k: jnp.stack(v).astype(jnp.float32) for k, v in p.items()}


if __name__ == "__main__":
    num_layers = 2                   # decoder stack depth (+1 for last_layer)
    nhead, d_model, dim_ff = 4, 128, 256   # D, dim_ff multiples of 128
    seq_tgt, seq_mem, batch = 8, 16, 3     # odd batch exercises tile padding

    key = jax.random.PRNGKey(0)
    k_t, k_m, k_p = jax.random.split(key, 3)
    tgt = jax.random.normal(k_t, (seq_tgt, batch, d_model), dtype=jnp.float32)
    mem = jax.random.normal(k_m, (seq_mem, batch, d_model), dtype=jnp.float32)
    params = init_params(k_p, num_layers, d_model, nhead, dim_ff)

    out = transformer_decoder(tgt, mem, params, nhead=nhead)
    out = jax.block_until_ready(out)
    assert out.shape == (seq_tgt, batch, d_model)
    assert bool(jnp.all(jnp.isfinite(out)))

    ref = reference_decoder(tgt, mem, params, nhead=nhead)
    err = float(jnp.max(jnp.abs(out - ref)))
    assert err < 0.1, f"kernel/reference mismatch: max abs err = {err}"
    print("KERNEL_OK")
</pallas_src>

<mosaic_0001>
module attributes {stable_mosaic.version = 11 : i64} {
  func.func @decoder_layer_kernel(%arg0: i32, %arg1: i32, %arg2: memref<3x8x128xf32, #tpu.memory_space<vmem>>, %arg3: memref<3x16x128xbf16, #tpu.memory_space<vmem>>, %arg4: memref<1x128x128xbf16, #tpu.memory_space<vmem>>, %arg5: memref<1x128x128xbf16, #tpu.memory_space<vmem>>, %arg6: memref<1x128x128xbf16, #tpu.memory_space<vmem>>, %arg7: memref<1x128x128xbf16, #tpu.memory_space<vmem>>, %arg8: memref<1x1x128xf32, #tpu.memory_space<vmem>>, %arg9: memref<1x1x128xf32, #tpu.memory_space<vmem>>, %arg10: memref<1x1x128xf32, #tpu.memory_space<vmem>>, %arg11: memref<1x1x128xf32, #tpu.memory_space<vmem>>, %arg12: memref<1x128x128xbf16, #tpu.memory_space<vmem>>, %arg13: memref<1x128x128xbf16, #tpu.memory_space<vmem>>, %arg14: memref<1x128x128xbf16, #tpu.memory_space<vmem>>, %arg15: memref<1x128x128xbf16, #tpu.memory_space<vmem>>, %arg16: memref<1x1x128xf32, #tpu.memory_space<vmem>>, %arg17: memref<1x1x128xf32, #tpu.memory_space<vmem>>, %arg18: memref<1x1x128xf32, #tpu.memory_space<vmem>>, %arg19: memref<1x1x128xf32, #tpu.memory_space<vmem>>, %arg20: memref<1x128x256xbf16, #tpu.memory_space<vmem>>, %arg21: memref<1x256x128xbf16, #tpu.memory_space<vmem>>, %arg22: memref<1x1x256xf32, #tpu.memory_space<vmem>>, %arg23: memref<1x1x128xf32, #tpu.memory_space<vmem>>, %arg24: memref<1x1x128xf32, #tpu.memory_space<vmem>>, %arg25: memref<1x1x128xf32, #tpu.memory_space<vmem>>, %arg26: memref<1x1x128xf32, #tpu.memory_space<vmem>>, %arg27: memref<1x1x128xf32, #tpu.memory_space<vmem>>, %arg28: memref<1x1x128xf32, #tpu.memory_space<vmem>>, %arg29: memref<1x1x128xf32, #tpu.memory_space<vmem>>, %arg30: memref<3x8x128xf32, #tpu.memory_space<vmem>>, %arg31: memref<24x128xf32, #tpu.memory_space<vmem>>) attributes {dimension_semantics = [#tpu.dimension_semantics<parallel>, #tpu.dimension_semantics<arbitrary>], iteration_bounds = array<i64: 1, 3>, scalar_prefetch = 0 : i64, scratch_operands = 1 : i64, tpu.core_type = #tpu.core_type<tc>, window_params = [{transform_indices = @transform_0, window_bounds = array<i64: 3, 8, 128>}, {transform_indices = @transform_1, window_bounds = array<i64: 3, 16, 128>}, {transform_indices = @transform_2, window_bounds = array<i64: 1, 128, 128>}, {transform_indices = @transform_3, window_bounds = array<i64: 1, 128, 128>}, {transform_indices = @transform_4, window_bounds = array<i64: 1, 128, 128>}, {transform_indices = @transform_5, window_bounds = array<i64: 1, 128, 128>}, {transform_indices = @transform_6, window_bounds = array<i64: 1, 1, 128>}, {transform_indices = @transform_7, window_bounds = array<i64: 1, 1, 128>}, {transform_indices = @transform_8, window_bounds = array<i64: 1, 1, 128>}, {transform_indices = @transform_9, window_bounds = array<i64: 1, 1, 128>}, {transform_indices = @transform_10, window_bounds = array<i64: 1, 128, 128>}, {transform_indices = @transform_11, window_bounds = array<i64: 1, 128, 128>}, {transform_indices = @transform_12, window_bounds = array<i64: 1, 128, 128>}, {transform_indices = @transform_13, window_bounds = array<i64: 1, 128, 128>}, {transform_indices = @transform_14, window_bounds = array<i64: 1, 1, 128>}, {transform_indices = @transform_15, window_bounds = array<i64: 1, 1, 128>}, {transform_indices = @transform_16, window_bounds = array<i64: 1, 1, 128>}, {transform_indices = @transform_17, window_bounds = array<i64: 1, 1, 128>}, {transform_indices = @transform_18, window_bounds = array<i64: 1, 128, 256>}, {transform_indices = @transform_19, window_bounds = array<i64: 1, 256, 128>}, {transform_indices = @transform_20, window_bounds = array<i64: 1, 1, 256>}, {transform_indices = @transform_21, window_bounds = array<i64: 1, 1, 128>}, {transform_indices = @transform_22, window_bounds = array<i64: 1, 1, 128>}, {transform_indices = @transform_23, window_bounds = array<i64: 1, 1, 128>}, {transform_indices = @transform_24, window_bounds = array<i64: 1, 1, 128>}, {transform_indices = @transform_25, window_bounds = array<i64: 1, 1, 128>}, {transform_indices = @transform_26, window_bounds = array<i64: 1, 1, 128>}, {transform_indices = @transform_27, window_bounds = array<i64: 1, 1, 128>}, {transform_indices = @transform_28, window_bounds = array<i64: 3, 8, 128>}]} {
    %c0_i32 = arith.constant 0 : i32
    %0 = arith.cmpi eq, %arg1, %c0_i32 : i32
    %1 = arith.extui %0 : i1 to i32
    %c0_i32_0 = arith.constant 0 : i32
    %2 = arith.cmpi ne, %1, %c0_i32_0 : i32
    scf.if %2 {
      %c0_120 = arith.constant 0 : index
      %c0_121 = arith.constant 0 : index
      %c0_122 = arith.constant 0 : index
      %251 = vector.load %arg2[%c0_120, %c0_121, %c0_122] : memref<3x8x128xf32, #tpu.memory_space<vmem>>, vector<3x8x128xf32>
      %252 = vector.shape_cast %251 : vector<3x8x128xf32> to vector<24x128xf32>
      %c0_123 = arith.constant 0 : index
      %c0_124 = arith.constant 0 : index
      %253 = vector.load %arg31[%c0_123, %c0_124] : memref<24x128xf32, #tpu.memory_space<vmem>>, vector<24x128xf32>
      tpu.vector_store %arg31[%c0_123, %c0_124], %252 {strides = array<i32>} : memref<24x128xf32, #tpu.memory_space<vmem>>, vector<24x128xf32>,
    } else {
    }
    %c0 = arith.constant 0 : index
    %c0_1 = arith.constant 0 : index
    %3 = vector.load %arg31[%c0, %c0_1] : memref<24x128xf32, #tpu.memory_space<vmem>>, vector<24x128xf32>
    %4 = arith.truncf %3 : vector<24x128xf32> to vector<24x128xbf16>
    %c0_2 = arith.constant 0 : index
    %c0_3 = arith.constant 0 : index
    %c0_4 = arith.constant 0 : index
    %5 = vector.load %arg4[%c0_2, %c0_3, %c0_4] : memref<1x128x128xbf16, #tpu.memory_space<vmem>>, vector<1x128x128xbf16>
    %6 = vector.shape_cast %5 : vector<1x128x128xbf16> to vector<128x128xbf16>
    %cst = arith.constant dense<0.000000e+00> : vector<24x128xf32>
    %7 = tpu.matmul %4, %6, %cst {dimension_numbers = #tpu.dot_dimension_numbers<[1], [0], [0], [1], [0, 0, 1, 1], [], []>} : vector<24x128xbf16>, vector<128x128xbf16>, vector<24x128xf32> -> vector<24x128xf32>
    %c0_5 = arith.constant 0 : index
    %c0_6 = arith.constant 0 : index
    %c0_7 = arith.constant 0 : index
    %8 = vector.load %arg8[%c0_5, %c0_6, %c0_7] : memref<1x1x128xf32, #tpu.memory_space<vmem>>, vector<1x1x128xf32>
    %9 = vector.shape_cast %8 : vector<1x1x128xf32> to vector<1x128xf32>
    %10 = vector.broadcast %9 : vector<1x128xf32> to vector<24x128xf32>
    %11 = arith.addf %7, %10 : vector<24x128xf32>
    %12 = arith.truncf %11 : vector<24x128xf32> to vector<24x128xbf16>
    %c0_8 = arith.constant 0 : index
    %c0_9 = arith.constant 0 : index
    %c0_10 = arith.constant 0 : index
    %13 = vector.load %arg5[%c0_8, %c0_9, %c0_10] : memref<1x128x128xbf16, #tpu.memory_space<vmem>>, vector<1x128x128xbf16>
    %14 = vector.shape_cast %13 : vector<1x128x128xbf16> to vector<128x128xbf16>
    %cst_11 = arith.constant dense<0.000000e+00> : vector<24x128xf32>
    %15 = tpu.matmul %4, %14, %cst_11 {dimension_numbers = #tpu.dot_dimension_numbers<[1], [0], [0], [1], [0, 0, 1, 1], [], []>} : vector<24x128xbf16>, vector<128x128xbf16>, vector<24x128xf32> -> vector<24x128xf32>
    %c0_12 = arith.constant 0 : index
    %c0_13 = arith.constant 0 : index
    %c0_14 = arith.constant 0 : index
    %16 = vector.load %arg9[%c0_12, %c0_13, %c0_14] : memref<1x1x128xf32, #tpu.memory_space<vmem>>, vector<1x1x128xf32>
    %17 = vector.shape_cast %16 : vector<1x1x128xf32> to vector<1x128xf32>
    %18 = vector.broadcast %17 : vector<1x128xf32> to vector<24x128xf32>
    %19 = arith.addf %15, %18 : vector<24x128xf32>
    %20 = arith.truncf %19 : vector<24x128xf32> to vector<24x128xbf16>
    %c0_15 = arith.constant 0 : index
    %c0_16 = arith.constant 0 : index
    %c0_17 = arith.constant 0 : index
    %21 = vector.load %arg6[%c0_15, %c0_16, %c0_17] : memref<1x128x128xbf16, #tpu.memory_space<vmem>>, vector<1x128x128xbf16>
    %22 = vector.shape_cast %21 : vector<1x128x128xbf16> to vector<128x128xbf16>
    %cst_18 = arith.constant dense<0.000000e+00> : vector<24x128xf32>
    %23 = tpu.matmul %4, %22, %cst_18 {dimension_numbers = #tpu.dot_dimension_numbers<[1], [0], [0], [1], [0, 0, 1, 1], [], []>} : vector<24x128xbf16>, vector<128x128xbf16>, vector<24x128xf32> -> vector<24x128xf32>
    %c0_19 = arith.constant 0 : index
    %c0_20 = arith.constant 0 : index
    %c0_21 = arith.constant 0 : index
    %24 = vector.load %arg10[%c0_19, %c0_20, %c0_21] : memref<1x1x128xf32, #tpu.memory_space<vmem>>, vector<1x1x128xf32>
    %25 = vector.shape_cast %24 : vector<1x1x128xf32> to vector<1x128xf32>
    %26 = vector.broadcast %25 : vector<1x128xf32> to vector<24x128xf32>
    %27 = arith.addf %23, %26 : vector<24x128xf32>
    %28 = arith.truncf %27 : vector<24x128xf32> to vector<24x128xbf16>
    %29 = vector.shape_cast %12 : vector<24x128xbf16> to vector<3x8x128xbf16>
    %30 = vector.extract_strided_slice %29 {offsets = [0, 0, 0], sizes = [3, 8, 32], strides = [1, 1, 1]} : vector<3x8x128xbf16> to vector<3x8x32xbf16>
    %31 = vector.extract_strided_slice %29 {offsets = [0, 0, 32], sizes = [3, 8, 32], strides = [1, 1, 1]} : vector<3x8x128xbf16> to vector<3x8x32xbf16>
    %32 = vector.extract_strided_slice %29 {offsets = [0, 0, 64], sizes = [3, 8, 32], strides = [1, 1, 1]} : vector<3x8x128xbf16> to vector<3x8x32xbf16>
    %33 = vector.extract_strided_slice %29 {offsets = [0, 0, 96], sizes = [3, 8, 32], strides = [1, 1, 1]} : vector<3x8x128xbf16> to vector<3x8x32xbf16>
    %34 = tpu.concatenate %30, %31, %32, %33 in 0 : vector<3x8x32xbf16>, vector<3x8x32xbf16>, vector<3x8x32xbf16>, vector<3x8x32xbf16> -> vector<12x8x32xbf16>
    %35 = vector.shape_cast %20 : vector<24x128xbf16> to vector<3x8x128xbf16>
    %36 = vector.extract_strided_slice %35 {offsets = [0, 0, 0], sizes = [3, 8, 32], strides = [1, 1, 1]} : vector<3x8x128xbf16> to vector<3x8x32xbf16>
    %37 = vector.extract_strided_slice %35 {offsets = [0, 0, 32], sizes = [3, 8, 32], strides = [1, 1, 1]} : vector<3x8x128xbf16> to vector<3x8x32xbf16>
    %38 = vector.extract_strided_slice %35 {offsets = [0, 0, 64], sizes = [3, 8, 32], strides = [1, 1, 1]} : vector<3x8x128xbf16> to vector<3x8x32xbf16>
    %39 = vector.extract_strided_slice %35 {offsets = [0, 0, 96], sizes = [3, 8, 32], strides = [1, 1, 1]} : vector<3x8x128xbf16> to vector<3x8x32xbf16>
    %40 = tpu.concatenate %36, %37, %38, %39 in 0 : vector<3x8x32xbf16>, vector<3x8x32xbf16>, vector<3x8x32xbf16>, vector<3x8x32xbf16> -> vector<12x8x32xbf16>
    %41 = vector.shape_cast %28 : vector<24x128xbf16> to vector<3x8x128xbf16>
    %42 = vector.extract_strided_slice %41 {offsets = [0, 0, 0], sizes = [3, 8, 32], strides = [1, 1, 1]} : vector<3x8x128xbf16> to vector<3x8x32xbf16>
    %43 = vector.extract_strided_slice %41 {offsets = [0, 0, 32], sizes = [3, 8, 32], strides = [1, 1, 1]} : vector<3x8x128xbf16> to vector<3x8x32xbf16>
    %44 = vector.extract_strided_slice %41 {offsets = [0, 0, 64], sizes = [3, 8, 32], strides = [1, 1, 1]} : vector<3x8x128xbf16> to vector<3x8x32xbf16>
    %45 = vector.extract_strided_slice %41 {offsets = [0, 0, 96], sizes = [3, 8, 32], strides = [1, 1, 1]} : vector<3x8x128xbf16> to vector<3x8x32xbf16>
    %46 = tpu.concatenate %42, %43, %44, %45 in 0 : vector<3x8x32xbf16>, vector<3x8x32xbf16>, vector<3x8x32xbf16>, vector<3x8x32xbf16> -> vector<12x8x32xbf16>
    "tpu.trace_start"() <{level = 10 : i32, message = "bqd,bkd->bqk"}> : () -> ()
    %cst_22 = arith.constant dense<0.000000e+00> : vector<12x8x8xf32>
    %47 = tpu.matmul %34, %40, %cst_22 {dimension_numbers = #tpu.dot_dimension_numbers<[2], [2], [1], [1], [0, 0, 0, 1, 1, 1], [0], [0]>} : vector<12x8x32xbf16>, vector<12x8x32xbf16>, vector<12x8x8xf32> -> vector<12x8x8xf32>
    "tpu.trace_stop"() : () -> ()
    %cst_23 = arith.constant dense<0xFF800000> : vector<12x8xf32>
    %48 = vector.multi_reduction <maximumf>, %47, %cst_23 [2] : vector<12x8x8xf32> to vector<12x8xf32>
    %49 = vector.shape_cast %48 : vector<12x8xf32> to vector<12x8x1xf32>
    %50 = vector.broadcast %49 : vector<12x8x1xf32> to vector<12x8x8xf32>
    %51 = arith.subf %47, %50 : vector<12x8x8xf32>
    %52 = math.exp %51 : vector<12x8x8xf32>
    %cst_24 = arith.constant dense<0.000000e+00> : vector<12x8xf32>
    %53 = vector.multi_reduction <add>, %52, %cst_24 [2] : vector<12x8x8xf32> to vector<12x8xf32>
    %54 = vector.shape_cast %53 : vector<12x8xf32> to vector<12x8x1xf32>
    %55 = tpu.reciprocal %54 {approx = true} : vector<12x8x1xf32> -> vector<12x8x1xf32>
    %56 = vector.broadcast %55 : vector<12x8x1xf32> to vector<12x8x8xf32>
    %57 = arith.mulf %52, %56 : vector<12x8x8xf32>
    %58 = arith.truncf %57 : vector<12x8x8xf32> to vector<12x8x8xbf16>
    "tpu.trace_start"() <{level = 10 : i32, message = "bqk,bkd->bqd"}> : () -> ()
    %cst_25 = arith.constant dense<0.000000e+00> : vector<12x8x32xf32>
    %59 = tpu.matmul %58, %46, %cst_25 {dimension_numbers = #tpu.dot_dimension_numbers<[2], [1], [1], [2], [0, 0, 0, 1, 1, 2], [0], [0]>} : vector<12x8x8xbf16>, vector<12x8x32xbf16>, vector<12x8x32xf32> -> vector<12x8x32xf32>
    "tpu.trace_stop"() : () -> ()
    %60 = arith.truncf %59 : vector<12x8x32xf32> to vector<12x8x32xbf16>
    %61 = vector.extract_strided_slice %60 {offsets = [0, 0, 0], sizes = [3, 8, 32], strides = [1, 1, 1]} : vector<12x8x32xbf16> to vector<3x8x32xbf16>
    %62 = vector.extract_strided_slice %60 {offsets = [3, 0, 0], sizes = [3, 8, 32], strides = [1, 1, 1]} : vector<12x8x32xbf16> to vector<3x8x32xbf16>
    %63 = vector.extract_strided_slice %60 {offsets = [6, 0, 0], sizes = [3, 8, 32], strides = [1, 1, 1]} : vector<12x8x32xbf16> to vector<3x8x32xbf16>
    %64 = vector.extract_strided_slice %60 {offsets = [9, 0, 0], sizes = [3, 8, 32], strides = [1, 1, 1]} : vector<12x8x32xbf16> to vector<3x8x32xbf16>
    %65 = tpu.concatenate %61, %62, %63, %64 in 2 : vector<3x8x32xbf16>, vector<3x8x32xbf16>, vector<3x8x32xbf16>, vector<3x8x32xbf16> -> vector<3x8x128xbf16>
    %66 = vector.shape_cast %65 : vector<3x8x128xbf16> to vector<24x128xbf16>
    %c0_26 = arith.constant 0 : index
    %c0_27 = arith.constant 0 : index
    %c0_28 = arith.constant 0 : index
    %67 = vector.load %arg7[%c0_26, %c0_27, %c0_28] : memref<1x128x128xbf16, #tpu.memory_space<vmem>>, vector<1x128x128xbf16>
    %68 = vector.shape_cast %67 : vector<1x128x128xbf16> to vector<128x128xbf16>
    %cst_29 = arith.constant dense<0.000000e+00> : vector<24x128xf32>
    %69 = tpu.matmul %66, %68, %cst_29 {dimension_numbers = #tpu.dot_dimension_numbers<[1], [0], [0], [1], [0, 0, 1, 1], [], []>} : vector<24x128xbf16>, vector<128x128xbf16>, vector<24x128xf32> -> vector<24x128xf32>
    %c0_30 = arith.constant 0 : index
    %c0_31 = arith.constant 0 : index
    %c0_32 = arith.constant 0 : index
    %70 = vector.load %arg11[%c0_30, %c0_31, %c0_32] : memref<1x1x128xf32, #tpu.memory_space<vmem>>, vector<1x1x128xf32>
    %71 = vector.shape_cast %70 : vector<1x1x128xf32> to vector<1x128xf32>
    %72 = vector.broadcast %71 : vector<1x128xf32> to vector<24x128xf32>
    %73 = arith.addf %69, %72 : vector<24x128xf32>
    %74 = arith.addf %3, %73 : vector<24x128xf32>
    %cst_33 = arith.constant dense<0.000000e+00> : vector<24xf32>
    %75 = vector.multi_reduction <add>, %74, %cst_33 [1] : vector<24x128xf32> to vector<24xf32>
    %76 = vector.shape_cast %75 : vector<24xf32> to vector<24x1xf32>
    %cst_34 = arith.constant 1.280000e+02 : f32
    %77 = vector.broadcast %cst_34 : f32 to vector<24x1xf32>
    %78 = arith.divf %76, %77 : vector<24x1xf32>
    %79 = arith.mulf %74, %74 : vector<24x128xf32>
    %cst_35 = arith.constant dense<0.000000e+00> : vector<24xf32>
    %80 = vector.multi_reduction <add>, %79, %cst_35 [1] : vector<24x128xf32> to vector<24xf32>
    %81 = vector.shape_cast %80 : vector<24xf32> to vector<24x1xf32>
    %cst_36 = arith.constant 1.280000e+02 : f32
    %82 = vector.broadcast %cst_36 : f32 to vector<24x1xf32>
    %83 = arith.divf %81, %82 : vector<24x1xf32>
    %84 = arith.mulf %78, %78 : vector<24x1xf32>
    %85 = arith.subf %83, %84 : vector<24x1xf32>
    %cst_37 = arith.constant 9.99999974E-6 : f32
    %86 = vector.broadcast %cst_37 : f32 to vector<24x1xf32>
    %87 = arith.addf %85, %86 : vector<24x1xf32>
    %88 = math.rsqrt %87 : vector<24x1xf32>
    %89 = vector.broadcast %78 : vector<24x1xf32> to vector<24x128xf32>
    %90 = arith.subf %74, %89 : vector<24x128xf32>
    %91 = vector.broadcast %88 : vector<24x1xf32> to vector<24x128xf32>
    %92 = arith.mulf %90, %91 : vector<24x128xf32>
    %c0_38 = arith.constant 0 : index
    %c0_39 = arith.constant 0 : index
    %c0_40 = arith.constant 0 : index
    %93 = vector.load %arg24[%c0_38, %c0_39, %c0_40] : memref<1x1x128xf32, #tpu.memory_space<vmem>>, vector<1x1x128xf32>
    %94 = vector.shape_cast %93 : vector<1x1x128xf32> to vector<1x128xf32>
    %95 = vector.broadcast %94 : vector<1x128xf32> to vector<24x128xf32>
    %96 = arith.mulf %92, %95 : vector<24x128xf32>
    %c0_41 = arith.constant 0 : index
    %c0_42 = arith.constant 0 : index
    %c0_43 = arith.constant 0 : index
    %97 = vector.load %arg25[%c0_41, %c0_42, %c0_43] : memref<1x1x128xf32, #tpu.memory_space<vmem>>, vector<1x1x128xf32>
    %98 = vector.shape_cast %97 : vector<1x1x128xf32> to vector<1x128xf32>
    %99 = vector.broadcast %98 : vector<1x128xf32> to vector<24x128xf32>
    %100 = arith.addf %96, %99 : vector<24x128xf32>
    %c0_44 = arith.constant 0 : index
    %c0_45 = arith.constant 0 : index
    %c0_46 = arith.constant 0 : index
    %101 = vector.load %arg3[%c0_44, %c0_45, %c0_46] : memref<3x16x128xbf16, #tpu.memory_space<vmem>>, vector<3x16x128xbf16>
    %102 = vector.shape_cast %101 : vector<3x16x128xbf16> to vector<48x128xbf16>
    %103 = arith.truncf %100 : vector<24x128xf32> to vector<24x128xbf16>
    %c0_47 = arith.constant 0 : index
    %c0_48 = arith.constant 0 : index
    %c0_49 = arith.constant 0 : index
    %104 = vector.load %arg12[%c0_47, %c0_48, %c0_49] : memref<1x128x128xbf16, #tpu.memory_space<vmem>>, vector<1x128x128xbf16>
    %105 = vector.shape_cast %104 : vector<1x128x128xbf16> to vector<128x128xbf16>
    %cst_50 = arith.constant dense<0.000000e+00> : vector<24x128xf32>
    %106 = tpu.matmul %103, %105, %cst_50 {dimension_numbers = #tpu.dot_dimension_numbers<[1], [0], [0], [1], [0, 0, 1, 1], [], []>} : vector<24x128xbf16>, vector<128x128xbf16>, vector<24x128xf32> -> vector<24x128xf32>
    %c0_51 = arith.constant 0 : index
    %c0_52 = arith.constant 0 : index
    %c0_53 = arith.constant 0 : index
    %107 = vector.load %arg16[%c0_51, %c0_52, %c0_53] : memref<1x1x128xf32, #tpu.memory_space<vmem>>, vector<1x1x128xf32>
    %108 = vector.shape_cast %107 : vector<1x1x128xf32> to vector<1x128xf32>
    %109 = vector.broadcast %108 : vector<1x128xf32> to vector<24x128xf32>
    %110 = arith.addf %106, %109 : vector<24x128xf32>
    %111 = arith.truncf %110 : vector<24x128xf32> to vector<24x128xbf16>
    %c0_54 = arith.constant 0 : index
    %c0_55 = arith.constant 0 : index
    %c0_56 = arith.constant 0 : index
    %112 = vector.load %arg13[%c0_54, %c0_55, %c0_56] : memref<1x128x128xbf16, #tpu.memory_space<vmem>>, vector<1x128x128xbf16>
    %113 = vector.shape_cast %112 : vector<1x128x128xbf16> to vector<128x128xbf16>
    %cst_57 = arith.constant dense<0.000000e+00> : vector<48x128xf32>
    %114 = tpu.matmul %102, %113, %cst_57 {dimension_numbers = #tpu.dot_dimension_numbers<[1], [0], [0], [1], [0, 0, 1, 1], [], []>} : vector<48x128xbf16>, vector<128x128xbf16>, vector<48x128xf32> -> vector<48x128xf32>
    %c0_58 = arith.constant 0 : index
    %c0_59 = arith.constant 0 : index
    %c0_60 = arith.constant 0 : index
    %115 = vector.load %arg17[%c0_58, %c0_59, %c0_60] : memref<1x1x128xf32, #tpu.memory_space<vmem>>, vector<1x1x128xf32>
    %116 = vector.shape_cast %115 : vector<1x1x128xf32> to vector<1x128xf32>
    %117 = vector.broadcast %116 : vector<1x128xf32> to vector<48x128xf32>
    %118 = arith.addf %114, %117 : vector<48x128xf32>
    %119 = arith.truncf %118 : vector<48x128xf32> to vector<48x128xbf16>
    %c0_61 = arith.constant 0 : index
    %c0_62 = arith.constant 0 : index
    %c0_63 = arith.constant 0 : index
    %120 = vector.load %arg14[%c0_61, %c0_62, %c0_63] : memref<1x128x128xbf16, #tpu.memory_space<vmem>>, vector<1x128x128xbf16>
    %121 = vector.shape_cast %120 : vector<1x128x128xbf16> to vector<128x128xbf16>
    %cst_64 = arith.constant dense<0.000000e+00> : vector<48x128xf32>
    %122 = tpu.matmul %102, %121, %cst_64 {dimension_numbers = #tpu.dot_dimension_numbers<[1], [0], [0], [1], [0, 0, 1, 1], [], []>} : vector<48x128xbf16>, vector<128x128xbf16>, vector<48x128xf32> -> vector<48x128xf32>
    %c0_65 = arith.constant 0 : index
    %c0_66 = arith.constant 0 : index
    %c0_67 = arith.constant 0 : index
    %123 = vector.load %arg18[%c0_65, %c0_66, %c0_67] : memref<1x1x128xf32, #tpu.memory_space<vmem>>, vector<1x1x128xf32>
    %124 = vector.shape_cast %123 : vector<1x1x128xf32> to vector<1x128xf32>
    %125 = vector.broadcast %124 : vector<1x128xf32> to vector<48x128xf32>
    %126 = arith.addf %122, %125 : vector<48x128xf32>
    %127 = arith.truncf %126 : vector<48x128xf32> to vector<48x128xbf16>
    %128 = vector.shape_cast %111 : vector<24x128xbf16> to vector<3x8x128xbf16>
    %129 = vector.extract_strided_slice %128 {offsets = [0, 0, 0], sizes = [3, 8, 32], strides = [1, 1, 1]} : vector<3x8x128xbf16> to vector<3x8x32xbf16>
    %130 = vector.extract_strided_slice %128 {offsets = [0, 0, 32], sizes = [3, 8, 32], strides = [1, 1, 1]} : vector<3x8x128xbf16> to vector<3x8x32xbf16>
    %131 = vector.extract_strided_slice %128 {offsets = [0, 0, 64], sizes = [3, 8, 32], strides = [1, 1, 1]} : vector<3x8x128xbf16> to vector<3x8x32xbf16>
    %132 = vector.extract_strided_slice %128 {offsets = [0, 0, 96], sizes = [3, 8, 32], strides = [1, 1, 1]} : vector<3x8x128xbf16> to vector<3x8x32xbf16>
    %133 = tpu.concatenate %129, %130, %131, %132 in 0 : vector<3x8x32xbf16>, vector<3x8x32xbf16>, vector<3x8x32xbf16>, vector<3x8x32xbf16> -> vector<12x8x32xbf16>
    %134 = vector.shape_cast %119 : vector<48x128xbf16> to vector<3x16x128xbf16>
    %135 = vector.extract_strided_slice %134 {offsets = [0, 0, 0], sizes = [3, 16, 32], strides = [1, 1, 1]} : vector<3x16x128xbf16> to vector<3x16x32xbf16>
    %136 = vector.extract_strided_slice %134 {offsets = [0, 0, 32], sizes = [3, 16, 32], strides = [1, 1, 1]} : vector<3x16x128xbf16> to vector<3x16x32xbf16>
    %137 = vector.extract_strided_slice %134 {offsets = [0, 0, 64], sizes = [3, 16, 32], strides = [1, 1, 1]} : vector<3x16x128xbf16> to vector<3x16x32xbf16>
    %138 = vector.extract_strided_slice %134 {offsets = [0, 0, 96], sizes = [3, 16, 32], strides = [1, 1, 1]} : vector<3x16x128xbf16> to vector<3x16x32xbf16>
    %139 = tpu.concatenate %135, %136, %137, %138 in 0 : vector<3x16x32xbf16>, vector<3x16x32xbf16>, vector<3x16x32xbf16>, vector<3x16x32xbf16> -> vector<12x16x32xbf16>
    %140 = vector.shape_cast %127 : vector<48x128xbf16> to vector<3x16x128xbf16>
    %141 = vector.extract_strided_slice %140 {offsets = [0, 0, 0], sizes = [3, 16, 32], strides = [1, 1, 1]} : vector<3x16x128xbf16> to vector<3x16x32xbf16>
    %142 = vector.extract_strided_slice %140 {offsets = [0, 0, 32], sizes = [3, 16, 32], strides = [1, 1, 1]} : vector<3x16x128xbf16> to vector<3x16x32xbf16>
    %143 = vector.extract_strided_slice %140 {offsets = [0, 0, 64], sizes = [3, 16, 32], strides = [1, 1, 1]} : vector<3x16x128xbf16> to vector<3x16x32xbf16>
    %144 = vector.extract_strided_slice %140 {offsets = [0, 0, 96], sizes = [3, 16, 32], strides = [1, 1, 1]} : vector<3x16x128xbf16> to vector<3x16x32xbf16>
    %145 = tpu.concatenate %141, %142, %143, %144 in 0 : vector<3x16x32xbf16>, vector<3x16x32xbf16>, vector<3x16x32xbf16>, vector<3x16x32xbf16> -> vector<12x16x32xbf16>
    "tpu.trace_start"() <{level = 10 : i32, message = "bqd,bkd->bqk"}> : () -> ()
    %cst_68 = arith.constant dense<0.000000e+00> : vector<12x8x16xf32>
    %146 = tpu.matmul %133, %139, %cst_68 {dimension_numbers = #tpu.dot_dimension_numbers<[2], [2], [1], [1], [0, 0, 0, 1, 1, 1], [0], [0]>} : vector<12x8x32xbf16>, vector<12x16x32xbf16>, vector<12x8x16xf32> -> vector<12x8x16xf32>
    "tpu.trace_stop"() : () -> ()
    %cst_69 = arith.constant dense<0xFF800000> : vector<12x8xf32>
    %147 = vector.multi_reduction <maximumf>, %146, %cst_69 [2] : vector<12x8x16xf32> to vector<12x8xf32>
    %148 = vector.shape_cast %147 : vector<12x8xf32> to vector<12x8x1xf32>
    %149 = vector.broadcast %148 : vector<12x8x1xf32> to vector<12x8x16xf32>
    %150 = arith.subf %146, %149 : vector<12x8x16xf32>
    %151 = math.exp %150 : vector<12x8x16xf32>
    %cst_70 = arith.constant dense<0.000000e+00> : vector<12x8xf32>
    %152 = vector.multi_reduction <add>, %151, %cst_70 [2] : vector<12x8x16xf32> to vector<12x8xf32>
    %153 = vector.shape_cast %152 : vector<12x8xf32> to vector<12x8x1xf32>
    %154 = tpu.reciprocal %153 {approx = true} : vector<12x8x1xf32> -> vector<12x8x1xf32>
    %155 = vector.broadcast %154 : vector<12x8x1xf32> to vector<12x8x16xf32>
    %156 = arith.mulf %151, %155 : vector<12x8x16xf32>
    %157 = arith.truncf %156 : vector<12x8x16xf32> to vector<12x8x16xbf16>
    "tpu.trace_start"() <{level = 10 : i32, message = "bqk,bkd->bqd"}> : () -> ()
    %cst_71 = arith.constant dense<0.000000e+00> : vector<12x8x32xf32>
    %158 = tpu.matmul %157, %145, %cst_71 {dimension_numbers = #tpu.dot_dimension_numbers<[2], [1], [1], [2], [0, 0, 0, 1, 1, 2], [0], [0]>} : vector<12x8x16xbf16>, vector<12x16x32xbf16>, vector<12x8x32xf32> -> vector<12x8x32xf32>
    "tpu.trace_stop"() : () -> ()
    %159 = arith.truncf %158 : vector<12x8x32xf32> to vector<12x8x32xbf16>
    %160 = vector.extract_strided_slice %159 {offsets = [0, 0, 0], sizes = [3, 8, 32], strides = [1, 1, 1]} : vector<12x8x32xbf16> to vector<3x8x32xbf16>
    %161 = vector.extract_strided_slice %159 {offsets = [3, 0, 0], sizes = [3, 8, 32], strides = [1, 1, 1]} : vector<12x8x32xbf16> to vector<3x8x32xbf16>
    %162 = vector.extract_strided_slice %159 {offsets = [6, 0, 0], sizes = [3, 8, 32], strides = [1, 1, 1]} : vector<12x8x32xbf16> to vector<3x8x32xbf16>
    %163 = vector.extract_strided_slice %159 {offsets = [9, 0, 0], sizes = [3, 8, 32], strides = [1, 1, 1]} : vector<12x8x32xbf16> to vector<3x8x32xbf16>
    %164 = tpu.concatenate %160, %161, %162, %163 in 2 : vector<3x8x32xbf16>, vector<3x8x32xbf16>, vector<3x8x32xbf16>, vector<3x8x32xbf16> -> vector<3x8x128xbf16>
    %165 = vector.shape_cast %164 : vector<3x8x128xbf16> to vector<24x128xbf16>
    %c0_72 = arith.constant 0 : index
    %c0_73 = arith.constant 0 : index
    %c0_74 = arith.constant 0 : index
    %166 = vector.load %arg15[%c0_72, %c0_73, %c0_74] : memref<1x128x128xbf16, #tpu.memory_space<vmem>>, vector<1x128x128xbf16>
    %167 = vector.shape_cast %166 : vector<1x128x128xbf16> to vector<128x128xbf16>
    %cst_75 = arith.constant dense<0.000000e+00> : vector<24x128xf32>
    %168 = tpu.matmul %165, %167, %cst_75 {dimension_numbers = #tpu.dot_dimension_numbers<[1], [0], [0], [1], [0, 0, 1, 1], [], []>} : vector<24x128xbf16>, vector<128x128xbf16>, vector<24x128xf32> -> vector<24x128xf32>
    %c0_76 = arith.constant 0 : index
    %c0_77 = arith.constant 0 : index
    %c0_78 = arith.constant 0 : index
    %169 = vector.load %arg19[%c0_76, %c0_77, %c0_78] : memref<1x1x128xf32, #tpu.memory_space<vmem>>, vector<1x1x128xf32>
    %170 = vector.shape_cast %169 : vector<1x1x128xf32> to vector<1x128xf32>
    %171 = vector.broadcast %170 : vector<1x128xf32> to vector<24x128xf32>
    %172 = arith.addf %168, %171 : vector<24x128xf32>
    %173 = arith.addf %100, %172 : vector<24x128xf32>
    %cst_79 = arith.constant dense<0.000000e+00> : vector<24xf32>
    %174 = vector.multi_reduction <add>, %173, %cst_79 [1] : vector<24x128xf32> to vector<24xf32>
    %175 = vector.shape_cast %174 : vector<24xf32> to vector<24x1xf32>
    %cst_80 = arith.constant 1.280000e+02 : f32
    %176 = vector.broadcast %cst_80 : f32 to vector<24x1xf32>
    %177 = arith.divf %175, %176 : vector<24x1xf32>
    %178 = arith.mulf %173, %173 : vector<24x128xf32>
    %cst_81 = arith.constant dense<0.000000e+00> : vector<24xf32>
    %179 = vector.multi_reduction <add>, %178, %cst_81 [1] : vector<24x128xf32> to vector<24xf32>
    %180 = vector.shape_cast %179 : vector<24xf32> to vector<24x1xf32>
    %cst_82 = arith.constant 1.280000e+02 : f32
    %181 = vector.broadcast %cst_82 : f32 to vector<24x1xf32>
    %182 = arith.divf %180, %181 : vector<24x1xf32>
    %183 = arith.mulf %177, %177 : vector<24x1xf32>
    %184 = arith.subf %182, %183 : vector<24x1xf32>
    %cst_83 = arith.constant 9.99999974E-6 : f32
    %185 = vector.broadcast %cst_83 : f32 to vector<24x1xf32>
    %186 = arith.addf %184, %185 : vector<24x1xf32>
    %187 = math.rsqrt %186 : vector<24x1xf32>
    %188 = vector.broadcast %177 : vector<24x1xf32> to vector<24x128xf32>
    %189 = arith.subf %173, %188 : vector<24x128xf32>
    %190 = vector.broadcast %187 : vector<24x1xf32> to vector<24x128xf32>
    %191 = arith.mulf %189, %190 : vector<24x128xf32>
    %c0_84 = arith.constant 0 : index
    %c0_85 = arith.constant 0 : index
    %c0_86 = arith.constant 0 : index
    %192 = vector.load %arg26[%c0_84, %c0_85, %c0_86] : memref<1x1x128xf32, #tpu.memory_space<vmem>>, vector<1x1x128xf32>
    %193 = vector.shape_cast %192 : vector<1x1x128xf32> to vector<1x128xf32>
    %194 = vector.broadcast %193 : vector<1x128xf32> to vector<24x128xf32>
    %195 = arith.mulf %191, %194 : vector<24x128xf32>
    %c0_87 = arith.constant 0 : index
    %c0_88 = arith.constant 0 : index
    %c0_89 = arith.constant 0 : index
    %196 = vector.load %arg27[%c0_87, %c0_88, %c0_89] : memref<1x1x128xf32, #tpu.memory_space<vmem>>, vector<1x1x128xf32>
    %197 = vector.shape_cast %196 : vector<1x1x128xf32> to vector<1x128xf32>
    %198 = vector.broadcast %197 : vector<1x128xf32> to vector<24x128xf32>
    %199 = arith.addf %195, %198 : vector<24x128xf32>
    %200 = arith.truncf %199 : vector<24x128xf32> to vector<24x128xbf16>
    %cst_90 = arith.constant 0.000000e+00 : f32
    %201 = vector.broadcast %cst_90 : f32 to vector<24x128xf32>
    %c0_91 = arith.constant 0 : index
    %c0_92 = arith.constant 0 : index
    %c0_93 = arith.constant 0 : index
    %202 = vector.load %arg20[%c0_91, %c0_92, %c0_93] : memref<1x128x256xbf16, #tpu.memory_space<vmem>>, vector<1x128x256xbf16>
    %203 = vector.shape_cast %202 : vector<1x128x256xbf16> to vector<128x256xbf16>
    %cst_94 = arith.constant dense<0.000000e+00> : vector<24x256xf32>
    %204 = tpu.matmul %200, %203, %cst_94 {dimension_numbers = #tpu.dot_dimension_numbers<[1], [0], [0], [1], [0, 0, 1, 1], [], []>} : vector<24x128xbf16>, vector<128x256xbf16>, vector<24x256xf32> -> vector<24x256xf32>
    %c0_95 = arith.constant 0 : index
    %c0_96 = arith.constant 0 : index
    %c0_97 = arith.constant 0 : index
    %205 = vector.load %arg22[%c0_95, %c0_96, %c0_97] : memref<1x1x256xf32, #tpu.memory_space<vmem>>, vector<1x1x256xf32>
    %206 = vector.shape_cast %205 : vector<1x1x256xf32> to vector<1x256xf32>
    %207 = vector.broadcast %206 : vector<1x256xf32> to vector<24x256xf32>
    %208 = arith.addf %204, %207 : vector<24x256xf32>
    %cst_98 = arith.constant 0.000000e+00 : f32
    %209 = vector.broadcast %cst_98 : f32 to vector<24x256xf32>
    %210 = arith.maximumf %208, %209 : vector<24x256xf32>
    %211 = arith.truncf %210 : vector<24x256xf32> to vector<24x256xbf16>
    %c0_99 = arith.constant 0 : index
    %c0_100 = arith.constant 0 : index
    %c0_101 = arith.constant 0 : index
    %212 = vector.load %arg21[%c0_99, %c0_100, %c0_101] : memref<1x256x128xbf16, #tpu.memory_space<vmem>>, vector<1x256x128xbf16>
    %213 = vector.shape_cast %212 : vector<1x256x128xbf16> to vector<256x128xbf16>
    %cst_102 = arith.constant dense<0.000000e+00> : vector<24x128xf32>
    %214 = tpu.matmul %211, %213, %cst_102 {dimension_numbers = #tpu.dot_dimension_numbers<[1], [0], [0], [1], [0, 0, 1, 1], [], []>} : vector<24x256xbf16>, vector<256x128xbf16>, vector<24x128xf32> -> vector<24x128xf32>
    %215 = arith.addf %201, %214 : vector<24x128xf32>
    %216 = arith.addf %199, %215 : vector<24x128xf32>
    %c0_103 = arith.constant 0 : index
    %c0_104 = arith.constant 0 : index
    %c0_105 = arith.constant 0 : index
    %217 = vector.load %arg23[%c0_103, %c0_104, %c0_105] : memref<1x1x128xf32, #tpu.memory_space<vmem>>, vector<1x1x128xf32>
    %218 = vector.shape_cast %217 : vector<1x1x128xf32> to vector<1x128xf32>
    %219 = vector.broadcast %218 : vector<1x128xf32> to vector<24x128xf32>
    %220 = arith.addf %216, %219 : vector<24x128xf32>
    %cst_106 = arith.constant dense<0.000000e+00> : vector<24xf32>
    %221 = vector.multi_reduction <add>, %220, %cst_106 [1] : vector<24x128xf32> to vector<24xf32>
    %222 = vector.shape_cast %221 : vector<24xf32> to vector<24x1xf32>
    %cst_107 = arith.constant 1.280000e+02 : f32
    %223 = vector.broadcast %cst_107 : f32 to vector<24x1xf32>
    %224 = arith.divf %222, %223 : vector<24x1xf32>
    %225 = arith.mulf %220, %220 : vector<24x128xf32>
    %cst_108 = arith.constant dense<0.000000e+00> : vector<24xf32>
    %226 = vector.multi_reduction <add>, %225, %cst_108 [1] : vector<24x128xf32> to vector<24xf32>
    %227 = vector.shape_cast %226 : vector<24xf32> to vector<24x1xf32>
    %cst_109 = arith.constant 1.280000e+02 : f32
    %228 = vector.broadcast %cst_109 : f32 to vector<24x1xf32>
    %229 = arith.divf %227, %228 : vector<24x1xf32>
    %230 = arith.mulf %224, %224 : vector<24x1xf32>
    %231 = arith.subf %229, %230 : vector<24x1xf32>
    %cst_110 = arith.constant 9.99999974E-6 : f32
    %232 = vector.broadcast %cst_110 : f32 to vector<24x1xf32>
    %233 = arith.addf %231, %232 : vector<24x1xf32>
    %234 = math.rsqrt %233 : vector<24x1xf32>
    %235 = vector.broadcast %224 : vector<24x1xf32> to vector<24x128xf32>
    %236 = arith.subf %220, %235 : vector<24x128xf32>
    %237 = vector.broadcast %234 : vector<24x1xf32> to vector<24x128xf32>
    %238 = arith.mulf %236, %237 : vector<24x128xf32>
    %c0_111 = arith.constant 0 : index
    %c0_112 = arith.constant 0 : index
    %c0_113 = arith.constant 0 : index
    %239 = vector.load %arg28[%c0_111, %c0_112, %c0_113] : memref<1x1x128xf32, #tpu.memory_space<vmem>>, vector<1x1x128xf32>
    %240 = vector.shape_cast %239 : vector<1x1x128xf32> to vector<1x128xf32>
    %241 = vector.broadcast %240 : vector<1x128xf32> to vector<24x128xf32>
    %242 = arith.mulf %238, %241 : vector<24x128xf32>
    %c0_114 = arith.constant 0 : index
    %c0_115 = arith.constant 0 : index
    %c0_116 = arith.constant 0 : index
    %243 = vector.load %arg29[%c0_114, %c0_115, %c0_116] : memref<1x1x128xf32, #tpu.memory_space<vmem>>, vector<1x1x128xf32>
    %244 = vector.shape_cast %243 : vector<1x1x128xf32> to vector<1x128xf32>
    %245 = vector.broadcast %244 : vector<1x128xf32> to vector<24x128xf32>
    %246 = arith.addf %242, %245 : vector<24x128xf32>
    %c0_117 = arith.constant 0 : index
    %c0_118 = arith.constant 0 : index
    %247 = vector.load %arg31[%c0_117, %c0_118] : memref<24x128xf32, #tpu.memory_space<vmem>>, vector<24x128xf32>
    tpu.vector_store %arg31[%c0_117, %c0_118], %246 {strides = array<i32>} : memref<24x128xf32, #tpu.memory_space<vmem>>, vector<24x128xf32>,
    %c2_i32 = arith.constant 2 : i32
    %248 = arith.cmpi eq, %arg1, %c2_i32 : i32
    %249 = arith.extui %248 : i1 to i32
    %c0_i32_119 = arith.constant 0 : i32
    %250 = arith.cmpi ne, %249, %c0_i32_119 : i32
    scf.if %250 {
      %251 = vector.shape_cast %246 : vector<24x128xf32> to vector<3x8x128xf32>
      %c0_120 = arith.constant 0 : index
      %c0_121 = arith.constant 0 : index
      %c0_122 = arith.constant 0 : index
      %252 = vector.load %arg30[%c0_120, %c0_121, %c0_122] : memref<3x8x128xf32, #tpu.memory_space<vmem>>, vector<3x8x128xf32>
      tpu.vector_store %arg30[%c0_120, %c0_121, %c0_122], %251 {strides = array<i32>} : memref<3x8x128xf32, #tpu.memory_space<vmem>>, vector<3x8x128xf32>,
    } else {
    }
    return
  }
  func.func @transform_0(%arg0: i32, %arg1: i32) -> (i32, i32, i32) {
    %c0_i32 = arith.constant 0 : i32
    %c0_i32_0 = arith.constant 0 : i32
    %c0_i32_1 = arith.constant 0 : i32
    return %arg0, %c0_i32, %c0_i32_0 : i32, i32, i32
  }
  func.func @transform_1(%arg0: i32, %arg1: i32) -> (i32, i32, i32) {
    %c0_i32 = arith.constant 0 : i32
    %c0_i32_0 = arith.constant 0 : i32
    %c0_i32_1 = arith.constant 0 : i32
    return %arg0, %c0_i32, %c0_i32_0 : i32, i32, i32
  }
  func.func @transform_2(%arg0: i32, %arg1: i32) -> (i32, i32, i32) {
    %c0_i32 = arith.constant 0 : i32
    %c0_i32_0 = arith.constant 0 : i32
    %c0_i32_1 = arith.constant 0 : i32
    return %arg1, %c0_i32, %c0_i32_0 : i32, i32, i32
  }
  func.func @transform_3(%arg0: i32, %arg1: i32) -> (i32, i32, i32) {
    %c0_i32 = arith.constant 0 : i32
    %c0_i32_0 = arith.constant 0 : i32
    %c0_i32_1 = arith.constant 0 : i32
    return %arg1, %c0_i32, %c0_i32_0 : i32, i32, i32
  }
  func.func @transform_4(%arg0: i32, %arg1: i32) -> (i32, i32, i32) {
    %c0_i32 = arith.constant 0 : i32
    %c0_i32_0 = arith.constant 0 : i32
    %c0_i32_1 = arith.constant 0 : i32
    return %arg1, %c0_i32, %c0_i32_0 : i32, i32, i32
  }
  func.func @transform_5(%arg0: i32, %arg1: i32) -> (i32, i32, i32) {
    %c0_i32 = arith.constant 0 : i32
    %c0_i32_0 = arith.constant 0 : i32
    %c0_i32_1 = arith.constant 0 : i32
    return %arg1, %c0_i32, %c0_i32_0 : i32, i32, i32
  }
  func.func @transform_6(%arg0: i32, %arg1: i32) -> (i32, i32, i32) {
    %c0_i32 = arith.constant 0 : i32
    %c0_i32_0 = arith.constant 0 : i32
    %c0_i32_1 = arith.constant 0 : i32
    return %arg1, %c0_i32, %c0_i32_0 : i32, i32, i32
  }
  func.func @transform_7(%arg0: i32, %arg1: i32) -> (i32, i32, i32) {
    %c0_i32 = arith.constant 0 : i32
    %c0_i32_0 = arith.constant 0 : i32
    %c0_i32_1 = arith.constant 0 : i32
    return %arg1, %c0_i32, %c0_i32_0 : i32, i32, i32
  }
  func.func @transform_8(%arg0: i32, %arg1: i32) -> (i32, i32, i32) {
    %c0_i32 = arith.constant 0 : i32
    %c0_i32_0 = arith.constant 0 : i32
    %c0_i32_1 = arith.constant 0 : i32
    return %arg1, %c0_i32, %c0_i32_0 : i32, i32, i32
  }
  func.func @transform_9(%arg0: i32, %arg1: i32) -> (i32, i32, i32) {
    %c0_i32 = arith.constant 0 : i32
    %c0_i32_0 = arith.constant 0 : i32
    %c0_i32_1 = arith.constant 0 : i32
    return %arg1, %c0_i32, %c0_i32_0 : i32, i32, i32
  }
  func.func @transform_10(%arg0: i32, %arg1: i32) -> (i32, i32, i32) {
    %c0_i32 = arith.constant 0 : i32
    %c0_i32_0 = arith.constant 0 : i32
    %c0_i32_1 = arith.constant 0 : i32
    return %arg1, %c0_i32, %c0_i32_0 : i32, i32, i32
  }
  func.func @transform_11(%arg0: i32, %arg1: i32) -> (i32, i32, i32) {
    %c0_i32 = arith.constant 0 : i32
    %c0_i32_0 = arith.constant 0 : i32
    %c0_i32_1 = arith.constant 0 : i32
    return %arg1, %c0_i32, %c0_i32_0 : i32, i32, i32
  }
  func.func @transform_12(%arg0: i32, %arg1: i32) -> (i32, i32, i32) {
    %c0_i32 = arith.constant 0 : i32
    %c0_i32_0 = arith.constant 0 : i32
    %c0_i32_1 = arith.constant 0 : i32
    return %arg1, %c0_i32, %c0_i32_0 : i32, i32, i32
  }
  func.func @transform_13(%arg0: i32, %arg1: i32) -> (i32, i32, i32) {
    %c0_i32 = arith.constant 0 : i32
    %c0_i32_0 = arith.constant 0 : i32
    %c0_i32_1 = arith.constant 0 : i32
    return %arg1, %c0_i32, %c0_i32_0 : i32, i32, i32
  }
  func.func @transform_14(%arg0: i32, %arg1: i32) -> (i32, i32, i32) {
    %c0_i32 = arith.constant 0 : i32
    %c0_i32_0 = arith.constant 0 : i32
    %c0_i32_1 = arith.constant 0 : i32
    return %arg1, %c0_i32, %c0_i32_0 : i32, i32, i32
  }
  func.func @transform_15(%arg0: i32, %arg1: i32) -> (i32, i32, i32) {
    %c0_i32 = arith.constant 0 : i32
    %c0_i32_0 = arith.constant 0 : i32
    %c0_i32_1 = arith.constant 0 : i32
    return %arg1, %c0_i32, %c0_i32_0 : i32, i32, i32
  }
  func.func @transform_16(%arg0: i32, %arg1: i32) -> (i32, i32, i32) {
    %c0_i32 = arith.constant 0 : i32
    %c0_i32_0 = arith.constant 0 : i32
    %c0_i32_1 = arith.constant 0 : i32
    return %arg1, %c0_i32, %c0_i32_0 : i32, i32, i32
  }
  func.func @transform_17(%arg0: i32, %arg1: i32) -> (i32, i32, i32) {
    %c0_i32 = arith.constant 0 : i32
    %c0_i32_0 = arith.constant 0 : i32
    %c0_i32_1 = arith.constant 0 : i32
    return %arg1, %c0_i32, %c0_i32_0 : i32, i32, i32
  }
  func.func @transform_18(%arg0: i32, %arg1: i32) -> (i32, i32, i32) {
    %c0_i32 = arith.constant 0 : i32
    %c0_i32_0 = arith.constant 0 : i32
    %c0_i32_1 = arith.constant 0 : i32
    return %arg1, %c0_i32, %c0_i32_0 : i32, i32, i32
  }
  func.func @transform_19(%arg0: i32, %arg1: i32) -> (i32, i32, i32) {
    %c0_i32 = arith.constant 0 : i32
    %c0_i32_0 = arith.constant 0 : i32
    %c0_i32_1 = arith.constant 0 : i32
    return %arg1, %c0_i32, %c0_i32_0 : i32, i32, i32
  }
  func.func @transform_20(%arg0: i32, %arg1: i32) -> (i32, i32, i32) {
    %c0_i32 = arith.constant 0 : i32
    %c0_i32_0 = arith.constant 0 : i32
    %c0_i32_1 = arith.constant 0 : i32
    return %arg1, %c0_i32, %c0_i32_0 : i32, i32, i32
  }
  func.func @transform_21(%arg0: i32, %arg1: i32) -> (i32, i32, i32) {
    %c0_i32 = arith.constant 0 : i32
    %c0_i32_0 = arith.constant 0 : i32
    %c0_i32_1 = arith.constant 0 : i32
    return %arg1, %c0_i32, %c0_i32_0 : i32, i32, i32
  }
  func.func @transform_22(%arg0: i32, %arg1: i32) -> (i32, i32, i32) {
    %c0_i32 = arith.constant 0 : i32
    %c0_i32_0 = arith.constant 0 : i32
    %c0_i32_1 = arith.constant 0 : i32
    return %arg1, %c0_i32, %c0_i32_0 : i32, i32, i32
  }
  func.func @transform_23(%arg0: i32, %arg1: i32) -> (i32, i32, i32) {
    %c0_i32 = arith.constant 0 : i32
    %c0_i32_0 = arith.constant 0 : i32
    %c0_i32_1 = arith.constant 0 : i32
    return %arg1, %c0_i32, %c0_i32_0 : i32, i32, i32
  }
  func.func @transform_24(%arg0: i32, %arg1: i32) -> (i32, i32, i32) {
    %c0_i32 = arith.constant 0 : i32
    %c0_i32_0 = arith.constant 0 : i32
    %c0_i32_1 = arith.constant 0 : i32
    return %arg1, %c0_i32, %c0_i32_0 : i32, i32, i32
  }
  func.func @transform_25(%arg0: i32, %arg1: i32) -> (i32, i32, i32) {
    %c0_i32 = arith.constant 0 : i32
    %c0_i32_0 = arith.constant 0 : i32
    %c0_i32_1 = arith.constant 0 : i32
    return %arg1, %c0_i32, %c0_i32_0 : i32, i32, i32
  }
  func.func @transform_26(%arg0: i32, %arg1: i32) -> (i32, i32, i32) {
    %c0_i32 = arith.constant 0 : i32
    %c0_i32_0 = arith.constant 0 : i32
    %c0_i32_1 = arith.constant 0 : i32
    return %arg1, %c0_i32, %c0_i32_0 : i32, i32, i32
  }
  func.func @transform_27(%arg0: i32, %arg1: i32) -> (i32, i32, i32) {
    %c0_i32 = arith.constant 0 : i32
    %c0_i32_0 = arith.constant 0 : i32
    %c0_i32_1 = arith.constant 0 : i32
    return %arg1, %c0_i32, %c0_i32_0 : i32, i32, i32
  }
  func.func @transform_28(%arg0: i32, %arg1: i32) -> (i32, i32, i32) {
    %c0_i32 = arith.constant 0 : i32
    %c0_i32_0 = arith.constant 0 : i32
    %c0_i32_1 = arith.constant 0 : i32
    return %arg0, %c0_i32, %c0_i32_0 : i32, i32, i32
  }
}

</mosaic_0001>

<llo_original>
// kernel: tpu_custom_call.1
$region0: #{tpu_custom_call.1}
  #allocation0 [shape = 'u32[]', space=smem, size = 0x4, offset = 0x4, fixed_abs, tag = 'smem constant byte address 0x4 - core index']
  #allocation1 [shape = 'u32[144,128]{1,0:T(1,128)}', space=vmem, size = 0x12000, scoped, tag = 'internal scratch']
  #allocation2 [shape = 'f32[24,128]{1,0:T(8,128)}', space=vmem, size = 0x3000, scoped, tag = 'scratch operand']
  %s0 = inlined_call_operand.hbm [shape: f32[3,8,128], index: 0, kind: input, shape index: {}]
  %s1 = inlined_call_operand.hbm [shape: bf16[3,16,128], index: 1, kind: input, shape index: {}]
  %s2 = inlined_call_operand.hbm [shape: bf16[3,128,128], index: 2, kind: input, shape index: {}]
  %s3 = inlined_call_operand.hbm [shape: bf16[3,128,128], index: 3, kind: input, shape index: {}]
  %s4 = inlined_call_operand.hbm [shape: bf16[3,128,128], index: 4, kind: input, shape index: {}]
  %s5 = inlined_call_operand.hbm [shape: bf16[3,128,128], index: 5, kind: input, shape index: {}]
  %s6 = inlined_call_operand.vmem [shape: f32[3,1,128], index: 6, kind: input, shape index: {}]
  %s7 = inlined_call_operand.vmem [shape: f32[3,1,128], index: 7, kind: input, shape index: {}]
  %s8 = inlined_call_operand.vmem [shape: f32[3,1,128], index: 8, kind: input, shape index: {}]
  %s9 = inlined_call_operand.vmem [shape: f32[3,1,128], index: 9, kind: input, shape index: {}]
  %s10 = inlined_call_operand.hbm [shape: bf16[3,128,128], index: 10, kind: input, shape index: {}]
  %s11 = inlined_call_operand.hbm [shape: bf16[3,128,128], index: 11, kind: input, shape index: {}]
  %s12 = inlined_call_operand.hbm [shape: bf16[3,128,128], index: 12, kind: input, shape index: {}]
  %s13 = inlined_call_operand.hbm [shape: bf16[3,128,128], index: 13, kind: input, shape index: {}]
  %s14 = inlined_call_operand.vmem [shape: f32[3,1,128], index: 14, kind: input, shape index: {}]
  %s15 = inlined_call_operand.vmem [shape: f32[3,1,128], index: 15, kind: input, shape index: {}]
  %s16 = inlined_call_operand.vmem [shape: f32[3,1,128], index: 16, kind: input, shape index: {}]
  %s17 = inlined_call_operand.vmem [shape: f32[3,1,128], index: 17, kind: input, shape index: {}]
  %s18 = inlined_call_operand.hbm [shape: bf16[3,128,256], index: 18, kind: input, shape index: {}]
  %s19 = inlined_call_operand.hbm [shape: bf16[3,256,128], index: 19, kind: input, shape index: {}]
  %s20 = inlined_call_operand.vmem [shape: f32[3,1,256], index: 20, kind: input, shape index: {}]
  %s21 = inlined_call_operand.vmem [shape: f32[3,1,128], index: 21, kind: input, shape index: {}]
  %s22 = inlined_call_operand.vmem [shape: f32[3,1,128], index: 22, kind: input, shape index: {}]
  %s23 = inlined_call_operand.vmem [shape: f32[3,1,128], index: 23, kind: input, shape index: {}]
  %s24 = inlined_call_operand.vmem [shape: f32[3,1,128], index: 24, kind: input, shape index: {}]
  %s25 = inlined_call_operand.vmem [shape: f32[3,1,128], index: 25, kind: input, shape index: {}]
  %s26 = inlined_call_operand.vmem [shape: f32[3,1,128], index: 26, kind: input, shape index: {}]
  %s27 = inlined_call_operand.vmem [shape: f32[3,1,128], index: 27, kind: input, shape index: {}]
  %s28 = inlined_call_operand.hbm [shape: f32[3,8,128], index: 28, kind: output, shape index: {}]
  %s29 = sld [smem:[#allocation0]]
  $region201: #{tpu_custom_call.1} parent=0
    _
  %s31 = ssub.s32 1, %s29
  %s32 = scalar_select 0, %s31, %s29
  $region1: #{tpu_custom_call.1} parent=0
    #allocation3 [shape = 'u8[12288]{0}', space=vmem, size = 0x3000, scoped, tag = 'input window, operand 0, single buffered']
    #allocation4 [shape = 's32[2]{0}', space=sflag, size = 0x8, scoped, tag = 'scoped memory for tpu_custom_call.1']
    #allocation5 [shape = 's32[2]{0}', space=sflag, size = 0x8, scoped, tag = 'scoped memory for tpu_custom_call.1']
    #allocation6 [shape = 'u8[12288]{0}', space=vmem, size = 0x3000, scoped, tag = 'input window, operand 1, single buffered']
    #allocation7 [shape = 's32[1]{0}', space=sflag, size = 0x4, scoped, tag = 'scoped memory for tpu_custom_call.1']
    #allocation8 [shape = 'u8[65536]{0}', space=vmem, size = 0x10000, scoped, tag = 'input window, operand 2']
    #allocation9 [shape = 'u8[65536]{0}', space=vmem, size = 0x10000, scoped, tag = 'input window, operand 3']
    #allocation10 [shape = 'u8[65536]{0}', space=vmem, size = 0x10000, scoped, tag = 'input window, operand 4']
    #allocation11 [shape = 'u8[65536]{0}', space=vmem, size = 0x10000, scoped, tag = 'input window, operand 5']
    #allocation12 [shape = 'u8[65536]{0}', space=vmem, size = 0x10000, scoped, tag = 'input window, operand 10']
    #allocation13 [shape = 'u8[65536]{0}', space=vmem, size = 0x10000, scoped, tag = 'input window, operand 11']
    #allocation14 [shape = 'u8[65536]{0}', space=vmem, size = 0x10000, scoped, tag = 'input window, operand 12']
    #allocation15 [shape = 'u8[65536]{0}', space=vmem, size = 0x10000, scoped, tag = 'input window, operand 13']
    #allocation16 [shape = 'u8[131072]{0}', space=vmem, size = 0x20000, scoped, tag = 'input window, operand 18']
    #allocation17 [shape = 'u8[131072]{0}', space=vmem, size = 0x20000, scoped, tag = 'input window, operand 19']
    #allocation18 [shape = 'u8[12288]{0}', space=vmem, size = 0x3000, scoped, tag = 'output window, operand 0, single buffered']
    %33 = vsyncpa [#allocation4], 0
    %34 = vsyncpa [#allocation7], 0
    %35 = vsyncpa [#allocation5], 0
    loop: start=0, step=1, limit=5
    $region2: #{tpu_custom_call.1} parent=1 // loop_pre_header
      _
    $region3: #{tpu_custom_call.1} parent=1 // loop_header
      %s37 = sphi 0, %s41
      %p38 = scmp.ge.s32.totalorder %s37, 5
      %s44 = sphi 0, %s56
      %s45 = sphi 0, %s52
      %s46 = sphi 0, %s44
      %s47 = sphi 0, %s45
      %s48 = sphi 0, %s46
      %s49 = sphi 0, %s47
      %s59 = sphi 0, %s61
      %s62 = sphi 0, %s59
      %s63 = sphi 0, %s62
      %s79 = sphi 0, %s63
      %s85 = sphi 0, %s87
      %s88 = sphi 0, %s85
      %s89 = sphi 0, %s88
      %s105 = sphi 0, %s89
      %s111 = sphi 0, %s113
      %s114 = sphi 0, %s111
      %s115 = sphi 0, %s114
      %s131 = sphi 0, %s115
      %s137 = sphi 0, %s139
      %s140 = sphi 0, %s137
      %s141 = sphi 0, %s140
      %s157 = sphi 0, %s141
      %s163 = sphi 0, %s165
      %s166 = sphi 0, %s163
      %s167 = sphi 0, %s166
      %s183 = sphi 0, %s167
      %s189 = sphi 0, %s191
      %s192 = sphi 0, %s189
      %s193 = sphi 0, %s192
      %s209 = sphi 0, %s193
      %s215 = sphi 0, %s217
      %s218 = sphi 0, %s215
      %s219 = sphi 0, %s218
      %s235 = sphi 0, %s219
      %s241 = sphi 0, %s243
      %s244 = sphi 0, %s241
      %s245 = sphi 0, %s244
      %s261 = sphi 0, %s245
      %s267 = sphi 0, %s269
      %s270 = sphi 0, %s267
      %s271 = sphi 0, %s270
      %s287 = sphi 0, %s271
      %s293 = sphi 0, %s295
      %s296 = sphi 0, %s293
      %s297 = sphi 0, %s296
      %s313 = sphi 0, %s297
      %s319 = sphi 0, %s321
      %s322 = sphi 0, %s319
      %s323 = sphi 0, %s322
      %s339 = sphi 0, %s323
      %s345 = sphi 0, %s347
      %s348 = sphi 0, %s345
      %s349 = sphi 0, %s348
      %s365 = sphi 0, %s349
      %s371 = sphi 0, %s373
      %s374 = sphi 0, %s371
      %s375 = sphi 0, %s374
      %s391 = sphi 0, %s375
      %s397 = sphi 0, %s399
      %s400 = sphi 0, %s397
      %s401 = sphi 0, %s400
      %s417 = sphi 0, %s401
      %s423 = sphi 0, %s425
      %s426 = sphi 0, %s423
      %s427 = sphi 0, %s426
      %s443 = sphi 0, %s427
      %s449 = sphi 0, %s451
      %s452 = sphi 0, %s449
      %s453 = sphi 0, %s452
      %s469 = sphi 0, %s453
      %s475 = sphi 0, %s477
      %s478 = sphi 0, %s475
      %s479 = sphi 0, %s478
      %s495 = sphi 0, %s479
      %s501 = sphi 0, %s503
      %s504 = sphi 0, %s501
      %s505 = sphi 0, %s504
      %s521 = sphi 0, %s505
      %s527 = sphi 0, %s529
      %s530 = sphi 0, %s527
      %s531 = sphi 0, %s530
      %s547 = sphi 0, %s531
      %s553 = sphi 0, %s555
      %s556 = sphi 0, %s553
      %s557 = sphi 0, %s556
      %s573 = sphi 0, %s557
      %s579 = sphi 0, %s581
      %s582 = sphi 0, %s579
      %s583 = sphi 0, %s582
      %s599 = sphi 0, %s583
      %s605 = sphi 0, %s607
      %s608 = sphi 0, %s605
      %s609 = sphi 0, %s608
      %s625 = sphi 0, %s609
      %s631 = sphi 0, %s633
      %s634 = sphi 0, %s631
      %s635 = sphi 0, %s634
      %s651 = sphi 0, %s635
      %s657 = sphi 0, %s659
      %s660 = sphi 0, %s657
      %s661 = sphi 0, %s660
      %s677 = sphi 0, %s661
      %s683 = sphi 0, %s685
      %s686 = sphi 0, %s683
      %s687 = sphi 0, %s686
      %s703 = sphi 0, %s687
      %s709 = sphi 0, %s711
      %s712 = sphi 0, %s709
      %s713 = sphi 0, %s712
      %s729 = sphi 0, %s713
      %s735 = sphi 0, %s737
      %s738 = sphi 0, %s735
      %s739 = sphi 0, %s738
      %s755 = sphi 0, %s739
      %s761 = sphi 0, %s763
      %s764 = sphi 0, %s761
      %s765 = sphi 0, %s764
      %s781 = sphi 0, %s765
      %s787 = sphi 0, %s789
      %s790 = sphi 0, %s787
      %s791 = sphi 0, %s790
      %s807 = sphi 0, %s791
    $region4: #{tpu_custom_call.1} parent=1 // loop_header_branch
      %40 = sbr.rel (%p38) target = $region8
    $region5: #{tpu_custom_call.1} parent=1 // loop_body
      %s42 = ssub.s32 %s37, 1
      %s43 = ssub.s32 %s37, 2
      %s50 = sadd.s32 1, %s45
      %p51 = scmp.ge.s32.totalorder %s50, 3
      %s52 = scalar_select %p51, 0, %s50
      %s53 = sadd.s32 1, %s44
      %s54 = scalar_select %p51, %s53, %s44
      %p55 = scmp.ge.s32.totalorder %s54, 1
      %s56 = scalar_select %p55, 0, %s54
      %s57 = ssub.s32 %s44, %s56
      %p58 = scmp.eq.s32.totalorder %s57, 0
      %s60 = sadd.s32 %s59, 1
      %s61 = scalar_select %p58, %s59, %s60
      %p64 = pneg %p58
      %p65 = scmp.eq.s32.totalorder %s37, 2
      %p66 = por %p64, %p65
      %p67 = scmp.ne.s32.totalorder %s59, %s62
      %p68 = scmp.eq.s32.totalorder %s37, 0
      %p69 = por %p67, %p68
      %p70 = scmp.ne.s32.totalorder %s59, %s62
      %p71 = scmp.eq.s32.totalorder %s42, 2
      %p72 = por %p70, %p71
      %p73 = scmp.ne.s32.totalorder %s62, %s63
      %p74 = scmp.eq.s32.totalorder %s42, 0
      %p75 = por %p73, %p74
      %p76 = scmp.ne.s32.totalorder %s62, %s63
      %p77 = scmp.eq.s32.totalorder %s43, 2
      %p78 = por %p76, %p77
      %p80 = scmp.ne.s32.totalorder %s63, %s79
      %p81 = scmp.eq.s32.totalorder %s43, 0
      %p82 = por %p80, %p81
      %s83 = ssub.s32 %s44, %s56
      %p84 = scmp.eq.s32.totalorder %s83, 0
      %s86 = sadd.s32 %s85, 1
      %s87 = scalar_select %p84, %s85, %s86
      %p90 = pneg %p84
      %p91 = scmp.eq.s32.totalorder %s37, 2
      %p92 = por %p90, %p91
      %p93 = scmp.ne.s32.totalorder %s85, %s88
      %p94 = scmp.eq.s32.totalorder %s37, 0
      %p95 = por %p93, %p94
      %p96 = scmp.ne.s32.totalorder %s85, %s88
      %p97 = scmp.eq.s32.totalorder %s42, 2
      %p98 = por %p96, %p97
      %p99 = scmp.ne.s32.totalorder %s88, %s89
      %p100 = scmp.eq.s32.totalorder %s42, 0
      %p101 = por %p99, %p100
      %p102 = scmp.ne.s32.totalorder %s88, %s89
      %p103 = scmp.eq.s32.totalorder %s43, 2
      %p104 = por %p102, %p103
      %p106 = scmp.ne.s32.totalorder %s89, %s105
      %p107 = scmp.eq.s32.totalorder %s43, 0
      %p108 = por %p106, %p107
      %s109 = ssub.s32 %s45, %s52
      %p110 = scmp.eq.s32.totalorder %s109, 0
      %s112 = sadd.s32 %s111, 1
      %s113 = scalar_select %p110, %s111, %s112
      %p116 = pneg %p110
      %p117 = scmp.eq.s32.totalorder %s37, 2
      %p118 = por %p116, %p117
      %p119 = scmp.ne.s32.totalorder %s111, %s114
      %p120 = scmp.eq.s32.totalorder %s37, 0
      %p121 = por %p119, %p120
      %p122 = scmp.ne.s32.totalorder %s111, %s114
      %p123 = scmp.eq.s32.totalorder %s42, 2
      %p124 = por %p122, %p123
      %p125 = scmp.ne.s32.totalorder %s114, %s115
      %p126 = scmp.eq.s32.totalorder %s42, 0
      %p127 = por %p125, %p126
      %p128 = scmp.ne.s32.totalorder %s114, %s115
      %p129 = scmp.eq.s32.totalorder %s43, 2
      %p130 = por %p128, %p129
      %p132 = scmp.ne.s32.totalorder %s115, %s131
      %p133 = scmp.eq.s32.totalorder %s43, 0
      %p134 = por %p132, %p133
      %s135 = ssub.s32 %s45, %s52
      %p136 = scmp.eq.s32.totalorder %s135, 0
      %s138 = sadd.s32 %s137, 1
      %s139 = scalar_select %p136, %s137, %s138
      %p142 = pneg %p136
      %p143 = scmp.eq.s32.totalorder %s37, 2
      %p144 = por %p142, %p143
      %p145 = scmp.ne.s32.totalorder %s137, %s140
      %p146 = scmp.eq.s32.totalorder %s37, 0
      %p147 = por %p145, %p146
      %p148 = scmp.ne.s32.totalorder %s137, %s140
      %p149 = scmp.eq.s32.totalorder %s42, 2
      %p150 = por %p148, %p149
      %p151 = scmp.ne.s32.totalorder %s140, %s141
      %p152 = scmp.eq.s32.totalorder %s42, 0
      %p153 = por %p151, %p152
      %p154 = scmp.ne.s32.totalorder %s140, %s141
      %p155 = scmp.eq.s32.totalorder %s43, 2
      %p156 = por %p154, %p155
      %p158 = scmp.ne.s32.totalorder %s141, %s157
      %p159 = scmp.eq.s32.totalorder %s43, 0
      %p160 = por %p158, %p159
      %s161 = ssub.s32 %s45, %s52
      %p162 = scmp.eq.s32.totalorder %s161, 0
      %s164 = sadd.s32 %s163, 1
      %s165 = scalar_select %p162, %s163, %s164
      %p168 = pneg %p162
      %p169 = scmp.eq.s32.totalorder %s37, 2
      %p170 = por %p168, %p169
      %p171 = scmp.ne.s32.totalorder %s163, %s166
      %p172 = scmp.eq.s32.totalorder %s37, 0
      %p173 = por %p171, %p172
      %p174 = scmp.ne.s32.totalorder %s163, %s166
      %p175 = scmp.eq.s32.totalorder %s42, 2
      %p176 = por %p174, %p175
      %p177 = scmp.ne.s32.totalorder %s166, %s167
      %p178 = scmp.eq.s32.totalorder %s42, 0
      %p179 = por %p177, %p178
      %p180 = scmp.ne.s32.totalorder %s166, %s167
      %p181 = scmp.eq.s32.totalorder %s43, 2
      %p182 = por %p180, %p181
      %p184 = scmp.ne.s32.totalorder %s167, %s183
      %p185 = scmp.eq.s32.totalorder %s43, 0
      %p186 = por %p184, %p185
      %s187 = ssub.s32 %s45, %s52
      %p188 = scmp.eq.s32.totalorder %s187, 0
      %s190 = sadd.s32 %s189, 1
      %s191 = scalar_select %p188, %s189, %s190
      %p194 = pneg %p188
      %p195 = scmp.eq.s32.totalorder %s37, 2
      %p196 = por %p194, %p195
      %p197 = scmp.ne.s32.totalorder %s189, %s192
      %p198 = scmp.eq.s32.totalorder %s37, 0
      %p199 = por %p197, %p198
      %p200 = scmp.ne.s32.totalorder %s189, %s192
      %p201 = scmp.eq.s32.totalorder %s42, 2
      %p202 = por %p200, %p201
      %p203 = scmp.ne.s32.totalorder %s192, %s193
      %p204 = scmp.eq.s32.totalorder %s42, 0
      %p205 = por %p203, %p204
      %p206 = scmp.ne.s32.totalorder %s192, %s193
      %p207 = scmp.eq.s32.totalorder %s43, 2
      %p208 = por %p206, %p207
      %p210 = scmp.ne.s32.totalorder %s193, %s209
      %p211 = scmp.eq.s32.totalorder %s43, 0
      %p212 = por %p210, %p211
      %s213 = ssub.s32 %s45, %s52
      %p214 = scmp.eq.s32.totalorder %s213, 0
      %s216 = sadd.s32 %s215, 1
      %s217 = scalar_select %p214, %s215, %s216
      %p220 = pneg %p214
      %p221 = scmp.eq.s32.totalorder %s37, 2
      %p222 = por %p220, %p221
      %p223 = scmp.ne.s32.totalorder %s215, %s218
      %p224 = scmp.eq.s32.totalorder %s37, 0
      %p225 = por %p223, %p224
      %p226 = scmp.ne.s32.totalorder %s215, %s218
      %p227 = scmp.eq.s32.totalorder %s42, 2
      %p228 = por %p226, %p227
      %p229 = scmp.ne.s32.totalorder %s218, %s219
      %p230 = scmp.eq.s32.totalorder %s42, 0
      %p231 = por %p229, %p230
      %p232 = scmp.ne.s32.totalorder %s218, %s219
      %p233 = scmp.eq.s32.totalorder %s43, 2
      %p234 = por %p232, %p233
      %p236 = scmp.ne.s32.totalorder %s219, %s235
      %p237 = scmp.eq.s32.totalorder %s43, 0
      %p238 = por %p236, %p237
      %s239 = ssub.s32 %s45, %s52
      %p240 = scmp.eq.s32.totalorder %s239, 0
      %s242 = sadd.s32 %s241, 1
      %s243 = scalar_select %p240, %s241, %s242
      %p246 = pneg %p240
      %p247 = scmp.eq.s32.totalorder %s37, 2
      %p248 = por %p246, %p247
      %p249 = scmp.ne.s32.totalorder %s241, %s244
      %p250 = scmp.eq.s32.totalorder %s37, 0
      %p251 = por %p249, %p250
      %p252 = scmp.ne.s32.totalorder %s241, %s244
      %p253 = scmp.eq.s32.totalorder %s42, 2
      %p254 = por %p252, %p253
      %p255 = scmp.ne.s32.totalorder %s244, %s245
      %p256 = scmp.eq.s32.totalorder %s42, 0
      %p257 = por %p255, %p256
      %p258 = scmp.ne.s32.totalorder %s244, %s245
      %p259 = scmp.eq.s32.totalorder %s43, 2
      %p260 = por %p258, %p259
      %p262 = scmp.ne.s32.totalorder %s245, %s261
      %p263 = scmp.eq.s32.totalorder %s43, 0
      %p264 = por %p262, %p263
      %s265 = ssub.s32 %s45, %s52
      %p266 = scmp.eq.s32.totalorder %s265, 0
      %s268 = sadd.s32 %s267, 1
      %s269 = scalar_select %p266, %s267, %s268
      %p272 = pneg %p266
      %p273 = scmp.eq.s32.totalorder %s37, 2
      %p274 = por %p272, %p273
      %p275 = scmp.ne.s32.totalorder %s267, %s270
      %p276 = scmp.eq.s32.totalorder %s37, 0
      %p277 = por %p275, %p276
      %p278 = scmp.ne.s32.totalorder %s267, %s270
      %p279 = scmp.eq.s32.totalorder %s42, 2
      %p280 = por %p278, %p279
      %p281 = scmp.ne.s32.totalorder %s270, %s271
      %p282 = scmp.eq.s32.totalorder %s42, 0
      %p283 = por %p281, %p282
      %p284 = scmp.ne.s32.totalorder %s270, %s271
      %p285 = scmp.eq.s32.totalorder %s43, 2
      %p286 = por %p284, %p285
      %p288 = scmp.ne.s32.totalorder %s271, %s287
      %p289 = scmp.eq.s32.totalorder %s43, 0
      %p290 = por %p288, %p289
      %s291 = ssub.s32 %s45, %s52
      %p292 = scmp.eq.s32.totalorder %s291, 0
      %s294 = sadd.s32 %s293, 1
      %s295 = scalar_select %p292, %s293, %s294
      %p298 = pneg %p292
      %p299 = scmp.eq.s32.totalorder %s37, 2
      %p300 = por %p298, %p299
      %p301 = scmp.ne.s32.totalorder %s293, %s296
      %p302 = scmp.eq.s32.totalorder %s37, 0
      %p303 = por %p301, %p302
      %p304 = scmp.ne.s32.totalorder %s293, %s296
      %p305 = scmp.eq.s32.totalorder %s42, 2
      %p306 = por %p304, %p305
      %p307 = scmp.ne.s32.totalorder %s296, %s297
      %p308 = scmp.eq.s32.totalorder %s42, 0
      %p309 = por %p307, %p308
      %p310 = scmp.ne.s32.totalorder %s296, %s297
      %p311 = scmp.eq.s32.totalorder %s43, 2
      %p312 = por %p310, %p311
      %p314 = scmp.ne.s32.totalorder %s297, %s313
      %p315 = scmp.eq.s32.totalorder %s43, 0
      %p316 = por %p314, %p315
      %s317 = ssub.s32 %s45, %s52
      %p318 = scmp.eq.s32.totalorder %s317, 0
      %s320 = sadd.s32 %s319, 1
      %s321 = scalar_select %p318, %s319, %s320
      %p324 = pneg %p318
      %p325 = scmp.eq.s32.totalorder %s37, 2
      %p326 = por %p324, %p325
      %p327 = scmp.ne.s32.totalorder %s319, %s322
      %p328 = scmp.eq.s32.totalorder %s37, 0
      %p329 = por %p327, %p328
      %p330 = scmp.ne.s32.totalorder %s319, %s322
      %p331 = scmp.eq.s32.totalorder %s42, 2
      %p332 = por %p330, %p331
      %p333 = scmp.ne.s32.totalorder %s322, %s323
      %p334 = scmp.eq.s32.totalorder %s42, 0
      %p335 = por %p333, %p334
      %p336 = scmp.ne.s32.totalorder %s322, %s323
      %p337 = scmp.eq.s32.totalorder %s43, 2
      %p338 = por %p336, %p337
      %p340 = scmp.ne.s32.totalorder %s323, %s339
      %p341 = scmp.eq.s32.totalorder %s43, 0
      %p342 = por %p340, %p341
      %s343 = ssub.s32 %s45, %s52
      %p344 = scmp.eq.s32.totalorder %s343, 0
      %s346 = sadd.s32 %s345, 1
      %s347 = scalar_select %p344, %s345, %s346
      %p350 = pneg %p344
      %p351 = scmp.eq.s32.totalorder %s37, 2
      %p352 = por %p350, %p351
      %p353 = scmp.ne.s32.totalorder %s345, %s348
      %p354 = scmp.eq.s32.totalorder %s37, 0
      %p355 = por %p353, %p354
      %p356 = scmp.ne.s32.totalorder %s345, %s348
      %p357 = scmp.eq.s32.totalorder %s42, 2
      %p358 = por %p356, %p357
      %p359 = scmp.ne.s32.totalorder %s348, %s349
      %p360 = scmp.eq.s32.totalorder %s42, 0
      %p361 = por %p359, %p360
      %p362 = scmp.ne.s32.totalorder %s348, %s349
      %p363 = scmp.eq.s32.totalorder %s43, 2
      %p364 = por %p362, %p363
      %p366 = scmp.ne.s32.totalorder %s349, %s365
      %p367 = scmp.eq.s32.totalorder %s43, 0
      %p368 = por %p366, %p367
      %s369 = ssub.s32 %s45, %s52
      %p370 = scmp.eq.s32.totalorder %s369, 0
      %s372 = sadd.s32 %s371, 1
      %s373 = scalar_select %p370, %s371, %s372
      %p376 = pneg %p370
      %p377 = scmp.eq.s32.totalorder %s37, 2
      %p378 = por %p376, %p377
      %p379 = scmp.ne.s32.totalorder %s371, %s374
      %p380 = scmp.eq.s32.totalorder %s37, 0
      %p381 = por %p379, %p380
      %p382 = scmp.ne.s32.totalorder %s371, %s374
      %p383 = scmp.eq.s32.totalorder %s42, 2
      %p384 = por %p382, %p383
      %p385 = scmp.ne.s32.totalorder %s374, %s375
      %p386 = scmp.eq.s32.totalorder %s42, 0
      %p387 = por %p385, %p386
      %p388 = scmp.ne.s32.totalorder %s374, %s375
      %p389 = scmp.eq.s32.totalorder %s43, 2
      %p390 = por %p388, %p389
      %p392 = scmp.ne.s32.totalorder %s375, %s391
      %p393 = scmp.eq.s32.totalorder %s43, 0
      %p394 = por %p392, %p393
      %s395 = ssub.s32 %s45, %s52
      %p396 = scmp.eq.s32.totalorder %s395, 0
      %s398 = sadd.s32 %s397, 1
      %s399 = scalar_select %p396, %s397, %s398
      %p402 = pneg %p396
      %p403 = scmp.eq.s32.totalorder %s37, 2
      %p404 = por %p402, %p403
      %p405 = scmp.ne.s32.totalorder %s397, %s400
      %p406 = scmp.eq.s32.totalorder %s37, 0
      %p407 = por %p405, %p406
      %p408 = scmp.ne.s32.totalorder %s397, %s400
      %p409 = scmp.eq.s32.totalorder %s42, 2
      %p410 = por %p408, %p409
      %p411 = scmp.ne.s32.totalorder %s400, %s401
      %p412 = scmp.eq.s32.totalorder %s42, 0
      %p413 = por %p411, %p412
      %p414 = scmp.ne.s32.totalorder %s400, %s401
      %p415 = scmp.eq.s32.totalorder %s43, 2
      %p416 = por %p414, %p415
      %p418 = scmp.ne.s32.totalorder %s401, %s417
      %p419 = scmp.eq.s32.totalorder %s43, 0
      %p420 = por %p418, %p419
      %s421 = ssub.s32 %s45, %s52
      %p422 = scmp.eq.s32.totalorder %s421, 0
      %s424 = sadd.s32 %s423, 1
      %s425 = scalar_select %p422, %s423, %s424
      %p428 = pneg %p422
      %p429 = scmp.eq.s32.totalorder %s37, 2
      %p430 = por %p428, %p429
      %p431 = scmp.ne.s32.totalorder %s423, %s426
      %p432 = scmp.eq.s32.totalorder %s37, 0
      %p433 = por %p431, %p432
      %p434 = scmp.ne.s32.totalorder %s423, %s426
      %p435 = scmp.eq.s32.totalorder %s42, 2
      %p436 = por %p434, %p435
      %p437 = scmp.ne.s32.totalorder %s426, %s427
      %p438 = scmp.eq.s32.totalorder %s42, 0
      %p439 = por %p437, %p438
      %p440 = scmp.ne.s32.totalorder %s426, %s427
      %p441 = scmp.eq.s32.totalorder %s43, 2
      %p442 = por %p440, %p441
      %p444 = scmp.ne.s32.totalorder %s427, %s443
      %p445 = scmp.eq.s32.totalorder %s43, 0
      %p446 = por %p444, %p445
      %s447 = ssub.s32 %s45, %s52
      %p448 = scmp.eq.s32.totalorder %s447, 0
      %s450 = sadd.s32 %s449, 1
      %s451 = scalar_select %p448, %s449, %s450
      %p454 = pneg %p448
      %p455 = scmp.eq.s32.totalorder %s37, 2
      %p456 = por %p454, %p455
      %p457 = scmp.ne.s32.totalorder %s449, %s452
      %p458 = scmp.eq.s32.totalorder %s37, 0
      %p459 = por %p457, %p458
      %p460 = scmp.ne.s32.totalorder %s449, %s452
      %p461 = scmp.eq.s32.totalorder %s42, 2
      %p462 = por %p460, %p461
      %p463 = scmp.ne.s32.totalorder %s452, %s453
      %p464 = scmp.eq.s32.totalorder %s42, 0
      %p465 = por %p463, %p464
      %p466 = scmp.ne.s32.totalorder %s452, %s453
      %p467 = scmp.eq.s32.totalorder %s43, 2
      %p468 = por %p466, %p467
      %p470 = scmp.ne.s32.totalorder %s453, %s469
      %p471 = scmp.eq.s32.totalorder %s43, 0
      %p472 = por %p470, %p471
      %s473 = ssub.s32 %s45, %s52
      %p474 = scmp.eq.s32.totalorder %s473, 0
      %s476 = sadd.s32 %s475, 1
      %s477 = scalar_select %p474, %s475, %s476
      %p480 = pneg %p474
      %p481 = scmp.eq.s32.totalorder %s37, 2
      %p482 = por %p480, %p481
      %p483 = scmp.ne.s32.totalorder %s475, %s478
      %p484 = scmp.eq.s32.totalorder %s37, 0
      %p485 = por %p483, %p484
      %p486 = scmp.ne.s32.totalorder %s475, %s478
      %p487 = scmp.eq.s32.totalorder %s42, 2
      %p488 = por %p486, %p487
      %p489 = scmp.ne.s32.totalorder %s478, %s479
      %p490 = scmp.eq.s32.totalorder %s42, 0
      %p491 = por %p489, %p490
      %p492 = scmp.ne.s32.totalorder %s478, %s479
      %p493 = scmp.eq.s32.totalorder %s43, 2
      %p494 = por %p492, %p493
      %p496 = scmp.ne.s32.totalorder %s479, %s495
      %p497 = scmp.eq.s32.totalorder %s43, 0
      %p498 = por %p496, %p497
      %s499 = ssub.s32 %s45, %s52
      %p500 = scmp.eq.s32.totalorder %s499, 0
      %s502 = sadd.s32 %s501, 1
      %s503 = scalar_select %p500, %s501, %s502
      %p506 = pneg %p500
      %p507 = scmp.eq.s32.totalorder %s37, 2
      %p508 = por %p506, %p507
      %p509 = scmp.ne.s32.totalorder %s501, %s504
      %p510 = scmp.eq.s32.totalorder %s37, 0
      %p511 = por %p509, %p510
      %p512 = scmp.ne.s32.totalorder %s501, %s504
      %p513 = scmp.eq.s32.totalorder %s42, 2
      %p514 = por %p512, %p513
      %p515 = scmp.ne.s32.totalorder %s504, %s505
      %p516 = scmp.eq.s32.totalorder %s42, 0
      %p517 = por %p515, %p516
      %p518 = scmp.ne.s32.totalorder %s504, %s505
      %p519 = scmp.eq.s32.totalorder %s43, 2
      %p520 = por %p518, %p519
      %p522 = scmp.ne.s32.totalorder %s505, %s521
      %p523 = scmp.eq.s32.totalorder %s43, 0
      %p524 = por %p522, %p523
      %s525 = ssub.s32 %s45, %s52
      %p526 = scmp.eq.s32.totalorder %s525, 0
      %s528 = sadd.s32 %s527, 1
      %s529 = scalar_select %p526, %s527, %s528
      %p532 = pneg %p526
      %p533 = scmp.eq.s32.totalorder %s37, 2
      %p534 = por %p532, %p533
      %p535 = scmp.ne.s32.totalorder %s527, %s530
      %p536 = scmp.eq.s32.totalorder %s37, 0
      %p537 = por %p535, %p536
      %p538 = scmp.ne.s32.totalorder %s527, %s530
      %p539 = scmp.eq.s32.totalorder %s42, 2
      %p540 = por %p538, %p539
      %p541 = scmp.ne.s32.totalorder %s530, %s531
      %p542 = scmp.eq.s32.totalorder %s42, 0
      %p543 = por %p541, %p542
      %p544 = scmp.ne.s32.totalorder %s530, %s531
      %p545 = scmp.eq.s32.totalorder %s43, 2
      %p546 = por %p544, %p545
      %p548 = scmp.ne.s32.totalorder %s531, %s547
      %p549 = scmp.eq.s32.totalorder %s43, 0
      %p550 = por %p548, %p549
      %s551 = ssub.s32 %s45, %s52
      %p552 = scmp.eq.s32.totalorder %s551, 0
      %s554 = sadd.s32 %s553, 1
      %s555 = scalar_select %p552, %s553, %s554
      %p558 = pneg %p552
      %p559 = scmp.eq.s32.totalorder %s37, 2
      %p560 = por %p558, %p559
      %p561 = scmp.ne.s32.totalorder %s553, %s556
      %p562 = scmp.eq.s32.totalorder %s37, 0
      %p563 = por %p561, %p562
      %p564 = scmp.ne.s32.totalorder %s553, %s556
      %p565 = scmp.eq.s32.totalorder %s42, 2
      %p566 = por %p564, %p565
      %p567 = scmp.ne.s32.totalorder %s556, %s557
      %p568 = scmp.eq.s32.totalorder %s42, 0
      %p569 = por %p567, %p568
      %p570 = scmp.ne.s32.totalorder %s556, %s557
      %p571 = scmp.eq.s32.totalorder %s43, 2
      %p572 = por %p570, %p571
      %p574 = scmp.ne.s32.totalorder %s557, %s573
      %p575 = scmp.eq.s32.totalorder %s43, 0
      %p576 = por %p574, %p575
      %s577 = ssub.s32 %s45, %s52
      %p578 = scmp.eq.s32.totalorder %s577, 0
      %s580 = sadd.s32 %s579, 1
      %s581 = scalar_select %p578, %s579, %s580
      %p584 = pneg %p578
      %p585 = scmp.eq.s32.totalorder %s37, 2
      %p586 = por %p584, %p585
      %p587 = scmp.ne.s32.totalorder %s579, %s582
      %p588 = scmp.eq.s32.totalorder %s37, 0
      %p589 = por %p587, %p588
      %p590 = scmp.ne.s32.totalorder %s579, %s582
      %p591 = scmp.eq.s32.totalorder %s42, 2
      %p592 = por %p590, %p591
      %p593 = scmp.ne.s32.totalorder %s582, %s583
      %p594 = scmp.eq.s32.totalorder %s42, 0
      %p595 = por %p593, %p594
      %p596 = scmp.ne.s32.totalorder %s582, %s583
      %p597 = scmp.eq.s32.totalorder %s43, 2
      %p598 = por %p596, %p597
      %p600 = scmp.ne.s32.totalorder %s583, %s599
      %p601 = scmp.eq.s32.totalorder %s43, 0
      %p602 = por %p600, %p601
      %s603 = ssub.s32 %s45, %s52
      %p604 = scmp.eq.s32.totalorder %s603, 0
      %s606 = sadd.s32 %s605, 1
      %s607 = scalar_select %p604, %s605, %s606
      %p610 = pneg %p604
      %p611 = scmp.eq.s32.totalorder %s37, 2
      %p612 = por %p610, %p611
      %p613 = scmp.ne.s32.totalorder %s605, %s608
      %p614 = scmp.eq.s32.totalorder %s37, 0
      %p615 = por %p613, %p614
      %p616 = scmp.ne.s32.totalorder %s605, %s608
      %p617 = scmp.eq.s32.totalorder %s42, 2
      %p618 = por %p616, %p617
      %p619 = scmp.ne.s32.totalorder %s608, %s609
      %p620 = scmp.eq.s32.totalorder %s42, 0
      %p621 = por %p619, %p620
      %p622 = scmp.ne.s32.totalorder %s608, %s609
      %p623 = scmp.eq.s32.totalorder %s43, 2
      %p624 = por %p622, %p623
      %p626 = scmp.ne.s32.totalorder %s609, %s625
      %p627 = scmp.eq.s32.totalorder %s43, 0
      %p628 = por %p626, %p627
      %s629 = ssub.s32 %s45, %s52
      %p630 = scmp.eq.s32.totalorder %s629, 0
      %s632 = sadd.s32 %s631, 1
      %s633 = scalar_select %p630, %s631, %s632
      %p636 = pneg %p630
      %p637 = scmp.eq.s32.totalorder %s37, 2
      %p638 = por %p636, %p637
      %p639 = scmp.ne.s32.totalorder %s631, %s634
      %p640 = scmp.eq.s32.totalorder %s37, 0
      %p641 = por %p639, %p640
      %p642 = scmp.ne.s32.totalorder %s631, %s634
      %p643 = scmp.eq.s32.totalorder %s42, 2
      %p644 = por %p642, %p643
      %p645 = scmp.ne.s32.totalorder %s634, %s635
      %p646 = scmp.eq.s32.totalorder %s42, 0
      %p647 = por %p645, %p646
      %p648 = scmp.ne.s32.totalorder %s634, %s635
      %p649 = scmp.eq.s32.totalorder %s43, 2
      %p650 = por %p648, %p649
      %p652 = scmp.ne.s32.totalorder %s635, %s651
      %p653 = scmp.eq.s32.totalorder %s43, 0
      %p654 = por %p652, %p653
      %s655 = ssub.s32 %s45, %s52
      %p656 = scmp.eq.s32.totalorder %s655, 0
      %s658 = sadd.s32 %s657, 1
      %s659 = scalar_select %p656, %s657, %s658
      %p662 = pneg %p656
      %p663 = scmp.eq.s32.totalorder %s37, 2
      %p664 = por %p662, %p663
      %p665 = scmp.ne.s32.totalorder %s657, %s660
      %p666 = scmp.eq.s32.totalorder %s37, 0
      %p667 = por %p665, %p666
      %p668 = scmp.ne.s32.totalorder %s657, %s660
      %p669 = scmp.eq.s32.totalorder %s42, 2
      %p670 = por %p668, %p669
      %p671 = scmp.ne.s32.totalorder %s660, %s661
      %p672 = scmp.eq.s32.totalorder %s42, 0
      %p673 = por %p671, %p672
      %p674 = scmp.ne.s32.totalorder %s660, %s661
      %p675 = scmp.eq.s32.totalorder %s43, 2
      %p676 = por %p674, %p675
      %p678 = scmp.ne.s32.totalorder %s661, %s677
      %p679 = scmp.eq.s32.totalorder %s43, 0
      %p680 = por %p678, %p679
      %s681 = ssub.s32 %s45, %s52
      %p682 = scmp.eq.s32.totalorder %s681, 0
      %s684 = sadd.s32 %s683, 1
      %s685 = scalar_select %p682, %s683, %s684
      %p688 = pneg %p682
      %p689 = scmp.eq.s32.totalorder %s37, 2
      %p690 = por %p688, %p689
      %p691 = scmp.ne.s32.totalorder %s683, %s686
      %p692 = scmp.eq.s32.totalorder %s37, 0
      %p693 = por %p691, %p692
      %p694 = scmp.ne.s32.totalorder %s683, %s686
      %p695 = scmp.eq.s32.totalorder %s42, 2
      %p696 = por %p694, %p695
      %p697 = scmp.ne.s32.totalorder %s686, %s687
      %p698 = scmp.eq.s32.totalorder %s42, 0
      %p699 = por %p697, %p698
      %p700 = scmp.ne.s32.totalorder %s686, %s687
      %p701 = scmp.eq.s32.totalorder %s43, 2
      %p702 = por %p700, %p701
      %p704 = scmp.ne.s32.totalorder %s687, %s703
      %p705 = scmp.eq.s32.totalorder %s43, 0
      %p706 = por %p704, %p705
      %s707 = ssub.s32 %s45, %s52
      %p708 = scmp.eq.s32.totalorder %s707, 0
      %s710 = sadd.s32 %s709, 1
      %s711 = scalar_select %p708, %s709, %s710
      %p714 = pneg %p708
      %p715 = scmp.eq.s32.totalorder %s37, 2
      %p716 = por %p714, %p715
      %p717 = scmp.ne.s32.totalorder %s709, %s712
      %p718 = scmp.eq.s32.totalorder %s37, 0
      %p719 = por %p717, %p718
      %p720 = scmp.ne.s32.totalorder %s709, %s712
      %p721 = scmp.eq.s32.totalorder %s42, 2
      %p722 = por %p720, %p721
      %p723 = scmp.ne.s32.totalorder %s712, %s713
      %p724 = scmp.eq.s32.totalorder %s42, 0
      %p725 = por %p723, %p724
      %p726 = scmp.ne.s32.totalorder %s712, %s713
      %p727 = scmp.eq.s32.totalorder %s43, 2
      %p728 = por %p726, %p727
      %p730 = scmp.ne.s32.totalorder %s713, %s729
      %p731 = scmp.eq.s32.totalorder %s43, 0
      %p732 = por %p730, %p731
      %s733 = ssub.s32 %s45, %s52
      %p734 = scmp.eq.s32.totalorder %s733, 0
      %s736 = sadd.s32 %s735, 1
      %s737 = scalar_select %p734, %s735, %s736
      %p740 = pneg %p734
      %p741 = scmp.eq.s32.totalorder %s37, 2
      %p742 = por %p740, %p741
      %p743 = scmp.ne.s32.totalorder %s735, %s738
      %p744 = scmp.eq.s32.totalorder %s37, 0
      %p745 = por %p743, %p744
      %p746 = scmp.ne.s32.totalorder %s735, %s738
      %p747 = scmp.eq.s32.totalorder %s42, 2
      %p748 = por %p746, %p747
      %p749 = scmp.ne.s32.totalorder %s738, %s739
      %p750 = scmp.eq.s32.totalorder %s42, 0
      %p751 = por %p749, %p750
      %p752 = scmp.ne.s32.totalorder %s738, %s739
      %p753 = scmp.eq.s32.totalorder %s43, 2
      %p754 = por %p752, %p753
      %p756 = scmp.ne.s32.totalorder %s739, %s755
      %p757 = scmp.eq.s32.totalorder %s43, 0
      %p758 = por %p756, %p757
      %s759 = ssub.s32 %s45, %s52
      %p760 = scmp.eq.s32.totalorder %s759, 0
      %s762 = sadd.s32 %s761, 1
      %s763 = scalar_select %p760, %s761, %s762
      %p766 = pneg %p760
      %p767 = scmp.eq.s32.totalorder %s37, 2
      %p768 = por %p766, %p767
      %p769 = scmp.ne.s32.totalorder %s761, %s764
      %p770 = scmp.eq.s32.totalorder %s37, 0
      %p771 = por %p769, %p770
      %p772 = scmp.ne.s32.totalorder %s761, %s764
      %p773 = scmp.eq.s32.totalorder %s42, 2
      %p774 = por %p772, %p773
      %p775 = scmp.ne.s32.totalorder %s764, %s765
      %p776 = scmp.eq.s32.totalorder %s42, 0
      %p777 = por %p775, %p776
      %p778 = scmp.ne.s32.totalorder %s764, %s765
      %p779 = scmp.eq.s32.totalorder %s43, 2
      %p780 = por %p778, %p779
      %p782 = scmp.ne.s32.totalorder %s765, %s781
      %p783 = scmp.eq.s32.totalorder %s43, 0
      %p784 = por %p782, %p783
      %s785 = ssub.s32 %s44, %s56
      %p786 = scmp.eq.s32.totalorder %s785, 0
      %s788 = sadd.s32 %s787, 1
      %s789 = scalar_select %p786, %s787, %s788
      %p792 = pneg %p786
      %p793 = scmp.eq.s32.totalorder %s37, 2
      %p794 = por %p792, %p793
      %p795 = scmp.ne.s32.totalorder %s787, %s790
      %p796 = scmp.eq.s32.totalorder %s37, 0
      %p797 = por %p795, %p796
      %p798 = scmp.ne.s32.totalorder %s787, %s790
      %p799 = scmp.eq.s32.totalorder %s42, 2
      %p800 = por %p798, %p799
      %p801 = scmp.ne.s32.totalorder %s790, %s791
      %p802 = scmp.eq.s32.totalorder %s42, 0
      %p803 = por %p801, %p802
      %p804 = scmp.ne.s32.totalorder %s790, %s791
      %p805 = scmp.eq.s32.totalorder %s43, 2
      %p806 = por %p804, %p805
      %p808 = scmp.ne.s32.totalorder %s791, %s807
      %p809 = scmp.eq.s32.totalorder %s43, 0
      %p810 = por %p808, %p809
      %p811 = scmp.le.s32.totalorder 1, %s37
      %p812 = scmp.lt.s32.totalorder %s37, 4
      %p813 = pnand %p811, %p812
      %p814 = pneg %p813
      // Predicated region
      $region9: #{tpu_custom_call.1} parent=5 // pred_check
        _
      $region10: #{tpu_custom_call.1} parent=5 // pred_check_branch
        %816 = sbr.rel (%p813) target = $region12
      $region11: #{tpu_custom_call.1} parent=5 // pred_region
        %s817 = ssub.s32 %s37, 1
        // Predicated region
        $region13: #{tpu_custom_call.1} parent=11 // pred_check
          %p818 = pneg %p75
        $region14: #{tpu_custom_call.1} parent=11 // pred_check_branch
          %820 = sbr.rel (%p818) target = $region16
        $region15: #{tpu_custom_call.1} parent=11 // pred_region
          %s821 = smul.u32 3, %s46
          %s823 = ssub.s32 384, 384
          %824 = vsyncadd [#allocation4], %s823
          %s825 = smul.addr %s821, 128
          %s826 = scalar_lea.hbm %s0, %s825
          %s827 = sshll.u32 [#allocation3], 4
          %s828 = int_to_ptr.vmem [resolvable:$true] %s827
          %833 = dma.hbm_to_vmem [thread:$0]  %s826, 384, %s828, [#allocation4], 128, 128, 8
        $region16: #{tpu_custom_call.1} parent=11 // pred_fallthru
          _
        // Predicated region
        $region17: #{tpu_custom_call.1} parent=11 // pred_check
          %p834 = pneg %p101
        $region18: #{tpu_custom_call.1} parent=11 // pred_check_branch
          %836 = sbr.rel (%p834) target = $region20
        $region19: #{tpu_custom_call.1} parent=11 // pred_region
          %s837 = smul.u32 3, %s46
          %s839 = ssub.s32 384, 384
          %840 = vsyncadd [#allocation7], %s839
          %s841 = smul.addr %s837, 2
          %s842 = smul.addr %s841, 64
          %s843 = scalar_lea.hbm %s1, %s842
          %s844 = sshll.u32 [#allocation6], 4
          %s845 = int_to_ptr.vmem [resolvable:$true] %s844
          %850 = dma.hbm_to_vmem [thread:$0]  %s843, 384, %s845, [#allocation7], 64, 64, 4
        $region20: #{tpu_custom_call.1} parent=11 // pred_fallthru
          _
      $region12: #{tpu_custom_call.1} parent=5 // pred_fallthru
        _
      %p851 = scmp.lt.s32.totalorder %s37, 3
      // Predicated region
      $region21: #{tpu_custom_call.1} parent=5 // pred_check
        %p852 = pneg %p851
      $region22: #{tpu_custom_call.1} parent=5 // pred_check_branch
        %854 = sbr.rel (%p852) target = $region24
      $region23: #{tpu_custom_call.1} parent=5 // pred_region
        // Predicated region
        $region25: #{tpu_custom_call.1} parent=23 // pred_check
          %p855 = pneg %p121
        $region26: #{tpu_custom_call.1} parent=23 // pred_check_branch
          %857 = sbr.rel (%p855) target = $region28
        $region27: #{tpu_custom_call.1} parent=23 // pred_region
          %s858 = sand.u32 %s37, 1
          %s859 = scalar_lea.sflag [#allocation4], %s858
          %s860 = sand.u32 %s111, 1
          %s861 = smul.addr %s860, 64
          %s862 = scalar_lea.vmem [#allocation8], %s861
          %s864 = ssub.s32 1024, 1024
          %865 = vsyncadd %s859, %s864
          %s866 = smul.addr %s45, 16
          %s867 = smul.addr %s866, 64
          %s868 = scalar_lea.hbm %s2, %s867
          %s869 = sshll.u32 %s862, 4
          %s870 = int_to_ptr.vmem [resolvable:$true] %s869
          %875 = dma.hbm_to_vmem [thread:$0]  %s868, 1024, %s870, %s859, 64, 64, 4
        $region28: #{tpu_custom_call.1} parent=23 // pred_fallthru
          _
        // Predicated region
        $region29: #{tpu_custom_call.1} parent=23 // pred_check
          %p876 = pneg %p147
        $region30: #{tpu_custom_call.1} parent=23 // pred_check_branch
          %878 = sbr.rel (%p876) target = $region32
        $region31: #{tpu_custom_call.1} parent=23 // pred_region
          %s879 = sand.u32 %s37, 1
          %s880 = scalar_lea.sflag [#allocation4], %s879
          %s881 = sand.u32 %s137, 1
          %s882 = smul.addr %s881, 64
          %s883 = scalar_lea.vmem [#allocation9], %s882
          %s885 = ssub.s32 1024, 1024
          %886 = vsyncadd %s880, %s885
          %s887 = smul.addr %s45, 16
          %s888 = smul.addr %s887, 64
          %s889 = scalar_lea.hbm %s3, %s888
          %s890 = sshll.u32 %s883, 4
          %s891 = int_to_ptr.vmem [resolvable:$true] %s890
          %896 = dma.hbm_to_vmem [thread:$0]  %s889, 1024, %s891, %s880, 64, 64, 4
        $region32: #{tpu_custom_call.1} parent=23 // pred_fallthru
          _
        // Predicated region
        $region33: #{tpu_custom_call.1} parent=23 // pred_check
          %p897 = pneg %p173
        $region34: #{tpu_custom_call.1} parent=23 // pred_check_branch
          %899 = sbr.rel (%p897) target = $region36
        $region35: #{tpu_custom_call.1} parent=23 // pred_region
          %s900 = sand.u32 %s37, 1
          %s901 = scalar_lea.sflag [#allocation4], %s900
          %s902 = sand.u32 %s163, 1
          %s903 = smul.addr %s902, 64
          %s904 = scalar_lea.vmem [#allocation10], %s903
          %s906 = ssub.s32 1024, 1024
          %907 = vsyncadd %s901, %s906
          %s908 = smul.addr %s45, 16
          %s909 = smul.addr %s908, 64
          %s910 = scalar_lea.hbm %s4, %s909
          %s911 = sshll.u32 %s904, 4
          %s912 = int_to_ptr.vmem [resolvable:$true] %s911
          %917 = dma.hbm_to_vmem [thread:$0]  %s910, 1024, %s912, %s901, 64, 64, 4
        $region36: #{tpu_custom_call.1} parent=23 // pred_fallthru
          _
        // Predicated region
        $region37: #{tpu_custom_call.1} parent=23 // pred_check
          %p918 = pneg %p199
        $region38: #{tpu_custom_call.1} parent=23 // pred_check_branch
          %920 = sbr.rel (%p918) target = $region40
        $region39: #{tpu_custom_call.1} parent=23 // pred_region
          %s921 = sand.u32 %s37, 1
          %s922 = scalar_lea.sflag [#allocation4], %s921
          %s923 = sand.u32 %s189, 1
          %s924 = smul.addr %s923, 64
          %s925 = scalar_lea.vmem [#allocation11], %s924
          %s927 = ssub.s32 1024, 1024
          %928 = vsyncadd %s922, %s927
          %s929 = smul.addr %s45, 16
          %s930 = smul.addr %s929, 64
          %s931 = scalar_lea.hbm %s5, %s930
          %s932 = sshll.u32 %s925, 4
          %s933 = int_to_ptr.vmem [resolvable:$true] %s932
          %938 = dma.hbm_to_vmem [thread:$0]  %s931, 1024, %s933, %s922, 64, 64, 4
        $region40: #{tpu_custom_call.1} parent=23 // pred_fallthru
          _
        // Predicated region
        $region41: #{tpu_custom_call.1} parent=23 // pred_check
          %p939 = pneg %p225
        $region42: #{tpu_custom_call.1} parent=23 // pred_check_branch
          %941 = sbr.rel (%p939) target = $region44
        $region43: #{tpu_custom_call.1} parent=23 // pred_region
          %p942 = scmp.lt.s32.totalorder %s45, 2
          %s943 = scalar_select %p942, %s45, 2
          %s944 = scalar_lea.vmem %s6, %s943
        $region44: #{tpu_custom_call.1} parent=23 // pred_fallthru
          _
        // Predicated region
        $region45: #{tpu_custom_call.1} parent=23 // pred_check
          %p945 = pneg %p251
        $region46: #{tpu_custom_call.1} parent=23 // pred_check_branch
          %947 = sbr.rel (%p945) target = $region48
        $region47: #{tpu_custom_call.1} parent=23 // pred_region
          %p948 = scmp.lt.s32.totalorder %s45, 2
          %s949 = scalar_select %p948, %s45, 2
          %s950 = scalar_lea.vmem %s7, %s949
        $region48: #{tpu_custom_call.1} parent=23 // pred_fallthru
          _
        // Predicated region
        $region49: #{tpu_custom_call.1} parent=23 // pred_check
          %p951 = pneg %p277
        $region50: #{tpu_custom_call.1} parent=23 // pred_check_branch
          %953 = sbr.rel (%p951) target = $region52
        $region51: #{tpu_custom_call.1} parent=23 // pred_region
          %p954 = scmp.lt.s32.totalorder %s45, 2
          %s955 = scalar_select %p954, %s45, 2
          %s956 = scalar_lea.vmem %s8, %s955
        $region52: #{tpu_custom_call.1} parent=23 // pred_fallthru
          _
        // Predicated region
        $region53: #{tpu_custom_call.1} parent=23 // pred_check
          %p957 = pneg %p303
        $region54: #{tpu_custom_call.1} parent=23 // pred_check_branch
          %959 = sbr.rel (%p957) target = $region56
        $region55: #{tpu_custom_call.1} parent=23 // pred_region
          %p960 = scmp.lt.s32.totalorder %s45, 2
          %s961 = scalar_select %p960, %s45, 2
          %s962 = scalar_lea.vmem %s9, %s961
        $region56: #{tpu_custom_call.1} parent=23 // pred_fallthru
          _
        // Predicated region
        $region57: #{tpu_custom_call.1} parent=23 // pred_check
          %p963 = pneg %p329
        $region58: #{tpu_custom_call.1} parent=23 // pred_check_branch
          %965 = sbr.rel (%p963) target = $region60
        $region59: #{tpu_custom_call.1} parent=23 // pred_region
          %s966 = sand.u32 %s37, 1
          %s967 = scalar_lea.sflag [#allocation4], %s966
          %s968 = sand.u32 %s319, 1
          %s969 = smul.addr %s968, 64
          %s970 = scalar_lea.vmem [#allocation12], %s969
          %s972 = ssub.s32 1024, 1024
          %973 = vsyncadd %s967, %s972
          %s974 = smul.addr %s45, 16
          %s975 = smul.addr %s974, 64
          %s976 = scalar_lea.hbm %s10, %s975
          %s977 = sshll.u32 %s970, 4
          %s978 = int_to_ptr.vmem [resolvable:$true] %s977
          %983 = dma.hbm_to_vmem [thread:$0]  %s976, 1024, %s978, %s967, 64, 64, 4
        $region60: #{tpu_custom_call.1} parent=23 // pred_fallthru
          _
        // Predicated region
        $region61: #{tpu_custom_call.1} parent=23 // pred_check
          %p984 = pneg %p355
        $region62: #{tpu_custom_call.1} parent=23 // pred_check_branch
          %986 = sbr.rel (%p984) target = $region64
        $region63: #{tpu_custom_call.1} parent=23 // pred_region
          %s987 = sand.u32 %s37, 1
          %s988 = scalar_lea.sflag [#allocation4], %s987
          %s989 = sand.u32 %s345, 1
          %s990 = smul.addr %s989, 64
          %s991 = scalar_lea.vmem [#allocation13], %s990
          %s993 = ssub.s32 1024, 1024
          %994 = vsyncadd %s988, %s993
          %s995 = smul.addr %s45, 16
          %s996 = smul.addr %s995, 64
          %s997 = scalar_lea.hbm %s11, %s996
          %s998 = sshll.u32 %s991, 4
          %s999 = int_to_ptr.vmem [resolvable:$true] %s998
          %1004 = dma.hbm_to_vmem [thread:$0]  %s997, 1024, %s999, %s988, 64, 64, 4
        $region64: #{tpu_custom_call.1} parent=23 // pred_fallthru
          _
        // Predicated region
        $region65: #{tpu_custom_call.1} parent=23 // pred_check
          %p1005 = pneg %p381
        $region66: #{tpu_custom_call.1} parent=23 // pred_check_branch
          %1007 = sbr.rel (%p1005) target = $region68
        $region67: #{tpu_custom_call.1} parent=23 // pred_region
          %s1008 = sand.u32 %s37, 1
          %s1009 = scalar_lea.sflag [#allocation4], %s1008
          %s1010 = sand.u32 %s371, 1
          %s1011 = smul.addr %s1010, 64
          %s1012 = scalar_lea.vmem [#allocation14], %s1011
          %s1014 = ssub.s32 1024, 1024
          %1015 = vsyncadd %s1009, %s1014
          %s1016 = smul.addr %s45, 16
          %s1017 = smul.addr %s1016, 64
          %s1018 = scalar_lea.hbm %s12, %s1017
          %s1019 = sshll.u32 %s1012, 4
          %s1020 = int_to_ptr.vmem [resolvable:$true] %s1019
          %1025 = dma.hbm_to_vmem [thread:$0]  %s1018, 1024, %s1020, %s1009, 64, 64, 4
        $region68: #{tpu_custom_call.1} parent=23 // pred_fallthru
          _
        // Predicated region
        $region69: #{tpu_custom_call.1} parent=23 // pred_check
          %p1026 = pneg %p407
        $region70: #{tpu_custom_call.1} parent=23 // pred_check_branch
          %1028 = sbr.rel (%p1026) target = $region72
        $region71: #{tpu_custom_call.1} parent=23 // pred_region
          %s1029 = sand.u32 %s37, 1
          %s1030 = scalar_lea.sflag [#allocation4], %s1029
          %s1031 = sand.u32 %s397, 1
          %s1032 = smul.addr %s1031, 64
          %s1033 = scalar_lea.vmem [#allocation15], %s1032
          %s1035 = ssub.s32 1024, 1024
          %1036 = vsyncadd %s1030, %s1035
          %s1037 = smul.addr %s45, 16
          %s1038 = smul.addr %s1037, 64
          %s1039 = scalar_lea.hbm %s13, %s1038
          %s1040 = sshll.u32 %s1033, 4
          %s1041 = int_to_ptr.vmem [resolvable:$true] %s1040
          %1046 = dma.hbm_to_vmem [thread:$0]  %s1039, 1024, %s1041, %s1030, 64, 64, 4
        $region72: #{tpu_custom_call.1} parent=23 // pred_fallthru
          _
        // Predicated region
        $region73: #{tpu_custom_call.1} parent=23 // pred_check
          %p1047 = pneg %p433
        $region74: #{tpu_custom_call.1} parent=23 // pred_check_branch
          %1049 = sbr.rel (%p1047) target = $region76
        $region75: #{tpu_custom_call.1} parent=23 // pred_region
          %p1050 = scmp.lt.s32.totalorder %s45, 2
          %s1051 = scalar_select %p1050, %s45, 2
          %s1052 = scalar_lea.vmem %s14, %s1051
        $region76: #{tpu_custom_call.1} parent=23 // pred_fallthru
          _
        // Predicated region
        $region77: #{tpu_custom_call.1} parent=23 // pred_check
          %p1053 = pneg %p459
        $region78: #{tpu_custom_call.1} parent=23 // pred_check_branch
          %1055 = sbr.rel (%p1053) target = $region80
        $region79: #{tpu_custom_call.1} parent=23 // pred_region
          %p1056 = scmp.lt.s32.totalorder %s45, 2
          %s1057 = scalar_select %p1056, %s45, 2
          %s1058 = scalar_lea.vmem %s15, %s1057
        $region80: #{tpu_custom_call.1} parent=23 // pred_fallthru
          _
        // Predicated region
        $region81: #{tpu_custom_call.1} parent=23 // pred_check
          %p1059 = pneg %p485
        $region82: #{tpu_custom_call.1} parent=23 // pred_check_branch
          %1061 = sbr.rel (%p1059) target = $region84
        $region83: #{tpu_custom_call.1} parent=23 // pred_region
          %p1062 = scmp.lt.s32.totalorder %s45, 2
          %s1063 = scalar_select %p1062, %s45, 2
          %s1064 = scalar_lea.vmem %s16, %s1063
        $region84: #{tpu_custom_call.1} parent=23 // pred_fallthru
          _
        // Predicated region
        $region85: #{tpu_custom_call.1} parent=23 // pred_check
          %p1065 = pneg %p511
        $region86: #{tpu_custom_call.1} parent=23 // pred_check_branch
          %1067 = sbr.rel (%p1065) target = $region88
        $region87: #{tpu_custom_call.1} parent=23 // pred_region
          %p1068 = scmp.lt.s32.totalorder %s45, 2
          %s1069 = scalar_select %p1068, %s45, 2
          %s1070 = scalar_lea.vmem %s17, %s1069
        $region88: #{tpu_custom_call.1} parent=23 // pred_fallthru
          _
        // Predicated region
        $region89: #{tpu_custom_call.1} parent=23 // pred_check
          %p1071 = pneg %p537
        $region90: #{tpu_custom_call.1} parent=23 // pred_check_branch
          %1073 = sbr.rel (%p1071) target = $region92
        $region91: #{tpu_custom_call.1} parent=23 // pred_region
          %s1074 = sand.u32 %s37, 1
          %s1075 = scalar_lea.sflag [#allocation4], %s1074
          %s1076 = sand.u32 %s527, 1
          %s1077 = smul.addr %s1076, 128
          %s1078 = scalar_lea.vmem [#allocation16], %s1077
          %s1080 = ssub.s32 2048, 2048
          %1081 = vsyncadd %s1075, %s1080
          %s1082 = smul.addr %s45, 32
          %s1083 = smul.addr %s1082, 64
          %s1084 = scalar_lea.hbm %s18, %s1083
          %s1085 = sshll.u32 %s1078, 4
          %s1086 = int_to_ptr.vmem [resolvable:$true] %s1085
          %1091 = dma.hbm_to_vmem [thread:$0]  %s1084, 2048, %s1086, %s1075, 128, 128, 8
        $region92: #{tpu_custom_call.1} parent=23 // pred_fallthru
          _
        // Predicated region
        $region93: #{tpu_custom_call.1} parent=23 // pred_check
          %p1092 = pneg %p563
        $region94: #{tpu_custom_call.1} parent=23 // pred_check_branch
          %1094 = sbr.rel (%p1092) target = $region96
        $region95: #{tpu_custom_call.1} parent=23 // pred_region
          %s1095 = sand.u32 %s37, 1
          %s1096 = scalar_lea.sflag [#allocation4], %s1095
          %s1097 = sand.u32 %s553, 1
          %s1098 = smul.addr %s1097, 128
          %s1099 = scalar_lea.vmem [#allocation17], %s1098
          %s1101 = ssub.s32 2048, 2048
          %1102 = vsyncadd %s1096, %s1101
          %s1103 = smul.addr %s45, 32
          %s1104 = smul.addr %s1103, 64
          %s1105 = scalar_lea.hbm %s19, %s1104
          %s1106 = sshll.u32 %s1099, 4
          %s1107 = int_to_ptr.vmem [resolvable:$true] %s1106
          %1112 = dma.hbm_to_vmem [thread:$0]  %s1105, 2048, %s1107, %s1096, 64, 64, 4
        $region96: #{tpu_custom_call.1} parent=23 // pred_fallthru
          _
        // Predicated region
        $region97: #{tpu_custom_call.1} parent=23 // pred_check
          %p1113 = pneg %p589
        $region98: #{tpu_custom_call.1} parent=23 // pred_check_branch
          %1115 = sbr.rel (%p1113) target = $region100
        $region99: #{tpu_custom_call.1} parent=23 // pred_region
          %p1116 = scmp.lt.s32.totalorder %s45, 2
          %s1117 = scalar_select %p1116, %s45, 2
          %s1118 = smul.addr %s1117, 2
          %s1119 = scalar_lea.vmem %s20, %s1118
        $region100: #{tpu_custom_call.1} parent=23 // pred_fallthru
          _
        // Predicated region
        $region101: #{tpu_custom_call.1} parent=23 // pred_check
          %p1120 = pneg %p615
        $region102: #{tpu_custom_call.1} parent=23 // pred_check_branch
          %1122 = sbr.rel (%p1120) target = $region104
        $region103: #{tpu_custom_call.1} parent=23 // pred_region
          %p1123 = scmp.lt.s32.totalorder %s45, 2
          %s1124 = scalar_select %p1123, %s45, 2
          %s1125 = scalar_lea.vmem %s21, %s1124
        $region104: #{tpu_custom_call.1} parent=23 // pred_fallthru
          _
        // Predicated region
        $region105: #{tpu_custom_call.1} parent=23 // pred_check
          %p1126 = pneg %p641
        $region106: #{tpu_custom_call.1} parent=23 // pred_check_branch
          %1128 = sbr.rel (%p1126) target = $region108
        $region107: #{tpu_custom_call.1} parent=23 // pred_region
          %p1129 = scmp.lt.s32.totalorder %s45, 2
          %s1130 = scalar_select %p1129, %s45, 2
          %s1131 = scalar_lea.vmem %s22, %s1130
        $region108: #{tpu_custom_call.1} parent=23 // pred_fallthru
          _
        // Predicated region
        $region109: #{tpu_custom_call.1} parent=23 // pred_check
          %p1132 = pneg %p667
        $region110: #{tpu_custom_call.1} parent=23 // pred_check_branch
          %1134 = sbr.rel (%p1132) target = $region112
        $region111: #{tpu_custom_call.1} parent=23 // pred_region
          %p1135 = scmp.lt.s32.totalorder %s45, 2
          %s1136 = scalar_select %p1135, %s45, 2
          %s1137 = scalar_lea.vmem %s23, %s1136
        $region112: #{tpu_custom_call.1} parent=23 // pred_fallthru
          _
        // Predicated region
        $region113: #{tpu_custom_call.1} parent=23 // pred_check
          %p1138 = pneg %p693
        $region114: #{tpu_custom_call.1} parent=23 // pred_check_branch
          %1140 = sbr.rel (%p1138) target = $region116
        $region115: #{tpu_custom_call.1} parent=23 // pred_region
          %p1141 = scmp.lt.s32.totalorder %s45, 2
          %s1142 = scalar_select %p1141, %s45, 2
          %s1143 = scalar_lea.vmem %s24, %s1142
        $region116: #{tpu_custom_call.1} parent=23 // pred_fallthru
          _
        // Predicated region
        $region117: #{tpu_custom_call.1} parent=23 // pred_check
          %p1144 = pneg %p719
        $region118: #{tpu_custom_call.1} parent=23 // pred_check_branch
          %1146 = sbr.rel (%p1144) target = $region120
        $region119: #{tpu_custom_call.1} parent=23 // pred_region
          %p1147 = scmp.lt.s32.totalorder %s45, 2
          %s1148 = scalar_select %p1147, %s45, 2
          %s1149 = scalar_lea.vmem %s25, %s1148
        $region120: #{tpu_custom_call.1} parent=23 // pred_fallthru
          _
        // Predicated region
        $region121: #{tpu_custom_call.1} parent=23 // pred_check
          %p1150 = pneg %p745
        $region122: #{tpu_custom_call.1} parent=23 // pred_check_branch
          %1152 = sbr.rel (%p1150) target = $region124
        $region123: #{tpu_custom_call.1} parent=23 // pred_region
          %p1153 = scmp.lt.s32.totalorder %s45, 2
          %s1154 = scalar_select %p1153, %s45, 2
          %s1155 = scalar_lea.vmem %s26, %s1154
        $region124: #{tpu_custom_call.1} parent=23 // pred_fallthru
          _
        // Predicated region
        $region125: #{tpu_custom_call.1} parent=23 // pred_check
          %p1156 = pneg %p771
        $region126: #{tpu_custom_call.1} parent=23 // pred_check_branch
          %1158 = sbr.rel (%p1156) target = $region128
        $region127: #{tpu_custom_call.1} parent=23 // pred_region
          %p1159 = scmp.lt.s32.totalorder %s45, 2
          %s1160 = scalar_select %p1159, %s45, 2
          %s1161 = scalar_lea.vmem %s27, %s1160
        $region128: #{tpu_custom_call.1} parent=23 // pred_fallthru
          _
      $region24: #{tpu_custom_call.1} parent=5 // pred_fallthru
        _
      %p1162 = scmp.le.s32.totalorder 1, %s37
      %p1163 = scmp.lt.s32.totalorder %s37, 4
      %p1164 = pnand %p1162, %p1163
      %p1165 = pneg %p1164
      // Predicated region
      $region129: #{tpu_custom_call.1} parent=5 // pred_check
        _
      $region130: #{tpu_custom_call.1} parent=5 // pred_check_branch
        %1167 = sbr.rel (%p1164) target = $region132
      $region131: #{tpu_custom_call.1} parent=5 // pred_region
        %s1168 = ssub.s32 %s37, 1
        // Predicated region
        $region133: #{tpu_custom_call.1} parent=131 // pred_check
          %p1169 = pneg %p75
        $region134: #{tpu_custom_call.1} parent=131 // pred_check_branch
          %1171 = sbr.rel (%p1169) target = $region136
        $region135: #{tpu_custom_call.1} parent=131 // pred_region
          %1172 = dma.done [#allocation4], 384
        $region136: #{tpu_custom_call.1} parent=131 // pred_fallthru
          _
        // Predicated region
        $region137: #{tpu_custom_call.1} parent=131 // pred_check
          %p1173 = pneg %p101
        $region138: #{tpu_custom_call.1} parent=131 // pred_check_branch
          %1175 = sbr.rel (%p1173) target = $region140
        $region139: #{tpu_custom_call.1} parent=131 // pred_region
          %1176 = dma.done [#allocation7], 384
        $region140: #{tpu_custom_call.1} parent=131 // pred_fallthru
          _
        %s1177 = sand.u32 %s42, 1
        %s1178 = scalar_lea.sflag [#allocation4], %s1177
        %s1179 = sand.u32 %s114, 1
        %s1180 = smul.addr %s1179, 64
        %s1181 = scalar_lea.vmem [#allocation8], %s1180
        // Predicated region
        $region141: #{tpu_custom_call.1} parent=131 // pred_check
          %p1182 = pneg %p127
        $region142: #{tpu_custom_call.1} parent=131 // pred_check_branch
          %1184 = sbr.rel (%p1182) target = $region144
        $region143: #{tpu_custom_call.1} parent=131 // pred_region
          %1185 = dma.done %s1178, 1024
        $region144: #{tpu_custom_call.1} parent=131 // pred_fallthru
          _
        %s1186 = sand.u32 %s42, 1
        %s1187 = scalar_lea.sflag [#allocation4], %s1186
        %s1188 = sand.u32 %s140, 1
        %s1189 = smul.addr %s1188, 64
        %s1190 = scalar_lea.vmem [#allocation9], %s1189
        // Predicated region
        $region145: #{tpu_custom_call.1} parent=131 // pred_check
          %p1191 = pneg %p153
        $region146: #{tpu_custom_call.1} parent=131 // pred_check_branch
          %1193 = sbr.rel (%p1191) target = $region148
        $region147: #{tpu_custom_call.1} parent=131 // pred_region
          %1194 = dma.done %s1187, 1024
        $region148: #{tpu_custom_call.1} parent=131 // pred_fallthru
          _
        %s1195 = sand.u32 %s42, 1
        %s1196 = scalar_lea.sflag [#allocation4], %s1195
        %s1197 = sand.u32 %s166, 1
        %s1198 = smul.addr %s1197, 64
        %s1199 = scalar_lea.vmem [#allocation10], %s1198
        // Predicated region
        $region149: #{tpu_custom_call.1} parent=131 // pred_check
          %p1200 = pneg %p179
        $region150: #{tpu_custom_call.1} parent=131 // pred_check_branch
          %1202 = sbr.rel (%p1200) target = $region152
        $region151: #{tpu_custom_call.1} parent=131 // pred_region
          %1203 = dma.done %s1196, 1024
        $region152: #{tpu_custom_call.1} parent=131 // pred_fallthru
          _
        %s1204 = sand.u32 %s42, 1
        %s1205 = scalar_lea.sflag [#allocation4], %s1204
        %s1206 = sand.u32 %s192, 1
        %s1207 = smul.addr %s1206, 64
        %s1208 = scalar_lea.vmem [#allocation11], %s1207
        // Predicated region
        $region153: #{tpu_custom_call.1} parent=131 // pred_check
          %p1209 = pneg %p205
        $region154: #{tpu_custom_call.1} parent=131 // pred_check_branch
          %1211 = sbr.rel (%p1209) target = $region156
        $region155: #{tpu_custom_call.1} parent=131 // pred_region
          %1212 = dma.done %s1205, 1024
        $region156: #{tpu_custom_call.1} parent=131 // pred_fallthru
          _
        %s1213 = sand.u32 %s42, 1
        %s1214 = scalar_lea.sflag [#allocation4], %s1213
        %s1215 = sand.u32 %s322, 1
        %s1216 = smul.addr %s1215, 64
        %s1217 = scalar_lea.vmem [#allocation12], %s1216
        // Predicated region
        $region157: #{tpu_custom_call.1} parent=131 // pred_check
          %p1218 = pneg %p335
        $region158: #{tpu_custom_call.1} parent=131 // pred_check_branch
          %1220 = sbr.rel (%p1218) target = $region160
        $region159: #{tpu_custom_call.1} parent=131 // pred_region
          %1221 = dma.done %s1214, 1024
        $region160: #{tpu_custom_call.1} parent=131 // pred_fallthru
          _
        %s1222 = sand.u32 %s42, 1
        %s1223 = scalar_lea.sflag [#allocation4], %s1222
        %s1224 = sand.u32 %s348, 1
        %s1225 = smul.addr %s1224, 64
        %s1226 = scalar_lea.vmem [#allocation13], %s1225
        // Predicated region
        $region161: #{tpu_custom_call.1} parent=131 // pred_check
          %p1227 = pneg %p361
        $region162: #{tpu_custom_call.1} parent=131 // pred_check_branch
          %1229 = sbr.rel (%p1227) target = $region164
        $region163: #{tpu_custom_call.1} parent=131 // pred_region
          %1230 = dma.done %s1223, 1024
        $region164: #{tpu_custom_call.1} parent=131 // pred_fallthru
          _
        %s1231 = sand.u32 %s42, 1
        %s1232 = scalar_lea.sflag [#allocation4], %s1231
        %s1233 = sand.u32 %s374, 1
        %s1234 = smul.addr %s1233, 64
        %s1235 = scalar_lea.vmem [#allocation14], %s1234
        // Predicated region
        $region165: #{tpu_custom_call.1} parent=131 // pred_check
          %p1236 = pneg %p387
        $region166: #{tpu_custom_call.1} parent=131 // pred_check_branch
          %1238 = sbr.rel (%p1236) target = $region168
        $region167: #{tpu_custom_call.1} parent=131 // pred_region
          %1239 = dma.done %s1232, 1024
        $region168: #{tpu_custom_call.1} parent=131 // pred_fallthru
          _
        %s1240 = sand.u32 %s42, 1
        %s1241 = scalar_lea.sflag [#allocation4], %s1240
        %s1242 = sand.u32 %s400, 1
        %s1243 = smul.addr %s1242, 64
        %s1244 = scalar_lea.vmem [#allocation15], %s1243
        // Predicated region
        $region169: #{tpu_custom_call.1} parent=131 // pred_check
          %p1245 = pneg %p413
        $region170: #{tpu_custom_call.1} parent=131 // pred_check_branch
          %1247 = sbr.rel (%p1245) target = $region172
        $region171: #{tpu_custom_call.1} parent=131 // pred_region
          %1248 = dma.done %s1241, 1024
        $region172: #{tpu_custom_call.1} parent=131 // pred_fallthru
          _
        %s1249 = sand.u32 %s42, 1
        %s1250 = scalar_lea.sflag [#allocation4], %s1249
        %s1251 = sand.u32 %s530, 1
        %s1252 = smul.addr %s1251, 128
        %s1253 = scalar_lea.vmem [#allocation16], %s1252
        // Predicated region
        $region173: #{tpu_custom_call.1} parent=131 // pred_check
          %p1254 = pneg %p543
        $region174: #{tpu_custom_call.1} parent=131 // pred_check_branch
          %1256 = sbr.rel (%p1254) target = $region176
        $region175: #{tpu_custom_call.1} parent=131 // pred_region
          %1257 = dma.done %s1250, 2048
        $region176: #{tpu_custom_call.1} parent=131 // pred_fallthru
          _
        %s1258 = sand.u32 %s42, 1
        %s1259 = scalar_lea.sflag [#allocation4], %s1258
        %s1260 = sand.u32 %s556, 1
        %s1261 = smul.addr %s1260, 128
        %s1262 = scalar_lea.vmem [#allocation17], %s1261
        // Predicated region
        $region177: #{tpu_custom_call.1} parent=131 // pred_check
          %p1263 = pneg %p569
        $region178: #{tpu_custom_call.1} parent=131 // pred_check_branch
          %1265 = sbr.rel (%p1263) target = $region180
        $region179: #{tpu_custom_call.1} parent=131 // pred_region
          %1266 = dma.done %s1259, 2048
        $region180: #{tpu_custom_call.1} parent=131 // pred_fallthru
          _
        %p1267 = pneg %p75
        %p1268 = pneg %p72
        %p1269 = pneg %p101
        %p1270 = pneg %p98
        %s1271 = sand.u32 %s42, 1
        %s1272 = scalar_lea.sflag [#allocation4], %s1271
        %s1273 = sand.u32 %s114, 1
        %s1274 = smul.addr %s1273, 64
        %s1275 = scalar_lea.vmem [#allocation8], %s1274
        %p1276 = pneg %p127
        %p1277 = pneg %p124
        %s1278 = sand.u32 %s42, 1
        %s1279 = scalar_lea.sflag [#allocation4], %s1278
        %s1280 = sand.u32 %s140, 1
        %s1281 = smul.addr %s1280, 64
        %s1282 = scalar_lea.vmem [#allocation9], %s1281
        %p1283 = pneg %p153
        %p1284 = pneg %p150
        %s1285 = sand.u32 %s42, 1
        %s1286 = scalar_lea.sflag [#allocation4], %s1285
        %s1287 = sand.u32 %s166, 1
        %s1288 = smul.addr %s1287, 64
        %s1289 = scalar_lea.vmem [#allocation10], %s1288
        %p1290 = pneg %p179
        %p1291 = pneg %p176
        %s1292 = sand.u32 %s42, 1
        %s1293 = scalar_lea.sflag [#allocation4], %s1292
        %s1294 = sand.u32 %s192, 1
        %s1295 = smul.addr %s1294, 64
        %s1296 = scalar_lea.vmem [#allocation11], %s1295
        %p1297 = pneg %p205
        %p1298 = pneg %p202
        %p1299 = scmp.lt.s32.totalorder %s47, 2
        %s1300 = scalar_select %p1299, %s47, 2
        %s1301 = scalar_lea.vmem %s6, %s1300
        %p1302 = pneg %p231
        %p1303 = pneg %p228
        %p1304 = scmp.lt.s32.totalorder %s47, 2
        %s1305 = scalar_select %p1304, %s47, 2
        %s1306 = scalar_lea.vmem %s7, %s1305
        %p1307 = pneg %p257
        %p1308 = pneg %p254
        %p1309 = scmp.lt.s32.totalorder %s47, 2
        %s1310 = scalar_select %p1309, %s47, 2
        %s1311 = scalar_lea.vmem %s8, %s1310
        %p1312 = pneg %p283
        %p1313 = pneg %p280
        %p1314 = scmp.lt.s32.totalorder %s47, 2
        %s1315 = scalar_select %p1314, %s47, 2
        %s1316 = scalar_lea.vmem %s9, %s1315
        %p1317 = pneg %p309
        %p1318 = pneg %p306
        %s1319 = sand.u32 %s42, 1
        %s1320 = scalar_lea.sflag [#allocation4], %s1319
        %s1321 = sand.u32 %s322, 1
        %s1322 = smul.addr %s1321, 64
        %s1323 = scalar_lea.vmem [#allocation12], %s1322
        %p1324 = pneg %p335
        %p1325 = pneg %p332
        %s1326 = sand.u32 %s42, 1
        %s1327 = scalar_lea.sflag [#allocation4], %s1326
        %s1328 = sand.u32 %s348, 1
        %s1329 = smul.addr %s1328, 64
        %s1330 = scalar_lea.vmem [#allocation13], %s1329
        %p1331 = pneg %p361
        %p1332 = pneg %p358
        %s1333 = sand.u32 %s42, 1
        %s1334 = scalar_lea.sflag [#allocation4], %s1333
        %s1335 = sand.u32 %s374, 1
        %s1336 = smul.addr %s1335, 64
        %s1337 = scalar_lea.vmem [#allocation14], %s1336
        %p1338 = pneg %p387
        %p1339 = pneg %p384
        %s1340 = sand.u32 %s42, 1
        %s1341 = scalar_lea.sflag [#allocation4], %s1340
        %s1342 = sand.u32 %s400, 1
        %s1343 = smul.addr %s1342, 64
        %s1344 = scalar_lea.vmem [#allocation15], %s1343
        %p1345 = pneg %p413
        %p1346 = pneg %p410
        %p1347 = scmp.lt.s32.totalorder %s47, 2
        %s1348 = scalar_select %p1347, %s47, 2
        %s1349 = scalar_lea.vmem %s14, %s1348
        %p1350 = pneg %p439
        %p1351 = pneg %p436
        %p1352 = scmp.lt.s32.totalorder %s47, 2
        %s1353 = scalar_select %p1352, %s47, 2
        %s1354 = scalar_lea.vmem %s15, %s1353
        %p1355 = pneg %p465
        %p1356 = pneg %p462
        %p1357 = scmp.lt.s32.totalorder %s47, 2
        %s1358 = scalar_select %p1357, %s47, 2
        %s1359 = scalar_lea.vmem %s16, %s1358
        %p1360 = pneg %p491
        %p1361 = pneg %p488
        %p1362 = scmp.lt.s32.totalorder %s47, 2
        %s1363 = scalar_select %p1362, %s47, 2
        %s1364 = scalar_lea.vmem %s17, %s1363
        %p1365 = pneg %p517
        %p1366 = pneg %p514
        %s1367 = sand.u32 %s42, 1
        %s1368 = scalar_lea.sflag [#allocation4], %s1367
        %s1369 = sand.u32 %s530, 1
        %s1370 = smul.addr %s1369, 128
        %s1371 = scalar_lea.vmem [#allocation16], %s1370
        %p1372 = pneg %p543
        %p1373 = pneg %p540
        %s1374 = sand.u32 %s42, 1
        %s1375 = scalar_lea.sflag [#allocation4], %s1374
        %s1376 = sand.u32 %s556, 1
        %s1377 = smul.addr %s1376, 128
        %s1378 = scalar_lea.vmem [#allocation17], %s1377
        %p1379 = pneg %p569
        %p1380 = pneg %p566
        %p1381 = scmp.lt.s32.totalorder %s47, 2
        %s1382 = scalar_select %p1381, %s47, 2
        %s1383 = smul.addr %s1382, 2
        %s1384 = scalar_lea.vmem %s20, %s1383
        %p1385 = pneg %p595
        %p1386 = pneg %p592
        %p1387 = scmp.lt.s32.totalorder %s47, 2
        %s1388 = scalar_select %p1387, %s47, 2
        %s1389 = scalar_lea.vmem %s21, %s1388
        %p1390 = pneg %p621
        %p1391 = pneg %p618
        %p1392 = scmp.lt.s32.totalorder %s47, 2
        %s1393 = scalar_select %p1392, %s47, 2
        %s1394 = scalar_lea.vmem %s22, %s1393
        %p1395 = pneg %p647
        %p1396 = pneg %p644
        %p1397 = scmp.lt.s32.totalorder %s47, 2
        %s1398 = scalar_select %p1397, %s47, 2
        %s1399 = scalar_lea.vmem %s23, %s1398
        %p1400 = pneg %p673
        %p1401 = pneg %p670
        %p1402 = scmp.lt.s32.totalorder %s47, 2
        %s1403 = scalar_select %p1402, %s47, 2
        %s1404 = scalar_lea.vmem %s24, %s1403
        %p1405 = pneg %p699
        %p1406 = pneg %p696
        %p1407 = scmp.lt.s32.totalorder %s47, 2
        %s1408 = scalar_select %p1407, %s47, 2
        %s1409 = scalar_lea.vmem %s25, %s1408
        %p1410 = pneg %p725
        %p1411 = pneg %p722
        %p1412 = scmp.lt.s32.totalorder %s47, 2
        %s1413 = scalar_select %p1412, %s47, 2
        %s1414 = scalar_lea.vmem %s26, %s1413
        %p1415 = pneg %p751
        %p1416 = pneg %p748
        %p1417 = scmp.lt.s32.totalorder %s47, 2
        %s1418 = scalar_select %p1417, %s47, 2
        %s1419 = scalar_lea.vmem %s27, %s1418
        %p1420 = pneg %p777
        %p1421 = pneg %p774
        %p1422 = pneg %p803
        %p1423 = pneg %p800
        %s1424 = smul.u32 3, %s46
        %s1425 = smul.u32 3, %s46
        %p1426 = scmp.lt.s32.totalorder %s47, 2
        %s1427 = scalar_select %p1426, %s47, 2
        %s1428 = scalar_lea.vmem %s6, %s1427
        %p1429 = scmp.lt.s32.totalorder %s47, 2
        %s1430 = scalar_select %p1429, %s47, 2
        %s1431 = scalar_lea.vmem %s7, %s1430
        %p1432 = scmp.lt.s32.totalorder %s47, 2
        %s1433 = scalar_select %p1432, %s47, 2
        %s1434 = scalar_lea.vmem %s8, %s1433
        %p1435 = scmp.lt.s32.totalorder %s47, 2
        %s1436 = scalar_select %p1435, %s47, 2
        %s1437 = scalar_lea.vmem %s9, %s1436
        %p1438 = scmp.lt.s32.totalorder %s47, 2
        %s1439 = scalar_select %p1438, %s47, 2
        %s1440 = scalar_lea.vmem %s14, %s1439
        %p1441 = scmp.lt.s32.totalorder %s47, 2
        %s1442 = scalar_select %p1441, %s47, 2
        %s1443 = scalar_lea.vmem %s15, %s1442
        %p1444 = scmp.lt.s32.totalorder %s47, 2
        %s1445 = scalar_select %p1444, %s47, 2
        %s1446 = scalar_lea.vmem %s16, %s1445
        %p1447 = scmp.lt.s32.totalorder %s47, 2
        %s1448 = scalar_select %p1447, %s47, 2
        %s1449 = scalar_lea.vmem %s17, %s1448
        %p1450 = scmp.lt.s32.totalorder %s47, 2
        %s1451 = scalar_select %p1450, %s47, 2
        %s1452 = smul.addr %s1451, 2
        %s1453 = scalar_lea.vmem %s20, %s1452
        %p1454 = scmp.lt.s32.totalorder %s47, 2
        %s1455 = scalar_select %p1454, %s47, 2
        %s1456 = scalar_lea.vmem %s21, %s1455
        %p1457 = scmp.lt.s32.totalorder %s47, 2
        %s1458 = scalar_select %p1457, %s47, 2
        %s1459 = scalar_lea.vmem %s22, %s1458
        %p1460 = scmp.lt.s32.totalorder %s47, 2
        %s1461 = scalar_select %p1460, %s47, 2
        %s1462 = scalar_lea.vmem %s23, %s1461
        %p1463 = scmp.lt.s32.totalorder %s47, 2
        %s1464 = scalar_select %p1463, %s47, 2
        %s1465 = scalar_lea.vmem %s24, %s1464
        %p1466 = scmp.lt.s32.totalorder %s47, 2
        %s1467 = scalar_select %p1466, %s47, 2
        %s1468 = scalar_lea.vmem %s25, %s1467
        %p1469 = scmp.lt.s32.totalorder %s47, 2
        %s1470 = scalar_select %p1469, %s47, 2
        %s1471 = scalar_lea.vmem %s26, %s1470
        %p1472 = scmp.lt.s32.totalorder %s47, 2
        %s1473 = scalar_select %p1472, %s47, 2
        %s1474 = scalar_lea.vmem %s27, %s1473
        %s1475 = smul.u32 3, %s46
        %p1477 = scmp.eq.s32.totalorder %s47, 0
        // Predicated region
        $region181: #{tpu_custom_call.1} parent=131 // pred_check
          %p1478 = pneg %p1477
        $region182: #{tpu_custom_call.1} parent=131 // pred_check_branch
          %1480 = sbr.rel (%p1478) target = $region184
        $region183: #{tpu_custom_call.1} parent=131 // pred_region
          %v1481 = vld [vmem:[#allocation3] sm:$0xff]
          %v1482 = vld [vmem:[#allocation3 + $0x8] sm:$0xff]
          %v1483 = vld [vmem:[#allocation3 + $0x10] sm:$0xff]
          %1484 = vst [vmem:[#allocation2] sm:$0xff] %v1481
          %1485 = vst [vmem:[#allocation2 + $0x8] sm:$0xff] %v1482
          %1486 = vst [vmem:[#allocation2 + $0x10] sm:$0xff] %v1483
        $region184: #{tpu_custom_call.1} parent=131 // pred_fallthru
          _
        %v1487 = vld [vmem:[#allocation2] sm:$0xff]
        %v1488 = vld [vmem:[#allocation2 + $0x8] sm:$0xff]
        %v1489 = vld [vmem:[#allocation2 + $0x10] sm:$0xff]
        %v1490 = vpack.c.bf16 %v1488, %v1487
        %v1491 = vpack.c.bf16 %v1489, %v1489
        %v1492 = vld [vmem:[%s1181] sm:$0xf]
        %v1493 = vld [vmem:[%s1181 + $0x4] sm:$0xf]
        %v1494 = vld [vmem:[%s1181 + $0x8] sm:$0xf]
        %v1495 = vld [vmem:[%s1181 + $0xc] sm:$0xf]
        %v1496 = vld [vmem:[%s1181 + $0x10] sm:$0xf]
        %v1497 = vld [vmem:[%s1181 + $0x14] sm:$0xf]
        %v1498 = vld [vmem:[%s1181 + $0x18] sm:$0xf]
        %v1499 = vld [vmem:[%s1181 + $0x1c] sm:$0xf]
        %v1500 = vld [vmem:[%s1181 + $0x20] sm:$0xf]
        %v1501 = vld [vmem:[%s1181 + $0x24] sm:$0xf]
        %v1502 = vld [vmem:[%s1181 + $0x28] sm:$0xf]
        %v1503 = vld [vmem:[%s1181 + $0x2c] sm:$0xf]
        %v1504 = vld [vmem:[%s1181 + $0x30] sm:$0xf]
        %v1505 = vld [vmem:[%s1181 + $0x34] sm:$0xf]
        %v1506 = vld [vmem:[%s1181 + $0x38] sm:$0xf]
        %v1507 = vld [vmem:[%s1181 + $0x3c] sm:$0xf]
        %v1508 = vld [vmem:[%s1428] sm:$0x1]
        %v1510 = vlaneseq
        %v1511 = vshrl.u32 %v1510, 7
        %v1512 = vsub.s32 0, %v1511
        %v1513 = vrot.slane %v1508, %v1512
        %v1531 = vunpack.c.l.b16 %v1492
        %v1532 = vunpack.c.l.b16 %v1493
        %v1533 = vunpack.c.l.b16 %v1494
        %v1534 = vunpack.c.l.b16 %v1495
        %v1535 = vunpack.c.l.b16 %v1496
        %v1536 = vunpack.c.l.b16 %v1497
        %v1537 = vunpack.c.l.b16 %v1498
        %v1538 = vunpack.c.l.b16 %v1499
        %v1539 = vunpack.c.l.b16 %v1500
        %v1540 = vunpack.c.l.b16 %v1501
        %v1541 = vunpack.c.l.b16 %v1502
        %v1542 = vunpack.c.l.b16 %v1503
        %v1543 = vunpack.c.l.b16 %v1504
        %v1544 = vunpack.c.l.b16 %v1505
        %v1545 = vunpack.c.l.b16 %v1506
        %v1546 = vunpack.c.l.b16 %v1507
        %v1547 = vpack.c.b16 %v1532, %v1531
        %v1548 = vpack.c.b16 %v1534, %v1533
        %v1549 = vpack.c.b16 %v1536, %v1535
        %v1550 = vpack.c.b16 %v1538, %v1537
        %v1551 = vpack.c.b16 %v1540, %v1539
        %v1552 = vpack.c.b16 %v1542, %v1541
        %v1553 = vpack.c.b16 %v1544, %v1543
        %v1554 = vpack.c.b16 %v1546, %v1545
        %1563 = vmatprep.subr.bf16.mxu0 0
        %1564 = vmatpush1.bf16.msra.mxu0 %v1547
        %1565 = vmatprep.subr.bf16.mxu0 0
        %1566 = vmatpush1.bf16.msra.mxu0 %v1548
        %1567 = vmatprep.subr.bf16.mxu0 0
        %1568 = vmatpush1.bf16.msra.mxu0 %v1549
        %1569 = vmatprep.subr.bf16.mxu0 0
        %1570 = vmatpush1.bf16.msra.mxu0 %v1550
        %1571 = vmatprep.subr.bf16.mxu0 0
        %1572 = vmatpush1.bf16.msra.mxu0 %v1551
        %1573 = vmatprep.subr.bf16.mxu0 0
        %1574 = vmatpush1.bf16.msra.mxu0 %v1552
        %1575 = vmatprep.subr.bf16.mxu0 0
        %1576 = vmatpush1.bf16.msra.mxu0 %v1553
        %1577 = vmatprep.subr.bf16.mxu0 0
        %1578 = vmatpush1.bf16.msra.mxu0 %v1554
        %1579 = vmatprep.subr.bf16.mxu0 0
        %1580 = vmatpush1.bf16.msra.mxu0 0
        %1581 = vmatprep.subr.bf16.mxu0 0
        %1582 = vmatpush1.bf16.msra.mxu0 0
        %1583 = vmatprep.subr.bf16.mxu0 0
        %1584 = vmatpush1.bf16.msra.mxu0 0
        %1585 = vmatprep.subr.bf16.mxu0 0
        %1586 = vmatpush1.bf16.msra.mxu0 0
        %1587 = vmatprep.subr.bf16.mxu0 0
        %1588 = vmatpush1.bf16.msra.mxu0 0
        %1589 = vmatprep.subr.bf16.mxu0 0
        %1590 = vmatpush1.bf16.msra.mxu0 0
        %1591 = vmatprep.subr.bf16.mxu0 0
        %1592 = vmatpush1.bf16.msra.mxu0 0
        %1593 = vmatprep.subr.bf16.mxu0 0
        %1594 = vmatpush1.bf16.msra.mxu0 0
        %1595 = vmatprep.mubr.bf16.mxu0 0
        %1596 = vmatmul.mubr.bf16.gmra.mrb[0].mxu0 %v1490
        %v1597 = vpop.f32.mrb[0].mxu0
        %v1598 = vadd.f32 %v1513, %v1597
        %v1599 = vpop.f32.mrb[0].mxu0
        %v1600 = vpop.f32.mrb[0].mxu0
        %v1601 = vadd.f32 %v1513, %v1600
        %v1602 = vpop.f32.mrb[0].mxu0
        %1603 = vmatprep.mubr.bf16.mxu0 0
        %1604 = vmatmul.mubr.bf16.gmra.mrb[0].mxu0 %v1491
        %v1605 = vpop.f32.mrb[0].mxu0
        %v1606 = vadd.f32 %v1513, %v1605
        %v1607 = vpop.f32.mrb[0].mxu0
        %v1608 = vpop.f32.mrb[0].mxu0
        %v1609 = vpop.f32.mrb[0].mxu0
        %1610 = vdwg.mxu0
        %v1611 = vpack.c.bf16 %v1601, %v1598
        %v1612 = vpack.c.bf16 %v1606, %v1606
        %v1613 = vld [vmem:[%s1190] sm:$0xf]
        %v1614 = vld [vmem:[%s1190 + $0x4] sm:$0xf]
        %v1615 = vld [vmem:[%s1190 + $0x8] sm:$0xf]
        %v1616 = vld [vmem:[%s1190 + $0xc] sm:$0xf]
        %v1617 = vld [vmem:[%s1190 + $0x10] sm:$0xf]
        %v1618 = vld [vmem:[%s1190 + $0x14] sm:$0xf]
        %v1619 = vld [vmem:[%s1190 + $0x18] sm:$0xf]
        %v1620 = vld [vmem:[%s1190 + $0x1c] sm:$0xf]
        %v1621 = vld [vmem:[%s1190 + $0x20] sm:$0xf]
        %v1622 = vld [vmem:[%s1190 + $0x24] sm:$0xf]
        %v1623 = vld [vmem:[%s1190 + $0x28] sm:$0xf]
        %v1624 = vld [vmem:[%s1190 + $0x2c] sm:$0xf]
        %v1625 = vld [vmem:[%s1190 + $0x30] sm:$0xf]
        %v1626 = vld [vmem:[%s1190 + $0x34] sm:$0xf]
        %v1627 = vld [vmem:[%s1190 + $0x38] sm:$0xf]
        %v1628 = vld [vmem:[%s1190 + $0x3c] sm:$0xf]
        %v1629 = vld [vmem:[%s1431] sm:$0x1]
        %v1631 = vlaneseq
        %v1632 = vshrl.u32 %v1631, 7
        %v1633 = vsub.s32 0, %v1632
        %v1634 = vrot.slane %v1629, %v1633
        %v1652 = vunpack.c.l.b16 %v1613
        %v1653 = vunpack.c.l.b16 %v1614
        %v1654 = vunpack.c.l.b16 %v1615
        %v1655 = vunpack.c.l.b16 %v1616
        %v1656 = vunpack.c.l.b16 %v1617
        %v1657 = vunpack.c.l.b16 %v1618
        %v1658 = vunpack.c.l.b16 %v1619
        %v1659 = vunpack.c.l.b16 %v1620
        %v1660 = vunpack.c.l.b16 %v1621
        %v1661 = vunpack.c.l.b16 %v1622
        %v1662 = vunpack.c.l.b16 %v1623
        %v1663 = vunpack.c.l.b16 %v1624
        %v1664 = vunpack.c.l.b16 %v1625
        %v1665 = vunpack.c.l.b16 %v1626
        %v1666 = vunpack.c.l.b16 %v1627
        %v1667 = vunpack.c.l.b16 %v1628
        %v1668 = vpack.c.b16 %v1653, %v1652
        %v1669 = vpack.c.b16 %v1655, %v1654
        %v1670 = vpack.c.b16 %v1657, %v1656
        %v1671 = vpack.c.b16 %v1659, %v1658
        %v1672 = vpack.c.b16 %v1661, %v1660
        %v1673 = vpack.c.b16 %v1663, %v1662
        %v1674 = vpack.c.b16 %v1665, %v1664
        %v1675 = vpack.c.b16 %v1667, %v1666
        %1684 = vmatprep.subr.bf16.mxu0 0
        %1685 = vmatpush1.bf16.msra.mxu0 %v1668
        %1686 = vmatprep.subr.bf16.mxu0 0
        %1687 = vmatpush1.bf16.msra.mxu0 %v1669
        %1688 = vmatprep.subr.bf16.mxu0 0
        %1689 = vmatpush1.bf16.msra.mxu0 %v1670
        %1690 = vmatprep.subr.bf16.mxu0 0
        %1691 = vmatpush1.bf16.msra.mxu0 %v1671
        %1692 = vmatprep.subr.bf16.mxu0 0
        %1693 = vmatpush1.bf16.msra.mxu0 %v1672
        %1694 = vmatprep.subr.bf16.mxu0 0
        %1695 = vmatpush1.bf16.msra.mxu0 %v1673
        %1696 = vmatprep.subr.bf16.mxu0 0
        %1697 = vmatpush1.bf16.msra.mxu0 %v1674
        %1698 = vmatprep.subr.bf16.mxu0 0
        %1699 = vmatpush1.bf16.msra.mxu0 %v1675
        %1700 = vmatprep.subr.bf16.mxu0 0
        %1701 = vmatpush1.bf16.msra.mxu0 0
        %1702 = vmatprep.subr.bf16.mxu0 0
        %1703 = vmatpush1.bf16.msra.mxu0 0
        %1704 = vmatprep.subr.bf16.mxu0 0
        %1705 = vmatpush1.bf16.msra.mxu0 0
        %1706 = vmatprep.subr.bf16.mxu0 0
        %1707 = vmatpush1.bf16.msra.mxu0 0
        %1708 = vmatprep.subr.bf16.mxu0 0
        %1709 = vmatpush1.bf16.msra.mxu0 0
        %1710 = vmatprep.subr.bf16.mxu0 0
        %1711 = vmatpush1.bf16.msra.mxu0 0
        %1712 = vmatprep.subr.bf16.mxu0 0
        %1713 = vmatpush1.bf16.msra.mxu0 0
        %1714 = vmatprep.subr.bf16.mxu0 0
        %1715 = vmatpush1.bf16.msra.mxu0 0
        %1716 = vmatprep.mubr.bf16.mxu0 0
        %1717 = vmatmul.mubr.bf16.gmra.mrb[0].mxu0 %v1490
        %v1718 = vpop.f32.mrb[0].mxu0
        %v1719 = vadd.f32 %v1634, %v1718
        %v1720 = vpop.f32.mrb[0].mxu0
        %v1721 = vpop.f32.mrb[0].mxu0
        %v1722 = vadd.f32 %v1634, %v1721
        %v1723 = vpop.f32.mrb[0].mxu0
        %1724 = vmatprep.mubr.bf16.mxu0 0
        %1725 = vmatmul.mubr.bf16.gmra.mrb[0].mxu0 %v1491
        %v1726 = vpop.f32.mrb[0].mxu0
        %v1727 = vadd.f32 %v1634, %v1726
        %v1728 = vpop.f32.mrb[0].mxu0
        %v1729 = vpop.f32.mrb[0].mxu0
        %v1730 = vpop.f32.mrb[0].mxu0
        %1731 = vdwg.mxu0
        %v1732 = vpack.c.bf16 %v1722, %v1719
        %v1733 = vpack.c.bf16 %v1727, %v1727
        %v1734 = vld [vmem:[%s1199] sm:$0xf]
        %v1735 = vld [vmem:[%s1199 + $0x4] sm:$0xf]
        %v1736 = vld [vmem:[%s1199 + $0x8] sm:$0xf]
        %v1737 = vld [vmem:[%s1199 + $0xc] sm:$0xf]
        %v1738 = vld [vmem:[%s1199 + $0x10] sm:$0xf]
        %v1739 = vld [vmem:[%s1199 + $0x14] sm:$0xf]
        %v1740 = vld [vmem:[%s1199 + $0x18] sm:$0xf]
        %v1741 = vld [vmem:[%s1199 + $0x1c] sm:$0xf]
        %v1742 = vld [vmem:[%s1199 + $0x20] sm:$0xf]
        %v1743 = vld [vmem:[%s1199 + $0x24] sm:$0xf]
        %v1744 = vld [vmem:[%s1199 + $0x28] sm:$0xf]
        %v1745 = vld [vmem:[%s1199 + $0x2c] sm:$0xf]
        %v1746 = vld [vmem:[%s1199 + $0x30] sm:$0xf]
        %v1747 = vld [vmem:[%s1199 + $0x34] sm:$0xf]
        %v1748 = vld [vmem:[%s1199 + $0x38] sm:$0xf]
        %v1749 = vld [vmem:[%s1199 + $0x3c] sm:$0xf]
        %v1750 = vld [vmem:[%s1434] sm:$0x1]
        %v1752 = vlaneseq
        %v1753 = vshrl.u32 %v1752, 7
        %v1754 = vsub.s32 0, %v1753
        %v1755 = vrot.slane %v1750, %v1754
        %v1773 = vunpack.c.l.b16 %v1734
        %v1774 = vunpack.c.l.b16 %v1735
        %v1775 = vunpack.c.l.b16 %v1736
        %v1776 = vunpack.c.l.b16 %v1737
        %v1777 = vunpack.c.l.b16 %v1738
        %v1778 = vunpack.c.l.b16 %v1739
        %v1779 = vunpack.c.l.b16 %v1740
        %v1780 = vunpack.c.l.b16 %v1741
        %v1781 = vunpack.c.l.b16 %v1742
        %v1782 = vunpack.c.l.b16 %v1743
        %v1783 = vunpack.c.l.b16 %v1744
        %v1784 = vunpack.c.l.b16 %v1745
        %v1785 = vunpack.c.l.b16 %v1746
        %v1786 = vunpack.c.l.b16 %v1747
        %v1787 = vunpack.c.l.b16 %v1748
        %v1788 = vunpack.c.l.b16 %v1749
        %v1789 = vpack.c.b16 %v1774, %v1773
        %v1790 = vpack.c.b16 %v1776, %v1775
        %v1791 = vpack.c.b16 %v1778, %v1777
        %v1792 = vpack.c.b16 %v1780, %v1779
        %v1793 = vpack.c.b16 %v1782, %v1781
        %v1794 = vpack.c.b16 %v1784, %v1783
        %v1795 = vpack.c.b16 %v1786, %v1785
        %v1796 = vpack.c.b16 %v1788, %v1787
        %1805 = vmatprep.subr.bf16.mxu0 0
        %1806 = vmatpush1.bf16.msra.mxu0 %v1789
        %1807 = vmatprep.subr.bf16.mxu0 0
        %1808 = vmatpush1.bf16.msra.mxu0 %v1790
        %1809 = vmatprep.subr.bf16.mxu0 0
        %1810 = vmatpush1.bf16.msra.mxu0 %v1791
        %1811 = vmatprep.subr.bf16.mxu0 0
        %1812 = vmatpush1.bf16.msra.mxu0 %v1792
        %1813 = vmatprep.subr.bf16.mxu0 0
        %1814 = vmatpush1.bf16.msra.mxu0 %v1793
        %1815 = vmatprep.subr.bf16.mxu0 0
        %1816 = vmatpush1.bf16.msra.mxu0 %v1794
        %1817 = vmatprep.subr.bf16.mxu0 0
        %1818 = vmatpush1.bf16.msra.mxu0 %v1795
        %1819 = vmatprep.subr.bf16.mxu0 0
        %1820 = vmatpush1.bf16.msra.mxu0 %v1796
        %1821 = vmatprep.subr.bf16.mxu0 0
        %1822 = vmatpush1.bf16.msra.mxu0 0
        %1823 = vmatprep.subr.bf16.mxu0 0
        %1824 = vmatpush1.bf16.msra.mxu0 0
        %1825 = vmatprep.subr.bf16.mxu0 0
        %1826 = vmatpush1.bf16.msra.mxu0 0
        %1827 = vmatprep.subr.bf16.mxu0 0
        %1828 = vmatpush1.bf16.msra.mxu0 0
        %1829 = vmatprep.subr.bf16.mxu0 0
        %1830 = vmatpush1.bf16.msra.mxu0 0
        %1831 = vmatprep.subr.bf16.mxu0 0
        %1832 = vmatpush1.bf16.msra.mxu0 0
        %1833 = vmatprep.subr.bf16.mxu0 0
        %1834 = vmatpush1.bf16.msra.mxu0 0
        %1835 = vmatprep.subr.bf16.mxu0 0
        %1836 = vmatpush1.bf16.msra.mxu0 0
        %1837 = vmatprep.mubr.bf16.mxu0 0
        %1838 = vmatmul.mubr.bf16.gmra.mrb[0].mxu0 %v1490
        %v1839 = vpop.f32.mrb[0].mxu0
        %v1840 = vadd.f32 %v1755, %v1839
        %v1841 = vpop.f32.mrb[0].mxu0
        %v1842 = vpop.f32.mrb[0].mxu0
        %v1843 = vadd.f32 %v1755, %v1842
        %v1844 = vpop.f32.mrb[0].mxu0
        %1845 = vmatprep.mubr.bf16.mxu0 0
        %1846 = vmatmul.mubr.bf16.gmra.mrb[0].mxu0 %v1491
        %v1847 = vpop.f32.mrb[0].mxu0
        %v1848 = vadd.f32 %v1755, %v1847
        %v1849 = vpop.f32.mrb[0].mxu0
        %v1850 = vpop.f32.mrb[0].mxu0
        %v1851 = vpop.f32.mrb[0].mxu0
        %1852 = vdwg.mxu0
        %v1853 = vpack.c.bf16 %v1843, %v1840
        %v1854 = vpack.c.bf16 %v1848, %v1848
        %v1857 = vunpack.c.l.b16 %v1611
        %v1858 = vunpack.c.h.b16 %v1611
        %v1859 = vunpack.c.l.b16 %v1612
        %v1860 = vpack.c.b16 %v1857, %v1857
        %v1861 = vpack.c.b16 %v1858, %v1858
        %v1862 = vpack.c.b16 %v1859, %v1859
        %1863 = vrot.lane.b32.xlu0 %v1860, 96
        %v1864 = vpop.permute.xlu0 %1863
        %1865 = vrot.lane.b32.xlu0 %v1861, 96
        %v1866 = vpop.permute.xlu0 %1865
        %1867 = vrot.lane.b32.xlu0 %v1862, 96
        %v1868 = vpop.permute.xlu0 %1867
        %1869 = vrot.lane.b32.xlu0 %v1860, 64
        %v1870 = vpop.permute.xlu0 %1869
        %1871 = vrot.lane.b32.xlu0 %v1861, 64
        %v1872 = vpop.permute.xlu0 %1871
        %1873 = vrot.lane.b32.xlu0 %v1862, 64
        %v1874 = vpop.permute.xlu0 %1873
        %1875 = vrot.lane.b32.xlu0 %v1860, 32
        %v1876 = vpop.permute.xlu0 %1875
        %1877 = vrot.lane.b32.xlu0 %v1861, 32
        %v1878 = vpop.permute.xlu0 %1877
        %1879 = vrot.lane.b32.xlu0 %v1862, 32
        %v1880 = vpop.permute.xlu0 %1879
        %v1883 = vunpack.c.l.b16 %v1732
        %v1884 = vunpack.c.h.b16 %v1732
        %v1885 = vunpack.c.l.b16 %v1733
        %v1886 = vpack.c.b16 %v1883, %v1883
        %v1887 = vpack.c.b16 %v1884, %v1884
        %v1888 = vpack.c.b16 %v1885, %v1885
        %1889 = vrot.lane.b32.xlu0 %v1886, 96
        %v1890 = vpop.permute.xlu0 %1889
        %1891 = vrot.lane.b32.xlu0 %v1887, 96
        %v1892 = vpop.permute.xlu0 %1891
        %1893 = vrot.lane.b32.xlu0 %v1888, 96
        %v1894 = vpop.permute.xlu0 %1893
        %1895 = vrot.lane.b32.xlu0 %v1886, 64
        %v1896 = vpop.permute.xlu0 %1895
        %1897 = vrot.lane.b32.xlu0 %v1887, 64
        %v1898 = vpop.permute.xlu0 %1897
        %1899 = vrot.lane.b32.xlu0 %v1888, 64
        %v1900 = vpop.permute.xlu0 %1899
        %1901 = vrot.lane.b32.xlu0 %v1886, 32
        %v1902 = vpop.permute.xlu0 %1901
        %1903 = vrot.lane.b32.xlu0 %v1887, 32
        %v1904 = vpop.permute.xlu0 %1903
        %1905 = vrot.lane.b32.xlu0 %v1888, 32
        %v1906 = vpop.permute.xlu0 %1905
        %v1909 = vunpack.c.l.b16 %v1853
        %v1910 = vunpack.c.h.b16 %v1853
        %v1911 = vunpack.c.l.b16 %v1854
        %v1912 = vpack.c.b16 %v1909, %v1909
        %v1913 = vpack.c.b16 %v1910, %v1910
        %v1914 = vpack.c.b16 %v1911, %v1911
        %1915 = vrot.lane.b32.xlu0 %v1912, 96
        %v1916 = vpop.permute.xlu0 %1915
        %1917 = vrot.lane.b32.xlu0 %v1913, 96
        %v1918 = vpop.permute.xlu0 %1917
        %1919 = vrot.lane.b32.xlu0 %v1914, 96
        %v1920 = vpop.permute.xlu0 %1919
        %1921 = vrot.lane.b32.xlu0 %v1912, 64
        %v1922 = vpop.permute.xlu0 %1921
        %1923 = vrot.lane.b32.xlu0 %v1913, 64
        %v1924 = vpop.permute.xlu0 %1923
        %1925 = vrot.lane.b32.xlu0 %v1914, 64
        %v1926 = vpop.permute.xlu0 %1925
        %1927 = vrot.lane.b32.xlu0 %v1912, 32
        %v1928 = vpop.permute.xlu0 %1927
        %1929 = vrot.lane.b32.xlu0 %v1913, 32
        %v1930 = vpop.permute.xlu0 %1929
        %1931 = vrot.lane.b32.xlu0 %v1914, 32
        %v1932 = vpop.permute.xlu0 %1931
        %vm1933 = vcmask 261120
        %v1935 = vsel %vm1933, %v1860, 0
        %v1938 = vsel %vm1933, %v1886, 0
        %1940 = vmatprep.subr.bf16.mxu0 0
        %1941 = vmatpush1.bf16.xpose.msra.mxu0 %v1938
        %1942 = vmatprep.subr.bf16.mxu0 0
        %1943 = vmatpush1.bf16.xpose.msra.mxu0 0
        %1944 = vmatprep.subr.bf16.mxu0 0
        %1945 = vmatpush1.bf16.xpose.msra.mxu0 0
        %1946 = vmatprep.subr.bf16.mxu0 0
        %1947 = vmatpush1.bf16.xpose.msra.mxu0 0
        %1948 = vmatprep.subr.bf16.mxu0 0
        %1949 = vmatpush1.bf16.xpose.msra.mxu0 0
        %1950 = vmatprep.subr.bf16.mxu0 0
        %1951 = vmatpush1.bf16.xpose.msra.mxu0 0
        %1952 = vmatprep.subr.bf16.mxu0 0
        %1953 = vmatpush1.bf16.xpose.msra.mxu0 0
        %1954 = vmatprep.subr.bf16.mxu0 0
        %1955 = vmatpush1.bf16.xpose.msra.mxu0 0
        %1956 = vmatprep.subr.bf16.mxu0 0
        %1957 = vmatpush1.bf16.xpose.msra.mxu0 0
        %1958 = vmatprep.subr.bf16.mxu0 0
        %1959 = vmatpush1.bf16.xpose.msra.mxu0 0
        %1960 = vmatprep.subr.bf16.mxu0 0
        %1961 = vmatpush1.bf16.xpose.msra.mxu0 0
        %1962 = vmatprep.subr.bf16.mxu0 0
        %1963 = vmatpush1.bf16.xpose.msra.mxu0 0
        %1964 = vmatprep.subr.bf16.mxu0 0
        %1965 = vmatpush1.bf16.xpose.msra.mxu0 0
        %1966 = vmatprep.subr.bf16.mxu0 0
        %1967 = vmatpush1.bf16.xpose.msra.mxu0 0
        %1968 = vmatprep.subr.bf16.mxu0 0
        %1969 = vmatpush1.bf16.xpose.msra.mxu0 0
        %1970 = vmatprep.subr.bf16.mxu0 0
        %1971 = vmatpush1.bf16.xpose.msra.mxu0 0
        %1972 = vmatprep.mubr.bf16.mxu0 0
        %1973 = vmatmul.mubr.bf16.gmra.mrb[0].mxu0 %v1935
        %v1974 = vpop.f32.mrb[0].mxu0
        %v1975 = vadd.f32 0.0, %v1974
        %v1976 = vpop.f32.mrb[0].mxu0
        %v1977 = vpop.f32.mrb[0].mxu0
        %v1978 = vpop.f32.mrb[0].mxu0
        %1979 = vdwg.mxu0
        %v1981 = vsel %vm1933, %v1861, 0
        %v1984 = vsel %vm1933, %v1887, 0
        %1986 = vmatprep.subr.bf16.mxu0 0
        %1987 = vmatpush1.bf16.xpose.msra.mxu0 %v1984
        %1988 = vmatprep.subr.bf16.mxu0 0
        %1989 = vmatpush1.bf16.xpose.msra.mxu0 0
        %1990 = vmatprep.subr.bf16.mxu0 0
        %1991 = vmatpush1.bf16.xpose.msra.mxu0 0
        %1992 = vmatprep.subr.bf16.mxu0 0
        %1993 = vmatpush1.bf16.xpose.msra.mxu0 0
        %1994 = vmatprep.subr.bf16.mxu0 0
        %1995 = vmatpush1.bf16.xpose.msra.mxu0 0
        %1996 = vmatprep.subr.bf16.mxu0 0
        %1997 = vmatpush1.bf16.xpose.msra.mxu0 0
        %1998 = vmatprep.subr.bf16.mxu0 0
        %1999 = vmatpush1.bf16.xpose.msra.mxu0 0
        %2000 = vmatprep.subr.bf16.mxu0 0
        %2001 = vmatpush1.bf16.xpose.msra.mxu0 0
        %2002 = vmatprep.subr.bf16.mxu0 0
        %2003 = vmatpush1.bf16.xpose.msra.mxu0 0
        %2004 = vmatprep.subr.bf16.mxu0 0
        %2005 = vmatpush1.bf16.xpose.msra.mxu0 0
        %2006 = vmatprep.subr.bf16.mxu0 0
        %2007 = vmatpush1.bf16.xpose.msra.mxu0 0
        %2008 = vmatprep.subr.bf16.mxu0 0
        %2009 = vmatpush1.bf16.xpose.msra.mxu0 0
        %2010 = vmatprep.subr.bf16.mxu0 0
        %2011 = vmatpush1.bf16.xpose.msra.mxu0 0
        %2012 = vmatprep.subr.bf16.mxu0 0
        %2013 = vmatpush1.bf16.xpose.msra.mxu0 0
        %2014 = vmatprep.subr.bf16.mxu0 0
        %2015 = vmatpush1.bf16.xpose.msra.mxu0 0
        %2016 = vmatprep.subr.bf16.mxu0 0
        %2017 = vmatpush1.bf16.xpose.msra.mxu0 0
        %2018 = vmatprep.mubr.bf16.mxu0 0
        %2019 = vmatmul.mubr.bf16.gmra.mrb[0].mxu0 %v1981
        %v2020 = vpop.f32.mrb[0].mxu0
        %v2021 = vadd.f32 0.0, %v2020
        %v2022 = vpop.f32.mrb[0].mxu0
        %v2023 = vpop.f32.mrb[0].mxu0
        %v2024 = vpop.f32.mrb[0].mxu0
        %2025 = vdwg.mxu0
        %v2027 = vsel %vm1933, %v1862, 0
        %v2030 = vsel %vm1933, %v1888, 0
        %2032 = vmatprep.subr.bf16.mxu0 0
        %2033 = vmatpush1.bf16.xpose.msra.mxu0 %v2030
        %2034 = vmatprep.subr.bf16.mxu0 0
        %2035 = vmatpush1.bf16.xpose.msra.mxu0 0
        %2036 = vmatprep.subr.bf16.mxu0 0
        %2037 = vmatpush1.bf16.xpose.msra.mxu0 0
        %2038 = vmatprep.subr.bf16.mxu0 0
        %2039 = vmatpush1.bf16.xpose.msra.mxu0 0
        %2040 = vmatprep.subr.bf16.mxu0 0
        %2041 = vmatpush1.bf16.xpose.msra.mxu0 0
        %2042 = vmatprep.subr.bf16.mxu0 0
        %2043 = vmatpush1.bf16.xpose.msra.mxu0 0
        %2044 = vmatprep.subr.bf16.mxu0 0
        %2045 = vmatpush1.bf16.xpose.msra.mxu0 0
        %2046 = vmatprep.subr.bf16.mxu0 0
        %2047 = vmatpush1.bf16.xpose.msra.mxu0 0
        %2048 = vmatprep.subr.bf16.mxu0 0
        %2049 = vmatpush1.bf16.xpose.msra.mxu0 0
        %2050 = vmatprep.subr.bf16.mxu0 0
        %2051 = vmatpush1.bf16.xpose.msra.mxu0 0
        %2052 = vmatprep.subr.bf16.mxu0 0
        %2053 = vmatpush1.bf16.xpose.msra.mxu0 0
        %2054 = vmatprep.subr.bf16.mxu0 0
        %2055 = vmatpush1.bf16.xpose.msra.mxu0 0
        %2056 = vmatprep.subr.bf16.mxu0 0
        %2057 = vmatpush1.bf16.xpose.msra.mxu0 0
        %2058 = vmatprep.subr.bf16.mxu0 0
        %2059 = vmatpush1.bf16.xpose.msra.mxu0 0
        %2060 = vmatprep.subr.bf16.mxu0 0
        %2061 = vmatpush1.bf16.xpose.msra.mxu0 0
        %2062 = vmatprep.subr.bf16.mxu0 0
        %2063 = vmatpush1.bf16.xpose.msra.mxu0 0
        %2064 = vmatprep.mubr.bf16.mxu0 0
        %2065 = vmatmul.mubr.bf16.gmra.mrb[0].mxu0 %v2027
        %v2066 = vpop.f32.mrb[0].mxu0
        %v2067 = vadd.f32 0.0, %v2066
        %v2068 = vpop.f32.mrb[0].mxu0
        %v2069 = vpop.f32.mrb[0].mxu0
        %v2070 = vpop.f32.mrb[0].mxu0
        %2071 = vdwg.mxu0
        %v2073 = vsel %vm1933, %v1864, 0
        %v2076 = vsel %vm1933, %v1890, 0
        %2078 = vmatprep.subr.bf16.mxu0 0
        %2079 = vmatpush1.bf16.xpose.msra.mxu0 %v2076
        %2080 = vmatprep.subr.bf16.mxu0 0
        %2081 = vmatpush1.bf16.xpose.msra.mxu0 0
        %2082 = vmatprep.subr.bf16.mxu0 0
        %2083 = vmatpush1.bf16.xpose.msra.mxu0 0
        %2084 = vmatprep.subr.bf16.mxu0 0
        %2085 = vmatpush1.bf16.xpose.msra.mxu0 0
        %2086 = vmatprep.subr.bf16.mxu0 0
        %2087 = vmatpush1.bf16.xpose.msra.mxu0 0
        %2088 = vmatprep.subr.bf16.mxu0 0
        %2089 = vmatpush1.bf16.xpose.msra.mxu0 0
        %2090 = vmatprep.subr.bf16.mxu0 0
        %2091 = vmatpush1.bf16.xpose.msra.mxu0 0
        %2092 = vmatprep.subr.bf16.mxu0 0
        %2093 = vmatpush1.bf16.xpose.msra.mxu0 0
        %2094 = vmatprep.subr.bf16.mxu0 0
        %2095 = vmatpush1.bf16.xpose.msra.mxu0 0
        %2096 = vmatprep.subr.bf16.mxu0 0
        %2097 = vmatpush1.bf16.xpose.msra.mxu0 0
        %2098 = vmatprep.subr.bf16.mxu0 0
        %2099 = vmatpush1.bf16.xpose.msra.mxu0 0
        %2100 = vmatprep.subr.bf16.mxu0 0
        %2101 = vmatpush1.bf16.xpose.msra.mxu0 0
        %2102 = vmatprep.subr.bf16.mxu0 0
        %2103 = vmatpush1.bf16.xpose.msra.mxu0 0
        %2104 = vmatprep.subr.bf16.mxu0 0
        %2105 = vmatpush1.bf16.xpose.msra.mxu0 0
        %2106 = vmatprep.subr.bf16.mxu0 0
        %2107 = vmatpush1.bf16.xpose.msra.mxu0 0
        %2108 = vmatprep.subr.bf16.mxu0 0
        %2109 = vmatpush1.bf16.xpose.msra.mxu0 0
        %2110 = vmatprep.mubr.bf16.mxu0 0
        %2111 = vmatmul.mubr.bf16.gmra.mrb[0].mxu0 %v2073
        %v2112 = vpop.f32.mrb[0].mxu0
        %v2113 = vadd.f32 0.0, %v2112
        %v2114 = vpop.f32.mrb[0].mxu0
        %v2115 = vpop.f32.mrb[0].mxu0
        %v2116 = vpop.f32.mrb[0].mxu0
        %2117 = vdwg.mxu0
        %v2119 = vsel %vm1933, %v1866, 0
        %v2122 = vsel %vm1933, %v1892, 0
        %2124 = vmatprep.subr.bf16.mxu0 0
        %2125 = vmatpush1.bf16.xpose.msra.mxu0 %v2122
        %2126 = vmatprep.subr.bf16.mxu0 0
        %2127 = vmatpush1.bf16.xpose.msra.mxu0 0
        %2128 = vmatprep.subr.bf16.mxu0 0
        %2129 = vmatpush1.bf16.xpose.msra.mxu0 0
        %2130 = vmatprep.subr.bf16.mxu0 0
        %2131 = vmatpush1.bf16.xpose.msra.mxu0 0
        %2132 = vmatprep.subr.bf16.mxu0 0
        %2133 = vmatpush1.bf16.xpose.msra.mxu0 0
        %2134 = vmatprep.subr.bf16.mxu0 0
        %2135 = vmatpush1.bf16.xpose.msra.mxu0 0
        %2136 = vmatprep.subr.bf16.mxu0 0
        %2137 = vmatpush1.bf16.xpose.msra.mxu0 0
        %2138 = vmatprep.subr.bf16.mxu0 0
        %2139 = vmatpush1.bf16.xpose.msra.mxu0 0
        %2140 = vmatprep.subr.bf16.mxu0 0
        %2141 = vmatpush1.bf16.xpose.msra.mxu0 0
        %2142 = vmatprep.subr.bf16.mxu0 0
        %2143 = vmatpush1.bf16.xpose.msra.mxu0 0
        %2144 = vmatprep.subr.bf16.mxu0 0
        %2145 = vmatpush1.bf16.xpose.msra.mxu0 0
        %2146 = vmatprep.subr.bf16.mxu0 0
        %2147 = vmatpush1.bf16.xpose.msra.mxu0 0
        %2148 = vmatprep.subr.bf16.mxu0 0
        %2149 = vmatpush1.bf16.xpose.msra.mxu0 0
        %2150 = vmatprep.subr.bf16.mxu0 0
        %2151 = vmatpush1.bf16.xpose.msra.mxu0 0
        %2152 = vmatprep.subr.bf16.mxu0 0
        %2153 = vmatpush1.bf16.xpose.msra.mxu0 0
        %2154 = vmatprep.subr.bf16.mxu0 0
        %2155 = vmatpush1.bf16.xpose.msra.mxu0 0
        %2156 = vmatprep.mubr.bf16.mxu0 0
        %2157 = vmatmul.mubr.bf16.gmra.mrb[0].mxu0 %v2119
        %v2158 = vpop.f32.mrb[0].mxu0
        %v2159 = vadd.f32 0.0, %v2158
        %v2160 = vpop.f32.mrb[0].mxu0
        %v2161 = vpop.f32.mrb[0].mxu0
        %v2162 = vpop.f32.mrb[0].mxu0
        %2163 = vdwg.mxu0
        %v2165 = vsel %vm1933, %v1868, 0
        %v2168 = vsel %vm1933, %v1894, 0
        %2170 = vmatprep.subr.bf16.mxu0 0
        %2171 = vmatpush1.bf16.xpose.msra.mxu0 %v2168
        %2172 = vmatprep.subr.bf16.mxu0 0
        %2173 = vmatpush1.bf16.xpose.msra.mxu0 0
        %2174 = vmatprep.subr.bf16.mxu0 0
        %2175 = vmatpush1.bf16.xpose.msra.mxu0 0
        %2176 = vmatprep.subr.bf16.mxu0 0
        %2177 = vmatpush1.bf16.xpose.msra.mxu0 0
        %2178 = vmatprep.subr.bf16.mxu0 0
        %2179 = vmatpush1.bf16.xpose.msra.mxu0 0
        %2180 = vmatprep.subr.bf16.mxu0 0
        %2181 = vmatpush1.bf16.xpose.msra.mxu0 0
        %2182 = vmatprep.subr.bf16.mxu0 0
        %2183 = vmatpush1.bf16.xpose.msra.mxu0 0
        %2184 = vmatprep.subr.bf16.mxu0 0
        %2185 = vmatpush1.bf16.xpose.msra.mxu0 0
        %2186 = vmatprep.subr.bf16.mxu0 0
        %2187 = vmatpush1.bf16.xpose.msra.mxu0 0
        %2188 = vmatprep.subr.bf16.mxu0 0
        %2189 = vmatpush1.bf16.xpose.msra.mxu0 0
        %2190 = vmatprep.subr.bf16.mxu0 0
        %2191 = vmatpush1.bf16.xpose.msra.mxu0 0
        %2192 = vmatprep.subr.bf16.mxu0 0
        %2193 = vmatpush1.bf16.xpose.msra.mxu0 0
        %2194 = vmatprep.subr.bf16.mxu0 0
        %2195 = vmatpush1.bf16.xpose.msra.mxu0 0
        %2196 = vmatprep.subr.bf16.mxu0 0
        %2197 = vmatpush1.bf16.xpose.msra.mxu0 0
        %2198 = vmatprep.subr.bf16.mxu0 0
        %2199 = vmatpush1.bf16.xpose.msra.mxu0 0
        %2200 = vmatprep.subr.bf16.mxu0 0
        %2201 = vmatpush1.bf16.xpose.msra.mxu0 0
        %2202 = vmatprep.mubr.bf16.mxu0 0
        %2203 = vmatmul.mubr.bf16.gmra.mrb[0].mxu0 %v2165
        %v2204 = vpop.f32.mrb[0].mxu0
        %v2205 = vadd.f32 0.0, %v2204
        %v2206 = vpop.f32.mrb[0].mxu0
        %v2207 = vpop.f32.mrb[0].mxu0
        %v2208 = vpop.f32.mrb[0].mxu0
        %2209 = vdwg.mxu0
        %v2211 = vsel %vm1933, %v1870, 0
        %v2214 = vsel %vm1933, %v1896, 0
        %2216 = vmatprep.subr.bf16.mxu0 0
        %2217 = vmatpush1.bf16.xpose.msra.mxu0 %v2214
        %2218 = vmatprep.subr.bf16.mxu0 0
        %2219 = vmatpush1.bf16.xpose.msra.mxu0 0
        %2220 = vmatprep.subr.bf16.mxu0 0
        %2221 = vmatpush1.bf16.xpose.msra.mxu0 0
        %2222 = vmatprep.subr.bf16.mxu0 0
        %2223 = vmatpush1.bf16.xpose.msra.mxu0 0
        %2224 = vmatprep.subr.bf16.mxu0 0
        %2225 = vmatpush1.bf16.xpose.msra.mxu0 0
        %2226 = vmatprep.subr.bf16.mxu0 0
        %2227 = vmatpush1.bf16.xpose.msra.mxu0 0
        %2228 = vmatprep.subr.bf16.mxu0 0
        %2229 = vmatpush1.bf16.xpose.msra.mxu0 0
        %2230 = vmatprep.subr.bf16.mxu0 0
        %2231 = vmatpush1.bf16.xpose.msra.mxu0 0
        %2232 = vmatprep.subr.bf16.mxu0 0
        %2233 = vmatpush1.bf16.xpose.msra.mxu0 0
        %2234 = vmatprep.subr.bf16.mxu0 0
        %2235 = vmatpush1.bf16.xpose.msra.mxu0 0
        %2236 = vmatprep.subr.bf16.mxu0 0
        %2237 = vmatpush1.bf16.xpose.msra.mxu0 0
        %2238 = vmatprep.subr.bf16.mxu0 0
        %2239 = vmatpush1.bf16.xpose.msra.mxu0 0
        %2240 = vmatprep.subr.bf16.mxu0 0
        %2241 = vmatpush1.bf16.xpose.msra.mxu0 0
        %2242 = vmatprep.subr.bf16.mxu0 0
        %2243 = vmatpush1.bf16.xpose.msra.mxu0 0
        %2244 = vmatprep.subr.bf16.mxu0 0
        %2245 = vmatpush1.bf16.xpose.msra.mxu0 0
        %2246 = vmatprep.subr.bf16.mxu0 0
        %2247 = vmatpush1.bf16.xpose.msra.mxu0 0
        %2248 = vmatprep.mubr.bf16.mxu0 0
        %2249 = vmatmul.mubr.bf16.gmra.mrb[0].mxu0 %v2211
        %v2250 = vpop.f32.mrb[0].mxu0
        %v2251 = vadd.f32 0.0, %v2250
        %v2252 = vpop.f32.mrb[0].mxu0
        %v2253 = vpop.f32.mrb[0].mxu0
        %v2254 = vpop.f32.mrb[0].mxu0
        %2255 = vdwg.mxu0
        %v2257 = vsel %vm1933, %v1872, 0
        %v2260 = vsel %vm1933, %v1898, 0
        %2262 = vmatprep.subr.bf16.mxu0 0
        %2263 = vmatpush1.bf16.xpose.msra.mxu0 %v2260
        %2264 = vmatprep.subr.bf16.mxu0 0
        %2265 = vmatpush1.bf16.xpose.msra.mxu0 0
        %2266 = vmatprep.subr.bf16.mxu0 0
        %2267 = vmatpush1.bf16.xpose.msra.mxu0 0
        %2268 = vmatprep.subr.bf16.mxu0 0
        %2269 = vmatpush1.bf16.xpose.msra.mxu0 0
        %2270 = vmatprep.subr.bf16.mxu0 0
        %2271 = vmatpush1.bf16.xpose.msra.mxu0 0
        %2272 = vmatprep.subr.bf16.mxu0 0
        %2273 = vmatpush1.bf16.xpose.msra.mxu0 0
        %2274 = vmatprep.subr.bf16.mxu0 0
        %2275 = vmatpush1.bf16.xpose.msra.mxu0 0
        %2276 = vmatprep.subr.bf16.mxu0 0
        %2277 = vmatpush1.bf16.xpose.msra.mxu0 0
        %2278 = vmatprep.subr.bf16.mxu0 0
        %2279 = vmatpush1.bf16.xpose.msra.mxu0 0
        %2280 = vmatprep.subr.bf16.mxu0 0
        %2281 = vmatpush1.bf16.xpose.msra.mxu0 0
        %2282 = vmatprep.subr.bf16.mxu0 0
        %2283 = vmatpush1.bf16.xpose.msra.mxu0 0
        %2284 = vmatprep.subr.bf16.mxu0 0
        %2285 = vmatpush1.bf16.xpose.msra.mxu0 0
        %2286 = vmatprep.subr.bf16.mxu0 0
        %2287 = vmatpush1.bf16.xpose.msra.mxu0 0
        %2288 = vmatprep.subr.bf16.mxu0 0
        %2289 = vmatpush1.bf16.xpose.msra.mxu0 0
        %2290 = vmatprep.subr.bf16.mxu0 0
        %2291 = vmatpush1.bf16.xpose.msra.mxu0 0
        %2292 = vmatprep.subr.bf16.mxu0 0
        %2293 = vmatpush1.bf16.xpose.msra.mxu0 0
        %2294 = vmatprep.mubr.bf16.mxu0 0
        %2295 = vmatmul.mubr.bf16.gmra.mrb[0].mxu0 %v2257
        %v2296 = vpop.f32.mrb[0].mxu0
        %v2297 = vadd.f32 0.0, %v2296
        %v2298 = vpop.f32.mrb[0].mxu0
        %v2299 = vpop.f32.mrb[0].mxu0
        %v2300 = vpop.f32.mrb[0].mxu0
        %2301 = vdwg.mxu0
        %v2303 = vsel %vm1933, %v1874, 0
        %v2306 = vsel %vm1933, %v1900, 0
        %2308 = vmatprep.subr.bf16.mxu0 0
        %2309 = vmatpush1.bf16.xpose.msra.mxu0 %v2306
        %2310 = vmatprep.subr.bf16.mxu0 0
        %2311 = vmatpush1.bf16.xpose.msra.mxu0 0
        %2312 = vmatprep.subr.bf16.mxu0 0
        %2313 = vmatpush1.bf16.xpose.msra.mxu0 0
        %2314 = vmatprep.subr.bf16.mxu0 0
        %2315 = vmatpush1.bf16.xpose.msra.mxu0 0
        %2316 = vmatprep.subr.bf16.mxu0 0
        %2317 = vmatpush1.bf16.xpose.msra.mxu0 0
        %2318 = vmatprep.subr.bf16.mxu0 0
        %2319 = vmatpush1.bf16.xpose.msra.mxu0 0
        %2320 = vmatprep.subr.bf16.mxu0 0
        %2321 = vmatpush1.bf16.xpose.msra.mxu0 0
        %2322 = vmatprep.subr.bf16.mxu0 0
        %2323 = vmatpush1.bf16.xpose.msra.mxu0 0
        %2324 = vmatprep.subr.bf16.mxu0 0
        %2325 = vmatpush1.bf16.xpose.msra.mxu0 0
        %2326 = vmatprep.subr.bf16.mxu0 0
        %2327 = vmatpush1.bf16.xpose.msra.mxu0 0
        %2328 = vmatprep.subr.bf16.mxu0 0
        %2329 = vmatpush1.bf16.xpose.msra.mxu0 0
        %2330 = vmatprep.subr.bf16.mxu0 0
        %2331 = vmatpush1.bf16.xpose.msra.mxu0 0
        %2332 = vmatprep.subr.bf16.mxu0 0
        %2333 = vmatpush1.bf16.xpose.msra.mxu0 0
        %2334 = vmatprep.subr.bf16.mxu0 0
        %2335 = vmatpush1.bf16.xpose.msra.mxu0 0
        %2336 = vmatprep.subr.bf16.mxu0 0
        %2337 = vmatpush1.bf16.xpose.msra.mxu0 0
        %2338 = vmatprep.subr.bf16.mxu0 0
        %2339 = vmatpush1.bf16.xpose.msra.mxu0 0
        %2340 = vmatprep.mubr.bf16.mxu0 0
        %2341 = vmatmul.mubr.bf16.gmra.mrb[0].mxu0 %v2303
        %v2342 = vpop.f32.mrb[0].mxu0
        %v2343 = vadd.f32 0.0, %v2342
        %v2344 = vpop.f32.mrb[0].mxu0
        %v2345 = vpop.f32.mrb[0].mxu0
        %v2346 = vpop.f32.mrb[0].mxu0
        %2347 = vdwg.mxu0
        %v2349 = vsel %vm1933, %v1876, 0
        %v2352 = vsel %vm1933, %v1902, 0
        %2354 = vmatprep.subr.bf16.mxu0 0
        %2355 = vmatpush1.bf16.xpose.msra.mxu0 %v2352
        %2356 = vmatprep.subr.bf16.mxu0 0
        %2357 = vmatpush1.bf16.xpose.msra.mxu0 0
        %2358 = vmatprep.subr.bf16.mxu0 0
        %2359 = vmatpush1.bf16.xpose.msra.mxu0 0
        %2360 = vmatprep.subr.bf16.mxu0 0
        %2361 = vmatpush1.bf16.xpose.msra.mxu0 0
        %2362 = vmatprep.subr.bf16.mxu0 0
        %2363 = vmatpush1.bf16.xpose.msra.mxu0 0
        %2364 = vmatprep.subr.bf16.mxu0 0
        %2365 = vmatpush1.bf16.xpose.msra.mxu0 0
        %2366 = vmatprep.subr.bf16.mxu0 0
        %2367 = vmatpush1.bf16.xpose.msra.mxu0 0
        %2368 = vmatprep.subr.bf16.mxu0 0
        %2369 = vmatpush1.bf16.xpose.msra.mxu0 0
        %2370 = vmatprep.subr.bf16.mxu0 0
        %2371 = vmatpush1.bf16.xpose.msra.mxu0 0
        %2372 = vmatprep.subr.bf16.mxu0 0
        %2373 = vmatpush1.bf16.xpose.msra.mxu0 0
        %2374 = vmatprep.subr.bf16.mxu0 0
        %2375 = vmatpush1.bf16.xpose.msra.mxu0 0
        %2376 = vmatprep.subr.bf16.mxu0 0
        %2377 = vmatpush1.bf16.xpose.msra.mxu0 0
        %2378 = vmatprep.subr.bf16.mxu0 0
        %2379 = vmatpush1.bf16.xpose.msra.mxu0 0
        %2380 = vmatprep.subr.bf16.mxu0 0
        %2381 = vmatpush1.bf16.xpose.msra.mxu0 0
        %2382 = vmatprep.subr.bf16.mxu0 0
        %2383 = vmatpush1.bf16.xpose.msra.mxu0 0
        %2384 = vmatprep.subr.bf16.mxu0 0
        %2385 = vmatpush1.bf16.xpose.msra.mxu0 0
        %2386 = vmatprep.mubr.bf16.mxu0 0
        %2387 = vmatmul.mubr.bf16.gmra.mrb[0].mxu0 %v2349
        %v2388 = vpop.f32.mrb[0].mxu0
        %v2389 = vadd.f32 0.0, %v2388
        %v2390 = vpop.f32.mrb[0].mxu0
        %v2391 = vpop.f32.mrb[0].mxu0
        %v2392 = vpop.f32.mrb[0].mxu0
        %2393 = vdwg.mxu0
        %v2395 = vsel %vm1933, %v1878, 0
        %v2398 = vsel %vm1933, %v1904, 0
        %2400 = vmatprep.subr.bf16.mxu0 0
        %2401 = vmatpush1.bf16.xpose.msra.mxu0 %v2398
        %2402 = vmatprep.subr.bf16.mxu0 0
        %2403 = vmatpush1.bf16.xpose.msra.mxu0 0
        %2404 = vmatprep.subr.bf16.mxu0 0
        %2405 = vmatpush1.bf16.xpose.msra.mxu0 0
        %2406 = vmatprep.subr.bf16.mxu0 0
        %2407 = vmatpush1.bf16.xpose.msra.mxu0 0
        %2408 = vmatprep.subr.bf16.mxu0 0
        %2409 = vmatpush1.bf16.xpose.msra.mxu0 0
        %2410 = vmatprep.subr.bf16.mxu0 0
        %2411 = vmatpush1.bf16.xpose.msra.mxu0 0
        %2412 = vmatprep.subr.bf16.mxu0 0
        %2413 = vmatpush1.bf16.xpose.msra.mxu0 0
        %2414 = vmatprep.subr.bf16.mxu0 0
        %2415 = vmatpush1.bf16.xpose.msra.mxu0 0
        %2416 = vmatprep.subr.bf16.mxu0 0
        %2417 = vmatpush1.bf16.xpose.msra.mxu0 0
        %2418 = vmatprep.subr.bf16.mxu0 0
        %2419 = vmatpush1.bf16.xpose.msra.mxu0 0
        %2420 = vmatprep.subr.bf16.mxu0 0
        %2421 = vmatpush1.bf16.xpose.msra.mxu0 0
        %2422 = vmatprep.subr.bf16.mxu0 0
        %2423 = vmatpush1.bf16.xpose.msra.mxu0 0
        %2424 = vmatprep.subr.bf16.mxu0 0
        %2425 = vmatpush1.bf16.xpose.msra.mxu0 0
        %2426 = vmatprep.subr.bf16.mxu0 0
        %2427 = vmatpush1.bf16.xpose.msra.mxu0 0
        %2428 = vmatprep.subr.bf16.mxu0 0
        %2429 = vmatpush1.bf16.xpose.msra.mxu0 0
        %2430 = vmatprep.subr.bf16.mxu0 0
        %2431 = vmatpush1.bf16.xpose.msra.mxu0 0
        %2432 = vmatprep.mubr.bf16.mxu0 0
        %2433 = vmatmul.mubr.bf16.gmra.mrb[0].mxu0 %v2395
        %v2434 = vpop.f32.mrb[0].mxu0
        %v2435 = vadd.f32 0.0, %v2434
        %v2436 = vpop.f32.mrb[0].mxu0
        %v2437 = vpop.f32.mrb[0].mxu0
        %v2438 = vpop.f32.mrb[0].mxu0
        %2439 = vdwg.mxu0
        %v2441 = vsel %vm1933, %v1880, 0
        %v2444 = vsel %vm1933, %v1906, 0
        %2446 = vmatprep.subr.bf16.mxu0 0
        %2447 = vmatpush1.bf16.xpose.msra.mxu0 %v2444
        %2448 = vmatprep.subr.bf16.mxu0 0
        %2449 = vmatpush1.bf16.xpose.msra.mxu0 0
        %2450 = vmatprep.subr.bf16.mxu0 0
        %2451 = vmatpush1.bf16.xpose.msra.mxu0 0
        %2452 = vmatprep.subr.bf16.mxu0 0
        %2453 = vmatpush1.bf16.xpose.msra.mxu0 0
        %2454 = vmatprep.subr.bf16.mxu0 0
        %2455 = vmatpush1.bf16.xpose.msra.mxu0 0
        %2456 = vmatprep.subr.bf16.mxu0 0
        %2457 = vmatpush1.bf16.xpose.msra.mxu0 0
        %2458 = vmatprep.subr.bf16.mxu0 0
        %2459 = vmatpush1.bf16.xpose.msra.mxu0 0
        %2460 = vmatprep.subr.bf16.mxu0 0
        %2461 = vmatpush1.bf16.xpose.msra.mxu0 0
        %2462 = vmatprep.subr.bf16.mxu0 0
        %2463 = vmatpush1.bf16.xpose.msra.mxu0 0
        %2464 = vmatprep.subr.bf16.mxu0 0
        %2465 = vmatpush1.bf16.xpose.msra.mxu0 0
        %2466 = vmatprep.subr.bf16.mxu0 0
        %2467 = vmatpush1.bf16.xpose.msra.mxu0 0
        %2468 = vmatprep.subr.bf16.mxu0 0
        %2469 = vmatpush1.bf16.xpose.msra.mxu0 0
        %2470 = vmatprep.subr.bf16.mxu0 0
        %2471 = vmatpush1.bf16.xpose.msra.mxu0 0
        %2472 = vmatprep.subr.bf16.mxu0 0
        %2473 = vmatpush1.bf16.xpose.msra.mxu0 0
        %2474 = vmatprep.subr.bf16.mxu0 0
        %2475 = vmatpush1.bf16.xpose.msra.mxu0 0
        %2476 = vmatprep.subr.bf16.mxu0 0
        %2477 = vmatpush1.bf16.xpose.msra.mxu0 0
        %2478 = vmatprep.mubr.bf16.mxu0 0
        %2479 = vmatmul.mubr.bf16.gmra.mrb[0].mxu0 %v2441
        %v2480 = vpop.f32.mrb[0].mxu0
        %v2481 = vadd.f32 0.0, %v2480
        %v2482 = vpop.f32.mrb[0].mxu0
        %v2483 = vpop.f32.mrb[0].mxu0
        %v2484 = vpop.f32.mrb[0].mxu0
        %2485 = vdwg.mxu0
        %vm2486 = vcmask 64512
        %v2487 = vsel %vm2486, %v1975, -inf
        %2488 = vmax.xlane.f32.xlu0 %v2487
        %v2489 = vpop.xlane.xlu0 %2488
        %v2490 = vsel %vm2486, %v2021, -inf
        %2491 = vmax.xlane.f32.xlu0 %v2490
        %v2492 = vpop.xlane.xlu0 %2491
        %v2493 = vsel %vm2486, %v2067, -inf
        %2494 = vmax.xlane.f32.xlu0 %v2493
        %v2495 = vpop.xlane.xlu0 %2494
        %v2496 = vsel %vm2486, %v2113, -inf
        %2497 = vmax.xlane.f32.xlu0 %v2496
        %v2498 = vpop.xlane.xlu0 %2497
        %v2499 = vsel %vm2486, %v2159, -inf
        %2500 = vmax.xlane.f32.xlu0 %v2499
        %v2501 = vpop.xlane.xlu0 %2500
        %v2502 = vsel %vm2486, %v2205, -inf
        %2503 = vmax.xlane.f32.xlu0 %v2502
        %v2504 = vpop.xlane.xlu0 %2503
        %v2505 = vsel %vm2486, %v2251, -inf
        %2506 = vmax.xlane.f32.xlu0 %v2505
        %v2507 = vpop.xlane.xlu0 %2506
        %v2508 = vsel %vm2486, %v2297, -inf
        %2509 = vmax.xlane.f32.xlu0 %v2508
        %v2510 = vpop.xlane.xlu0 %2509
        %v2511 = vsel %vm2486, %v2343, -inf
        %2512 = vmax.xlane.f32.xlu0 %v2511
        %v2513 = vpop.xlane.xlu0 %2512
        %v2514 = vsel %vm2486, %v2389, -inf
        %2515 = vmax.xlane.f32.xlu0 %v2514
        %v2516 = vpop.xlane.xlu0 %2515
        %v2517 = vsel %vm2486, %v2435, -inf
        %2518 = vmax.xlane.f32.xlu0 %v2517
        %v2519 = vpop.xlane.xlu0 %2518
        %v2520 = vsel %vm2486, %v2481, -inf
        %2521 = vmax.xlane.f32.xlu0 %v2520
        %v2522 = vpop.xlane.xlu0 %2521
        %v2523 = vsub.f32 %v1975, %v2489
        %v2524 = vsub.f32 %v2021, %v2492
        %v2525 = vsub.f32 %v2067, %v2495
        %v2526 = vsub.f32 %v2113, %v2498
        %v2527 = vsub.f32 %v2159, %v2501
        %v2528 = vsub.f32 %v2205, %v2504
        %v2529 = vsub.f32 %v2251, %v2507
        %v2530 = vsub.f32 %v2297, %v2510
        %v2531 = vsub.f32 %v2343, %v2513
        %v2532 = vsub.f32 %v2389, %v2516
        %v2533 = vsub.f32 %v2435, %v2519
        %v2534 = vsub.f32 %v2481, %v2522
        %v2535 = vmul.f32 %v2523, 1.442695
        %v2536 = vpow.pop %v2535
        %v2537 = vmul.f32 %v2524, 1.442695
        %v2538 = vpow.pop %v2537
        %v2539 = vmul.f32 %v2525, 1.442695
        %v2540 = vpow.pop %v2539
        %v2541 = vmul.f32 %v2526, 1.442695
        %v2542 = vpow.pop %v2541
        %v2543 = vmul.f32 %v2527, 1.442695
        %v2544 = vpow.pop %v2543
        %v2545 = vmul.f32 %v2528, 1.442695
        %v2546 = vpow.pop %v2545
        %v2547 = vmul.f32 %v2529, 1.442695
        %v2548 = vpow.pop %v2547
        %v2549 = vmul.f32 %v2530, 1.442695
        %v2550 = vpow.pop %v2549
        %v2551 = vmul.f32 %v2531, 1.442695
        %v2552 = vpow.pop %v2551
        %v2553 = vmul.f32 %v2532, 1.442695
        %v2554 = vpow.pop %v2553
        %v2555 = vmul.f32 %v2533, 1.442695
        %v2556 = vpow.pop %v2555
        %v2557 = vmul.f32 %v2534, 1.442695
        %v2558 = vpow.pop %v2557
        %v2559 = vsel %vm2486, %v2536, 0.0
        %2560 = vadd.xlane.f32.xlu0 %v2559
        %v2561 = vpop.xlane.xlu0 %2560
        %v2562 = vsel %vm2486, %v2538, 0.0
        %2563 = vadd.xlane.f32.xlu0 %v2562
        %v2564 = vpop.xlane.xlu0 %2563
        %v2565 = vsel %vm2486, %v2540, 0.0
        %2566 = vadd.xlane.f32.xlu0 %v2565
        %v2567 = vpop.xlane.xlu0 %2566
        %v2568 = vsel %vm2486, %v2542, 0.0
        %2569 = vadd.xlane.f32.xlu0 %v2568
        %v2570 = vpop.xlane.xlu0 %2569
        %v2571 = vsel %vm2486, %v2544, 0.0
        %2572 = vadd.xlane.f32.xlu0 %v2571
        %v2573 = vpop.xlane.xlu0 %2572
        %v2574 = vsel %vm2486, %v2546, 0.0
        %2575 = vadd.xlane.f32.xlu0 %v2574
        %v2576 = vpop.xlane.xlu0 %2575
        %v2577 = vsel %vm2486, %v2548, 0.0
        %2578 = vadd.xlane.f32.xlu0 %v2577
        %v2579 = vpop.xlane.xlu0 %2578
        %v2580 = vsel %vm2486, %v2550, 0.0
        %2581 = vadd.xlane.f32.xlu0 %v2580
        %v2582 = vpop.xlane.xlu0 %2581
        %v2583 = vsel %vm2486, %v2552, 0.0
        %2584 = vadd.xlane.f32.xlu0 %v2583
        %v2585 = vpop.xlane.xlu0 %2584
        %v2586 = vsel %vm2486, %v2554, 0.0
        %2587 = vadd.xlane.f32.xlu0 %v2586
        %v2588 = vpop.xlane.xlu0 %2587
        %v2589 = vsel %vm2486, %v2556, 0.0
        %2590 = vadd.xlane.f32.xlu0 %v2589
        %v2591 = vpop.xlane.xlu0 %2590
        %v2592 = vsel %vm2486, %v2558, 0.0
        %2593 = vadd.xlane.f32.xlu0 %v2592
        %v2594 = vpop.xlane.xlu0 %2593
        %v2595 = vrcp.pop %v2561
        %v2596 = vrcp.pop %v2564
        %v2597 = vrcp.pop %v2567
        %v2598 = vrcp.pop %v2570
        %v2599 = vrcp.pop %v2573
        %v2600 = vrcp.pop %v2576
        %v2601 = vrcp.pop %v2579
        %v2602 = vrcp.pop %v2582
        %v2603 = vrcp.pop %v2585
        %v2604 = vrcp.pop %v2588
        %v2605 = vrcp.pop %v2591
        %v2606 = vrcp.pop %v2594
        %v2607 = vmul.f32 %v2536, %v2595
        %v2608 = vmul.f32 %v2538, %v2596
        %v2609 = vmul.f32 %v2540, %v2597
        %v2610 = vmul.f32 %v2542, %v2598
        %v2611 = vmul.f32 %v2544, %v2599
        %v2612 = vmul.f32 %v2546, %v2600
        %v2613 = vmul.f32 %v2548, %v2601
        %v2614 = vmul.f32 %v2550, %v2602
        %v2615 = vmul.f32 %v2552, %v2603
        %v2616 = vmul.f32 %v2554, %v2604
        %v2617 = vmul.f32 %v2556, %v2605
        %v2618 = vmul.f32 %v2558, %v2606
        %v2619 = vpack.c.bf16 %v2607, %v2607
        %v2620 = vpack.c.bf16 %v2608, %v2608
        %v2621 = vpack.c.bf16 %v2609, %v2609
        %v2622 = vpack.c.bf16 %v2610, %v2610
        %v2623 = vpack.c.bf16 %v2611, %v2611
        %v2624 = vpack.c.bf16 %v2612, %v2612
        %v2625 = vpack.c.bf16 %v2613, %v2613
        %v2626 = vpack.c.bf16 %v2614, %v2614
        %v2627 = vpack.c.bf16 %v2615, %v2615
        %v2628 = vpack.c.bf16 %v2616, %v2616
        %v2629 = vpack.c.bf16 %v2617, %v2617
        %v2630 = vpack.c.bf16 %v2618, %v2618
        %v2632 = vsel %vm2486, %v2619, 0
        %vm2634 = vcmask 1043456
        %v2636 = vsel %vm2634, %v1912, 0
        %2638 = vmatprep.subr.bf16.mxu0 0
        %2639 = vmatpush1.bf16.msra.mxu0 %v2636
        %2640 = vmatprep.subr.bf16.mxu0 0
        %2641 = vmatpush1.bf16.msra.mxu0 0
        %2642 = vmatprep.subr.bf16.mxu0 0
        %2643 = vmatpush1.bf16.msra.mxu0 0
        %2644 = vmatprep.subr.bf16.mxu0 0
        %2645 = vmatpush1.bf16.msra.mxu0 0
        %2646 = vmatprep.subr.bf16.mxu0 0
        %2647 = vmatpush1.bf16.msra.mxu0 0
        %2648 = vmatprep.subr.bf16.mxu0 0
        %2649 = vmatpush1.bf16.msra.mxu0 0
        %2650 = vmatprep.subr.bf16.mxu0 0
        %2651 = vmatpush1.bf16.msra.mxu0 0
        %2652 = vmatprep.subr.bf16.mxu0 0
        %2653 = vmatpush1.bf16.msra.mxu0 0
        %2654 = vmatprep.subr.bf16.mxu0 0
        %2655 = vmatpush1.bf16.msra.mxu0 0
        %2656 = vmatprep.subr.bf16.mxu0 0
        %2657 = vmatpush1.bf16.msra.mxu0 0
        %2658 = vmatprep.subr.bf16.mxu0 0
        %2659 = vmatpush1.bf16.msra.mxu0 0
        %2660 = vmatprep.subr.bf16.mxu0 0
        %2661 = vmatpush1.bf16.msra.mxu0 0
        %2662 = vmatprep.subr.bf16.mxu0 0
        %2663 = vmatpush1.bf16.msra.mxu0 0
        %2664 = vmatprep.subr.bf16.mxu0 0
        %2665 = vmatpush1.bf16.msra.mxu0 0
        %2666 = vmatprep.subr.bf16.mxu0 0
        %2667 = vmatpush1.bf16.msra.mxu0 0
        %2668 = vmatprep.subr.bf16.mxu0 0
        %2669 = vmatpush1.bf16.msra.mxu0 0
        %2670 = vmatprep.mubr.bf16.mxu0 0
        %2671 = vmatmul.mubr.bf16.gmra.mrb[0].mxu0 %v2632
        %v2672 = vpop.f32.mrb[0].mxu0
        %v2673 = vadd.f32 0.0, %v2672
        %v2674 = vpop.f32.mrb[0].mxu0
        %v2675 = vpop.f32.mrb[0].mxu0
        %v2676 = vpop.f32.mrb[0].mxu0
        %2677 = vdwg.mxu0
        %v2679 = vsel %vm2486, %v2620, 0
        %v2682 = vsel %vm2634, %v1913, 0
        %2684 = vmatprep.subr.bf16.mxu0 0
        %2685 = vmatpush1.bf16.msra.mxu0 %v2682
        %2686 = vmatprep.subr.bf16.mxu0 0
        %2687 = vmatpush1.bf16.msra.mxu0 0
        %2688 = vmatprep.subr.bf16.mxu0 0
        %2689 = vmatpush1.bf16.msra.mxu0 0
        %2690 = vmatprep.subr.bf16.mxu0 0
        %2691 = vmatpush1.bf16.msra.mxu0 0
        %2692 = vmatprep.subr.bf16.mxu0 0
        %2693 = vmatpush1.bf16.msra.mxu0 0
        %2694 = vmatprep.subr.bf16.mxu0 0
        %2695 = vmatpush1.bf16.msra.mxu0 0
        %2696 = vmatprep.subr.bf16.mxu0 0
        %2697 = vmatpush1.bf16.msra.mxu0 0
        %2698 = vmatprep.subr.bf16.mxu0 0
        %2699 = vmatpush1.bf16.msra.mxu0 0
        %2700 = vmatprep.subr.bf16.mxu0 0
        %2701 = vmatpush1.bf16.msra.mxu0 0
        %2702 = vmatprep.subr.bf16.mxu0 0
        %2703 = vmatpush1.bf16.msra.mxu0 0
        %2704 = vmatprep.subr.bf16.mxu0 0
        %2705 = vmatpush1.bf16.msra.mxu0 0
        %2706 = vmatprep.subr.bf16.mxu0 0
        %2707 = vmatpush1.bf16.msra.mxu0 0
        %2708 = vmatprep.subr.bf16.mxu0 0
        %2709 = vmatpush1.bf16.msra.mxu0 0
        %2710 = vmatprep.subr.bf16.mxu0 0
        %2711 = vmatpush1.bf16.msra.mxu0 0
        %2712 = vmatprep.subr.bf16.mxu0 0
        %2713 = vmatpush1.bf16.msra.mxu0 0
        %2714 = vmatprep.subr.bf16.mxu0 0
        %2715 = vmatpush1.bf16.msra.mxu0 0
        %2716 = vmatprep.mubr.bf16.mxu0 0
        %2717 = vmatmul.mubr.bf16.gmra.mrb[0].mxu0 %v2679
        %v2718 = vpop.f32.mrb[0].mxu0
        %v2719 = vadd.f32 0.0, %v2718
        %v2720 = vpop.f32.mrb[0].mxu0
        %v2721 = vpop.f32.mrb[0].mxu0
        %v2722 = vpop.f32.mrb[0].mxu0
        %2723 = vdwg.mxu0
        %v2725 = vsel %vm2486, %v2621, 0
        %v2728 = vsel %vm2634, %v1914, 0
        %2730 = vmatprep.subr.bf16.mxu0 0
        %2731 = vmatpush1.bf16.msra.mxu0 %v2728
        %2732 = vmatprep.subr.bf16.mxu0 0
        %2733 = vmatpush1.bf16.msra.mxu0 0
        %2734 = vmatprep.subr.bf16.mxu0 0
        %2735 = vmatpush1.bf16.msra.mxu0 0
        %2736 = vmatprep.subr.bf16.mxu0 0
        %2737 = vmatpush1.bf16.msra.mxu0 0
        %2738 = vmatprep.subr.bf16.mxu0 0
        %2739 = vmatpush1.bf16.msra.mxu0 0
        %2740 = vmatprep.subr.bf16.mxu0 0
        %2741 = vmatpush1.bf16.msra.mxu0 0
        %2742 = vmatprep.subr.bf16.mxu0 0
        %2743 = vmatpush1.bf16.msra.mxu0 0
        %2744 = vmatprep.subr.bf16.mxu0 0
        %2745 = vmatpush1.bf16.msra.mxu0 0
        %2746 = vmatprep.subr.bf16.mxu0 0
        %2747 = vmatpush1.bf16.msra.mxu0 0
        %2748 = vmatprep.subr.bf16.mxu0 0
        %2749 = vmatpush1.bf16.msra.mxu0 0
        %2750 = vmatprep.subr.bf16.mxu0 0
        %2751 = vmatpush1.bf16.msra.mxu0 0
        %2752 = vmatprep.subr.bf16.mxu0 0
        %2753 = vmatpush1.bf16.msra.mxu0 0
        %2754 = vmatprep.subr.bf16.mxu0 0
        %2755 = vmatpush1.bf16.msra.mxu0 0
        %2756 = vmatprep.subr.bf16.mxu0 0
        %2757 = vmatpush1.bf16.msra.mxu0 0
        %2758 = vmatprep.subr.bf16.mxu0 0
        %2759 = vmatpush1.bf16.msra.mxu0 0
        %2760 = vmatprep.subr.bf16.mxu0 0
        %2761 = vmatpush1.bf16.msra.mxu0 0
        %2762 = vmatprep.mubr.bf16.mxu0 0
        %2763 = vmatmul.mubr.bf16.gmra.mrb[0].mxu0 %v2725
        %v2764 = vpop.f32.mrb[0].mxu0
        %v2765 = vadd.f32 0.0, %v2764
        %v2766 = vpop.f32.mrb[0].mxu0
        %v2767 = vpop.f32.mrb[0].mxu0
        %v2768 = vpop.f32.mrb[0].mxu0
        %2769 = vdwg.mxu0
        %v2771 = vsel %vm2486, %v2622, 0
        %v2774 = vsel %vm2634, %v1916, 0
        %2776 = vmatprep.subr.bf16.mxu0 0
        %2777 = vmatpush1.bf16.msra.mxu0 %v2774
        %2778 = vmatprep.subr.bf16.mxu0 0
        %2779 = vmatpush1.bf16.msra.mxu0 0
        %2780 = vmatprep.subr.bf16.mxu0 0
        %2781 = vmatpush1.bf16.msra.mxu0 0
        %2782 = vmatprep.subr.bf16.mxu0 0
        %2783 = vmatpush1.bf16.msra.mxu0 0
        %2784 = vmatprep.subr.bf16.mxu0 0
        %2785 = vmatpush1.bf16.msra.mxu0 0
        %2786 = vmatprep.subr.bf16.mxu0 0
        %2787 = vmatpush1.bf16.msra.mxu0 0
        %2788 = vmatprep.subr.bf16.mxu0 0
        %2789 = vmatpush1.bf16.msra.mxu0 0
        %2790 = vmatprep.subr.bf16.mxu0 0
        %2791 = vmatpush1.bf16.msra.mxu0 0
        %2792 = vmatprep.subr.bf16.mxu0 0
        %2793 = vmatpush1.bf16.msra.mxu0 0
        %2794 = vmatprep.subr.bf16.mxu0 0
        %2795 = vmatpush1.bf16.msra.mxu0 0
        %2796 = vmatprep.subr.bf16.mxu0 0
        %2797 = vmatpush1.bf16.msra.mxu0 0
        %2798 = vmatprep.subr.bf16.mxu0 0
        %2799 = vmatpush1.bf16.msra.mxu0 0
        %2800 = vmatprep.subr.bf16.mxu0 0
        %2801 = vmatpush1.bf16.msra.mxu0 0
        %2802 = vmatprep.subr.bf16.mxu0 0
        %2803 = vmatpush1.bf16.msra.mxu0 0
        %2804 = vmatprep.subr.bf16.mxu0 0
        %2805 = vmatpush1.bf16.msra.mxu0 0
        %2806 = vmatprep.subr.bf16.mxu0 0
        %2807 = vmatpush1.bf16.msra.mxu0 0
        %2808 = vmatprep.mubr.bf16.mxu0 0
        %2809 = vmatmul.mubr.bf16.gmra.mrb[0].mxu0 %v2771
        %v2810 = vpop.f32.mrb[0].mxu0
        %v2811 = vadd.f32 0.0, %v2810
        %v2812 = vpop.f32.mrb[0].mxu0
        %v2813 = vpop.f32.mrb[0].mxu0
        %v2814 = vpop.f32.mrb[0].mxu0
        %2815 = vdwg.mxu0
        %v2817 = vsel %vm2486, %v2623, 0
        %v2820 = vsel %vm2634, %v1918, 0
        %2822 = vmatprep.subr.bf16.mxu0 0
        %2823 = vmatpush1.bf16.msra.mxu0 %v2820
        %2824 = vmatprep.subr.bf16.mxu0 0
        %2825 = vmatpush1.bf16.msra.mxu0 0
        %2826 = vmatprep.subr.bf16.mxu0 0
        %2827 = vmatpush1.bf16.msra.mxu0 0
        %2828 = vmatprep.subr.bf16.mxu0 0
        %2829 = vmatpush1.bf16.msra.mxu0 0
        %2830 = vmatprep.subr.bf16.mxu0 0
        %2831 = vmatpush1.bf16.msra.mxu0 0
        %2832 = vmatprep.subr.bf16.mxu0 0
        %2833 = vmatpush1.bf16.msra.mxu0 0
        %2834 = vmatprep.subr.bf16.mxu0 0
        %2835 = vmatpush1.bf16.msra.mxu0 0
        %2836 = vmatprep.subr.bf16.mxu0 0
        %2837 = vmatpush1.bf16.msra.mxu0 0
        %2838 = vmatprep.subr.bf16.mxu0 0
        %2839 = vmatpush1.bf16.msra.mxu0 0
        %2840 = vmatprep.subr.bf16.mxu0 0
        %2841 = vmatpush1.bf16.msra.mxu0 0
        %2842 = vmatprep.subr.bf16.mxu0 0
        %2843 = vmatpush1.bf16.msra.mxu0 0
        %2844 = vmatprep.subr.bf16.mxu0 0
        %2845 = vmatpush1.bf16.msra.mxu0 0
        %2846 = vmatprep.subr.bf16.mxu0 0
        %2847 = vmatpush1.bf16.msra.mxu0 0
        %2848 = vmatprep.subr.bf16.mxu0 0
        %2849 = vmatpush1.bf16.msra.mxu0 0
        %2850 = vmatprep.subr.bf16.mxu0 0
        %2851 = vmatpush1.bf16.msra.mxu0 0
        %2852 = vmatprep.subr.bf16.mxu0 0
        %2853 = vmatpush1.bf16.msra.mxu0 0
        %2854 = vmatprep.mubr.bf16.mxu0 0
        %2855 = vmatmul.mubr.bf16.gmra.mrb[0].mxu0 %v2817
        %v2856 = vpop.f32.mrb[0].mxu0
        %v2857 = vadd.f32 0.0, %v2856
        %v2858 = vpop.f32.mrb[0].mxu0
        %v2859 = vpop.f32.mrb[0].mxu0
        %v2860 = vpop.f32.mrb[0].mxu0
        %2861 = vdwg.mxu0
        %v2863 = vsel %vm2486, %v2624, 0
        %v2866 = vsel %vm2634, %v1920, 0
        %2868 = vmatprep.subr.bf16.mxu0 0
        %2869 = vmatpush1.bf16.msra.mxu0 %v2866
        %2870 = vmatprep.subr.bf16.mxu0 0
        %2871 = vmatpush1.bf16.msra.mxu0 0
        %2872 = vmatprep.subr.bf16.mxu0 0
        %2873 = vmatpush1.bf16.msra.mxu0 0
        %2874 = vmatprep.subr.bf16.mxu0 0
        %2875 = vmatpush1.bf16.msra.mxu0 0
        %2876 = vmatprep.subr.bf16.mxu0 0
        %2877 = vmatpush1.bf16.msra.mxu0 0
        %2878 = vmatprep.subr.bf16.mxu0 0
        %2879 = vmatpush1.bf16.msra.mxu0 0
        %2880 = vmatprep.subr.bf16.mxu0 0
        %2881 = vmatpush1.bf16.msra.mxu0 0
        %2882 = vmatprep.subr.bf16.mxu0 0
        %2883 = vmatpush1.bf16.msra.mxu0 0
        %2884 = vmatprep.subr.bf16.mxu0 0
        %2885 = vmatpush1.bf16.msra.mxu0 0
        %2886 = vmatprep.subr.bf16.mxu0 0
        %2887 = vmatpush1.bf16.msra.mxu0 0
        %2888 = vmatprep.subr.bf16.mxu0 0
        %2889 = vmatpush1.bf16.msra.mxu0 0
        %2890 = vmatprep.subr.bf16.mxu0 0
        %2891 = vmatpush1.bf16.msra.mxu0 0
        %2892 = vmatprep.subr.bf16.mxu0 0
        %2893 = vmatpush1.bf16.msra.mxu0 0
        %2894 = vmatprep.subr.bf16.mxu0 0
        %2895 = vmatpush1.bf16.msra.mxu0 0
        %2896 = vmatprep.subr.bf16.mxu0 0
        %2897 = vmatpush1.bf16.msra.mxu0 0
        %2898 = vmatprep.subr.bf16.mxu0 0
        %2899 = vmatpush1.bf16.msra.mxu0 0
        %2900 = vmatprep.mubr.bf16.mxu0 0
        %2901 = vmatmul.mubr.bf16.gmra.mrb[0].mxu0 %v2863
        %v2902 = vpop.f32.mrb[0].mxu0
        %v2903 = vadd.f32 0.0, %v2902
        %v2904 = vpop.f32.mrb[0].mxu0
        %v2905 = vpop.f32.mrb[0].mxu0
        %v2906 = vpop.f32.mrb[0].mxu0
        %2907 = vdwg.mxu0
        %v2909 = vsel %vm2486, %v2625, 0
        %v2912 = vsel %vm2634, %v1922, 0
        %2914 = vmatprep.subr.bf16.mxu0 0
        %2915 = vmatpush1.bf16.msra.mxu0 %v2912
        %2916 = vmatprep.subr.bf16.mxu0 0
        %2917 = vmatpush1.bf16.msra.mxu0 0
        %2918 = vmatprep.subr.bf16.mxu0 0
        %2919 = vmatpush1.bf16.msra.mxu0 0
        %2920 = vmatprep.subr.bf16.mxu0 0
        %2921 = vmatpush1.bf16.msra.mxu0 0
        %2922 = vmatprep.subr.bf16.mxu0 0
        %2923 = vmatpush1.bf16.msra.mxu0 0
        %2924 = vmatprep.subr.bf16.mxu0 0
        %2925 = vmatpush1.bf16.msra.mxu0 0
        %2926 = vmatprep.subr.bf16.mxu0 0
        %2927 = vmatpush1.bf16.msra.mxu0 0
        %2928 = vmatprep.subr.bf16.mxu0 0
        %2929 = vmatpush1.bf16.msra.mxu0 0
        %2930 = vmatprep.subr.bf16.mxu0 0
        %2931 = vmatpush1.bf16.msra.mxu0 0
        %2932 = vmatprep.subr.bf16.mxu0 0
        %2933 = vmatpush1.bf16.msra.mxu0 0
        %2934 = vmatprep.subr.bf16.mxu0 0
        %2935 = vmatpush1.bf16.msra.mxu0 0
        %2936 = vmatprep.subr.bf16.mxu0 0
        %2937 = vmatpush1.bf16.msra.mxu0 0
        %2938 = vmatprep.subr.bf16.mxu0 0
        %2939 = vmatpush1.bf16.msra.mxu0 0
        %2940 = vmatprep.subr.bf16.mxu0 0
        %2941 = vmatpush1.bf16.msra.mxu0 0
        %2942 = vmatprep.subr.bf16.mxu0 0
        %2943 = vmatpush1.bf16.msra.mxu0 0
        %2944 = vmatprep.subr.bf16.mxu0 0
        %2945 = vmatpush1.bf16.msra.mxu0 0
        %2946 = vmatprep.mubr.bf16.mxu0 0
        %2947 = vmatmul.mubr.bf16.gmra.mrb[0].mxu0 %v2909
        %v2948 = vpop.f32.mrb[0].mxu0
        %v2949 = vadd.f32 0.0, %v2948
        %v2950 = vpop.f32.mrb[0].mxu0
        %v2951 = vpop.f32.mrb[0].mxu0
        %v2952 = vpop.f32.mrb[0].mxu0
        %2953 = vdwg.mxu0
        %v2955 = vsel %vm2486, %v2626, 0
        %v2958 = vsel %vm2634, %v1924, 0
        %2960 = vmatprep.subr.bf16.mxu0 0
        %2961 = vmatpush1.bf16.msra.mxu0 %v2958
        %2962 = vmatprep.subr.bf16.mxu0 0
        %2963 = vmatpush1.bf16.msra.mxu0 0
        %2964 = vmatprep.subr.bf16.mxu0 0
        %2965 = vmatpush1.bf16.msra.mxu0 0
        %2966 = vmatprep.subr.bf16.mxu0 0
        %2967 = vmatpush1.bf16.msra.mxu0 0
        %2968 = vmatprep.subr.bf16.mxu0 0
        %2969 = vmatpush1.bf16.msra.mxu0 0
        %2970 = vmatprep.subr.bf16.mxu0 0
        %2971 = vmatpush1.bf16.msra.mxu0 0
        %2972 = vmatprep.subr.bf16.mxu0 0
        %2973 = vmatpush1.bf16.msra.mxu0 0
        %2974 = vmatprep.subr.bf16.mxu0 0
        %2975 = vmatpush1.bf16.msra.mxu0 0
        %2976 = vmatprep.subr.bf16.mxu0 0
        %2977 = vmatpush1.bf16.msra.mxu0 0
        %2978 = vmatprep.subr.bf16.mxu0 0
        %2979 = vmatpush1.bf16.msra.mxu0 0
        %2980 = vmatprep.subr.bf16.mxu0 0
        %2981 = vmatpush1.bf16.msra.mxu0 0
        %2982 = vmatprep.subr.bf16.mxu0 0
        %2983 = vmatpush1.bf16.msra.mxu0 0
        %2984 = vmatprep.subr.bf16.mxu0 0
        %2985 = vmatpush1.bf16.msra.mxu0 0
        %2986 = vmatprep.subr.bf16.mxu0 0
        %2987 = vmatpush1.bf16.msra.mxu0 0
        %2988 = vmatprep.subr.bf16.mxu0 0
        %2989 = vmatpush1.bf16.msra.mxu0 0
        %2990 = vmatprep.subr.bf16.mxu0 0
        %2991 = vmatpush1.bf16.msra.mxu0 0
        %2992 = vmatprep.mubr.bf16.mxu0 0
        %2993 = vmatmul.mubr.bf16.gmra.mrb[0].mxu0 %v2955
        %v2994 = vpop.f32.mrb[0].mxu0
        %v2995 = vadd.f32 0.0, %v2994
        %v2996 = vpop.f32.mrb[0].mxu0
        %v2997 = vpop.f32.mrb[0].mxu0
        %v2998 = vpop.f32.mrb[0].mxu0
        %2999 = vdwg.mxu0
        %v3001 = vsel %vm2486, %v2627, 0
        %v3004 = vsel %vm2634, %v1926, 0
        %3006 = vmatprep.subr.bf16.mxu0 0
        %3007 = vmatpush1.bf16.msra.mxu0 %v3004
        %3008 = vmatprep.subr.bf16.mxu0 0
        %3009 = vmatpush1.bf16.msra.mxu0 0
        %3010 = vmatprep.subr.bf16.mxu0 0
        %3011 = vmatpush1.bf16.msra.mxu0 0
        %3012 = vmatprep.subr.bf16.mxu0 0
        %3013 = vmatpush1.bf16.msra.mxu0 0
        %3014 = vmatprep.subr.bf16.mxu0 0
        %3015 = vmatpush1.bf16.msra.mxu0 0
        %3016 = vmatprep.subr.bf16.mxu0 0
        %3017 = vmatpush1.bf16.msra.mxu0 0
        %3018 = vmatprep.subr.bf16.mxu0 0
        %3019 = vmatpush1.bf16.msra.mxu0 0
        %3020 = vmatprep.subr.bf16.mxu0 0
        %3021 = vmatpush1.bf16.msra.mxu0 0
        %3022 = vmatprep.subr.bf16.mxu0 0
        %3023 = vmatpush1.bf16.msra.mxu0 0
        %3024 = vmatprep.subr.bf16.mxu0 0
        %3025 = vmatpush1.bf16.msra.mxu0 0
        %3026 = vmatprep.subr.bf16.mxu0 0
        %3027 = vmatpush1.bf16.msra.mxu0 0
        %3028 = vmatprep.subr.bf16.mxu0 0
        %3029 = vmatpush1.bf16.msra.mxu0 0
        %3030 = vmatprep.subr.bf16.mxu0 0
        %3031 = vmatpush1.bf16.msra.mxu0 0
        %3032 = vmatprep.subr.bf16.mxu0 0
        %3033 = vmatpush1.bf16.msra.mxu0 0
        %3034 = vmatprep.subr.bf16.mxu0 0
        %3035 = vmatpush1.bf16.msra.mxu0 0
        %3036 = vmatprep.subr.bf16.mxu0 0
        %3037 = vmatpush1.bf16.msra.mxu0 0
        %3038 = vmatprep.mubr.bf16.mxu0 0
        %3039 = vmatmul.mubr.bf16.gmra.mrb[0].mxu0 %v3001
        %v3040 = vpop.f32.mrb[0].mxu0
        %v3041 = vadd.f32 0.0, %v3040
        %v3042 = vpop.f32.mrb[0].mxu0
        %v3043 = vpop.f32.mrb[0].mxu0
        %v3044 = vpop.f32.mrb[0].mxu0
        %3045 = vdwg.mxu0
        %v3047 = vsel %vm2486, %v2628, 0
        %v3050 = vsel %vm2634, %v1928, 0
        %3052 = vmatprep.subr.bf16.mxu0 0
        %3053 = vmatpush1.bf16.msra.mxu0 %v3050
        %3054 = vmatprep.subr.bf16.mxu0 0
        %3055 = vmatpush1.bf16.msra.mxu0 0
        %3056 = vmatprep.subr.bf16.mxu0 0
        %3057 = vmatpush1.bf16.msra.mxu0 0
        %3058 = vmatprep.subr.bf16.mxu0 0
        %3059 = vmatpush1.bf16.msra.mxu0 0
        %3060 = vmatprep.subr.bf16.mxu0 0
        %3061 = vmatpush1.bf16.msra.mxu0 0
        %3062 = vmatprep.subr.bf16.mxu0 0
        %3063 = vmatpush1.bf16.msra.mxu0 0
        %3064 = vmatprep.subr.bf16.mxu0 0
        %3065 = vmatpush1.bf16.msra.mxu0 0
        %3066 = vmatprep.subr.bf16.mxu0 0
        %3067 = vmatpush1.bf16.msra.mxu0 0
        %3068 = vmatprep.subr.bf16.mxu0 0
        %3069 = vmatpush1.bf16.msra.mxu0 0
        %3070 = vmatprep.subr.bf16.mxu0 0
        %3071 = vmatpush1.bf16.msra.mxu0 0
        %3072 = vmatprep.subr.bf16.mxu0 0
        %3073 = vmatpush1.bf16.msra.mxu0 0
        %3074 = vmatprep.subr.bf16.mxu0 0
        %3075 = vmatpush1.bf16.msra.mxu0 0
        %3076 = vmatprep.subr.bf16.mxu0 0
        %3077 = vmatpush1.bf16.msra.mxu0 0
        %3078 = vmatprep.subr.bf16.mxu0 0
        %3079 = vmatpush1.bf16.msra.mxu0 0
        %3080 = vmatprep.subr.bf16.mxu0 0
        %3081 = vmatpush1.bf16.msra.mxu0 0
        %3082 = vmatprep.subr.bf16.mxu0 0
        %3083 = vmatpush1.bf16.msra.mxu0 0
        %3084 = vmatprep.mubr.bf16.mxu0 0
        %3085 = vmatmul.mubr.bf16.gmra.mrb[0].mxu0 %v3047
        %v3086 = vpop.f32.mrb[0].mxu0
        %v3087 = vadd.f32 0.0, %v3086
        %v3088 = vpop.f32.mrb[0].mxu0
        %v3089 = vpop.f32.mrb[0].mxu0
        %v3090 = vpop.f32.mrb[0].mxu0
        %3091 = vdwg.mxu0
        %v3093 = vsel %vm2486, %v2629, 0
        %v3096 = vsel %vm2634, %v1930, 0
        %3098 = vmatprep.subr.bf16.mxu0 0
        %3099 = vmatpush1.bf16.msra.mxu0 %v3096
        %3100 = vmatprep.subr.bf16.mxu0 0
        %3101 = vmatpush1.bf16.msra.mxu0 0
        %3102 = vmatprep.subr.bf16.mxu0 0
        %3103 = vmatpush1.bf16.msra.mxu0 0
        %3104 = vmatprep.subr.bf16.mxu0 0
        %3105 = vmatpush1.bf16.msra.mxu0 0
        %3106 = vmatprep.subr.bf16.mxu0 0
        %3107 = vmatpush1.bf16.msra.mxu0 0
        %3108 = vmatprep.subr.bf16.mxu0 0
        %3109 = vmatpush1.bf16.msra.mxu0 0
        %3110 = vmatprep.subr.bf16.mxu0 0
        %3111 = vmatpush1.bf16.msra.mxu0 0
        %3112 = vmatprep.subr.bf16.mxu0 0
        %3113 = vmatpush1.bf16.msra.mxu0 0
        %3114 = vmatprep.subr.bf16.mxu0 0
        %3115 = vmatpush1.bf16.msra.mxu0 0
        %3116 = vmatprep.subr.bf16.mxu0 0
        %3117 = vmatpush1.bf16.msra.mxu0 0
        %3118 = vmatprep.subr.bf16.mxu0 0
        %3119 = vmatpush1.bf16.msra.mxu0 0
        %3120 = vmatprep.subr.bf16.mxu0 0
        %3121 = vmatpush1.bf16.msra.mxu0 0
        %3122 = vmatprep.subr.bf16.mxu0 0
        %3123 = vmatpush1.bf16.msra.mxu0 0
        %3124 = vmatprep.subr.bf16.mxu0 0
        %3125 = vmatpush1.bf16.msra.mxu0 0
        %3126 = vmatprep.subr.bf16.mxu0 0
        %3127 = vmatpush1.bf16.msra.mxu0 0
        %3128 = vmatprep.subr.bf16.mxu0 0
        %3129 = vmatpush1.bf16.msra.mxu0 0
        %3130 = vmatprep.mubr.bf16.mxu0 0
        %3131 = vmatmul.mubr.bf16.gmra.mrb[0].mxu0 %v3093
        %v3132 = vpop.f32.mrb[0].mxu0
        %v3133 = vadd.f32 0.0, %v3132
        %v3134 = vpop.f32.mrb[0].mxu0
        %v3135 = vpop.f32.mrb[0].mxu0
        %v3136 = vpop.f32.mrb[0].mxu0
        %3137 = vdwg.mxu0
        %v3139 = vsel %vm2486, %v2630, 0
        %v3142 = vsel %vm2634, %v1932, 0
        %3144 = vmatprep.subr.bf16.mxu0 0
        %3145 = vmatpush1.bf16.msra.mxu0 %v3142
        %3146 = vmatprep.subr.bf16.mxu0 0
        %3147 = vmatpush1.bf16.msra.mxu0 0
        %3148 = vmatprep.subr.bf16.mxu0 0
        %3149 = vmatpush1.bf16.msra.mxu0 0
        %3150 = vmatprep.subr.bf16.mxu0 0
        %3151 = vmatpush1.bf16.msra.mxu0 0
        %3152 = vmatprep.subr.bf16.mxu0 0
        %3153 = vmatpush1.bf16.msra.mxu0 0
        %3154 = vmatprep.subr.bf16.mxu0 0
        %3155 = vmatpush1.bf16.msra.mxu0 0
        %3156 = vmatprep.subr.bf16.mxu0 0
        %3157 = vmatpush1.bf16.msra.mxu0 0
        %3158 = vmatprep.subr.bf16.mxu0 0
        %3159 = vmatpush1.bf16.msra.mxu0 0
        %3160 = vmatprep.subr.bf16.mxu0 0
        %3161 = vmatpush1.bf16.msra.mxu0 0
        %3162 = vmatprep.subr.bf16.mxu0 0
        %3163 = vmatpush1.bf16.msra.mxu0 0
        %3164 = vmatprep.subr.bf16.mxu0 0
        %3165 = vmatpush1.bf16.msra.mxu0 0
        %3166 = vmatprep.subr.bf16.mxu0 0
        %3167 = vmatpush1.bf16.msra.mxu0 0
        %3168 = vmatprep.subr.bf16.mxu0 0
        %3169 = vmatpush1.bf16.msra.mxu0 0
        %3170 = vmatprep.subr.bf16.mxu0 0
        %3171 = vmatpush1.bf16.msra.mxu0 0
        %3172 = vmatprep.subr.bf16.mxu0 0
        %3173 = vmatpush1.bf16.msra.mxu0 0
        %3174 = vmatprep.subr.bf16.mxu0 0
        %3175 = vmatpush1.bf16.msra.mxu0 0
        %3176 = vmatprep.mubr.bf16.mxu0 0
        %3177 = vmatmul.mubr.bf16.gmra.mrb[0].mxu0 %v3139
        %v3178 = vpop.f32.mrb[0].mxu0
        %v3179 = vadd.f32 0.0, %v3178
        %v3180 = vpop.f32.mrb[0].mxu0
        %v3181 = vpop.f32.mrb[0].mxu0
        %v3182 = vpop.f32.mrb[0].mxu0
        %3183 = vdwg.mxu0
        %v3184 = vpack.c.bf16 %v2673, %v2673
        %v3185 = vpack.c.bf16 %v2719, %v2719
        %v3186 = vpack.c.bf16 %v2765, %v2765
        %v3187 = vpack.c.bf16 %v2811, %v2811
        %v3188 = vpack.c.bf16 %v2857, %v2857
        %v3189 = vpack.c.bf16 %v2903, %v2903
        %v3190 = vpack.c.bf16 %v2949, %v2949
        %v3191 = vpack.c.bf16 %v2995, %v2995
        %v3192 = vpack.c.bf16 %v3041, %v3041
        %v3193 = vpack.c.bf16 %v3087, %v3087
        %v3194 = vpack.c.bf16 %v3133, %v3133
        %v3195 = vpack.c.bf16 %v3179, %v3179
        %3199 = vrot.lane.b32.xlu0 %v3187, 32
        %v3200 = vpop.permute.xlu0 %3199
        %3201 = vrot.lane.b32.xlu0 %v3188, 32
        %v3202 = vpop.permute.xlu0 %3201
        %3203 = vrot.lane.b32.xlu0 %v3189, 32
        %v3204 = vpop.permute.xlu0 %3203
        %3208 = vrot.lane.b32.xlu0 %v3190, 64
        %v3209 = vpop.permute.xlu0 %3208
        %3210 = vrot.lane.b32.xlu0 %v3191, 64
        %v3211 = vpop.permute.xlu0 %3210
        %3212 = vrot.lane.b32.xlu0 %v3192, 64
        %v3213 = vpop.permute.xlu0 %3212
        %3217 = vrot.lane.b32.xlu0 %v3193, 96
        %v3218 = vpop.permute.xlu0 %3217
        %3219 = vrot.lane.b32.xlu0 %v3194, 96
        %v3220 = vpop.permute.xlu0 %3219
        %3221 = vrot.lane.b32.xlu0 %v3195, 96
        %v3222 = vpop.permute.xlu0 %3221
        %v3225 = vsel %vm1933, %v3184, %v3200
        %v3228 = vsel %vm1933, %v3185, %v3202
        %v3231 = vsel %vm1933, %v3186, %v3204
        %vm3232 = vcmask 523264
        %v3234 = vsel %vm3232, %v3225, %v3209
        %v3236 = vsel %vm3232, %v3228, %v3211
        %v3238 = vsel %vm3232, %v3231, %v3213
        %vm3239 = vcmask 785408
        %v3241 = vsel %vm3239, %v3234, %v3218
        %v3243 = vsel %vm3239, %v3236, %v3220
        %v3245 = vsel %vm3239, %v3238, %v3222
        %v3246 = vld [vmem:[%s1208] sm:$0xf]
        %v3247 = vld [vmem:[%s1208 + $0x4] sm:$0xf]
        %v3248 = vld [vmem:[%s1208 + $0x8] sm:$0xf]
        %v3249 = vld [vmem:[%s1208 + $0xc] sm:$0xf]
        %v3250 = vld [vmem:[%s1208 + $0x10] sm:$0xf]
        %v3251 = vld [vmem:[%s1208 + $0x14] sm:$0xf]
        %v3252 = vld [vmem:[%s1208 + $0x18] sm:$0xf]
        %v3253 = vld [vmem:[%s1208 + $0x1c] sm:$0xf]
        %v3254 = vld [vmem:[%s1208 + $0x20] sm:$0xf]
        %v3255 = vld [vmem:[%s1208 + $0x24] sm:$0xf]
        %v3256 = vld [vmem:[%s1208 + $0x28] sm:$0xf]
        %v3257 = vld [vmem:[%s1208 + $0x2c] sm:$0xf]
        %v3258 = vld [vmem:[%s1208 + $0x30] sm:$0xf]
        %v3259 = vld [vmem:[%s1208 + $0x34] sm:$0xf]
        %v3260 = vld [vmem:[%s1208 + $0x38] sm:$0xf]
        %v3261 = vld [vmem:[%s1208 + $0x3c] sm:$0xf]
        %v3262 = vld [vmem:[%s1437] sm:$0x1]
        %v3264 = vlaneseq
        %v3265 = vshrl.u32 %v3264, 7
        %v3266 = vsub.s32 0, %v3265
        %v3267 = vrot.slane %v3262, %v3266
        %v3272 = vunpack.c.l.b16 %v3241
        %v3273 = vunpack.c.l.b16 %v3243
        %v3274 = vunpack.c.l.b16 %v3245
        %v3275 = vpack.c.b16 %v3273, %v3272
        %v3276 = vpack.c.b16 %v3274, %v3274
        %v3295 = vunpack.c.l.b16 %v3246
        %v3296 = vunpack.c.l.b16 %v3247
        %v3297 = vunpack.c.l.b16 %v3248
        %v3298 = vunpack.c.l.b16 %v3249
        %v3299 = vunpack.c.l.b16 %v3250
        %v3300 = vunpack.c.l.b16 %v3251
        %v3301 = vunpack.c.l.b16 %v3252
        %v3302 = vunpack.c.l.b16 %v3253
        %v3303 = vunpack.c.l.b16 %v3254
        %v3304 = vunpack.c.l.b16 %v3255
        %v3305 = vunpack.c.l.b16 %v3256
        %v3306 = vunpack.c.l.b16 %v3257
        %v3307 = vunpack.c.l.b16 %v3258
        %v3308 = vunpack.c.l.b16 %v3259
        %v3309 = vunpack.c.l.b16 %v3260
        %v3310 = vunpack.c.l.b16 %v3261
        %v3311 = vpack.c.b16 %v3296, %v3295
        %v3312 = vpack.c.b16 %v3298, %v3297
        %v3313 = vpack.c.b16 %v3300, %v3299
        %v3314 = vpack.c.b16 %v3302, %v3301
        %v3315 = vpack.c.b16 %v3304, %v3303
        %v3316 = vpack.c.b16 %v3306, %v3305
        %v3317 = vpack.c.b16 %v3308, %v3307
        %v3318 = vpack.c.b16 %v3310, %v3309
        %3327 = vmatprep.subr.bf16.mxu0 0
        %3328 = vmatpush1.bf16.msra.mxu0 %v3311
        %3329 = vmatprep.subr.bf16.mxu0 0
        %3330 = vmatpush1.bf16.msra.mxu0 %v3312
        %3331 = vmatprep.subr.bf16.mxu0 0
        %3332 = vmatpush1.bf16.msra.mxu0 %v3313
        %3333 = vmatprep.subr.bf16.mxu0 0
        %3334 = vmatpush1.bf16.msra.mxu0 %v3314
        %3335 = vmatprep.subr.bf16.mxu0 0
        %3336 = vmatpush1.bf16.msra.mxu0 %v3315
        %3337 = vmatprep.subr.bf16.mxu0 0
        %3338 = vmatpush1.bf16.msra.mxu0 %v3316
        %3339 = vmatprep.subr.bf16.mxu0 0
        %3340 = vmatpush1.bf16.msra.mxu0 %v3317
        %3341 = vmatprep.subr.bf16.mxu0 0
        %3342 = vmatpush1.bf16.msra.mxu0 %v3318
        %3343 = vmatprep.subr.bf16.mxu0 0
        %3344 = vmatpush1.bf16.msra.mxu0 0
        %3345 = vmatprep.subr.bf16.mxu0 0
        %3346 = vmatpush1.bf16.msra.mxu0 0
        %3347 = vmatprep.subr.bf16.mxu0 0
        %3348 = vmatpush1.bf16.msra.mxu0 0
        %3349 = vmatprep.subr.bf16.mxu0 0
        %3350 = vmatpush1.bf16.msra.mxu0 0
        %3351 = vmatprep.subr.bf16.mxu0 0
        %3352 = vmatpush1.bf16.msra.mxu0 0
        %3353 = vmatprep.subr.bf16.mxu0 0
        %3354 = vmatpush1.bf16.msra.mxu0 0
        %3355 = vmatprep.subr.bf16.mxu0 0
        %3356 = vmatpush1.bf16.msra.mxu0 0
        %3357 = vmatprep.subr.bf16.mxu0 0
        %3358 = vmatpush1.bf16.msra.mxu0 0
        %3359 = vmatprep.mubr.bf16.mxu0 0
        %3360 = vmatmul.mubr.bf16.gmra.mrb[0].mxu0 %v3275
        %v3361 = vpop.f32.mrb[0].mxu0
        %v3362 = vadd.f32 %v3267, %v3361
        %v3363 = vpop.f32.mrb[0].mxu0
        %v3364 = vpop.f32.mrb[0].mxu0
        %v3365 = vadd.f32 %v3267, %v3364
        %v3366 = vpop.f32.mrb[0].mxu0
        %3367 = vmatprep.mubr.bf16.mxu0 0
        %3368 = vmatmul.mubr.bf16.gmra.mrb[0].mxu0 %v3276
        %v3369 = vpop.f32.mrb[0].mxu0
        %v3370 = vadd.f32 %v3267, %v3369
        %v3371 = vpop.f32.mrb[0].mxu0
        %v3372 = vpop.f32.mrb[0].mxu0
        %v3373 = vpop.f32.mrb[0].mxu0
        %3374 = vdwg.mxu0
        %v3375 = vadd.f32 %v1487, %v3362
        %v3376 = vadd.f32 %v1488, %v3365
        %v3377 = vadd.f32 %v1489, %v3370
        %3378 = vadd.xlane.f32.xlu0 %v3375
        %v3379 = vpop.xlane.xlu0 %3378
        %3380 = vadd.xlane.f32.xlu0 %v3376
        %v3381 = vpop.xlane.xlu0 %3380
        %3382 = vadd.xlane.f32.xlu0 %v3377
        %v3383 = vpop.xlane.xlu0 %3382
        %v3384 = vrcp.pop 128.0
        %v3385 = vmul.f32 %v3379, %v3384
        %v3386 = vmul.f32 %v3381, %v3384
        %v3387 = vmul.f32 %v3383, %v3384
        %v3388 = vmul.f32 %v3375, %v3375
        %v3389 = vmul.f32 %v3376, %v3376
        %v3390 = vmul.f32 %v3377, %v3377
        %3391 = vadd.xlane.f32.xlu0 %v3388
        %v3392 = vpop.xlane.xlu0 %3391
        %3393 = vadd.xlane.f32.xlu0 %v3389
        %v3394 = vpop.xlane.xlu0 %3393
        %3395 = vadd.xlane.f32.xlu0 %v3390
        %v3396 = vpop.xlane.xlu0 %3395
        %v3397 = vmul.f32 %v3392, %v3384
        %v3398 = vmul.f32 %v3394, %v3384
        %v3399 = vmul.f32 %v3396, %v3384
        %v3400 = vmul.f32 %v3385, %v3385
        %v3401 = vmul.f32 %v3386, %v3386
        %v3402 = vmul.f32 %v3387, %v3387
        %v3403 = vsub.f32 %v3397, %v3400
        %v3404 = vsub.f32 %v3398, %v3401
        %v3405 = vsub.f32 %v3399, %v3402
        %v3406 = vadd.f32 %v3403, 1e-05
        %v3407 = vadd.f32 %v3404, 1e-05
        %v3408 = vadd.f32 %v3405, 1e-05
        %v3409 = vrsqrt.pop %v3406
        %v3410 = vrsqrt.pop %v3407
        %v3411 = vrsqrt.pop %v3408
        %v3412 = vsub.f32 %v3375, %v3385
        %v3413 = vsub.f32 %v3376, %v3386
        %v3414 = vsub.f32 %v3377, %v3387
        %v3415 = vmul.f32 %v3412, %v3409
        %v3416 = vmul.f32 %v3413, %v3410
        %v3417 = vmul.f32 %v3414, %v3411
        %v3418 = vld [vmem:[%s1459] sm:$0x1]
        %v3420 = vlaneseq
        %v3421 = vshrl.u32 %v3420, 7
        %v3422 = vsub.s32 0, %v3421
        %v3423 = vrot.slane %v3418, %v3422
        %v3425 = vmul.f32 %v3415, %v3423
        %v3426 = vmul.f32 %v3416, %v3423
        %v3427 = vmul.f32 %v3417, %v3423
        %v3428 = vld [vmem:[%s1462] sm:$0x1]
        %v3430 = vlaneseq
        %v3431 = vshrl.u32 %v3430, 7
        %v3432 = vsub.s32 0, %v3431
        %v3433 = vrot.slane %v3428, %v3432
        %v3435 = vadd.f32 %v3425, %v3433
        %v3436 = vadd.f32 %v3426, %v3433
        %v3437 = vadd.f32 %v3427, %v3433
        %v3438 = vld [vmem:[#allocation6] sm:$0xf]
        %v3439 = vld [vmem:[#allocation6 + $0x4] sm:$0xf]
        %v3440 = vld [vmem:[#allocation6 + $0x8] sm:$0xf]
        %v3441 = vld [vmem:[#allocation6 + $0xc] sm:$0xf]
        %v3442 = vld [vmem:[#allocation6 + $0x10] sm:$0xf]
        %v3443 = vld [vmem:[#allocation6 + $0x14] sm:$0xf]
        %v3444 = vpack.c.bf16 %v3436, %v3435
        %v3445 = vpack.c.bf16 %v3437, %v3437
        %v3446 = vld [vmem:[%s1217] sm:$0xf]
        %v3447 = vld [vmem:[%s1217 + $0x4] sm:$0xf]
        %v3448 = vld [vmem:[%s1217 + $0x8] sm:$0xf]
        %v3449 = vld [vmem:[%s1217 + $0xc] sm:$0xf]
        %v3450 = vld [vmem:[%s1217 + $0x10] sm:$0xf]
        %v3451 = vld [vmem:[%s1217 + $0x14] sm:$0xf]
        %v3452 = vld [vmem:[%s1217 + $0x18] sm:$0xf]
        %v3453 = vld [vmem:[%s1217 + $0x1c] sm:$0xf]
        %v3454 = vld [vmem:[%s1217 + $0x20] sm:$0xf]
        %v3455 = vld [vmem:[%s1217 + $0x24] sm:$0xf]
        %v3456 = vld [vmem:[%s1217 + $0x28] sm:$0xf]
        %v3457 = vld [vmem:[%s1217 + $0x2c] sm:$0xf]
        %v3458 = vld [vmem:[%s1217 + $0x30] sm:$0xf]
        %v3459 = vld [vmem:[%s1217 + $0x34] sm:$0xf]
        %v3460 = vld [vmem:[%s1217 + $0x38] sm:$0xf]
        %v3461 = vld [vmem:[%s1217 + $0x3c] sm:$0xf]
        %v3462 = vld [vmem:[%s1440] sm:$0x1]
        %v3464 = vlaneseq
        %v3465 = vshrl.u32 %v3464, 7
        %v3466 = vsub.s32 0, %v3465
        %v3467 = vrot.slane %v3462, %v3466
        %v3485 = vunpack.c.l.b16 %v3446
        %v3486 = vunpack.c.l.b16 %v3447
        %v3487 = vunpack.c.l.b16 %v3448
        %v3488 = vunpack.c.l.b16 %v3449
        %v3489 = vunpack.c.l.b16 %v3450
        %v3490 = vunpack.c.l.b16 %v3451
        %v3491 = vunpack.c.l.b16 %v3452
        %v3492 = vunpack.c.l.b16 %v3453
        %v3493 = vunpack.c.l.b16 %v3454
        %v3494 = vunpack.c.l.b16 %v3455
        %v3495 = vunpack.c.l.b16 %v3456
        %v3496 = vunpack.c.l.b16 %v3457
        %v3497 = vunpack.c.l.b16 %v3458
        %v3498 = vunpack.c.l.b16 %v3459
        %v3499 = vunpack.c.l.b16 %v3460
        %v3500 = vunpack.c.l.b16 %v3461
        %v3501 = vpack.c.b16 %v3486, %v3485
        %v3502 = vpack.c.b16 %v3488, %v3487
        %v3503 = vpack.c.b16 %v3490, %v3489
        %v3504 = vpack.c.b16 %v3492, %v3491
        %v3505 = vpack.c.b16 %v3494, %v3493
        %v3506 = vpack.c.b16 %v3496, %v3495
        %v3507 = vpack.c.b16 %v3498, %v3497
        %v3508 = vpack.c.b16 %v3500, %v3499
        %3517 = vmatprep.subr.bf16.mxu0 0
        %3518 = vmatpush1.bf16.msra.mxu0 %v3501
        %3519 = vmatprep.subr.bf16.mxu0 0
        %3520 = vmatpush1.bf16.msra.mxu0 %v3502
        %3521 = vmatprep.subr.bf16.mxu0 0
        %3522 = vmatpush1.bf16.msra.mxu0 %v3503
        %3523 = vmatprep.subr.bf16.mxu0 0
        %3524 = vmatpush1.bf16.msra.mxu0 %v3504
        %3525 = vmatprep.subr.bf16.mxu0 0
        %3526 = vmatpush1.bf16.msra.mxu0 %v3505
        %3527 = vmatprep.subr.bf16.mxu0 0
        %3528 = vmatpush1.bf16.msra.mxu0 %v3506
        %3529 = vmatprep.subr.bf16.mxu0 0
        %3530 = vmatpush1.bf16.msra.mxu0 %v3507
        %3531 = vmatprep.subr.bf16.mxu0 0
        %3532 = vmatpush1.bf16.msra.mxu0 %v3508
        %3533 = vmatprep.subr.bf16.mxu0 0
        %3534 = vmatpush1.bf16.msra.mxu0 0
        %3535 = vmatprep.subr.bf16.mxu0 0
        %3536 = vmatpush1.bf16.msra.mxu0 0
        %3537 = vmatprep.subr.bf16.mxu0 0
        %3538 = vmatpush1.bf16.msra.mxu0 0
        %3539 = vmatprep.subr.bf16.mxu0 0
        %3540 = vmatpush1.bf16.msra.mxu0 0
        %3541 = vmatprep.subr.bf16.mxu0 0
        %3542 = vmatpush1.bf16.msra.mxu0 0
        %3543 = vmatprep.subr.bf16.mxu0 0
        %3544 = vmatpush1.bf16.msra.mxu0 0
        %3545 = vmatprep.subr.bf16.mxu0 0
        %3546 = vmatpush1.bf16.msra.mxu0 0
        %3547 = vmatprep.subr.bf16.mxu0 0
        %3548 = vmatpush1.bf16.msra.mxu0 0
        %3549 = vmatprep.mubr.bf16.mxu0 0
        %3550 = vmatmul.mubr.bf16.gmra.mrb[0].mxu0 %v3444
        %v3551 = vpop.f32.mrb[0].mxu0
        %v3552 = vadd.f32 %v3467, %v3551
        %v3553 = vpop.f32.mrb[0].mxu0
        %v3554 = vpop.f32.mrb[0].mxu0
        %v3555 = vadd.f32 %v3467, %v3554
        %v3556 = vpop.f32.mrb[0].mxu0
        %3557 = vmatprep.mubr.bf16.mxu0 0
        %3558 = vmatmul.mubr.bf16.gmra.mrb[0].mxu0 %v3445
        %v3559 = vpop.f32.mrb[0].mxu0
        %v3560 = vadd.f32 %v3467, %v3559
        %v3561 = vpop.f32.mrb[0].mxu0
        %v3562 = vpop.f32.mrb[0].mxu0
        %v3563 = vpop.f32.mrb[0].mxu0
        %3564 = vdwg.mxu0
        %v3565 = vpack.c.bf16 %v3555, %v3552
        %v3566 = vpack.c.bf16 %v3560, %v3560
        %v3567 = vld [vmem:[%s1226] sm:$0xf]
        %v3568 = vld [vmem:[%s1226 + $0x4] sm:$0xf]
        %v3569 = vld [vmem:[%s1226 + $0x8] sm:$0xf]
        %v3570 = vld [vmem:[%s1226 + $0xc] sm:$0xf]
        %v3571 = vld [vmem:[%s1226 + $0x10] sm:$0xf]
        %v3572 = vld [vmem:[%s1226 + $0x14] sm:$0xf]
        %v3573 = vld [vmem:[%s1226 + $0x18] sm:$0xf]
        %v3574 = vld [vmem:[%s1226 + $0x1c] sm:$0xf]
        %v3575 = vld [vmem:[%s1226 + $0x20] sm:$0xf]
        %v3576 = vld [vmem:[%s1226 + $0x24] sm:$0xf]
        %v3577 = vld [vmem:[%s1226 + $0x28] sm:$0xf]
        %v3578 = vld [vmem:[%s1226 + $0x2c] sm:$0xf]
        %v3579 = vld [vmem:[%s1226 + $0x30] sm:$0xf]
        %v3580 = vld [vmem:[%s1226 + $0x34] sm:$0xf]
        %v3581 = vld [vmem:[%s1226 + $0x38] sm:$0xf]
        %v3582 = vld [vmem:[%s1226 + $0x3c] sm:$0xf]
        %v3583 = vld [vmem:[%s1443] sm:$0x1]
        %v3585 = vlaneseq
        %v3586 = vshrl.u32 %v3585, 7
        %v3587 = vsub.s32 0, %v3586
        %v3588 = vrot.slane %v3583, %v3587
        %v3596 = vunpack.c.l.b16 %v3438
        %v3597 = vunpack.c.l.b16 %v3439
        %v3598 = vunpack.c.l.b16 %v3440
        %v3599 = vunpack.c.l.b16 %v3441
        %v3600 = vunpack.c.l.b16 %v3442
        %v3601 = vunpack.c.l.b16 %v3443
        %v3602 = vpack.c.b16 %v3597, %v3596
        %v3603 = vpack.c.b16 %v3599, %v3598
        %v3604 = vpack.c.b16 %v3601, %v3600
        %v3624 = vunpack.c.l.b16 %v3567
        %v3625 = vunpack.c.l.b16 %v3568
        %v3626 = vunpack.c.l.b16 %v3569
        %v3627 = vunpack.c.l.b16 %v3570
        %v3628 = vunpack.c.l.b16 %v3571
        %v3629 = vunpack.c.l.b16 %v3572
        %v3630 = vunpack.c.l.b16 %v3573
        %v3631 = vunpack.c.l.b16 %v3574
        %v3632 = vunpack.c.l.b16 %v3575
        %v3633 = vunpack.c.l.b16 %v3576
        %v3634 = vunpack.c.l.b16 %v3577
        %v3635 = vunpack.c.l.b16 %v3578
        %v3636 = vunpack.c.l.b16 %v3579
        %v3637 = vunpack.c.l.b16 %v3580
        %v3638 = vunpack.c.l.b16 %v3581
        %v3639 = vunpack.c.l.b16 %v3582
        %v3640 = vpack.c.b16 %v3625, %v3624
        %v3641 = vpack.c.b16 %v3627, %v3626
        %v3642 = vpack.c.b16 %v3629, %v3628
        %v3643 = vpack.c.b16 %v3631, %v3630
        %v3644 = vpack.c.b16 %v3633, %v3632
        %v3645 = vpack.c.b16 %v3635, %v3634
        %v3646 = vpack.c.b16 %v3637, %v3636
        %v3647 = vpack.c.b16 %v3639, %v3638
        %3656 = vmatprep.subr.bf16.mxu0 0
        %3657 = vmatpush1.bf16.msra.mxu0 %v3640
        %3658 = vmatprep.subr.bf16.mxu0 0
        %3659 = vmatpush1.bf16.msra.mxu0 %v3641
        %3660 = vmatprep.subr.bf16.mxu0 0
        %3661 = vmatpush1.bf16.msra.mxu0 %v3642
        %3662 = vmatprep.subr.bf16.mxu0 0
        %3663 = vmatpush1.bf16.msra.mxu0 %v3643
        %3664 = vmatprep.subr.bf16.mxu0 0
        %3665 = vmatpush1.bf16.msra.mxu0 %v3644
        %3666 = vmatprep.subr.bf16.mxu0 0
        %3667 = vmatpush1.bf16.msra.mxu0 %v3645
        %3668 = vmatprep.subr.bf16.mxu0 0
        %3669 = vmatpush1.bf16.msra.mxu0 %v3646
        %3670 = vmatprep.subr.bf16.mxu0 0
        %3671 = vmatpush1.bf16.msra.mxu0 %v3647
        %3672 = vmatprep.subr.bf16.mxu0 0
        %3673 = vmatpush1.bf16.msra.mxu0 0
        %3674 = vmatprep.subr.bf16.mxu0 0
        %3675 = vmatpush1.bf16.msra.mxu0 0
        %3676 = vmatprep.subr.bf16.mxu0 0
        %3677 = vmatpush1.bf16.msra.mxu0 0
        %3678 = vmatprep.subr.bf16.mxu0 0
        %3679 = vmatpush1.bf16.msra.mxu0 0
        %3680 = vmatprep.subr.bf16.mxu0 0
        %3681 = vmatpush1.bf16.msra.mxu0 0
        %3682 = vmatprep.subr.bf16.mxu0 0
        %3683 = vmatpush1.bf16.msra.mxu0 0
        %3684 = vmatprep.subr.bf16.mxu0 0
        %3685 = vmatpush1.bf16.msra.mxu0 0
        %3686 = vmatprep.subr.bf16.mxu0 0
        %3687 = vmatpush1.bf16.msra.mxu0 0
        %3688 = vmatprep.mubr.bf16.mxu0 0
        %3689 = vmatmul.mubr.bf16.gmra.mrb[0].mxu0 %v3602
        %v3690 = vpop.f32.mrb[0].mxu0
        %v3691 = vadd.f32 %v3588, %v3690
        %v3692 = vpop.f32.mrb[0].mxu0
        %v3693 = vpop.f32.mrb[0].mxu0
        %v3694 = vadd.f32 %v3588, %v3693
        %v3695 = vpop.f32.mrb[0].mxu0
        %3696 = vmatprep.mubr.bf16.mxu0 0
        %3697 = vmatmul.mubr.bf16.gmra.mrb[0].mxu0 %v3603
        %v3698 = vpop.f32.mrb[0].mxu0
        %v3699 = vadd.f32 %v3588, %v3698
        %v3700 = vpop.f32.mrb[0].mxu0
        %v3701 = vpop.f32.mrb[0].mxu0
        %v3702 = vadd.f32 %v3588, %v3701
        %v3703 = vpop.f32.mrb[0].mxu0
        %3704 = vmatprep.mubr.bf16.mxu0 0
        %3705 = vmatmul.mubr.bf16.gmra.mrb[0].mxu0 %v3604
        %v3706 = vpop.f32.mrb[0].mxu0
        %v3707 = vadd.f32 %v3588, %v3706
        %v3708 = vpop.f32.mrb[0].mxu0
        %v3709 = vpop.f32.mrb[0].mxu0
        %v3710 = vadd.f32 %v3588, %v3709
        %v3711 = vpop.f32.mrb[0].mxu0
        %3712 = vdwg.mxu0
        %v3713 = vpack.c.bf16 %v3694, %v3691
        %v3714 = vpack.c.bf16 %v3702, %v3699
        %v3715 = vpack.c.bf16 %v3710, %v3707
        %v3716 = vld [vmem:[%s1235] sm:$0xf]
        %v3717 = vld [vmem:[%s1235 + $0x4] sm:$0xf]
        %v3718 = vld [vmem:[%s1235 + $0x8] sm:$0xf]
        %v3719 = vld [vmem:[%s1235 + $0xc] sm:$0xf]
        %v3720 = vld [vmem:[%s1235 + $0x10] sm:$0xf]
        %v3721 = vld [vmem:[%s1235 + $0x14] sm:$0xf]
        %v3722 = vld [vmem:[%s1235 + $0x18] sm:$0xf]
        %v3723 = vld [vmem:[%s1235 + $0x1c] sm:$0xf]
        %v3724 = vld [vmem:[%s1235 + $0x20] sm:$0xf]
        %v3725 = vld [vmem:[%s1235 + $0x24] sm:$0xf]
        %v3726 = vld [vmem:[%s1235 + $0x28] sm:$0xf]
        %v3727 = vld [vmem:[%s1235 + $0x2c] sm:$0xf]
        %v3728 = vld [vmem:[%s1235 + $0x30] sm:$0xf]
        %v3729 = vld [vmem:[%s1235 + $0x34] sm:$0xf]
        %v3730 = vld [vmem:[%s1235 + $0x38] sm:$0xf]
        %v3731 = vld [vmem:[%s1235 + $0x3c] sm:$0xf]
        %v3732 = vld [vmem:[%s1446] sm:$0x1]
        %v3734 = vlaneseq
        %v3735 = vshrl.u32 %v3734, 7
        %v3736 = vsub.s32 0, %v3735
        %v3737 = vrot.slane %v3732, %v3736
        %v3755 = vunpack.c.l.b16 %v3716
        %v3756 = vunpack.c.l.b16 %v3717
        %v3757 = vunpack.c.l.b16 %v3718
        %v3758 = vunpack.c.l.b16 %v3719
        %v3759 = vunpack.c.l.b16 %v3720
        %v3760 = vunpack.c.l.b16 %v3721
        %v3761 = vunpack.c.l.b16 %v3722
        %v3762 = vunpack.c.l.b16 %v3723
        %v3763 = vunpack.c.l.b16 %v3724
        %v3764 = vunpack.c.l.b16 %v3725
        %v3765 = vunpack.c.l.b16 %v3726
        %v3766 = vunpack.c.l.b16 %v3727
        %v3767 = vunpack.c.l.b16 %v3728
        %v3768 = vunpack.c.l.b16 %v3729
        %v3769 = vunpack.c.l.b16 %v3730
        %v3770 = vunpack.c.l.b16 %v3731
        %v3771 = vpack.c.b16 %v3756, %v3755
        %v3772 = vpack.c.b16 %v3758, %v3757
        %v3773 = vpack.c.b16 %v3760, %v3759
        %v3774 = vpack.c.b16 %v3762, %v3761
        %v3775 = vpack.c.b16 %v3764, %v3763
        %v3776 = vpack.c.b16 %v3766, %v3765
        %v3777 = vpack.c.b16 %v3768, %v3767
        %v3778 = vpack.c.b16 %v3770, %v3769
        %3787 = vmatprep.subr.bf16.mxu0 0
        %3788 = vmatpush1.bf16.msra.mxu0 %v3771
        %3789 = vmatprep.subr.bf16.mxu0 0
        %3790 = vmatpush1.bf16.msra.mxu0 %v3772
        %3791 = vmatprep.subr.bf16.mxu0 0
        %3792 = vmatpush1.bf16.msra.mxu0 %v3773
        %3793 = vmatprep.subr.bf16.mxu0 0
        %3794 = vmatpush1.bf16.msra.mxu0 %v3774
        %3795 = vmatprep.subr.bf16.mxu0 0
        %3796 = vmatpush1.bf16.msra.mxu0 %v3775
        %3797 = vmatprep.subr.bf16.mxu0 0
        %3798 = vmatpush1.bf16.msra.mxu0 %v3776
        %3799 = vmatprep.subr.bf16.mxu0 0
        %3800 = vmatpush1.bf16.msra.mxu0 %v3777
        %3801 = vmatprep.subr.bf16.mxu0 0
        %3802 = vmatpush1.bf16.msra.mxu0 %v3778
        %3803 = vmatprep.subr.bf16.mxu0 0
        %3804 = vmatpush1.bf16.msra.mxu0 0
        %3805 = vmatprep.subr.bf16.mxu0 0
        %3806 = vmatpush1.bf16.msra.mxu0 0
        %3807 = vmatprep.subr.bf16.mxu0 0
        %3808 = vmatpush1.bf16.msra.mxu0 0
        %3809 = vmatprep.subr.bf16.mxu0 0
        %3810 = vmatpush1.bf16.msra.mxu0 0
        %3811 = vmatprep.subr.bf16.mxu0 0
        %3812 = vmatpush1.bf16.msra.mxu0 0
        %3813 = vmatprep.subr.bf16.mxu0 0
        %3814 = vmatpush1.bf16.msra.mxu0 0
        %3815 = vmatprep.subr.bf16.mxu0 0
        %3816 = vmatpush1.bf16.msra.mxu0 0
        %3817 = vmatprep.subr.bf16.mxu0 0
        %3818 = vmatpush1.bf16.msra.mxu0 0
        %3819 = vmatprep.mubr.bf16.mxu0 0
        %3820 = vmatmul.mubr.bf16.gmra.mrb[0].mxu0 %v3602
        %v3821 = vpop.f32.mrb[0].mxu0
        %v3822 = vadd.f32 %v3737, %v3821
        %v3823 = vpop.f32.mrb[0].mxu0
        %v3824 = vpop.f32.mrb[0].mxu0
        %v3825 = vadd.f32 %v3737, %v3824
        %v3826 = vpop.f32.mrb[0].mxu0
        %3827 = vmatprep.mubr.bf16.mxu0 0
        %3828 = vmatmul.mubr.bf16.gmra.mrb[0].mxu0 %v3603
        %v3829 = vpop.f32.mrb[0].mxu0
        %v3830 = vadd.f32 %v3737, %v3829
        %v3831 = vpop.f32.mrb[0].mxu0
        %v3832 = vpop.f32.mrb[0].mxu0
        %v3833 = vadd.f32 %v3737, %v3832
        %v3834 = vpop.f32.mrb[0].mxu0
        %3835 = vmatprep.mubr.bf16.mxu0 0
        %3836 = vmatmul.mubr.bf16.gmra.mrb[0].mxu0 %v3604
        %v3837 = vpop.f32.mrb[0].mxu0
        %v3838 = vadd.f32 %v3737, %v3837
        %v3839 = vpop.f32.mrb[0].mxu0
        %v3840 = vpop.f32.mrb[0].mxu0
        %v3841 = vadd.f32 %v3737, %v3840
        %v3842 = vpop.f32.mrb[0].mxu0
        %3843 = vdwg.mxu0
        %v3844 = vpack.c.bf16 %v3825, %v3822
        %v3845 = vpack.c.bf16 %v3833, %v3830
        %v3846 = vpack.c.bf16 %v3841, %v3838
        %v3849 = vunpack.c.l.b16 %v3565
        %v3850 = vunpack.c.h.b16 %v3565
        %v3851 = vunpack.c.l.b16 %v3566
        %v3852 = vpack.c.b16 %v3849, %v3849
        %v3853 = vpack.c.b16 %v3850, %v3850
        %v3854 = vpack.c.b16 %v3851, %v3851
        %3855 = vrot.lane.b32.xlu0 %v3852, 96
        %v3856 = vpop.permute.xlu0 %3855
        %3857 = vrot.lane.b32.xlu0 %v3853, 96
        %v3858 = vpop.permute.xlu0 %3857
        %3859 = vrot.lane.b32.xlu0 %v3854, 96
        %v3860 = vpop.permute.xlu0 %3859
        %3861 = vrot.lane.b32.xlu0 %v3852, 64
        %v3862 = vpop.permute.xlu0 %3861
        %3863 = vrot.lane.b32.xlu0 %v3853, 64
        %v3864 = vpop.permute.xlu0 %3863
        %3865 = vrot.lane.b32.xlu0 %v3854, 64
        %v3866 = vpop.permute.xlu0 %3865
        %3867 = vrot.lane.b32.xlu0 %v3852, 32
        %v3868 = vpop.permute.xlu0 %3867
        %3869 = vrot.lane.b32.xlu0 %v3853, 32
        %v3870 = vpop.permute.xlu0 %3869
        %3871 = vrot.lane.b32.xlu0 %v3854, 32
        %v3872 = vpop.permute.xlu0 %3871
        %3876 = vrot.lane.b32.xlu0 %v3713, 96
        %v3877 = vpop.permute.xlu0 %3876
        %3878 = vrot.lane.b32.xlu0 %v3714, 96
        %v3879 = vpop.permute.xlu0 %3878
        %3880 = vrot.lane.b32.xlu0 %v3715, 96
        %v3881 = vpop.permute.xlu0 %3880
        %3882 = vrot.lane.b32.xlu0 %v3713, 64
        %v3883 = vpop.permute.xlu0 %3882
        %3884 = vrot.lane.b32.xlu0 %v3714, 64
        %v3885 = vpop.permute.xlu0 %3884
        %3886 = vrot.lane.b32.xlu0 %v3715, 64
        %v3887 = vpop.permute.xlu0 %3886
        %3888 = vrot.lane.b32.xlu0 %v3713, 32
        %v3889 = vpop.permute.xlu0 %3888
        %3890 = vrot.lane.b32.xlu0 %v3714, 32
        %v3891 = vpop.permute.xlu0 %3890
        %3892 = vrot.lane.b32.xlu0 %v3715, 32
        %v3893 = vpop.permute.xlu0 %3892
        %3897 = vrot.lane.b32.xlu0 %v3844, 96
        %v3898 = vpop.permute.xlu0 %3897
        %3899 = vrot.lane.b32.xlu0 %v3845, 96
        %v3900 = vpop.permute.xlu0 %3899
        %3901 = vrot.lane.b32.xlu0 %v3846, 96
        %v3902 = vpop.permute.xlu0 %3901
        %3906 = vrot.lane.b32.xlu0 %v3844, 64
        %v3907 = vpop.permute.xlu0 %3906
        %3908 = vrot.lane.b32.xlu0 %v3845, 64
        %v3909 = vpop.permute.xlu0 %3908
        %3910 = vrot.lane.b32.xlu0 %v3846, 64
        %v3911 = vpop.permute.xlu0 %3910
        %3915 = vrot.lane.b32.xlu0 %v3844, 32
        %v3916 = vpop.permute.xlu0 %3915
        %3917 = vrot.lane.b32.xlu0 %v3845, 32
        %v3918 = vpop.permute.xlu0 %3917
        %3919 = vrot.lane.b32.xlu0 %v3846, 32
        %v3920 = vpop.permute.xlu0 %3919
        %v3925 = vsel %vm1933, %v3852, 0
        %v3928 = vsel %vm1933, %v3713, 0
        %3930 = vmatprep.subr.bf16.mxu0 0
        %3931 = vmatpush1.bf16.xpose.msra.mxu0 %v3928
        %3932 = vmatprep.subr.bf16.mxu0 0
        %3933 = vmatpush1.bf16.xpose.msra.mxu0 0
        %3934 = vmatprep.subr.bf16.mxu0 0
        %3935 = vmatpush1.bf16.xpose.msra.mxu0 0
        %3936 = vmatprep.subr.bf16.mxu0 0
        %3937 = vmatpush1.bf16.xpose.msra.mxu0 0
        %3938 = vmatprep.subr.bf16.mxu0 0
        %3939 = vmatpush1.bf16.xpose.msra.mxu0 0
        %3940 = vmatprep.subr.bf16.mxu0 0
        %3941 = vmatpush1.bf16.xpose.msra.mxu0 0
        %3942 = vmatprep.subr.bf16.mxu0 0
        %3943 = vmatpush1.bf16.xpose.msra.mxu0 0
        %3944 = vmatprep.subr.bf16.mxu0 0
        %3945 = vmatpush1.bf16.xpose.msra.mxu0 0
        %3946 = vmatprep.subr.bf16.mxu0 0
        %3947 = vmatpush1.bf16.xpose.msra.mxu0 0
        %3948 = vmatprep.subr.bf16.mxu0 0
        %3949 = vmatpush1.bf16.xpose.msra.mxu0 0
        %3950 = vmatprep.subr.bf16.mxu0 0
        %3951 = vmatpush1.bf16.xpose.msra.mxu0 0
        %3952 = vmatprep.subr.bf16.mxu0 0
        %3953 = vmatpush1.bf16.xpose.msra.mxu0 0
        %3954 = vmatprep.subr.bf16.mxu0 0
        %3955 = vmatpush1.bf16.xpose.msra.mxu0 0
        %3956 = vmatprep.subr.bf16.mxu0 0
        %3957 = vmatpush1.bf16.xpose.msra.mxu0 0
        %3958 = vmatprep.subr.bf16.mxu0 0
        %3959 = vmatpush1.bf16.xpose.msra.mxu0 0
        %3960 = vmatprep.subr.bf16.mxu0 0
        %3961 = vmatpush1.bf16.xpose.msra.mxu0 0
        %3962 = vmatprep.mubr.bf16.mxu0 0
        %3963 = vmatmul.mubr.bf16.gmra.mrb[0].mxu0 %v3925
        %v3964 = vpop.f32.mrb[0].mxu0
        %v3965 = vadd.f32 0.0, %v3964
        %v3966 = vpop.f32.mrb[0].mxu0
        %v3967 = vpop.f32.mrb[0].mxu0
        %v3968 = vpop.f32.mrb[0].mxu0
        %3969 = vdwg.mxu0
        %v3971 = vsel %vm1933, %v3853, 0
        %v3974 = vsel %vm1933, %v3714, 0
        %3976 = vmatprep.subr.bf16.mxu0 0
        %3977 = vmatpush1.bf16.xpose.msra.mxu0 %v3974
        %3978 = vmatprep.subr.bf16.mxu0 0
        %3979 = vmatpush1.bf16.xpose.msra.mxu0 0
        %3980 = vmatprep.subr.bf16.mxu0 0
        %3981 = vmatpush1.bf16.xpose.msra.mxu0 0
        %3982 = vmatprep.subr.bf16.mxu0 0
        %3983 = vmatpush1.bf16.xpose.msra.mxu0 0
        %3984 = vmatprep.subr.bf16.mxu0 0
        %3985 = vmatpush1.bf16.xpose.msra.mxu0 0
        %3986 = vmatprep.subr.bf16.mxu0 0
        %3987 = vmatpush1.bf16.xpose.msra.mxu0 0
        %3988 = vmatprep.subr.bf16.mxu0 0
        %3989 = vmatpush1.bf16.xpose.msra.mxu0 0
        %3990 = vmatprep.subr.bf16.mxu0 0
        %3991 = vmatpush1.bf16.xpose.msra.mxu0 0
        %3992 = vmatprep.subr.bf16.mxu0 0
        %3993 = vmatpush1.bf16.xpose.msra.mxu0 0
        %3994 = vmatprep.subr.bf16.mxu0 0
        %3995 = vmatpush1.bf16.xpose.msra.mxu0 0
        %3996 = vmatprep.subr.bf16.mxu0 0
        %3997 = vmatpush1.bf16.xpose.msra.mxu0 0
        %3998 = vmatprep.subr.bf16.mxu0 0
        %3999 = vmatpush1.bf16.xpose.msra.mxu0 0
        %4000 = vmatprep.subr.bf16.mxu0 0
        %4001 = vmatpush1.bf16.xpose.msra.mxu0 0
        %4002 = vmatprep.subr.bf16.mxu0 0
        %4003 = vmatpush1.bf16.xpose.msra.mxu0 0
        %4004 = vmatprep.subr.bf16.mxu0 0
        %4005 = vmatpush1.bf16.xpose.msra.mxu0 0
        %4006 = vmatprep.subr.bf16.mxu0 0
        %4007 = vmatpush1.bf16.xpose.msra.mxu0 0
        %4008 = vmatprep.mubr.bf16.mxu0 0
        %4009 = vmatmul.mubr.bf16.gmra.mrb[0].mxu0 %v3971
        %v4010 = vpop.f32.mrb[0].mxu0
        %v4011 = vadd.f32 0.0, %v4010
        %v4012 = vpop.f32.mrb[0].mxu0
        %v4013 = vpop.f32.mrb[0].mxu0
        %v4014 = vpop.f32.mrb[0].mxu0
        %4015 = vdwg.mxu0
        %v4017 = vsel %vm1933, %v3854, 0
        %v4020 = vsel %vm1933, %v3715, 0
        %4022 = vmatprep.subr.bf16.mxu0 0
        %4023 = vmatpush1.bf16.xpose.msra.mxu0 %v4020
        %4024 = vmatprep.subr.bf16.mxu0 0
        %4025 = vmatpush1.bf16.xpose.msra.mxu0 0
        %4026 = vmatprep.subr.bf16.mxu0 0
        %4027 = vmatpush1.bf16.xpose.msra.mxu0 0
        %4028 = vmatprep.subr.bf16.mxu0 0
        %4029 = vmatpush1.bf16.xpose.msra.mxu0 0
        %4030 = vmatprep.subr.bf16.mxu0 0
        %4031 = vmatpush1.bf16.xpose.msra.mxu0 0
        %4032 = vmatprep.subr.bf16.mxu0 0
        %4033 = vmatpush1.bf16.xpose.msra.mxu0 0
        %4034 = vmatprep.subr.bf16.mxu0 0
        %4035 = vmatpush1.bf16.xpose.msra.mxu0 0
        %4036 = vmatprep.subr.bf16.mxu0 0
        %4037 = vmatpush1.bf16.xpose.msra.mxu0 0
        %4038 = vmatprep.subr.bf16.mxu0 0
        %4039 = vmatpush1.bf16.xpose.msra.mxu0 0
        %4040 = vmatprep.subr.bf16.mxu0 0
        %4041 = vmatpush1.bf16.xpose.msra.mxu0 0
        %4042 = vmatprep.subr.bf16.mxu0 0
        %4043 = vmatpush1.bf16.xpose.msra.mxu0 0
        %4044 = vmatprep.subr.bf16.mxu0 0
        %4045 = vmatpush1.bf16.xpose.msra.mxu0 0
        %4046 = vmatprep.subr.bf16.mxu0 0
        %4047 = vmatpush1.bf16.xpose.msra.mxu0 0
        %4048 = vmatprep.subr.bf16.mxu0 0
        %4049 = vmatpush1.bf16.xpose.msra.mxu0 0
        %4050 = vmatprep.subr.bf16.mxu0 0
        %4051 = vmatpush1.bf16.xpose.msra.mxu0 0
        %4052 = vmatprep.subr.bf16.mxu0 0
        %4053 = vmatpush1.bf16.xpose.msra.mxu0 0
        %4054 = vmatprep.mubr.bf16.mxu0 0
        %4055 = vmatmul.mubr.bf16.gmra.mrb[0].mxu0 %v4017
        %v4056 = vpop.f32.mrb[0].mxu0
        %v4057 = vadd.f32 0.0, %v4056
        %v4058 = vpop.f32.mrb[0].mxu0
        %v4059 = vpop.f32.mrb[0].mxu0
        %v4060 = vpop.f32.mrb[0].mxu0
        %4061 = vdwg.mxu0
        %v4063 = vsel %vm1933, %v3856, 0
        %v4066 = vsel %vm1933, %v3877, 0
        %4068 = vmatprep.subr.bf16.mxu0 0
        %4069 = vmatpush1.bf16.xpose.msra.mxu0 %v4066
        %4070 = vmatprep.subr.bf16.mxu0 0
        %4071 = vmatpush1.bf16.xpose.msra.mxu0 0
        %4072 = vmatprep.subr.bf16.mxu0 0
        %4073 = vmatpush1.bf16.xpose.msra.mxu0 0
        %4074 = vmatprep.subr.bf16.mxu0 0
        %4075 = vmatpush1.bf16.xpose.msra.mxu0 0
        %4076 = vmatprep.subr.bf16.mxu0 0
        %4077 = vmatpush1.bf16.xpose.msra.mxu0 0
        %4078 = vmatprep.subr.bf16.mxu0 0
        %4079 = vmatpush1.bf16.xpose.msra.mxu0 0
        %4080 = vmatprep.subr.bf16.mxu0 0
        %4081 = vmatpush1.bf16.xpose.msra.mxu0 0
        %4082 = vmatprep.subr.bf16.mxu0 0
        %4083 = vmatpush1.bf16.xpose.msra.mxu0 0
        %4084 = vmatprep.subr.bf16.mxu0 0
        %4085 = vmatpush1.bf16.xpose.msra.mxu0 0
        %4086 = vmatprep.subr.bf16.mxu0 0
        %4087 = vmatpush1.bf16.xpose.msra.mxu0 0
        %4088 = vmatprep.subr.bf16.mxu0 0
        %4089 = vmatpush1.bf16.xpose.msra.mxu0 0
        %4090 = vmatprep.subr.bf16.mxu0 0
        %4091 = vmatpush1.bf16.xpose.msra.mxu0 0
        %4092 = vmatprep.subr.bf16.mxu0 0
        %4093 = vmatpush1.bf16.xpose.msra.mxu0 0
        %4094 = vmatprep.subr.bf16.mxu0 0
        %4095 = vmatpush1.bf16.xpose.msra.mxu0 0
        %4096 = vmatprep.subr.bf16.mxu0 0
        %4097 = vmatpush1.bf16.xpose.msra.mxu0 0
        %4098 = vmatprep.subr.bf16.mxu0 0
        %4099 = vmatpush1.bf16.xpose.msra.mxu0 0
        %4100 = vmatprep.mubr.bf16.mxu0 0
        %4101 = vmatmul.mubr.bf16.gmra.mrb[0].mxu0 %v4063
        %v4102 = vpop.f32.mrb[0].mxu0
        %v4103 = vadd.f32 0.0, %v4102
        %v4104 = vpop.f32.mrb[0].mxu0
        %v4105 = vpop.f32.mrb[0].mxu0
        %v4106 = vpop.f32.mrb[0].mxu0
        %4107 = vdwg.mxu0
        %v4109 = vsel %vm1933, %v3858, 0
        %v4112 = vsel %vm1933, %v3879, 0
        %4114 = vmatprep.subr.bf16.mxu0 0
        %4115 = vmatpush1.bf16.xpose.msra.mxu0 %v4112
        %4116 = vmatprep.subr.bf16.mxu0 0
        %4117 = vmatpush1.bf16.xpose.msra.mxu0 0
        %4118 = vmatprep.subr.bf16.mxu0 0
        %4119 = vmatpush1.bf16.xpose.msra.mxu0 0
        %4120 = vmatprep.subr.bf16.mxu0 0
        %4121 = vmatpush1.bf16.xpose.msra.mxu0 0
        %4122 = vmatprep.subr.bf16.mxu0 0
        %4123 = vmatpush1.bf16.xpose.msra.mxu0 0
        %4124 = vmatprep.subr.bf16.mxu0 0
        %4125 = vmatpush1.bf16.xpose.msra.mxu0 0
        %4126 = vmatprep.subr.bf16.mxu0 0
        %4127 = vmatpush1.bf16.xpose.msra.mxu0 0
        %4128 = vmatprep.subr.bf16.mxu0 0
        %4129 = vmatpush1.bf16.xpose.msra.mxu0 0
        %4130 = vmatprep.subr.bf16.mxu0 0
        %4131 = vmatpush1.bf16.xpose.msra.mxu0 0
        %4132 = vmatprep.subr.bf16.mxu0 0
        %4133 = vmatpush1.bf16.xpose.msra.mxu0 0
        %4134 = vmatprep.subr.bf16.mxu0 0
        %4135 = vmatpush1.bf16.xpose.msra.mxu0 0
        %4136 = vmatprep.subr.bf16.mxu0 0
        %4137 = vmatpush1.bf16.xpose.msra.mxu0 0
        %4138 = vmatprep.subr.bf16.mxu0 0
        %4139 = vmatpush1.bf16.xpose.msra.mxu0 0
        %4140 = vmatprep.subr.bf16.mxu0 0
        %4141 = vmatpush1.bf16.xpose.msra.mxu0 0
        %4142 = vmatprep.subr.bf16.mxu0 0
        %4143 = vmatpush1.bf16.xpose.msra.mxu0 0
        %4144 = vmatprep.subr.bf16.mxu0 0
        %4145 = vmatpush1.bf16.xpose.msra.mxu0 0
        %4146 = vmatprep.mubr.bf16.mxu0 0
        %4147 = vmatmul.mubr.bf16.gmra.mrb[0].mxu0 %v4109
        %v4148 = vpop.f32.mrb[0].mxu0
        %v4149 = vadd.f32 0.0, %v4148
        %v4150 = vpop.f32.mrb[0].mxu0
        %v4151 = vpop.f32.mrb[0].mxu0
        %v4152 = vpop.f32.mrb[0].mxu0
        %4153 = vdwg.mxu0
        %v4155 = vsel %vm1933, %v3860, 0
        %v4158 = vsel %vm1933, %v3881, 0
        %4160 = vmatprep.subr.bf16.mxu0 0
        %4161 = vmatpush1.bf16.xpose.msra.mxu0 %v4158
        %4162 = vmatprep.subr.bf16.mxu0 0
        %4163 = vmatpush1.bf16.xpose.msra.mxu0 0
        %4164 = vmatprep.subr.bf16.mxu0 0
        %4165 = vmatpush1.bf16.xpose.msra.mxu0 0
        %4166 = vmatprep.subr.bf16.mxu0 0
        %4167 = vmatpush1.bf16.xpose.msra.mxu0 0
        %4168 = vmatprep.subr.bf16.mxu0 0
        %4169 = vmatpush1.bf16.xpose.msra.mxu0 0
        %4170 = vmatprep.subr.bf16.mxu0 0
        %4171 = vmatpush1.bf16.xpose.msra.mxu0 0
        %4172 = vmatprep.subr.bf16.mxu0 0
        %4173 = vmatpush1.bf16.xpose.msra.mxu0 0
        %4174 = vmatprep.subr.bf16.mxu0 0
        %4175 = vmatpush1.bf16.xpose.msra.mxu0 0
        %4176 = vmatprep.subr.bf16.mxu0 0
        %4177 = vmatpush1.bf16.xpose.msra.mxu0 0
        %4178 = vmatprep.subr.bf16.mxu0 0
        %4179 = vmatpush1.bf16.xpose.msra.mxu0 0
        %4180 = vmatprep.subr.bf16.mxu0 0
        %4181 = vmatpush1.bf16.xpose.msra.mxu0 0
        %4182 = vmatprep.subr.bf16.mxu0 0
        %4183 = vmatpush1.bf16.xpose.msra.mxu0 0
        %4184 = vmatprep.subr.bf16.mxu0 0
        %4185 = vmatpush1.bf16.xpose.msra.mxu0 0
        %4186 = vmatprep.subr.bf16.mxu0 0
        %4187 = vmatpush1.bf16.xpose.msra.mxu0 0
        %4188 = vmatprep.subr.bf16.mxu0 0
        %4189 = vmatpush1.bf16.xpose.msra.mxu0 0
        %4190 = vmatprep.subr.bf16.mxu0 0
        %4191 = vmatpush1.bf16.xpose.msra.mxu0 0
        %4192 = vmatprep.mubr.bf16.mxu0 0
        %4193 = vmatmul.mubr.bf16.gmra.mrb[0].mxu0 %v4155
        %v4194 = vpop.f32.mrb[0].mxu0
        %v4195 = vadd.f32 0.0, %v4194
        %v4196 = vpop.f32.mrb[0].mxu0
        %v4197 = vpop.f32.mrb[0].mxu0
        %v4198 = vpop.f32.mrb[0].mxu0
        %4199 = vdwg.mxu0
        %v4201 = vsel %vm1933, %v3862, 0
        %v4204 = vsel %vm1933, %v3883, 0
        %4206 = vmatprep.subr.bf16.mxu0 0
        %4207 = vmatpush1.bf16.xpose.msra.mxu0 %v4204
        %4208 = vmatprep.subr.bf16.mxu0 0
        %4209 = vmatpush1.bf16.xpose.msra.mxu0 0
        %4210 = vmatprep.subr.bf16.mxu0 0
        %4211 = vmatpush1.bf16.xpose.msra.mxu0 0
        %4212 = vmatprep.subr.bf16.mxu0 0
        %4213 = vmatpush1.bf16.xpose.msra.mxu0 0
        %4214 = vmatprep.subr.bf16.mxu0 0
        %4215 = vmatpush1.bf16.xpose.msra.mxu0 0
        %4216 = vmatprep.subr.bf16.mxu0 0
        %4217 = vmatpush1.bf16.xpose.msra.mxu0 0
        %4218 = vmatprep.subr.bf16.mxu0 0
        %4219 = vmatpush1.bf16.xpose.msra.mxu0 0
        %4220 = vmatprep.subr.bf16.mxu0 0
        %4221 = vmatpush1.bf16.xpose.msra.mxu0 0
        %4222 = vmatprep.subr.bf16.mxu0 0
        %4223 = vmatpush1.bf16.xpose.msra.mxu0 0
        %4224 = vmatprep.subr.bf16.mxu0 0
        %4225 = vmatpush1.bf16.xpose.msra.mxu0 0
        %4226 = vmatprep.subr.bf16.mxu0 0
        %4227 = vmatpush1.bf16.xpose.msra.mxu0 0
        %4228 = vmatprep.subr.bf16.mxu0 0
        %4229 = vmatpush1.bf16.xpose.msra.mxu0 0
        %4230 = vmatprep.subr.bf16.mxu0 0
        %4231 = vmatpush1.bf16.xpose.msra.mxu0 0
        %4232 = vmatprep.subr.bf16.mxu0 0
        %4233 = vmatpush1.bf16.xpose.msra.mxu0 0
        %4234 = vmatprep.subr.bf16.mxu0 0
        %4235 = vmatpush1.bf16.xpose.msra.mxu0 0
        %4236 = vmatprep.subr.bf16.mxu0 0
        %4237 = vmatpush1.bf16.xpose.msra.mxu0 0
        %4238 = vmatprep.mubr.bf16.mxu0 0
        %4239 = vmatmul.mubr.bf16.gmra.mrb[0].mxu0 %v4201
        %v4240 = vpop.f32.mrb[0].mxu0
        %v4241 = vadd.f32 0.0, %v4240
        %v4242 = vpop.f32.mrb[0].mxu0
        %v4243 = vpop.f32.mrb[0].mxu0
        %v4244 = vpop.f32.mrb[0].mxu0
        %4245 = vdwg.mxu0
        %v4247 = vsel %vm1933, %v3864, 0
        %v4250 = vsel %vm1933, %v3885, 0
        %4252 = vmatprep.subr.bf16.mxu0 0
        %4253 = vmatpush1.bf16.xpose.msra.mxu0 %v4250
        %4254 = vmatprep.subr.bf16.mxu0 0
        %4255 = vmatpush1.bf16.xpose.msra.mxu0 0
        %4256 = vmatprep.subr.bf16.mxu0 0
        %4257 = vmatpush1.bf16.xpose.msra.mxu0 0
        %4258 = vmatprep.subr.bf16.mxu0 0
        %4259 = vmatpush1.bf16.xpose.msra.mxu0 0
        %4260 = vmatprep.subr.bf16.mxu0 0
        %4261 = vmatpush1.bf16.xpose.msra.mxu0 0
        %4262 = vmatprep.subr.bf16.mxu0 0
        %4263 = vmatpush1.bf16.xpose.msra.mxu0 0
        %4264 = vmatprep.subr.bf16.mxu0 0
        %4265 = vmatpush1.bf16.xpose.msra.mxu0 0
        %4266 = vmatprep.subr.bf16.mxu0 0
        %4267 = vmatpush1.bf16.xpose.msra.mxu0 0
        %4268 = vmatprep.subr.bf16.mxu0 0
        %4269 = vmatpush1.bf16.xpose.msra.mxu0 0
        %4270 = vmatprep.subr.bf16.mxu0 0
        %4271 = vmatpush1.bf16.xpose.msra.mxu0 0
        %4272 = vmatprep.subr.bf16.mxu0 0
        %4273 = vmatpush1.bf16.xpose.msra.mxu0 0
        %4274 = vmatprep.subr.bf16.mxu0 0
        %4275 = vmatpush1.bf16.xpose.msra.mxu0 0
        %4276 = vmatprep.subr.bf16.mxu0 0
        %4277 = vmatpush1.bf16.xpose.msra.mxu0 0
        %4278 = vmatprep.subr.bf16.mxu0 0
        %4279 = vmatpush1.bf16.xpose.msra.mxu0 0
        %4280 = vmatprep.subr.bf16.mxu0 0
        %4281 = vmatpush1.bf16.xpose.msra.mxu0 0
        %4282 = vmatprep.subr.bf16.mxu0 0
        %4283 = vmatpush1.bf16.xpose.msra.mxu0 0
        %4284 = vmatprep.mubr.bf16.mxu0 0
        %4285 = vmatmul.mubr.bf16.gmra.mrb[0].mxu0 %v4247
        %v4286 = vpop.f32.mrb[0].mxu0
        %v4287 = vadd.f32 0.0, %v4286
        %v4288 = vpop.f32.mrb[0].mxu0
        %v4289 = vpop.f32.mrb[0].mxu0
        %v4290 = vpop.f32.mrb[0].mxu0
        %4291 = vdwg.mxu0
        %v4293 = vsel %vm1933, %v3866, 0
        %v4296 = vsel %vm1933, %v3887, 0
        %4298 = vmatprep.subr.bf16.mxu0 0
        %4299 = vmatpush1.bf16.xpose.msra.mxu0 %v4296
        %4300 = vmatprep.subr.bf16.mxu0 0
        %4301 = vmatpush1.bf16.xpose.msra.mxu0 0
        %4302 = vmatprep.subr.bf16.mxu0 0
        %4303 = vmatpush1.bf16.xpose.msra.mxu0 0
        %4304 = vmatprep.subr.bf16.mxu0 0
        %4305 = vmatpush1.bf16.xpose.msra.mxu0 0
        %4306 = vmatprep.subr.bf16.mxu0 0
        %4307 = vmatpush1.bf16.xpose.msra.mxu0 0
        %4308 = vmatprep.subr.bf16.mxu0 0
        %4309 = vmatpush1.bf16.xpose.msra.mxu0 0
        %4310 = vmatprep.subr.bf16.mxu0 0
        %4311 = vmatpush1.bf16.xpose.msra.mxu0 0
        %4312 = vmatprep.subr.bf16.mxu0 0
        %4313 = vmatpush1.bf16.xpose.msra.mxu0 0
        %4314 = vmatprep.subr.bf16.mxu0 0
        %4315 = vmatpush1.bf16.xpose.msra.mxu0 0
        %4316 = vmatprep.subr.bf16.mxu0 0
        %4317 = vmatpush1.bf16.xpose.msra.mxu0 0
        %4318 = vmatprep.subr.bf16.mxu0 0
        %4319 = vmatpush1.bf16.xpose.msra.mxu0 0
        %4320 = vmatprep.subr.bf16.mxu0 0
        %4321 = vmatpush1.bf16.xpose.msra.mxu0 0
        %4322 = vmatprep.subr.bf16.mxu0 0
        %4323 = vmatpush1.bf16.xpose.msra.mxu0 0
        %4324 = vmatprep.subr.bf16.mxu0 0
        %4325 = vmatpush1.bf16.xpose.msra.mxu0 0
        %4326 = vmatprep.subr.bf16.mxu0 0
        %4327 = vmatpush1.bf16.xpose.msra.mxu0 0
        %4328 = vmatprep.subr.bf16.mxu0 0
        %4329 = vmatpush1.bf16.xpose.msra.mxu0 0
        %4330 = vmatprep.mubr.bf16.mxu0 0
        %4331 = vmatmul.mubr.bf16.gmra.mrb[0].mxu0 %v4293
        %v4332 = vpop.f32.mrb[0].mxu0
        %v4333 = vadd.f32 0.0, %v4332
        %v4334 = vpop.f32.mrb[0].mxu0
        %v4335 = vpop.f32.mrb[0].mxu0
        %v4336 = vpop.f32.mrb[0].mxu0
        %4337 = vdwg.mxu0
        %v4339 = vsel %vm1933, %v3868, 0
        %v4342 = vsel %vm1933, %v3889, 0
        %4344 = vmatprep.subr.bf16.mxu0 0
        %4345 = vmatpush1.bf16.xpose.msra.mxu0 %v4342
        %4346 = vmatprep.subr.bf16.mxu0 0
        %4347 = vmatpush1.bf16.xpose.msra.mxu0 0
        %4348 = vmatprep.subr.bf16.mxu0 0
        %4349 = vmatpush1.bf16.xpose.msra.mxu0 0
        %4350 = vmatprep.subr.bf16.mxu0 0
        %4351 = vmatpush1.bf16.xpose.msra.mxu0 0
        %4352 = vmatprep.subr.bf16.mxu0 0
        %4353 = vmatpush1.bf16.xpose.msra.mxu0 0
        %4354 = vmatprep.subr.bf16.mxu0 0
        %4355 = vmatpush1.bf16.xpose.msra.mxu0 0
        %4356 = vmatprep.subr.bf16.mxu0 0
        %4357 = vmatpush1.bf16.xpose.msra.mxu0 0
        %4358 = vmatprep.subr.bf16.mxu0 0
        %4359 = vmatpush1.bf16.xpose.msra.mxu0 0
        %4360 = vmatprep.subr.bf16.mxu0 0
        %4361 = vmatpush1.bf16.xpose.msra.mxu0 0
        %4362 = vmatprep.subr.bf16.mxu0 0
        %4363 = vmatpush1.bf16.xpose.msra.mxu0 0
        %4364 = vmatprep.subr.bf16.mxu0 0
        %4365 = vmatpush1.bf16.xpose.msra.mxu0 0
        %4366 = vmatprep.subr.bf16.mxu0 0
        %4367 = vmatpush1.bf16.xpose.msra.mxu0 0
        %4368 = vmatprep.subr.bf16.mxu0 0
        %4369 = vmatpush1.bf16.xpose.msra.mxu0 0
        %4370 = vmatprep.subr.bf16.mxu0 0
        %4371 = vmatpush1.bf16.xpose.msra.mxu0 0
        %4372 = vmatprep.subr.bf16.mxu0 0
        %4373 = vmatpush1.bf16.xpose.msra.mxu0 0
        %4374 = vmatprep.subr.bf16.mxu0 0
        %4375 = vmatpush1.bf16.xpose.msra.mxu0 0
        %4376 = vmatprep.mubr.bf16.mxu0 0
        %4377 = vmatmul.mubr.bf16.gmra.mrb[0].mxu0 %v4339
        %v4378 = vpop.f32.mrb[0].mxu0
        %v4379 = vadd.f32 0.0, %v4378
        %v4380 = vpop.f32.mrb[0].mxu0
        %v4381 = vpop.f32.mrb[0].mxu0
        %v4382 = vpop.f32.mrb[0].mxu0
        %4383 = vdwg.mxu0
        %v4385 = vsel %vm1933, %v3870, 0
        %v4388 = vsel %vm1933, %v3891, 0
        %4390 = vmatprep.subr.bf16.mxu0 0
        %4391 = vmatpush1.bf16.xpose.msra.mxu0 %v4388
        %4392 = vmatprep.subr.bf16.mxu0 0
        %4393 = vmatpush1.bf16.xpose.msra.mxu0 0
        %4394 = vmatprep.subr.bf16.mxu0 0
        %4395 = vmatpush1.bf16.xpose.msra.mxu0 0
        %4396 = vmatprep.subr.bf16.mxu0 0
        %4397 = vmatpush1.bf16.xpose.msra.mxu0 0
        %4398 = vmatprep.subr.bf16.mxu0 0
        %4399 = vmatpush1.bf16.xpose.msra.mxu0 0
        %4400 = vmatprep.subr.bf16.mxu0 0
        %4401 = vmatpush1.bf16.xpose.msra.mxu0 0
        %4402 = vmatprep.subr.bf16.mxu0 0
        %4403 = vmatpush1.bf16.xpose.msra.mxu0 0
        %4404 = vmatprep.subr.bf16.mxu0 0
        %4405 = vmatpush1.bf16.xpose.msra.mxu0 0
        %4406 = vmatprep.subr.bf16.mxu0 0
        %4407 = vmatpush1.bf16.xpose.msra.mxu0 0
        %4408 = vmatprep.subr.bf16.mxu0 0
        %4409 = vmatpush1.bf16.xpose.msra.mxu0 0
        %4410 = vmatprep.subr.bf16.mxu0 0
        %4411 = vmatpush1.bf16.xpose.msra.mxu0 0
        %4412 = vmatprep.subr.bf16.mxu0 0
        %4413 = vmatpush1.bf16.xpose.msra.mxu0 0
        %4414 = vmatprep.subr.bf16.mxu0 0
        %4415 = vmatpush1.bf16.xpose.msra.mxu0 0
        %4416 = vmatprep.subr.bf16.mxu0 0
        %4417 = vmatpush1.bf16.xpose.msra.mxu0 0
        %4418 = vmatprep.subr.bf16.mxu0 0
        %4419 = vmatpush1.bf16.xpose.msra.mxu0 0
        %4420 = vmatprep.subr.bf16.mxu0 0
        %4421 = vmatpush1.bf16.xpose.msra.mxu0 0
        %4422 = vmatprep.mubr.bf16.mxu0 0
        %4423 = vmatmul.mubr.bf16.gmra.mrb[0].mxu0 %v4385
        %v4424 = vpop.f32.mrb[0].mxu0
        %v4425 = vadd.f32 0.0, %v4424
        %v4426 = vpop.f32.mrb[0].mxu0
        %v4427 = vpop.f32.mrb[0].mxu0
        %v4428 = vpop.f32.mrb[0].mxu0
        %4429 = vdwg.mxu0
        %v4431 = vsel %vm1933, %v3872, 0
        %v4434 = vsel %vm1933, %v3893, 0
        %4436 = vmatprep.subr.bf16.mxu0 0
        %4437 = vmatpush1.bf16.xpose.msra.mxu0 %v4434
        %4438 = vmatprep.subr.bf16.mxu0 0
        %4439 = vmatpush1.bf16.xpose.msra.mxu0 0
        %4440 = vmatprep.subr.bf16.mxu0 0
        %4441 = vmatpush1.bf16.xpose.msra.mxu0 0
        %4442 = vmatprep.subr.bf16.mxu0 0
        %4443 = vmatpush1.bf16.xpose.msra.mxu0 0
        %4444 = vmatprep.subr.bf16.mxu0 0
        %4445 = vmatpush1.bf16.xpose.msra.mxu0 0
        %4446 = vmatprep.subr.bf16.mxu0 0
        %4447 = vmatpush1.bf16.xpose.msra.mxu0 0
        %4448 = vmatprep.subr.bf16.mxu0 0
        %4449 = vmatpush1.bf16.xpose.msra.mxu0 0
        %4450 = vmatprep.subr.bf16.mxu0 0
        %4451 = vmatpush1.bf16.xpose.msra.mxu0 0
        %4452 = vmatprep.subr.bf16.mxu0 0
        %4453 = vmatpush1.bf16.xpose.msra.mxu0 0
        %4454 = vmatprep.subr.bf16.mxu0 0
        %4455 = vmatpush1.bf16.xpose.msra.mxu0 0
        %4456 = vmatprep.subr.bf16.mxu0 0
        %4457 = vmatpush1.bf16.xpose.msra.mxu0 0
        %4458 = vmatprep.subr.bf16.mxu0 0
        %4459 = vmatpush1.bf16.xpose.msra.mxu0 0
        %4460 = vmatprep.subr.bf16.mxu0 0
        %4461 = vmatpush1.bf16.xpose.msra.mxu0 0
        %4462 = vmatprep.subr.bf16.mxu0 0
        %4463 = vmatpush1.bf16.xpose.msra.mxu0 0
        %4464 = vmatprep.subr.bf16.mxu0 0
        %4465 = vmatpush1.bf16.xpose.msra.mxu0 0
        %4466 = vmatprep.subr.bf16.mxu0 0
        %4467 = vmatpush1.bf16.xpose.msra.mxu0 0
        %4468 = vmatprep.mubr.bf16.mxu0 0
        %4469 = vmatmul.mubr.bf16.gmra.mrb[0].mxu0 %v4431
        %v4470 = vpop.f32.mrb[0].mxu0
        %v4471 = vadd.f32 0.0, %v4470
        %v4472 = vpop.f32.mrb[0].mxu0
        %v4473 = vpop.f32.mrb[0].mxu0
        %v4474 = vpop.f32.mrb[0].mxu0
        %4475 = vdwg.mxu0
        %vm4476 = vcmask 130048
        %v4477 = vsel %vm4476, %v3965, -inf
        %4478 = vmax.xlane.f32.xlu0 %v4477
        %v4479 = vpop.xlane.xlu0 %4478
        %v4480 = vsel %vm4476, %v4011, -inf
        %4481 = vmax.xlane.f32.xlu0 %v4480
        %v4482 = vpop.xlane.xlu0 %4481
        %v4483 = vsel %vm4476, %v4057, -inf
        %4484 = vmax.xlane.f32.xlu0 %v4483
        %v4485 = vpop.xlane.xlu0 %4484
        %v4486 = vsel %vm4476, %v4103, -inf
        %4487 = vmax.xlane.f32.xlu0 %v4486
        %v4488 = vpop.xlane.xlu0 %4487
        %v4489 = vsel %vm4476, %v4149, -inf
        %4490 = vmax.xlane.f32.xlu0 %v4489
        %v4491 = vpop.xlane.xlu0 %4490
        %v4492 = vsel %vm4476, %v4195, -inf
        %4493 = vmax.xlane.f32.xlu0 %v4492
        %v4494 = vpop.xlane.xlu0 %4493
        %v4495 = vsel %vm4476, %v4241, -inf
        %4496 = vmax.xlane.f32.xlu0 %v4495
        %v4497 = vpop.xlane.xlu0 %4496
        %v4498 = vsel %vm4476, %v4287, -inf
        %4499 = vmax.xlane.f32.xlu0 %v4498
        %v4500 = vpop.xlane.xlu0 %4499
        %v4501 = vsel %vm4476, %v4333, -inf
        %4502 = vmax.xlane.f32.xlu0 %v4501
        %v4503 = vpop.xlane.xlu0 %4502
        %v4504 = vsel %vm4476, %v4379, -inf
        %4505 = vmax.xlane.f32.xlu0 %v4504
        %v4506 = vpop.xlane.xlu0 %4505
        %v4507 = vsel %vm4476, %v4425, -inf
        %4508 = vmax.xlane.f32.xlu0 %v4507
        %v4509 = vpop.xlane.xlu0 %4508
        %v4510 = vsel %vm4476, %v4471, -inf
        %4511 = vmax.xlane.f32.xlu0 %v4510
        %v4512 = vpop.xlane.xlu0 %4511
        %v4513 = vsub.f32 %v3965, %v4479
        %v4514 = vsub.f32 %v4011, %v4482
        %v4515 = vsub.f32 %v4057, %v4485
        %v4516 = vsub.f32 %v4103, %v4488
        %v4517 = vsub.f32 %v4149, %v4491
        %v4518 = vsub.f32 %v4195, %v4494
        %v4519 = vsub.f32 %v4241, %v4497
        %v4520 = vsub.f32 %v4287, %v4500
        %v4521 = vsub.f32 %v4333, %v4503
        %v4522 = vsub.f32 %v4379, %v4506
        %v4523 = vsub.f32 %v4425, %v4509
        %v4524 = vsub.f32 %v4471, %v4512
        %v4525 = vmul.f32 %v4513, 1.442695
        %v4526 = vpow.pop %v4525
        %v4527 = vmul.f32 %v4514, 1.442695
        %v4528 = vpow.pop %v4527
        %v4529 = vmul.f32 %v4515, 1.442695
        %v4530 = vpow.pop %v4529
        %v4531 = vmul.f32 %v4516, 1.442695
        %v4532 = vpow.pop %v4531
        %v4533 = vmul.f32 %v4517, 1.442695
        %v4534 = vpow.pop %v4533
        %v4535 = vmul.f32 %v4518, 1.442695
        %v4536 = vpow.pop %v4535
        %v4537 = vmul.f32 %v4519, 1.442695
        %v4538 = vpow.pop %v4537
        %v4539 = vmul.f32 %v4520, 1.442695
        %v4540 = vpow.pop %v4539
        %v4541 = vmul.f32 %v4521, 1.442695
        %v4542 = vpow.pop %v4541
        %v4543 = vmul.f32 %v4522, 1.442695
        %v4544 = vpow.pop %v4543
        %v4545 = vmul.f32 %v4523, 1.442695
        %v4546 = vpow.pop %v4545
        %v4547 = vmul.f32 %v4524, 1.442695
        %v4548 = vpow.pop %v4547
        %v4549 = vsel %vm4476, %v4526, 0.0
        %4550 = vadd.xlane.f32.xlu0 %v4549
        %v4551 = vpop.xlane.xlu0 %4550
        %v4552 = vsel %vm4476, %v4528, 0.0
        %4553 = vadd.xlane.f32.xlu0 %v4552
        %v4554 = vpop.xlane.xlu0 %4553
        %v4555 = vsel %vm4476, %v4530, 0.0
        %4556 = vadd.xlane.f32.xlu0 %v4555
        %v4557 = vpop.xlane.xlu0 %4556
        %v4558 = vsel %vm4476, %v4532, 0.0
        %4559 = vadd.xlane.f32.xlu0 %v4558
        %v4560 = vpop.xlane.xlu0 %4559
        %v4561 = vsel %vm4476, %v4534, 0.0
        %4562 = vadd.xlane.f32.xlu0 %v4561
        %v4563 = vpop.xlane.xlu0 %4562
        %v4564 = vsel %vm4476, %v4536, 0.0
        %4565 = vadd.xlane.f32.xlu0 %v4564
        %v4566 = vpop.xlane.xlu0 %4565
        %v4567 = vsel %vm4476, %v4538, 0.0
        %4568 = vadd.xlane.f32.xlu0 %v4567
        %v4569 = vpop.xlane.xlu0 %4568
        %v4570 = vsel %vm4476, %v4540, 0.0
        %4571 = vadd.xlane.f32.xlu0 %v4570
        %v4572 = vpop.xlane.xlu0 %4571
        %v4573 = vsel %vm4476, %v4542, 0.0
        %4574 = vadd.xlane.f32.xlu0 %v4573
        %v4575 = vpop.xlane.xlu0 %4574
        %v4576 = vsel %vm4476, %v4544, 0.0
        %4577 = vadd.xlane.f32.xlu0 %v4576
        %v4578 = vpop.xlane.xlu0 %4577
        %v4579 = vsel %vm4476, %v4546, 0.0
        %4580 = vadd.xlane.f32.xlu0 %v4579
        %v4581 = vpop.xlane.xlu0 %4580
        %v4582 = vsel %vm4476, %v4548, 0.0
        %4583 = vadd.xlane.f32.xlu0 %v4582
        %v4584 = vpop.xlane.xlu0 %4583
        %v4585 = vrcp.pop %v4551
        %v4586 = vrcp.pop %v4554
        %v4587 = vrcp.pop %v4557
        %v4588 = vrcp.pop %v4560
        %v4589 = vrcp.pop %v4563
        %v4590 = vrcp.pop %v4566
        %v4591 = vrcp.pop %v4569
        %v4592 = vrcp.pop %v4572
        %v4593 = vrcp.pop %v4575
        %v4594 = vrcp.pop %v4578
        %v4595 = vrcp.pop %v4581
        %v4596 = vrcp.pop %v4584
        %v4597 = vmul.f32 %v4526, %v4585
        %v4598 = vmul.f32 %v4528, %v4586
        %v4599 = vmul.f32 %v4530, %v4587
        %v4600 = vmul.f32 %v4532, %v4588
        %v4601 = vmul.f32 %v4534, %v4589
        %v4602 = vmul.f32 %v4536, %v4590
        %v4603 = vmul.f32 %v4538, %v4591
        %v4604 = vmul.f32 %v4540, %v4592
        %v4605 = vmul.f32 %v4542, %v4593
        %v4606 = vmul.f32 %v4544, %v4594
        %v4607 = vmul.f32 %v4546, %v4595
        %v4608 = vmul.f32 %v4548, %v4596
        %v4609 = vpack.c.bf16 %v4597, %v4597
        %v4610 = vpack.c.bf16 %v4598, %v4598
        %v4611 = vpack.c.bf16 %v4599, %v4599
        %v4612 = vpack.c.bf16 %v4600, %v4600
        %v4613 = vpack.c.bf16 %v4601, %v4601
        %v4614 = vpack.c.bf16 %v4602, %v4602
        %v4615 = vpack.c.bf16 %v4603, %v4603
        %v4616 = vpack.c.bf16 %v4604, %v4604
        %v4617 = vpack.c.bf16 %v4605, %v4605
        %v4618 = vpack.c.bf16 %v4606, %v4606
        %v4619 = vpack.c.bf16 %v4607, %v4607
        %v4620 = vpack.c.bf16 %v4608, %v4608
        %v4622 = vsel %vm4476, %v4609, 0
        %4624 = vmatprep.subr.bf16.mxu0 0
        %4625 = vmatpush1.bf16.msra.mxu0 %v3844
        %4626 = vmatprep.subr.bf16.mxu0 0
        %4627 = vmatpush1.bf16.msra.mxu0 0
        %4628 = vmatprep.subr.bf16.mxu0 0
        %4629 = vmatpush1.bf16.msra.mxu0 0
        %4630 = vmatprep.subr.bf16.mxu0 0
        %4631 = vmatpush1.bf16.msra.mxu0 0
        %4632 = vmatprep.subr.bf16.mxu0 0
        %4633 = vmatpush1.bf16.msra.mxu0 0
        %4634 = vmatprep.subr.bf16.mxu0 0
        %4635 = vmatpush1.bf16.msra.mxu0 0
        %4636 = vmatprep.subr.bf16.mxu0 0
        %4637 = vmatpush1.bf16.msra.mxu0 0
        %4638 = vmatprep.subr.bf16.mxu0 0
        %4639 = vmatpush1.bf16.msra.mxu0 0
        %4640 = vmatprep.subr.bf16.mxu0 0
        %4641 = vmatpush1.bf16.msra.mxu0 0
        %4642 = vmatprep.subr.bf16.mxu0 0
        %4643 = vmatpush1.bf16.msra.mxu0 0
        %4644 = vmatprep.subr.bf16.mxu0 0
        %4645 = vmatpush1.bf16.msra.mxu0 0
        %4646 = vmatprep.subr.bf16.mxu0 0
        %4647 = vmatpush1.bf16.msra.mxu0 0
        %4648 = vmatprep.subr.bf16.mxu0 0
        %4649 = vmatpush1.bf16.msra.mxu0 0
        %4650 = vmatprep.subr.bf16.mxu0 0
        %4651 = vmatpush1.bf16.msra.mxu0 0
        %4652 = vmatprep.subr.bf16.mxu0 0
        %4653 = vmatpush1.bf16.msra.mxu0 0
        %4654 = vmatprep.subr.bf16.mxu0 0
        %4655 = vmatpush1.bf16.msra.mxu0 0
        %4656 = vmatprep.mubr.bf16.mxu0 0
        %4657 = vmatmul.mubr.bf16.gmra.mrb[0].mxu0 %v4622
        %v4658 = vpop.f32.mrb[0].mxu0
        %v4659 = vadd.f32 0.0, %v4658
        %v4660 = vpop.f32.mrb[0].mxu0
        %v4661 = vpop.f32.mrb[0].mxu0
        %v4662 = vpop.f32.mrb[0].mxu0
        %4663 = vdwg.mxu0
        %v4665 = vsel %vm4476, %v4610, 0
        %4667 = vmatprep.subr.bf16.mxu0 0
        %4668 = vmatpush1.bf16.msra.mxu0 %v3845
        %4669 = vmatprep.subr.bf16.mxu0 0
        %4670 = vmatpush1.bf16.msra.mxu0 0
        %4671 = vmatprep.subr.bf16.mxu0 0
        %4672 = vmatpush1.bf16.msra.mxu0 0
        %4673 = vmatprep.subr.bf16.mxu0 0
        %4674 = vmatpush1.bf16.msra.mxu0 0
        %4675 = vmatprep.subr.bf16.mxu0 0
        %4676 = vmatpush1.bf16.msra.mxu0 0
        %4677 = vmatprep.subr.bf16.mxu0 0
        %4678 = vmatpush1.bf16.msra.mxu0 0
        %4679 = vmatprep.subr.bf16.mxu0 0
        %4680 = vmatpush1.bf16.msra.mxu0 0
        %4681 = vmatprep.subr.bf16.mxu0 0
        %4682 = vmatpush1.bf16.msra.mxu0 0
        %4683 = vmatprep.subr.bf16.mxu0 0
        %4684 = vmatpush1.bf16.msra.mxu0 0
        %4685 = vmatprep.subr.bf16.mxu0 0
        %4686 = vmatpush1.bf16.msra.mxu0 0
        %4687 = vmatprep.subr.bf16.mxu0 0
        %4688 = vmatpush1.bf16.msra.mxu0 0
        %4689 = vmatprep.subr.bf16.mxu0 0
        %4690 = vmatpush1.bf16.msra.mxu0 0
        %4691 = vmatprep.subr.bf16.mxu0 0
        %4692 = vmatpush1.bf16.msra.mxu0 0
        %4693 = vmatprep.subr.bf16.mxu0 0
        %4694 = vmatpush1.bf16.msra.mxu0 0
        %4695 = vmatprep.subr.bf16.mxu0 0
        %4696 = vmatpush1.bf16.msra.mxu0 0
        %4697 = vmatprep.subr.bf16.mxu0 0
        %4698 = vmatpush1.bf16.msra.mxu0 0
        %4699 = vmatprep.mubr.bf16.mxu0 0
        %4700 = vmatmul.mubr.bf16.gmra.mrb[0].mxu0 %v4665
        %v4701 = vpop.f32.mrb[0].mxu0
        %v4702 = vadd.f32 0.0, %v4701
        %v4703 = vpop.f32.mrb[0].mxu0
        %v4704 = vpop.f32.mrb[0].mxu0
        %v4705 = vpop.f32.mrb[0].mxu0
        %4706 = vdwg.mxu0
        %v4708 = vsel %vm4476, %v4611, 0
        %4710 = vmatprep.subr.bf16.mxu0 0
        %4711 = vmatpush1.bf16.msra.mxu0 %v3846
        %4712 = vmatprep.subr.bf16.mxu0 0
        %4713 = vmatpush1.bf16.msra.mxu0 0
        %4714 = vmatprep.subr.bf16.mxu0 0
        %4715 = vmatpush1.bf16.msra.mxu0 0
        %4716 = vmatprep.subr.bf16.mxu0 0
        %4717 = vmatpush1.bf16.msra.mxu0 0
        %4718 = vmatprep.subr.bf16.mxu0 0
        %4719 = vmatpush1.bf16.msra.mxu0 0
        %4720 = vmatprep.subr.bf16.mxu0 0
        %4721 = vmatpush1.bf16.msra.mxu0 0
        %4722 = vmatprep.subr.bf16.mxu0 0
        %4723 = vmatpush1.bf16.msra.mxu0 0
        %4724 = vmatprep.subr.bf16.mxu0 0
        %4725 = vmatpush1.bf16.msra.mxu0 0
        %4726 = vmatprep.subr.bf16.mxu0 0
        %4727 = vmatpush1.bf16.msra.mxu0 0
        %4728 = vmatprep.subr.bf16.mxu0 0
        %4729 = vmatpush1.bf16.msra.mxu0 0
        %4730 = vmatprep.subr.bf16.mxu0 0
        %4731 = vmatpush1.bf16.msra.mxu0 0
        %4732 = vmatprep.subr.bf16.mxu0 0
        %4733 = vmatpush1.bf16.msra.mxu0 0
        %4734 = vmatprep.subr.bf16.mxu0 0
        %4735 = vmatpush1.bf16.msra.mxu0 0
        %4736 = vmatprep.subr.bf16.mxu0 0
        %4737 = vmatpush1.bf16.msra.mxu0 0
        %4738 = vmatprep.subr.bf16.mxu0 0
        %4739 = vmatpush1.bf16.msra.mxu0 0
        %4740 = vmatprep.subr.bf16.mxu0 0
        %4741 = vmatpush1.bf16.msra.mxu0 0
        %4742 = vmatprep.mubr.bf16.mxu0 0
        %4743 = vmatmul.mubr.bf16.gmra.mrb[0].mxu0 %v4708
        %v4744 = vpop.f32.mrb[0].mxu0
        %v4745 = vadd.f32 0.0, %v4744
        %v4746 = vpop.f32.mrb[0].mxu0
        %v4747 = vpop.f32.mrb[0].mxu0
        %v4748 = vpop.f32.mrb[0].mxu0
        %4749 = vdwg.mxu0
        %v4751 = vsel %vm4476, %v4612, 0
        %4753 = vmatprep.subr.bf16.mxu0 0
        %4754 = vmatpush1.bf16.msra.mxu0 %v3898
        %4755 = vmatprep.subr.bf16.mxu0 0
        %4756 = vmatpush1.bf16.msra.mxu0 0
        %4757 = vmatprep.subr.bf16.mxu0 0
        %4758 = vmatpush1.bf16.msra.mxu0 0
        %4759 = vmatprep.subr.bf16.mxu0 0
        %4760 = vmatpush1.bf16.msra.mxu0 0
        %4761 = vmatprep.subr.bf16.mxu0 0
        %4762 = vmatpush1.bf16.msra.mxu0 0
        %4763 = vmatprep.subr.bf16.mxu0 0
        %4764 = vmatpush1.bf16.msra.mxu0 0
        %4765 = vmatprep.subr.bf16.mxu0 0
        %4766 = vmatpush1.bf16.msra.mxu0 0
        %4767 = vmatprep.subr.bf16.mxu0 0
        %4768 = vmatpush1.bf16.msra.mxu0 0
        %4769 = vmatprep.subr.bf16.mxu0 0
        %4770 = vmatpush1.bf16.msra.mxu0 0
        %4771 = vmatprep.subr.bf16.mxu0 0
        %4772 = vmatpush1.bf16.msra.mxu0 0
        %4773 = vmatprep.subr.bf16.mxu0 0
        %4774 = vmatpush1.bf16.msra.mxu0 0
        %4775 = vmatprep.subr.bf16.mxu0 0
        %4776 = vmatpush1.bf16.msra.mxu0 0
        %4777 = vmatprep.subr.bf16.mxu0 0
        %4778 = vmatpush1.bf16.msra.mxu0 0
        %4779 = vmatprep.subr.bf16.mxu0 0
        %4780 = vmatpush1.bf16.msra.mxu0 0
        %4781 = vmatprep.subr.bf16.mxu0 0
        %4782 = vmatpush1.bf16.msra.mxu0 0
        %4783 = vmatprep.subr.bf16.mxu0 0
        %4784 = vmatpush1.bf16.msra.mxu0 0
        %4785 = vmatprep.mubr.bf16.mxu0 0
        %4786 = vmatmul.mubr.bf16.gmra.mrb[0].mxu0 %v4751
        %v4787 = vpop.f32.mrb[0].mxu0
        %v4788 = vadd.f32 0.0, %v4787
        %v4789 = vpop.f32.mrb[0].mxu0
        %v4790 = vpop.f32.mrb[0].mxu0
        %v4791 = vpop.f32.mrb[0].mxu0
        %4792 = vdwg.mxu0
        %v4794 = vsel %vm4476, %v4613, 0
        %4796 = vmatprep.subr.bf16.mxu0 0
        %4797 = vmatpush1.bf16.msra.mxu0 %v3900
        %4798 = vmatprep.subr.bf16.mxu0 0
        %4799 = vmatpush1.bf16.msra.mxu0 0
        %4800 = vmatprep.subr.bf16.mxu0 0
        %4801 = vmatpush1.bf16.msra.mxu0 0
        %4802 = vmatprep.subr.bf16.mxu0 0
        %4803 = vmatpush1.bf16.msra.mxu0 0
        %4804 = vmatprep.subr.bf16.mxu0 0
        %4805 = vmatpush1.bf16.msra.mxu0 0
        %4806 = vmatprep.subr.bf16.mxu0 0
        %4807 = vmatpush1.bf16.msra.mxu0 0
        %4808 = vmatprep.subr.bf16.mxu0 0
        %4809 = vmatpush1.bf16.msra.mxu0 0
        %4810 = vmatprep.subr.bf16.mxu0 0
        %4811 = vmatpush1.bf16.msra.mxu0 0
        %4812 = vmatprep.subr.bf16.mxu0 0
        %4813 = vmatpush1.bf16.msra.mxu0 0
        %4814 = vmatprep.subr.bf16.mxu0 0
        %4815 = vmatpush1.bf16.msra.mxu0 0
        %4816 = vmatprep.subr.bf16.mxu0 0
        %4817 = vmatpush1.bf16.msra.mxu0 0
        %4818 = vmatprep.subr.bf16.mxu0 0
        %4819 = vmatpush1.bf16.msra.mxu0 0
        %4820 = vmatprep.subr.bf16.mxu0 0
        %4821 = vmatpush1.bf16.msra.mxu0 0
        %4822 = vmatprep.subr.bf16.mxu0 0
        %4823 = vmatpush1.bf16.msra.mxu0 0
        %4824 = vmatprep.subr.bf16.mxu0 0
        %4825 = vmatpush1.bf16.msra.mxu0 0
        %4826 = vmatprep.subr.bf16.mxu0 0
        %4827 = vmatpush1.bf16.msra.mxu0 0
        %4828 = vmatprep.mubr.bf16.mxu0 0
        %4829 = vmatmul.mubr.bf16.gmra.mrb[0].mxu0 %v4794
        %v4830 = vpop.f32.mrb[0].mxu0
        %v4831 = vadd.f32 0.0, %v4830
        %v4832 = vpop.f32.mrb[0].mxu0
        %v4833 = vpop.f32.mrb[0].mxu0
        %v4834 = vpop.f32.mrb[0].mxu0
        %4835 = vdwg.mxu0
        %v4837 = vsel %vm4476, %v4614, 0
        %4839 = vmatprep.subr.bf16.mxu0 0
        %4840 = vmatpush1.bf16.msra.mxu0 %v3902
        %4841 = vmatprep.subr.bf16.mxu0 0
        %4842 = vmatpush1.bf16.msra.mxu0 0
        %4843 = vmatprep.subr.bf16.mxu0 0
        %4844 = vmatpush1.bf16.msra.mxu0 0
        %4845 = vmatprep.subr.bf16.mxu0 0
        %4846 = vmatpush1.bf16.msra.mxu0 0
        %4847 = vmatprep.subr.bf16.mxu0 0
        %4848 = vmatpush1.bf16.msra.mxu0 0
        %4849 = vmatprep.subr.bf16.mxu0 0
        %4850 = vmatpush1.bf16.msra.mxu0 0
        %4851 = vmatprep.subr.bf16.mxu0 0
        %4852 = vmatpush1.bf16.msra.mxu0 0
        %4853 = vmatprep.subr.bf16.mxu0 0
        %4854 = vmatpush1.bf16.msra.mxu0 0
        %4855 = vmatprep.subr.bf16.mxu0 0
        %4856 = vmatpush1.bf16.msra.mxu0 0
        %4857 = vmatprep.subr.bf16.mxu0 0
        %4858 = vmatpush1.bf16.msra.mxu0 0
        %4859 = vmatprep.subr.bf16.mxu0 0
        %4860 = vmatpush1.bf16.msra.mxu0 0
        %4861 = vmatprep.subr.bf16.mxu0 0
        %4862 = vmatpush1.bf16.msra.mxu0 0
        %4863 = vmatprep.subr.bf16.mxu0 0
        %4864 = vmatpush1.bf16.msra.mxu0 0
        %4865 = vmatprep.subr.bf16.mxu0 0
        %4866 = vmatpush1.bf16.msra.mxu0 0
        %4867 = vmatprep.subr.bf16.mxu0 0
        %4868 = vmatpush1.bf16.msra.mxu0 0
        %4869 = vmatprep.subr.bf16.mxu0 0
        %4870 = vmatpush1.bf16.msra.mxu0 0
        %4871 = vmatprep.mubr.bf16.mxu0 0
        %4872 = vmatmul.mubr.bf16.gmra.mrb[0].mxu0 %v4837
        %v4873 = vpop.f32.mrb[0].mxu0
        %v4874 = vadd.f32 0.0, %v4873
        %v4875 = vpop.f32.mrb[0].mxu0
        %v4876 = vpop.f32.mrb[0].mxu0
        %v4877 = vpop.f32.mrb[0].mxu0
        %4878 = vdwg.mxu0
        %v4880 = vsel %vm4476, %v4615, 0
        %4882 = vmatprep.subr.bf16.mxu0 0
        %4883 = vmatpush1.bf16.msra.mxu0 %v3907
        %4884 = vmatprep.subr.bf16.mxu0 0
        %4885 = vmatpush1.bf16.msra.mxu0 0
        %4886 = vmatprep.subr.bf16.mxu0 0
        %4887 = vmatpush1.bf16.msra.mxu0 0
        %4888 = vmatprep.subr.bf16.mxu0 0
        %4889 = vmatpush1.bf16.msra.mxu0 0
        %4890 = vmatprep.subr.bf16.mxu0 0
        %4891 = vmatpush1.bf16.msra.mxu0 0
        %4892 = vmatprep.subr.bf16.mxu0 0
        %4893 = vmatpush1.bf16.msra.mxu0 0
        %4894 = vmatprep.subr.bf16.mxu0 0
        %4895 = vmatpush1.bf16.msra.mxu0 0
        %4896 = vmatprep.subr.bf16.mxu0 0
        %4897 = vmatpush1.bf16.msra.mxu0 0
        %4898 = vmatprep.subr.bf16.mxu0 0
        %4899 = vmatpush1.bf16.msra.mxu0 0
        %4900 = vmatprep.subr.bf16.mxu0 0
        %4901 = vmatpush1.bf16.msra.mxu0 0
        %4902 = vmatprep.subr.bf16.mxu0 0
        %4903 = vmatpush1.bf16.msra.mxu0 0
        %4904 = vmatprep.subr.bf16.mxu0 0
        %4905 = vmatpush1.bf16.msra.mxu0 0
        %4906 = vmatprep.subr.bf16.mxu0 0
        %4907 = vmatpush1.bf16.msra.mxu0 0
        %4908 = vmatprep.subr.bf16.mxu0 0
        %4909 = vmatpush1.bf16.msra.mxu0 0
        %4910 = vmatprep.subr.bf16.mxu0 0
        %4911 = vmatpush1.bf16.msra.mxu0 0
        %4912 = vmatprep.subr.bf16.mxu0 0
        %4913 = vmatpush1.bf16.msra.mxu0 0
        %4914 = vmatprep.mubr.bf16.mxu0 0
        %4915 = vmatmul.mubr.bf16.gmra.mrb[0].mxu0 %v4880
        %v4916 = vpop.f32.mrb[0].mxu0
        %v4917 = vadd.f32 0.0, %v4916
        %v4918 = vpop.f32.mrb[0].mxu0
        %v4919 = vpop.f32.mrb[0].mxu0
        %v4920 = vpop.f32.mrb[0].mxu0
        %4921 = vdwg.mxu0
        %v4923 = vsel %vm4476, %v4616, 0
        %4925 = vmatprep.subr.bf16.mxu0 0
        %4926 = vmatpush1.bf16.msra.mxu0 %v3909
        %4927 = vmatprep.subr.bf16.mxu0 0
        %4928 = vmatpush1.bf16.msra.mxu0 0
        %4929 = vmatprep.subr.bf16.mxu0 0
        %4930 = vmatpush1.bf16.msra.mxu0 0
        %4931 = vmatprep.subr.bf16.mxu0 0
        %4932 = vmatpush1.bf16.msra.mxu0 0
        %4933 = vmatprep.subr.bf16.mxu0 0
        %4934 = vmatpush1.bf16.msra.mxu0 0
        %4935 = vmatprep.subr.bf16.mxu0 0
        %4936 = vmatpush1.bf16.msra.mxu0 0
        %4937 = vmatprep.subr.bf16.mxu0 0
        %4938 = vmatpush1.bf16.msra.mxu0 0
        %4939 = vmatprep.subr.bf16.mxu0 0
        %4940 = vmatpush1.bf16.msra.mxu0 0
        %4941 = vmatprep.subr.bf16.mxu0 0
        %4942 = vmatpush1.bf16.msra.mxu0 0
        %4943 = vmatprep.subr.bf16.mxu0 0
        %4944 = vmatpush1.bf16.msra.mxu0 0
        %4945 = vmatprep.subr.bf16.mxu0 0
        %4946 = vmatpush1.bf16.msra.mxu0 0
        %4947 = vmatprep.subr.bf16.mxu0 0
        %4948 = vmatpush1.bf16.msra.mxu0 0
        %4949 = vmatprep.subr.bf16.mxu0 0
        %4950 = vmatpush1.bf16.msra.mxu0 0
        %4951 = vmatprep.subr.bf16.mxu0 0
        %4952 = vmatpush1.bf16.msra.mxu0 0
        %4953 = vmatprep.subr.bf16.mxu0 0
        %4954 = vmatpush1.bf16.msra.mxu0 0
        %4955 = vmatprep.subr.bf16.mxu0 0
        %4956 = vmatpush1.bf16.msra.mxu0 0
        %4957 = vmatprep.mubr.bf16.mxu0 0
        %4958 = vmatmul.mubr.bf16.gmra.mrb[0].mxu0 %v4923
        %v4959 = vpop.f32.mrb[0].mxu0
        %v4960 = vadd.f32 0.0, %v4959
        %v4961 = vpop.f32.mrb[0].mxu0
        %v4962 = vpop.f32.mrb[0].mxu0
        %v4963 = vpop.f32.mrb[0].mxu0
        %4964 = vdwg.mxu0
        %v4966 = vsel %vm4476, %v4617, 0
        %4968 = vmatprep.subr.bf16.mxu0 0
        %4969 = vmatpush1.bf16.msra.mxu0 %v3911
        %4970 = vmatprep.subr.bf16.mxu0 0
        %4971 = vmatpush1.bf16.msra.mxu0 0
        %4972 = vmatprep.subr.bf16.mxu0 0
        %4973 = vmatpush1.bf16.msra.mxu0 0
        %4974 = vmatprep.subr.bf16.mxu0 0
        %4975 = vmatpush1.bf16.msra.mxu0 0
        %4976 = vmatprep.subr.bf16.mxu0 0
        %4977 = vmatpush1.bf16.msra.mxu0 0
        %4978 = vmatprep.subr.bf16.mxu0 0
        %4979 = vmatpush1.bf16.msra.mxu0 0
        %4980 = vmatprep.subr.bf16.mxu0 0
        %4981 = vmatpush1.bf16.msra.mxu0 0
        %4982 = vmatprep.subr.bf16.mxu0 0
        %4983 = vmatpush1.bf16.msra.mxu0 0
        %4984 = vmatprep.subr.bf16.mxu0 0
        %4985 = vmatpush1.bf16.msra.mxu0 0
        %4986 = vmatprep.subr.bf16.mxu0 0
        %4987 = vmatpush1.bf16.msra.mxu0 0
        %4988 = vmatprep.subr.bf16.mxu0 0
        %4989 = vmatpush1.bf16.msra.mxu0 0
        %4990 = vmatprep.subr.bf16.mxu0 0
        %4991 = vmatpush1.bf16.msra.mxu0 0
        %4992 = vmatprep.subr.bf16.mxu0 0
        %4993 = vmatpush1.bf16.msra.mxu0 0
        %4994 = vmatprep.subr.bf16.mxu0 0
        %4995 = vmatpush1.bf16.msra.mxu0 0
        %4996 = vmatprep.subr.bf16.mxu0 0
        %4997 = vmatpush1.bf16.msra.mxu0 0
        %4998 = vmatprep.subr.bf16.mxu0 0
        %4999 = vmatpush1.bf16.msra.mxu0 0
        %5000 = vmatprep.mubr.bf16.mxu0 0
        %5001 = vmatmul.mubr.bf16.gmra.mrb[0].mxu0 %v4966
        %v5002 = vpop.f32.mrb[0].mxu0
        %v5003 = vadd.f32 0.0, %v5002
        %v5004 = vpop.f32.mrb[0].mxu0
        %v5005 = vpop.f32.mrb[0].mxu0
        %v5006 = vpop.f32.mrb[0].mxu0
        %5007 = vdwg.mxu0
        %v5009 = vsel %vm4476, %v4618, 0
        %5011 = vmatprep.subr.bf16.mxu0 0
        %5012 = vmatpush1.bf16.msra.mxu0 %v3916
        %5013 = vmatprep.subr.bf16.mxu0 0
        %5014 = vmatpush1.bf16.msra.mxu0 0
        %5015 = vmatprep.subr.bf16.mxu0 0
        %5016 = vmatpush1.bf16.msra.mxu0 0
        %5017 = vmatprep.subr.bf16.mxu0 0
        %5018 = vmatpush1.bf16.msra.mxu0 0
        %5019 = vmatprep.subr.bf16.mxu0 0
        %5020 = vmatpush1.bf16.msra.mxu0 0
        %5021 = vmatprep.subr.bf16.mxu0 0
        %5022 = vmatpush1.bf16.msra.mxu0 0
        %5023 = vmatprep.subr.bf16.mxu0 0
        %5024 = vmatpush1.bf16.msra.mxu0 0
        %5025 = vmatprep.subr.bf16.mxu0 0
        %5026 = vmatpush1.bf16.msra.mxu0 0
        %5027 = vmatprep.subr.bf16.mxu0 0
        %5028 = vmatpush1.bf16.msra.mxu0 0
        %5029 = vmatprep.subr.bf16.mxu0 0
        %5030 = vmatpush1.bf16.msra.mxu0 0
        %5031 = vmatprep.subr.bf16.mxu0 0
        %5032 = vmatpush1.bf16.msra.mxu0 0
        %5033 = vmatprep.subr.bf16.mxu0 0
        %5034 = vmatpush1.bf16.msra.mxu0 0
        %5035 = vmatprep.subr.bf16.mxu0 0
        %5036 = vmatpush1.bf16.msra.mxu0 0
        %5037 = vmatprep.subr.bf16.mxu0 0
        %5038 = vmatpush1.bf16.msra.mxu0 0
        %5039 = vmatprep.subr.bf16.mxu0 0
        %5040 = vmatpush1.bf16.msra.mxu0 0
        %5041 = vmatprep.subr.bf16.mxu0 0
        %5042 = vmatpush1.bf16.msra.mxu0 0
        %5043 = vmatprep.mubr.bf16.mxu0 0
        %5044 = vmatmul.mubr.bf16.gmra.mrb[0].mxu0 %v5009
        %v5045 = vpop.f32.mrb[0].mxu0
        %v5046 = vadd.f32 0.0, %v5045
        %v5047 = vpop.f32.mrb[0].mxu0
        %v5048 = vpop.f32.mrb[0].mxu0
        %v5049 = vpop.f32.mrb[0].mxu0
        %5050 = vdwg.mxu0
        %v5052 = vsel %vm4476, %v4619, 0
        %5054 = vmatprep.subr.bf16.mxu0 0
        %5055 = vmatpush1.bf16.msra.mxu0 %v3918
        %5056 = vmatprep.subr.bf16.mxu0 0
        %5057 = vmatpush1.bf16.msra.mxu0 0
        %5058 = vmatprep.subr.bf16.mxu0 0
        %5059 = vmatpush1.bf16.msra.mxu0 0
        %5060 = vmatprep.subr.bf16.mxu0 0
        %5061 = vmatpush1.bf16.msra.mxu0 0
        %5062 = vmatprep.subr.bf16.mxu0 0
        %5063 = vmatpush1.bf16.msra.mxu0 0
        %5064 = vmatprep.subr.bf16.mxu0 0
        %5065 = vmatpush1.bf16.msra.mxu0 0
        %5066 = vmatprep.subr.bf16.mxu0 0
        %5067 = vmatpush1.bf16.msra.mxu0 0
        %5068 = vmatprep.subr.bf16.mxu0 0
        %5069 = vmatpush1.bf16.msra.mxu0 0
        %5070 = vmatprep.subr.bf16.mxu0 0
        %5071 = vmatpush1.bf16.msra.mxu0 0
        %5072 = vmatprep.subr.bf16.mxu0 0
        %5073 = vmatpush1.bf16.msra.mxu0 0
        %5074 = vmatprep.subr.bf16.mxu0 0
        %5075 = vmatpush1.bf16.msra.mxu0 0
        %5076 = vmatprep.subr.bf16.mxu0 0
        %5077 = vmatpush1.bf16.msra.mxu0 0
        %5078 = vmatprep.subr.bf16.mxu0 0
        %5079 = vmatpush1.bf16.msra.mxu0 0
        %5080 = vmatprep.subr.bf16.mxu0 0
        %5081 = vmatpush1.bf16.msra.mxu0 0
        %5082 = vmatprep.subr.bf16.mxu0 0
        %5083 = vmatpush1.bf16.msra.mxu0 0
        %5084 = vmatprep.subr.bf16.mxu0 0
        %5085 = vmatpush1.bf16.msra.mxu0 0
        %5086 = vmatprep.mubr.bf16.mxu0 0
        %5087 = vmatmul.mubr.bf16.gmra.mrb[0].mxu0 %v5052
        %v5088 = vpop.f32.mrb[0].mxu0
        %v5089 = vadd.f32 0.0, %v5088
        %v5090 = vpop.f32.mrb[0].mxu0
        %v5091 = vpop.f32.mrb[0].mxu0
        %v5092 = vpop.f32.mrb[0].mxu0
        %5093 = vdwg.mxu0
        %v5095 = vsel %vm4476, %v4620, 0
        %5097 = vmatprep.subr.bf16.mxu0 0
        %5098 = vmatpush1.bf16.msra.mxu0 %v3920
        %5099 = vmatprep.subr.bf16.mxu0 0
        %5100 = vmatpush1.bf16.msra.mxu0 0
        %5101 = vmatprep.subr.bf16.mxu0 0
        %5102 = vmatpush1.bf16.msra.mxu0 0
        %5103 = vmatprep.subr.bf16.mxu0 0
        %5104 = vmatpush1.bf16.msra.mxu0 0
        %5105 = vmatprep.subr.bf16.mxu0 0
        %5106 = vmatpush1.bf16.msra.mxu0 0
        %5107 = vmatprep.subr.bf16.mxu0 0
        %5108 = vmatpush1.bf16.msra.mxu0 0
        %5109 = vmatprep.subr.bf16.mxu0 0
        %5110 = vmatpush1.bf16.msra.mxu0 0
        %5111 = vmatprep.subr.bf16.mxu0 0
        %5112 = vmatpush1.bf16.msra.mxu0 0
        %5113 = vmatprep.subr.bf16.mxu0 0
        %5114 = vmatpush1.bf16.msra.mxu0 0
        %5115 = vmatprep.subr.bf16.mxu0 0
        %5116 = vmatpush1.bf16.msra.mxu0 0
        %5117 = vmatprep.subr.bf16.mxu0 0
        %5118 = vmatpush1.bf16.msra.mxu0 0
        %5119 = vmatprep.subr.bf16.mxu0 0
        %5120 = vmatpush1.bf16.msra.mxu0 0
        %5121 = vmatprep.subr.bf16.mxu0 0
        %5122 = vmatpush1.bf16.msra.mxu0 0
        %5123 = vmatprep.subr.bf16.mxu0 0
        %5124 = vmatpush1.bf16.msra.mxu0 0
        %5125 = vmatprep.subr.bf16.mxu0 0
        %5126 = vmatpush1.bf16.msra.mxu0 0
        %5127 = vmatprep.subr.bf16.mxu0 0
        %5128 = vmatpush1.bf16.msra.mxu0 0
        %5129 = vmatprep.mubr.bf16.mxu0 0
        %5130 = vmatmul.mubr.bf16.gmra.mrb[0].mxu0 %v5095
        %v5131 = vpop.f32.mrb[0].mxu0
        %v5132 = vadd.f32 0.0, %v5131
        %v5133 = vpop.f32.mrb[0].mxu0
        %v5134 = vpop.f32.mrb[0].mxu0
        %v5135 = vpop.f32.mrb[0].mxu0
        %5136 = vdwg.mxu0
        %v5137 = vpack.c.bf16 %v4659, %v4659
        %v5138 = vpack.c.bf16 %v4702, %v4702
        %v5139 = vpack.c.bf16 %v4745, %v4745
        %v5140 = vpack.c.bf16 %v4788, %v4788
        %v5141 = vpack.c.bf16 %v4831, %v4831
        %v5142 = vpack.c.bf16 %v4874, %v4874
        %v5143 = vpack.c.bf16 %v4917, %v4917
        %v5144 = vpack.c.bf16 %v4960, %v4960
        %v5145 = vpack.c.bf16 %v5003, %v5003
        %v5146 = vpack.c.bf16 %v5046, %v5046
        %v5147 = vpack.c.bf16 %v5089, %v5089
        %v5148 = vpack.c.bf16 %v5132, %v5132
        %5152 = vrot.lane.b32.xlu0 %v5140, 32
        %v5153 = vpop.permute.xlu0 %5152
        %5154 = vrot.lane.b32.xlu0 %v5141, 32
        %v5155 = vpop.permute.xlu0 %5154
        %5156 = vrot.lane.b32.xlu0 %v5142, 32
        %v5157 = vpop.permute.xlu0 %5156
        %5161 = vrot.lane.b32.xlu0 %v5143, 64
        %v5162 = vpop.permute.xlu0 %5161
        %5163 = vrot.lane.b32.xlu0 %v5144, 64
        %v5164 = vpop.permute.xlu0 %5163
        %5165 = vrot.lane.b32.xlu0 %v5145, 64
        %v5166 = vpop.permute.xlu0 %5165
        %5170 = vrot.lane.b32.xlu0 %v5146, 96
        %v5171 = vpop.permute.xlu0 %5170
        %5172 = vrot.lane.b32.xlu0 %v5147, 96
        %v5173 = vpop.permute.xlu0 %5172
        %5174 = vrot.lane.b32.xlu0 %v5148, 96
        %v5175 = vpop.permute.xlu0 %5174
        %v5178 = vsel %vm1933, %v5137, %v5153
        %v5181 = vsel %vm1933, %v5138, %v5155
        %v5184 = vsel %vm1933, %v5139, %v5157
        %v5186 = vsel %vm3232, %v5178, %v5162
        %v5188 = vsel %vm3232, %v5181, %v5164
        %v5190 = vsel %vm3232, %v5184, %v5166
        %v5192 = vsel %vm3239, %v5186, %v5171
        %v5194 = vsel %vm3239, %v5188, %v5173
        %v5196 = vsel %vm3239, %v5190, %v5175
        %v5197 = vld [vmem:[%s1244] sm:$0xf]
        %v5198 = vld [vmem:[%s1244 + $0x4] sm:$0xf]
        %v5199 = vld [vmem:[%s1244 + $0x8] sm:$0xf]
        %v5200 = vld [vmem:[%s1244 + $0xc] sm:$0xf]
        %v5201 = vld [vmem:[%s1244 + $0x10] sm:$0xf]
        %v5202 = vld [vmem:[%s1244 + $0x14] sm:$0xf]
        %v5203 = vld [vmem:[%s1244 + $0x18] sm:$0xf]
        %v5204 = vld [vmem:[%s1244 + $0x1c] sm:$0xf]
        %v5205 = vld [vmem:[%s1244 + $0x20] sm:$0xf]
        %v5206 = vld [vmem:[%s1244 + $0x24] sm:$0xf]
        %v5207 = vld [vmem:[%s1244 + $0x28] sm:$0xf]
        %v5208 = vld [vmem:[%s1244 + $0x2c] sm:$0xf]
        %v5209 = vld [vmem:[%s1244 + $0x30] sm:$0xf]
        %v5210 = vld [vmem:[%s1244 + $0x34] sm:$0xf]
        %v5211 = vld [vmem:[%s1244 + $0x38] sm:$0xf]
        %v5212 = vld [vmem:[%s1244 + $0x3c] sm:$0xf]
        %v5213 = vld [vmem:[%s1449] sm:$0x1]
        %v5215 = vlaneseq
        %v5216 = vshrl.u32 %v5215, 7
        %v5217 = vsub.s32 0, %v5216
        %v5218 = vrot.slane %v5213, %v5217
        %v5223 = vunpack.c.l.b16 %v5192
        %v5224 = vunpack.c.l.b16 %v5194
        %v5225 = vunpack.c.l.b16 %v5196
        %v5226 = vpack.c.b16 %v5224, %v5223
        %v5227 = vpack.c.b16 %v5225, %v5225
        %v5246 = vunpack.c.l.b16 %v5197
        %v5247 = vunpack.c.l.b16 %v5198
        %v5248 = vunpack.c.l.b16 %v5199
        %v5249 = vunpack.c.l.b16 %v5200
        %v5250 = vunpack.c.l.b16 %v5201
        %v5251 = vunpack.c.l.b16 %v5202
        %v5252 = vunpack.c.l.b16 %v5203
        %v5253 = vunpack.c.l.b16 %v5204
        %v5254 = vunpack.c.l.b16 %v5205
        %v5255 = vunpack.c.l.b16 %v5206
        %v5256 = vunpack.c.l.b16 %v5207
        %v5257 = vunpack.c.l.b16 %v5208
        %v5258 = vunpack.c.l.b16 %v5209
        %v5259 = vunpack.c.l.b16 %v5210
        %v5260 = vunpack.c.l.b16 %v5211
        %v5261 = vunpack.c.l.b16 %v5212
        %v5262 = vpack.c.b16 %v5247, %v5246
        %v5263 = vpack.c.b16 %v5249, %v5248
        %v5264 = vpack.c.b16 %v5251, %v5250
        %v5265 = vpack.c.b16 %v5253, %v5252
        %v5266 = vpack.c.b16 %v5255, %v5254
        %v5267 = vpack.c.b16 %v5257, %v5256
        %v5268 = vpack.c.b16 %v5259, %v5258
        %v5269 = vpack.c.b16 %v5261, %v5260
        %5278 = vmatprep.subr.bf16.mxu0 0
        %5279 = vmatpush1.bf16.msra.mxu0 %v5262
        %5280 = vmatprep.subr.bf16.mxu0 0
        %5281 = vmatpush1.bf16.msra.mxu0 %v5263
        %5282 = vmatprep.subr.bf16.mxu0 0
        %5283 = vmatpush1.bf16.msra.mxu0 %v5264
        %5284 = vmatprep.subr.bf16.mxu0 0
        %5285 = vmatpush1.bf16.msra.mxu0 %v5265
        %5286 = vmatprep.subr.bf16.mxu0 0
        %5287 = vmatpush1.bf16.msra.mxu0 %v5266
        %5288 = vmatprep.subr.bf16.mxu0 0
        %5289 = vmatpush1.bf16.msra.mxu0 %v5267
        %5290 = vmatprep.subr.bf16.mxu0 0
        %5291 = vmatpush1.bf16.msra.mxu0 %v5268
        %5292 = vmatprep.subr.bf16.mxu0 0
        %5293 = vmatpush1.bf16.msra.mxu0 %v5269
        %5294 = vmatprep.subr.bf16.mxu0 0
        %5295 = vmatpush1.bf16.msra.mxu0 0
        %5296 = vmatprep.subr.bf16.mxu0 0
        %5297 = vmatpush1.bf16.msra.mxu0 0
        %5298 = vmatprep.subr.bf16.mxu0 0
        %5299 = vmatpush1.bf16.msra.mxu0 0
        %5300 = vmatprep.subr.bf16.mxu0 0
        %5301 = vmatpush1.bf16.msra.mxu0 0
        %5302 = vmatprep.subr.bf16.mxu0 0
        %5303 = vmatpush1.bf16.msra.mxu0 0
        %5304 = vmatprep.subr.bf16.mxu0 0
        %5305 = vmatpush1.bf16.msra.mxu0 0
        %5306 = vmatprep.subr.bf16.mxu0 0
        %5307 = vmatpush1.bf16.msra.mxu0 0
        %5308 = vmatprep.subr.bf16.mxu0 0
        %5309 = vmatpush1.bf16.msra.mxu0 0
        %5310 = vmatprep.mubr.bf16.mxu0 0
        %5311 = vmatmul.mubr.bf16.gmra.mrb[0].mxu0 %v5226
        %v5312 = vpop.f32.mrb[0].mxu0
        %v5313 = vadd.f32 %v5218, %v5312
        %v5314 = vpop.f32.mrb[0].mxu0
        %v5315 = vpop.f32.mrb[0].mxu0
        %v5316 = vadd.f32 %v5218, %v5315
        %v5317 = vpop.f32.mrb[0].mxu0
        %5318 = vmatprep.mubr.bf16.mxu0 0
        %5319 = vmatmul.mubr.bf16.gmra.mrb[0].mxu0 %v5227
        %v5320 = vpop.f32.mrb[0].mxu0
        %v5321 = vadd.f32 %v5218, %v5320
        %v5322 = vpop.f32.mrb[0].mxu0
        %v5323 = vpop.f32.mrb[0].mxu0
        %v5324 = vpop.f32.mrb[0].mxu0
        %5325 = vdwg.mxu0
        %v5326 = vadd.f32 %v3435, %v5313
        %v5327 = vadd.f32 %v3436, %v5316
        %v5328 = vadd.f32 %v3437, %v5321
        %5329 = vadd.xlane.f32.xlu0 %v5326
        %v5330 = vpop.xlane.xlu0 %5329
        %5331 = vadd.xlane.f32.xlu0 %v5327
        %v5332 = vpop.xlane.xlu0 %5331
        %5333 = vadd.xlane.f32.xlu0 %v5328
        %v5334 = vpop.xlane.xlu0 %5333
        %v5335 = vmul.f32 %v5330, %v3384
        %v5336 = vmul.f32 %v5332, %v3384
        %v5337 = vmul.f32 %v5334, %v3384
        %v5338 = vmul.f32 %v5326, %v5326
        %v5339 = vmul.f32 %v5327, %v5327
        %v5340 = vmul.f32 %v5328, %v5328
        %5341 = vadd.xlane.f32.xlu0 %v5338
        %v5342 = vpop.xlane.xlu0 %5341
        %5343 = vadd.xlane.f32.xlu0 %v5339
        %v5344 = vpop.xlane.xlu0 %5343
        %5345 = vadd.xlane.f32.xlu0 %v5340
        %v5346 = vpop.xlane.xlu0 %5345
        %v5347 = vmul.f32 %v5342, %v3384
        %v5348 = vmul.f32 %v5344, %v3384
        %v5349 = vmul.f32 %v5346, %v3384
        %v5350 = vmul.f32 %v5335, %v5335
        %v5351 = vmul.f32 %v5336, %v5336
        %v5352 = vmul.f32 %v5337, %v5337
        %v5353 = vsub.f32 %v5347, %v5350
        %v5354 = vsub.f32 %v5348, %v5351
        %v5355 = vsub.f32 %v5349, %v5352
        %v5356 = vadd.f32 %v5353, 1e-05
        %v5357 = vadd.f32 %v5354, 1e-05
        %v5358 = vadd.f32 %v5355, 1e-05
        %v5359 = vrsqrt.pop %v5356
        %v5360 = vrsqrt.pop %v5357
        %v5361 = vrsqrt.pop %v5358
        %v5362 = vsub.f32 %v5326, %v5335
        %v5363 = vsub.f32 %v5327, %v5336
        %v5364 = vsub.f32 %v5328, %v5337
        %v5365 = vmul.f32 %v5362, %v5359
        %v5366 = vmul.f32 %v5363, %v5360
        %v5367 = vmul.f32 %v5364, %v5361
        %v5368 = vld [vmem:[%s1465] sm:$0x1]
        %v5370 = vlaneseq
        %v5371 = vshrl.u32 %v5370, 7
        %v5372 = vsub.s32 0, %v5371
        %v5373 = vrot.slane %v5368, %v5372
        %v5375 = vmul.f32 %v5365, %v5373
        %v5376 = vmul.f32 %v5366, %v5373
        %v5377 = vmul.f32 %v5367, %v5373
        %v5378 = vld [vmem:[%s1468] sm:$0x1]
        %v5380 = vlaneseq
        %v5381 = vshrl.u32 %v5380, 7
        %v5382 = vsub.s32 0, %v5381
        %v5383 = vrot.slane %v5378, %v5382
        %v5385 = vadd.f32 %v5375, %v5383
        %v5386 = vadd.f32 %v5376, %v5383
        %v5387 = vadd.f32 %v5377, %v5383
        %v5388 = vpack.c.bf16 %v5386, %v5385
        %v5389 = vpack.c.bf16 %v5387, %v5387
        %v5390 = vld [vmem:[%s1253] sm:$0xff]
        %v5391 = vld [vmem:[%s1253 + $0x8] sm:$0xff]
        %v5392 = vld [vmem:[%s1253 + $0x10] sm:$0xff]
        %v5393 = vld [vmem:[%s1253 + $0x18] sm:$0xff]
        %v5394 = vld [vmem:[%s1253 + $0x20] sm:$0xff]
        %v5395 = vld [vmem:[%s1253 + $0x28] sm:$0xff]
        %v5396 = vld [vmem:[%s1253 + $0x30] sm:$0xff]
        %v5397 = vld [vmem:[%s1253 + $0x38] sm:$0xff]
        %v5398 = vld [vmem:[%s1253 + $0x40] sm:$0xff]
        %v5399 = vld [vmem:[%s1253 + $0x48] sm:$0xff]
        %v5400 = vld [vmem:[%s1253 + $0x50] sm:$0xff]
        %v5401 = vld [vmem:[%s1253 + $0x58] sm:$0xff]
        %v5402 = vld [vmem:[%s1253 + $0x60] sm:$0xff]
        %v5403 = vld [vmem:[%s1253 + $0x68] sm:$0xff]
        %v5404 = vld [vmem:[%s1253 + $0x70] sm:$0xff]
        %v5405 = vld [vmem:[%s1253 + $0x78] sm:$0xff]
        %v5406 = vld [vmem:[%s1453] sm:$0x3]
        %v5408 = vlaneseq
        %v5409 = vshrl.u32 %v5408, 7
        %v5410 = vsub.s32 0, %v5409
        %v5411 = vrot.slane %v5406, %v5410
        %v5412 = vlaneseq
        %v5413 = vshrl.u32 %v5412, 7
        %v5414 = vsub.s32 1, %v5413
        %v5415 = vrot.slane %v5406, %v5414
        %v5434 = vunpack.c.l.b16 %v5390
        %v5435 = vunpack.c.h.b16 %v5390
        %v5436 = vunpack.c.l.b16 %v5391
        %v5437 = vunpack.c.h.b16 %v5391
        %v5438 = vunpack.c.l.b16 %v5392
        %v5439 = vunpack.c.h.b16 %v5392
        %v5440 = vunpack.c.l.b16 %v5393
        %v5441 = vunpack.c.h.b16 %v5393
        %v5442 = vunpack.c.l.b16 %v5394
        %v5443 = vunpack.c.h.b16 %v5394
        %v5444 = vunpack.c.l.b16 %v5395
        %v5445 = vunpack.c.h.b16 %v5395
        %v5446 = vunpack.c.l.b16 %v5396
        %v5447 = vunpack.c.h.b16 %v5396
        %v5448 = vunpack.c.l.b16 %v5397
        %v5449 = vunpack.c.h.b16 %v5397
        %v5450 = vunpack.c.l.b16 %v5398
        %v5451 = vunpack.c.h.b16 %v5398
        %v5452 = vunpack.c.l.b16 %v5399
        %v5453 = vunpack.c.h.b16 %v5399
        %v5454 = vunpack.c.l.b16 %v5400
        %v5455 = vunpack.c.h.b16 %v5400
        %v5456 = vunpack.c.l.b16 %v5401
        %v5457 = vunpack.c.h.b16 %v5401
        %v5458 = vunpack.c.l.b16 %v5402
        %v5459 = vunpack.c.h.b16 %v5402
        %v5460 = vunpack.c.l.b16 %v5403
        %v5461 = vunpack.c.h.b16 %v5403
        %v5462 = vunpack.c.l.b16 %v5404
        %v5463 = vunpack.c.h.b16 %v5404
        %v5464 = vunpack.c.l.b16 %v5405
        %v5465 = vunpack.c.h.b16 %v5405
        %v5466 = vpack.c.b16 %v5436, %v5434
        %v5467 = vpack.c.b16 %v5437, %v5435
        %v5468 = vpack.c.b16 %v5440, %v5438
        %v5469 = vpack.c.b16 %v5441, %v5439
        %v5470 = vpack.c.b16 %v5444, %v5442
        %v5471 = vpack.c.b16 %v5445, %v5443
        %v5472 = vpack.c.b16 %v5448, %v5446
        %v5473 = vpack.c.b16 %v5449, %v5447
        %v5474 = vpack.c.b16 %v5452, %v5450
        %v5475 = vpack.c.b16 %v5453, %v5451
        %v5476 = vpack.c.b16 %v5456, %v5454
        %v5477 = vpack.c.b16 %v5457, %v5455
        %v5478 = vpack.c.b16 %v5460, %v5458
        %v5479 = vpack.c.b16 %v5461, %v5459
        %v5480 = vpack.c.b16 %v5464, %v5462
        %v5481 = vpack.c.b16 %v5465, %v5463
        %5498 = vmatprep.subr.bf16.mxu0 %v5467
        %5499 = vmatpush1.bf16.msra.mxu0 %v5466
        %5500 = vmatprep.subr.bf16.mxu0 %v5469
        %5501 = vmatpush1.bf16.msra.mxu0 %v5468
        %5502 = vmatprep.subr.bf16.mxu0 %v5471
        %5503 = vmatpush1.bf16.msra.mxu0 %v5470
        %5504 = vmatprep.subr.bf16.mxu0 %v5473
        %5505 = vmatpush1.bf16.msra.mxu0 %v5472
        %5506 = vmatprep.subr.bf16.mxu0 %v5475
        %5507 = vmatpush1.bf16.msra.mxu0 %v5474
        %5508 = vmatprep.subr.bf16.mxu0 %v5477
        %5509 = vmatpush1.bf16.msra.mxu0 %v5476
        %5510 = vmatprep.subr.bf16.mxu0 %v5479
        %5511 = vmatpush1.bf16.msra.mxu0 %v5478
        %5512 = vmatprep.subr.bf16.mxu0 %v5481
        %5513 = vmatpush1.bf16.msra.mxu0 %v5480
        %5514 = vmatprep.subr.bf16.mxu0 0
        %5515 = vmatpush1.bf16.msra.mxu0 0
        %5516 = vmatprep.subr.bf16.mxu0 0
        %5517 = vmatpush1.bf16.msra.mxu0 0
        %5518 = vmatprep.subr.bf16.mxu0 0
        %5519 = vmatpush1.bf16.msra.mxu0 0
        %5520 = vmatprep.subr.bf16.mxu0 0
        %5521 = vmatpush1.bf16.msra.mxu0 0
        %5522 = vmatprep.subr.bf16.mxu0 0
        %5523 = vmatpush1.bf16.msra.mxu0 0
        %5524 = vmatprep.subr.bf16.mxu0 0
        %5525 = vmatpush1.bf16.msra.mxu0 0
        %5526 = vmatprep.subr.bf16.mxu0 0
        %5527 = vmatpush1.bf16.msra.mxu0 0
        %5528 = vmatprep.subr.bf16.mxu0 0
        %5529 = vmatpush1.bf16.msra.mxu0 0
        %5530 = vmatprep.mubr.bf16.mxu0 0
        %5531 = vmatmul.mubr.bf16.gmra.mrb[0].mxu0 %v5388
        %v5532 = vpop.f32.mrb[0].mxu0
        %v5533 = vadd.f32 %v5411, %v5532
        %v5534 = vpop.f32.mrb[0].mxu0
        %v5535 = vadd.f32 %v5415, %v5534
        %v5536 = vpop.f32.mrb[0].mxu0
        %v5537 = vadd.f32 %v5411, %v5536
        %v5538 = vpop.f32.mrb[0].mxu0
        %v5539 = vadd.f32 %v5415, %v5538
        %5540 = vmatprep.mubr.bf16.mxu0 0
        %5541 = vmatmul.mubr.bf16.gmra.mrb[0].mxu0 %v5389
        %v5542 = vpop.f32.mrb[0].mxu0
        %v5543 = vadd.f32 %v5411, %v5542
        %v5544 = vpop.f32.mrb[0].mxu0
        %v5545 = vadd.f32 %v5415, %v5544
        %v5546 = vpop.f32.mrb[0].mxu0
        %v5547 = vpop.f32.mrb[0].mxu0
        %5548 = vdwg.mxu0
        %v5549 = vmax.f32 %v5533, 0.0
        %v5550 = vmax.f32 %v5535, 0.0
        %v5551 = vmax.f32 %v5537, 0.0
        %v5552 = vmax.f32 %v5539, 0.0
        %v5553 = vmax.f32 %v5543, 0.0
        %v5554 = vmax.f32 %v5545, 0.0
        %v5555 = vpack.c.bf16 %v5551, %v5549
        %v5556 = vpack.c.bf16 %v5552, %v5550
        %v5557 = vpack.c.bf16 %v5553, %v5553
        %v5558 = vpack.c.bf16 %v5554, %v5554
        %v5559 = vld [vmem:[%s1262] sm:$0xf]
        %v5560 = vld [vmem:[%s1262 + $0x4] sm:$0xf]
        %v5561 = vld [vmem:[%s1262 + $0x8] sm:$0xf]
        %v5562 = vld [vmem:[%s1262 + $0xc] sm:$0xf]
        %v5563 = vld [vmem:[%s1262 + $0x10] sm:$0xf]
        %v5564 = vld [vmem:[%s1262 + $0x14] sm:$0xf]
        %v5565 = vld [vmem:[%s1262 + $0x18] sm:$0xf]
        %v5566 = vld [vmem:[%s1262 + $0x1c] sm:$0xf]
        %v5567 = vld [vmem:[%s1262 + $0x20] sm:$0xf]
        %v5568 = vld [vmem:[%s1262 + $0x24] sm:$0xf]
        %v5569 = vld [vmem:[%s1262 + $0x28] sm:$0xf]
        %v5570 = vld [vmem:[%s1262 + $0x2c] sm:$0xf]
        %v5571 = vld [vmem:[%s1262 + $0x30] sm:$0xf]
        %v5572 = vld [vmem:[%s1262 + $0x34] sm:$0xf]
        %v5573 = vld [vmem:[%s1262 + $0x38] sm:$0xf]
        %v5574 = vld [vmem:[%s1262 + $0x3c] sm:$0xf]
        %v5575 = vld [vmem:[%s1262 + $0x40] sm:$0xf]
        %v5576 = vld [vmem:[%s1262 + $0x44] sm:$0xf]
        %v5577 = vld [vmem:[%s1262 + $0x48] sm:$0xf]
        %v5578 = vld [vmem:[%s1262 + $0x4c] sm:$0xf]
        %v5579 = vld [vmem:[%s1262 + $0x50] sm:$0xf]
        %v5580 = vld [vmem:[%s1262 + $0x54] sm:$0xf]
        %v5581 = vld [vmem:[%s1262 + $0x58] sm:$0xf]
        %v5582 = vld [vmem:[%s1262 + $0x5c] sm:$0xf]
        %v5583 = vld [vmem:[%s1262 + $0x60] sm:$0xf]
        %v5584 = vld [vmem:[%s1262 + $0x64] sm:$0xf]
        %v5585 = vld [vmem:[%s1262 + $0x68] sm:$0xf]
        %v5586 = vld [vmem:[%s1262 + $0x6c] sm:$0xf]
        %v5587 = vld [vmem:[%s1262 + $0x70] sm:$0xf]
        %v5588 = vld [vmem:[%s1262 + $0x74] sm:$0xf]
        %v5589 = vld [vmem:[%s1262 + $0x78] sm:$0xf]
        %v5590 = vld [vmem:[%s1262 + $0x7c] sm:$0xf]
        %v5623 = vunpack.c.l.b16 %v5559
        %v5624 = vunpack.c.l.b16 %v5560
        %v5625 = vunpack.c.l.b16 %v5561
        %v5626 = vunpack.c.l.b16 %v5562
        %v5627 = vunpack.c.l.b16 %v5563
        %v5628 = vunpack.c.l.b16 %v5564
        %v5629 = vunpack.c.l.b16 %v5565
        %v5630 = vunpack.c.l.b16 %v5566
        %v5631 = vunpack.c.l.b16 %v5567
        %v5632 = vunpack.c.l.b16 %v5568
        %v5633 = vunpack.c.l.b16 %v5569
        %v5634 = vunpack.c.l.b16 %v5570
        %v5635 = vunpack.c.l.b16 %v5571
        %v5636 = vunpack.c.l.b16 %v5572
        %v5637 = vunpack.c.l.b16 %v5573
        %v5638 = vunpack.c.l.b16 %v5574
        %v5639 = vunpack.c.l.b16 %v5575
        %v5640 = vunpack.c.l.b16 %v5576
        %v5641 = vunpack.c.l.b16 %v5577
        %v5642 = vunpack.c.l.b16 %v5578
        %v5643 = vunpack.c.l.b16 %v5579
        %v5644 = vunpack.c.l.b16 %v5580
        %v5645 = vunpack.c.l.b16 %v5581
        %v5646 = vunpack.c.l.b16 %v5582
        %v5647 = vunpack.c.l.b16 %v5583
        %v5648 = vunpack.c.l.b16 %v5584
        %v5649 = vunpack.c.l.b16 %v5585
        %v5650 = vunpack.c.l.b16 %v5586
        %v5651 = vunpack.c.l.b16 %v5587
        %v5652 = vunpack.c.l.b16 %v5588
        %v5653 = vunpack.c.l.b16 %v5589
        %v5654 = vunpack.c.l.b16 %v5590
        %v5655 = vpack.c.b16 %v5624, %v5623
        %v5656 = vpack.c.b16 %v5626, %v5625
        %v5657 = vpack.c.b16 %v5628, %v5627
        %v5658 = vpack.c.b16 %v5630, %v5629
        %v5659 = vpack.c.b16 %v5632, %v5631
        %v5660 = vpack.c.b16 %v5634, %v5633
        %v5661 = vpack.c.b16 %v5636, %v5635
        %v5662 = vpack.c.b16 %v5638, %v5637
        %v5663 = vpack.c.b16 %v5640, %v5639
        %v5664 = vpack.c.b16 %v5642, %v5641
        %v5665 = vpack.c.b16 %v5644, %v5643
        %v5666 = vpack.c.b16 %v5646, %v5645
        %v5667 = vpack.c.b16 %v5648, %v5647
        %v5668 = vpack.c.b16 %v5650, %v5649
        %v5669 = vpack.c.b16 %v5652, %v5651
        %v5670 = vpack.c.b16 %v5654, %v5653
        %5687 = vmatprep.subr.bf16.mxu0 0
        %5688 = vmatpush1.bf16.msra.mxu0 %v5655
        %5689 = vmatprep.subr.bf16.mxu0 0
        %5690 = vmatpush1.bf16.msra.mxu0 %v5656
        %5691 = vmatprep.subr.bf16.mxu0 0
        %5692 = vmatpush1.bf16.msra.mxu0 %v5657
        %5693 = vmatprep.subr.bf16.mxu0 0
        %5694 = vmatpush1.bf16.msra.mxu0 %v5658
        %5695 = vmatprep.subr.bf16.mxu0 0
        %5696 = vmatpush1.bf16.msra.mxu0 %v5659
        %5697 = vmatprep.subr.bf16.mxu0 0
        %5698 = vmatpush1.bf16.msra.mxu0 %v5660
        %5699 = vmatprep.subr.bf16.mxu0 0
        %5700 = vmatpush1.bf16.msra.mxu0 %v5661
        %5701 = vmatprep.subr.bf16.mxu0 0
        %5702 = vmatpush1.bf16.msra.mxu0 %v5662
        %5703 = vmatprep.subr.bf16.mxu0 0
        %5704 = vmatpush1.bf16.msra.mxu0 %v5663
        %5705 = vmatprep.subr.bf16.mxu0 0
        %5706 = vmatpush1.bf16.msra.mxu0 %v5664
        %5707 = vmatprep.subr.bf16.mxu0 0
        %5708 = vmatpush1.bf16.msra.mxu0 %v5665
        %5709 = vmatprep.subr.bf16.mxu0 0
        %5710 = vmatpush1.bf16.msra.mxu0 %v5666
        %5711 = vmatprep.subr.bf16.mxu0 0
        %5712 = vmatpush1.bf16.msra.mxu0 %v5667
        %5713 = vmatprep.subr.bf16.mxu0 0
        %5714 = vmatpush1.bf16.msra.mxu0 %v5668
        %5715 = vmatprep.subr.bf16.mxu0 0
        %5716 = vmatpush1.bf16.msra.mxu0 %v5669
        %5717 = vmatprep.subr.bf16.mxu0 0
        %5718 = vmatpush1.bf16.msra.mxu0 %v5670
        %5719 = vmatprep.mubr.bf16.mxu0 %v5556
        %5720 = vmatmul.mubr.bf16.gmra.mrb[0].mxu0 %v5555
        %v5721 = vpop.f32.mrb[0].mxu0
        %v5722 = vadd.f32 0.0, %v5721
        %v5723 = vpop.f32.mrb[0].mxu0
        %v5724 = vpop.f32.mrb[0].mxu0
        %v5725 = vadd.f32 0.0, %v5724
        %v5726 = vpop.f32.mrb[0].mxu0
        %5727 = vmatprep.mubr.bf16.mxu0 %v5558
        %5728 = vmatmul.mubr.bf16.gmra.mrb[0].mxu0 %v5557
        %v5729 = vpop.f32.mrb[0].mxu0
        %v5730 = vadd.f32 0.0, %v5729
        %v5731 = vpop.f32.mrb[0].mxu0
        %v5732 = vpop.f32.mrb[0].mxu0
        %v5733 = vpop.f32.mrb[0].mxu0
        %5734 = vdwg.mxu0
        %v5735 = vadd.f32 %v5385, %v5722
        %v5736 = vadd.f32 %v5386, %v5725
        %v5737 = vadd.f32 %v5387, %v5730
        %v5738 = vld [vmem:[%s1456] sm:$0x1]
        %v5740 = vlaneseq
        %v5741 = vshrl.u32 %v5740, 7
        %v5742 = vsub.s32 0, %v5741
        %v5743 = vrot.slane %v5738, %v5742
        %v5745 = vadd.f32 %v5735, %v5743
        %v5746 = vadd.f32 %v5736, %v5743
        %v5747 = vadd.f32 %v5737, %v5743
        %5748 = vadd.xlane.f32.xlu0 %v5745
        %v5749 = vpop.xlane.xlu0 %5748
        %5750 = vadd.xlane.f32.xlu0 %v5746
        %v5751 = vpop.xlane.xlu0 %5750
        %5752 = vadd.xlane.f32.xlu0 %v5747
        %v5753 = vpop.xlane.xlu0 %5752
        %v5754 = vmul.f32 %v5749, %v3384
        %v5755 = vmul.f32 %v5751, %v3384
        %v5756 = vmul.f32 %v5753, %v3384
        %v5757 = vmul.f32 %v5745, %v5745
        %v5758 = vmul.f32 %v5746, %v5746
        %v5759 = vmul.f32 %v5747, %v5747
        %5760 = vadd.xlane.f32.xlu0 %v5757
        %v5761 = vpop.xlane.xlu0 %5760
        %5762 = vadd.xlane.f32.xlu0 %v5758
        %v5763 = vpop.xlane.xlu0 %5762
        %5764 = vadd.xlane.f32.xlu0 %v5759
        %v5765 = vpop.xlane.xlu0 %5764
        %v5766 = vmul.f32 %v5761, %v3384
        %v5767 = vmul.f32 %v5763, %v3384
        %v5768 = vmul.f32 %v5765, %v3384
        %v5769 = vmul.f32 %v5754, %v5754
        %v5770 = vmul.f32 %v5755, %v5755
        %v5771 = vmul.f32 %v5756, %v5756
        %v5772 = vsub.f32 %v5766, %v5769
        %v5773 = vsub.f32 %v5767, %v5770
        %v5774 = vsub.f32 %v5768, %v5771
        %v5775 = vadd.f32 %v5772, 1e-05
        %v5776 = vadd.f32 %v5773, 1e-05
        %v5777 = vadd.f32 %v5774, 1e-05
        %v5778 = vrsqrt.pop %v5775
        %v5779 = vrsqrt.pop %v5776
        %v5780 = vrsqrt.pop %v5777
        %v5781 = vsub.f32 %v5745, %v5754
        %v5782 = vsub.f32 %v5746, %v5755
        %v5783 = vsub.f32 %v5747, %v5756
        %v5784 = vmul.f32 %v5781, %v5778
        %v5785 = vmul.f32 %v5782, %v5779
        %v5786 = vmul.f32 %v5783, %v5780
        %v5787 = vld [vmem:[%s1471] sm:$0x1]
        %v5789 = vlaneseq
        %v5790 = vshrl.u32 %v5789, 7
        %v5791 = vsub.s32 0, %v5790
        %v5792 = vrot.slane %v5787, %v5791
        %v5794 = vmul.f32 %v5784, %v5792
        %v5795 = vmul.f32 %v5785, %v5792
        %v5796 = vmul.f32 %v5786, %v5792
        %v5797 = vld [vmem:[%s1474] sm:$0x1]
        %v5799 = vlaneseq
        %v5800 = vshrl.u32 %v5799, 7
        %v5801 = vsub.s32 0, %v5800
        %v5802 = vrot.slane %v5797, %v5801
        %v5804 = vadd.f32 %v5794, %v5802
        %v5805 = vadd.f32 %v5795, %v5802
        %v5806 = vadd.f32 %v5796, %v5802
        %5807 = vst [vmem:[#allocation2] sm:$0xff] %v5804
        %5808 = vst [vmem:[#allocation2 + $0x8] sm:$0xff] %v5805
        %5809 = vst [vmem:[#allocation2 + $0x10] sm:$0xff] %v5806
        %p5810 = scmp.eq.s32.totalorder %s47, 2
        // Predicated region
        $region185: #{tpu_custom_call.1} parent=131 // pred_check
          %p5811 = pneg %p5810
        $region186: #{tpu_custom_call.1} parent=131 // pred_check_branch
          %5813 = sbr.rel (%p5811) target = $region188
        $region187: #{tpu_custom_call.1} parent=131 // pred_region
          %5814 = vst [vmem:[#allocation18] sm:$0xff] %v5804
          %5815 = vst [vmem:[#allocation18 + $0x8] sm:$0xff] %v5805
          %5816 = vst [vmem:[#allocation18 + $0x10] sm:$0xff] %v5806
        $region188: #{tpu_custom_call.1} parent=131 // pred_fallthru
          _
        // Predicated region
        $region189: #{tpu_custom_call.1} parent=131 // pred_check
          %p5817 = pneg %p800
        $region190: #{tpu_custom_call.1} parent=131 // pred_check_branch
          %5819 = sbr.rel (%p5817) target = $region192
        $region191: #{tpu_custom_call.1} parent=131 // pred_region
          %s5820 = smul.u32 3, %s46
          %s5822 = ssub.s32 384, 384
          %5823 = vsyncadd [#allocation5], %s5822
          %s5824 = smul.addr %s5820, 128
          %s5825 = scalar_lea.hbm %s28, %s5824
          %s5826 = sshll.u32 [#allocation18], 4
          %s5827 = int_to_ptr.vmem [resolvable:$true] %s5826
          %5832 = dma.vmem_to_hbm [thread:$0]  %s5827, 384, %s5825, [#allocation5], 128, 128, 8
        $region192: #{tpu_custom_call.1} parent=131 // pred_fallthru
          _
        // Predicated region
        $region193: #{tpu_custom_call.1} parent=131 // pred_check
          %p5833 = pneg %p800
        $region194: #{tpu_custom_call.1} parent=131 // pred_check_branch
          %5835 = sbr.rel (%p5833) target = $region196
        $region195: #{tpu_custom_call.1} parent=131 // pred_region
          %5836 = dma.done [#allocation5], 384
        $region196: #{tpu_custom_call.1} parent=131 // pred_fallthru
          _
      $region132: #{tpu_custom_call.1} parent=5 // pred_fallthru
        _
      %p5837 = scmp.le.s32.totalorder 2, %s37
      // Predicated region
      $region197: #{tpu_custom_call.1} parent=5 // pred_check
        %p5838 = pneg %p5837
      $region198: #{tpu_custom_call.1} parent=5 // pred_check_branch
        %5840 = sbr.rel (%p5838) target = $region200
      $region199: #{tpu_custom_call.1} parent=5 // pred_region
        %s5841 = ssub.s32 %s37, 2
      $region200: #{tpu_custom_call.1} parent=5 // pred_fallthru
        _
    $region6: #{tpu_custom_call.1} parent=1 // loop_footer
      %s41 = sadd.s32 1, %s37
    $region7: #{tpu_custom_call.1} parent=1 // loop_footer_branch
      %36 = sbr.rel target = $region3
    $region8: #{tpu_custom_call.1} parent=1 // loop_exit
      _
    %5842 = vsyncpa [#allocation4], 1
    %s5843 = scalar_lea.sflag [#allocation4], 1
    %5844 = vsyncpa %s5843, 1
    %5845 = vsyncpa [#allocation7], 1
    %5846 = vsyncpa [#allocation5], 1
    %s5847 = scalar_lea.sflag [#allocation5], 1
    %5848 = vsyncpa %s5847, 1

</llo_original>
